<compile_context>
chip_gen: v6e
topology: v6e:2x2x1
jax: 0.10.0
libtpu: 0.0.40
codegen_flags: <defaults>
</compile_context>

<pallas_src>
import functools

import jax
import jax.numpy as jnp
from jax import lax
from jax.experimental import pallas as pl
from jax.experimental.pallas import tpu as pltpu


# ----------------------------------------------------------------------------
# Pallas kernels: fused  W @ P^T  (bf16 MXU, f32 acc)  ->  BatchNorm / bias -> act
# ----------------------------------------------------------------------------
def _matmul_bn_act_kernel(w_ref, p_ref, g_ref, beta_ref, o_ref,
                          *, activation, eps=1e-5):
    # w_ref: (Cout, K) bf16   p_ref: (K, M) bf16
    # g/beta: (Cout, 1) f32   o_ref: (Cout, M)
    z = jnp.dot(w_ref[...], p_ref[...], preferred_element_type=jnp.float32)
    # PyTorch training-mode BatchNorm2d: biased batch stats over (N, H, W)
    # per channel == over the M (lane) axis.  The conv bias is elided: it
    # cancels exactly in (z + b) - mean(z + b).
    mean = jnp.mean(z, axis=1, keepdims=True)
    var = jnp.maximum(jnp.mean(z * z, axis=1, keepdims=True) - mean * mean, 0.0)
    scale = g_ref[...] * jax.lax.rsqrt(var + eps)
    shift = beta_ref[...] - mean * scale
    z = z * scale + shift
    if activation == "relu":
        z = jnp.maximum(z, 0.0)
    elif activation == "sigmoid":
        z = jax.nn.sigmoid(z)
    o_ref[...] = z.astype(o_ref.dtype)


def _matmul_bias_act_kernel(w_ref, p_ref, b_ref, o_ref, *, activation):
    # Final layer (no BatchNorm): matmul + bias + activation.
    z = jnp.dot(w_ref[...], p_ref[...], preferred_element_type=jnp.float32)
    z = z + b_ref[...]
    if activation == "relu":
        z = jnp.maximum(z, 0.0)
    elif activation == "sigmoid":
        z = jax.nn.sigmoid(z)
    o_ref[...] = z.astype(o_ref.dtype)


def _fused_conv_matmul(wmat, pT, bias, gamma, beta, *, activation, use_bn,
                       out_dtype):
    """One fused (Cout,K) @ (K,M) + BN/bias + activation pallas_call."""
    Cout, K = wmat.shape
    M = pT.shape[1]
    w_bf = wmat.astype(jnp.bfloat16)
    p_bf = pT.astype(jnp.bfloat16)
    vec_spec = pl.BlockSpec((Cout, 1), lambda i: (0, 0))
    common = dict(
        out_shape=jax.ShapeDtypeStruct((Cout, M), out_dtype),
        grid=(1,),
        out_specs=pl.BlockSpec((Cout, M), lambda i: (0, 0)),
        # Working set is < 2 MiB; default scoped VMEM budget is plenty
        # (NOTE: no hard-coded 96 MiB limit -> safe on v7x's 64 MiB VMEM).
        compiler_params=pltpu.CompilerParams(
            dimension_semantics=("arbitrary",)),
    )
    if use_bn:
        kernel = functools.partial(_matmul_bn_act_kernel, activation=activation)
        return pl.pallas_call(
            kernel,
            in_specs=[pl.BlockSpec((Cout, K), lambda i: (0, 0)),
                      pl.BlockSpec((K, M), lambda i: (0, 0)),
                      vec_spec, vec_spec],
            **common,
        )(w_bf, p_bf,
          gamma.reshape(Cout, 1).astype(jnp.float32),
          beta.reshape(Cout, 1).astype(jnp.float32))
    kernel = functools.partial(_matmul_bias_act_kernel, activation=activation)
    return pl.pallas_call(
        kernel,
        in_specs=[pl.BlockSpec((Cout, K), lambda i: (0, 0)),
                  pl.BlockSpec((K, M), lambda i: (0, 0)),
                  vec_spec],
        **common,
    )(w_bf, p_bf, bias.reshape(Cout, 1).astype(jnp.float32))


# ----------------------------------------------------------------------------
# Glue (XLA, tiny tensors): transposed im2col, conv / conv-transpose wrappers
# ----------------------------------------------------------------------------
def _im2col_T(xc, K, stride, padding, dilation):
    """xc: (C, N, H, W) channel-first -> P^T (K*K*C, N*Ho*Wo), rows (kh,kw,c)."""
    C, N, H, W = xc.shape
    if padding:
        xc = jnp.pad(xc, ((0, 0), (0, 0),
                          (padding, padding), (padding, padding)))
    Ho = (H + 2 * padding - dilation * (K - 1) - 1) // stride + 1
    Wo = (W + 2 * padding - dilation * (K - 1) - 1) // stride + 1
    rows = []
    for kh in range(K):
        for kw in range(K):
            sl = xc[:, :,
                    kh * dilation: kh * dilation + (Ho - 1) * stride + 1: stride,
                    kw * dilation: kw * dilation + (Wo - 1) * stride + 1: stride]
            rows.append(sl.reshape(C, N * Ho * Wo))
    return jnp.concatenate(rows, axis=0), (N, Ho, Wo)


def conv2d_bn_act(xc, p, *, stride=1, padding=0, dilation=1,
                  activation="relu", use_bn=True, out_dtype=jnp.bfloat16):
    w, b = p["w"], p["b"]                          # w: (Cout, Cin, K, K)
    Cout, Cin, K, _ = w.shape
    pT, (N, Ho, Wo) = _im2col_T(xc, K, stride, padding, dilation)
    # (Cout, K*K*Cin) with column order (kh, kw, cin) matching P^T row order.
    wmat = jnp.transpose(w, (0, 2, 3, 1)).reshape(Cout, K * K * Cin)
    gamma = p.get("gamma", jnp.ones((Cout,), jnp.float32))
    beta = p.get("beta", jnp.zeros((Cout,), jnp.float32))
    y = _fused_conv_matmul(wmat, pT, b, gamma, beta,
                           activation=activation, use_bn=use_bn,
                           out_dtype=out_dtype)
    return y.reshape(Cout, N, Ho, Wo)              # ready for next layer


def convtranspose2d_bn_act(xc, p, *, stride=1, padding=0, output_padding=0,
                           dilation=1, activation="relu", use_bn=True,
                           out_dtype=jnp.bfloat16):
    w = p["w"]                                     # (Cin, Cout, K, K)
    Cin, Cout, K, _ = w.shape
    # zero-stuff (interior padding) + edge padding in one lax.pad.
    lo = dilation * (K - 1) - padding              # requires lo >= 0 (true here)
    hi = lo + output_padding
    xs = lax.pad(xc, jnp.zeros((), xc.dtype),
                 ((0, 0, 0), (0, 0, 0),
                  (lo, hi, stride - 1), (lo, hi, stride - 1)))
    # equivalent forward-conv weight: flip spatial taps, swap in/out channels.
    w_conv = jnp.transpose(w[:, :, ::-1, ::-1], (1, 0, 2, 3))  # (Cout, Cin, K, K)
    p_eq = dict(p)
    p_eq["w"] = w_conv
    return conv2d_bn_act(xs, p_eq, stride=1, padding=0, dilation=dilation,
                         activation=activation, use_bn=use_bn,
                         out_dtype=out_dtype)


# ----------------------------------------------------------------------------
# Parameters (deterministic synthetic init, PyTorch-style fan-in bounds)
# ----------------------------------------------------------------------------
def init_params(key):
    ks = jax.random.split(key, 16)

    def conv(k, cout, cin, ksz):
        kw, kb = jax.random.split(k)
        bound = 1.0 / float(cin * ksz * ksz) ** 0.5
        return {"w": jax.random.uniform(kw, (cout, cin, ksz, ksz), jnp.float32,
                                        -bound, bound),
                "b": jax.random.uniform(kb, (cout,), jnp.float32, -bound, bound)}

    def convt(k, cin, cout, ksz):
        kw, kb = jax.random.split(k)
        bound = 1.0 / float(cout * ksz * ksz) ** 0.5
        return {"w": jax.random.uniform(kw, (cin, cout, ksz, ksz), jnp.float32,
                                        -bound, bound),
                "b": jax.random.uniform(kb, (cout,), jnp.float32, -bound, bound)}

    def bn(k, c):
        kg, kb = jax.random.split(k)
        return {"gamma": 1.0 + 0.1 * jax.random.normal(kg, (c,), jnp.float32),
                "beta": 0.1 * jax.random.normal(kb, (c,), jnp.float32)}

    return {
        "enc1": {**conv(ks[0], 16, 1, 3),   **bn(ks[1], 16)},
        "enc2": {**conv(ks[2], 32, 16, 3),  **bn(ks[3], 32)},
        "enc3": {**conv(ks[4], 64, 32, 3),  **bn(ks[5], 64)},
        "enc4": {**conv(ks[6], 128, 64, 3), **bn(ks[7], 128)},
        "dec1": {**convt(ks[8], 128, 64, 3),  **bn(ks[9], 64)},
        "dec2": {**convt(ks[10], 64, 32, 3),  **bn(ks[11], 32)},
        "dec3": {**convt(ks[12], 32, 16, 3),  **bn(ks[13], 16)},
        "dec4": {**convt(ks[14], 16, 1, 3)},    # final layer: no BatchNorm
    }


# ----------------------------------------------------------------------------
# Full forward pass
# ----------------------------------------------------------------------------
def autoencoder_forward(x_nchw, params):
    # NCHW -> channel-first (C, N, H, W); intermediates stay channel-first so
    # the (Cout, M) kernel outputs chain without transposes.
    x = jnp.transpose(x_nchw, (1, 0, 2, 3)).astype(jnp.bfloat16)
    # ---- encoder ----
    x = conv2d_bn_act(x, params["enc1"], stride=2, padding=1)
    x = conv2d_bn_act(x, params["enc2"], stride=2, padding=2, dilation=2)
    x = conv2d_bn_act(x, params["enc3"], stride=1, padding=1)
    x = conv2d_bn_act(x, params["enc4"], stride=1, padding=0)
    # ---- decoder ----
    x = convtranspose2d_bn_act(x, params["dec1"])
    x = convtranspose2d_bn_act(x, params["dec2"], stride=2, padding=1,
                               output_padding=1)
    x = convtranspose2d_bn_act(x, params["dec3"], stride=2, padding=2,
                               output_padding=1, dilation=2)
    x = convtranspose2d_bn_act(x, params["dec4"], padding=1,
                               activation="sigmoid", use_bn=False,
                               out_dtype=jnp.float32)
    return jnp.transpose(x, (1, 0, 2, 3))          # (C, N, H, W) -> NCHW


if __name__ == "__main__":
    key = jax.random.PRNGKey(0)
    k_par, k_in = jax.random.split(key)
    params = init_params(k_par)

    # MNIST-like input consistent with the 1-channel encoder/decoder:
    # 28x28 round-trips exactly back to 28x28 through this architecture.
    x = jax.random.normal(k_in, (2, 1, 28, 28), dtype=jnp.float32)

    fwd = jax.jit(autoencoder_forward)
    out = fwd(x, params)
    out = jax.block_until_ready(out)

    assert out.shape == (2, 1, 28, 28), out.shape
    assert out.dtype == jnp.float32
    assert bool(jnp.all(jnp.isfinite(out)))
    assert bool(jnp.all((out >= 0.0) & (out <= 1.0)))   # sigmoid output range
    print("KERNEL_OK")
</pallas_src>

<mosaic_0001>
module attributes {stable_mosaic.version = 11 : i64} {
  func.func @_matmul_bn_act_kernel(%arg0: i32, %arg1: memref<16x9xbf16, #tpu.memory_space<vmem>>, %arg2: memref<9x392xbf16, #tpu.memory_space<vmem>>, %arg3: memref<16x1xf32, #tpu.memory_space<vmem>>, %arg4: memref<16x1xf32, #tpu.memory_space<vmem>>, %arg5: memref<16x392xbf16, #tpu.memory_space<vmem>>) attributes {dimension_semantics = [#tpu.dimension_semantics<arbitrary>], iteration_bounds = array<i64: 1>, scalar_prefetch = 0 : i64, scratch_operands = 0 : i64, tpu.core_type = #tpu.core_type<tc>, window_params = [{pipeline_mode = #tpu.pipeline_mode<synchronous>, transform_indices = @transform_0, window_bounds = array<i64: 16, 9>}, {pipeline_mode = #tpu.pipeline_mode<synchronous>, transform_indices = @transform_1, window_bounds = array<i64: 9, 392>}, {pipeline_mode = #tpu.pipeline_mode<synchronous>, transform_indices = @transform_2, window_bounds = array<i64: 16, 1>}, {pipeline_mode = #tpu.pipeline_mode<synchronous>, transform_indices = @transform_3, window_bounds = array<i64: 16, 1>}, {pipeline_mode = #tpu.pipeline_mode<synchronous>, transform_indices = @transform_4, window_bounds = array<i64: 16, 392>}]} {
    %c0 = arith.constant 0 : index
    %c0_0 = arith.constant 0 : index
    %0 = vector.load %arg1[%c0, %c0_0] : memref<16x9xbf16, #tpu.memory_space<vmem>>, vector<16x9xbf16>
    %c0_1 = arith.constant 0 : index
    %c0_2 = arith.constant 0 : index
    %1 = vector.load %arg2[%c0_1, %c0_2] : memref<9x392xbf16, #tpu.memory_space<vmem>>, vector<9x392xbf16>
    %cst = arith.constant dense<0.000000e+00> : vector<16x392xf32>
    %2 = tpu.matmul %0, %1, %cst {dimension_numbers = #tpu.dot_dimension_numbers<[1], [0], [0], [1], [0, 0, 1, 1], [], []>} : vector<16x9xbf16>, vector<9x392xbf16>, vector<16x392xf32> -> vector<16x392xf32>
    %cst_3 = arith.constant dense<0.000000e+00> : vector<16xf32>
    %3 = vector.multi_reduction <add>, %2, %cst_3 [1] : vector<16x392xf32> to vector<16xf32>
    %4 = vector.shape_cast %3 : vector<16xf32> to vector<16x1xf32>
    %cst_4 = arith.constant 3.920000e+02 : f32
    %5 = vector.broadcast %cst_4 : f32 to vector<16x1xf32>
    %6 = arith.divf %4, %5 : vector<16x1xf32>
    %7 = arith.mulf %2, %2 : vector<16x392xf32>
    %cst_5 = arith.constant dense<0.000000e+00> : vector<16xf32>
    %8 = vector.multi_reduction <add>, %7, %cst_5 [1] : vector<16x392xf32> to vector<16xf32>
    %9 = vector.shape_cast %8 : vector<16xf32> to vector<16x1xf32>
    %cst_6 = arith.constant 3.920000e+02 : f32
    %10 = vector.broadcast %cst_6 : f32 to vector<16x1xf32>
    %11 = arith.divf %9, %10 : vector<16x1xf32>
    %12 = arith.mulf %6, %6 : vector<16x1xf32>
    %13 = arith.subf %11, %12 : vector<16x1xf32>
    %cst_7 = arith.constant 0.000000e+00 : f32
    %14 = vector.broadcast %cst_7 : f32 to vector<16x1xf32>
    %15 = arith.maximumf %13, %14 : vector<16x1xf32>
    %c0_8 = arith.constant 0 : index
    %c0_9 = arith.constant 0 : index
    %16 = vector.load %arg3[%c0_8, %c0_9] : memref<16x1xf32, #tpu.memory_space<vmem>>, vector<16x1xf32>
    %cst_10 = arith.constant 9.99999974E-6 : f32
    %17 = vector.broadcast %cst_10 : f32 to vector<16x1xf32>
    %18 = arith.addf %15, %17 : vector<16x1xf32>
    %19 = math.rsqrt %18 : vector<16x1xf32>
    %20 = arith.mulf %16, %19 : vector<16x1xf32>
    %c0_11 = arith.constant 0 : index
    %c0_12 = arith.constant 0 : index
    %21 = vector.load %arg4[%c0_11, %c0_12] : memref<16x1xf32, #tpu.memory_space<vmem>>, vector<16x1xf32>
    %22 = arith.mulf %6, %20 : vector<16x1xf32>
    %23 = arith.subf %21, %22 : vector<16x1xf32>
    %24 = vector.broadcast %20 : vector<16x1xf32> to vector<16x392xf32>
    %25 = arith.mulf %2, %24 : vector<16x392xf32>
    %26 = vector.broadcast %23 : vector<16x1xf32> to vector<16x392xf32>
    %27 = arith.addf %25, %26 : vector<16x392xf32>
    %cst_13 = arith.constant 0.000000e+00 : f32
    %28 = vector.broadcast %cst_13 : f32 to vector<16x392xf32>
    %29 = arith.maximumf %27, %28 : vector<16x392xf32>
    %30 = arith.truncf %29 : vector<16x392xf32> to vector<16x392xbf16>
    %c0_14 = arith.constant 0 : index
    %c0_15 = arith.constant 0 : index
    %31 = vector.load %arg5[%c0_14, %c0_15] : memref<16x392xbf16, #tpu.memory_space<vmem>>, vector<16x392xbf16>
    tpu.vector_store %arg5[%c0_14, %c0_15], %30 {strides = array<i32>} : memref<16x392xbf16, #tpu.memory_space<vmem>>, vector<16x392xbf16>,
    return
  }
  func.func @transform_0(%arg0: i32) -> (i32, i32) {
    %c0_i32 = arith.constant 0 : i32
    %c0_i32_0 = arith.constant 0 : i32
    %c0_i32_1 = arith.constant 0 : i32
    return %c0_i32, %c0_i32_0 : i32, i32
  }
  func.func @transform_1(%arg0: i32) -> (i32, i32) {
    %c0_i32 = arith.constant 0 : i32
    %c0_i32_0 = arith.constant 0 : i32
    %c0_i32_1 = arith.constant 0 : i32
    return %c0_i32, %c0_i32_0 : i32, i32
  }
  func.func @transform_2(%arg0: i32) -> (i32, i32) {
    %c0_i32 = arith.constant 0 : i32
    %c0_i32_0 = arith.constant 0 : i32
    %c0_i32_1 = arith.constant 0 : i32
    return %c0_i32, %c0_i32_0 : i32, i32
  }
  func.func @transform_3(%arg0: i32) -> (i32, i32) {
    %c0_i32 = arith.constant 0 : i32
    %c0_i32_0 = arith.constant 0 : i32
    %c0_i32_1 = arith.constant 0 : i32
    return %c0_i32, %c0_i32_0 : i32, i32
  }
  func.func @transform_4(%arg0: i32) -> (i32, i32) {
    %c0_i32 = arith.constant 0 : i32
    %c0_i32_0 = arith.constant 0 : i32
    %c0_i32_1 = arith.constant 0 : i32
    return %c0_i32, %c0_i32_0 : i32, i32
  }
}

module attributes {stable_mosaic.version = 11 : i64} {
  func.func @_matmul_bn_act_kernel(%arg0: i32, %arg1: memref<32x144xbf16, #tpu.memory_space<vmem>>, %arg2: memref<144x98xbf16, #tpu.memory_space<vmem>>, %arg3: memref<32x1xf32, #tpu.memory_space<vmem>>, %arg4: memref<32x1xf32, #tpu.memory_space<vmem>>, %arg5: memref<32x98xbf16, #tpu.memory_space<vmem>>) attributes {dimension_semantics = [#tpu.dimension_semantics<arbitrary>], iteration_bounds = array<i64: 1>, scalar_prefetch = 0 : i64, scratch_operands = 0 : i64, tpu.core_type = #tpu.core_type<tc>, window_params = [{pipeline_mode = #tpu.pipeline_mode<synchronous>, transform_indices = @transform_0, window_bounds = array<i64: 32, 144>}, {pipeline_mode = #tpu.pipeline_mode<synchronous>, transform_indices = @transform_1, window_bounds = array<i64: 144, 98>}, {pipeline_mode = #tpu.pipeline_mode<synchronous>, transform_indices = @transform_2, window_bounds = array<i64: 32, 1>}, {pipeline_mode = #tpu.pipeline_mode<synchronous>, transform_indices = @transform_3, window_bounds = array<i64: 32, 1>}, {pipeline_mode = #tpu.pipeline_mode<synchronous>, transform_indices = @transform_4, window_bounds = array<i64: 32, 98>}]} {
    %c0 = arith.constant 0 : index
    %c0_0 = arith.constant 0 : index
    %0 = vector.load %arg1[%c0, %c0_0] : memref<32x144xbf16, #tpu.memory_space<vmem>>, vector<32x144xbf16>
    %c0_1 = arith.constant 0 : index
    %c0_2 = arith.constant 0 : index
    %1 = vector.load %arg2[%c0_1, %c0_2] : memref<144x98xbf16, #tpu.memory_space<vmem>>, vector<144x98xbf16>
    %cst = arith.constant dense<0.000000e+00> : vector<32x98xf32>
    %2 = tpu.matmul %0, %1, %cst {dimension_numbers = #tpu.dot_dimension_numbers<[1], [0], [0], [1], [0, 0, 1, 1], [], []>} : vector<32x144xbf16>, vector<144x98xbf16>, vector<32x98xf32> -> vector<32x98xf32>
    %cst_3 = arith.constant dense<0.000000e+00> : vector<32xf32>
    %3 = vector.multi_reduction <add>, %2, %cst_3 [1] : vector<32x98xf32> to vector<32xf32>
    %4 = vector.shape_cast %3 : vector<32xf32> to vector<32x1xf32>
    %cst_4 = arith.constant 9.800000e+01 : f32
    %5 = vector.broadcast %cst_4 : f32 to vector<32x1xf32>
    %6 = arith.divf %4, %5 : vector<32x1xf32>
    %7 = arith.mulf %2, %2 : vector<32x98xf32>
    %cst_5 = arith.constant dense<0.000000e+00> : vector<32xf32>
    %8 = vector.multi_reduction <add>, %7, %cst_5 [1] : vector<32x98xf32> to vector<32xf32>
    %9 = vector.shape_cast %8 : vector<32xf32> to vector<32x1xf32>
    %cst_6 = arith.constant 9.800000e+01 : f32
    %10 = vector.broadcast %cst_6 : f32 to vector<32x1xf32>
    %11 = arith.divf %9, %10 : vector<32x1xf32>
    %12 = arith.mulf %6, %6 : vector<32x1xf32>
    %13 = arith.subf %11, %12 : vector<32x1xf32>
    %cst_7 = arith.constant 0.000000e+00 : f32
    %14 = vector.broadcast %cst_7 : f32 to vector<32x1xf32>
    %15 = arith.maximumf %13, %14 : vector<32x1xf32>
    %c0_8 = arith.constant 0 : index
    %c0_9 = arith.constant 0 : index
    %16 = vector.load %arg3[%c0_8, %c0_9] : memref<32x1xf32, #tpu.memory_space<vmem>>, vector<32x1xf32>
    %cst_10 = arith.constant 9.99999974E-6 : f32
    %17 = vector.broadcast %cst_10 : f32 to vector<32x1xf32>
    %18 = arith.addf %15, %17 : vector<32x1xf32>
    %19 = math.rsqrt %18 : vector<32x1xf32>
    %20 = arith.mulf %16, %19 : vector<32x1xf32>
    %c0_11 = arith.constant 0 : index
    %c0_12 = arith.constant 0 : index
    %21 = vector.load %arg4[%c0_11, %c0_12] : memref<32x1xf32, #tpu.memory_space<vmem>>, vector<32x1xf32>
    %22 = arith.mulf %6, %20 : vector<32x1xf32>
    %23 = arith.subf %21, %22 : vector<32x1xf32>
    %24 = vector.broadcast %20 : vector<32x1xf32> to vector<32x98xf32>
    %25 = arith.mulf %2, %24 : vector<32x98xf32>
    %26 = vector.broadcast %23 : vector<32x1xf32> to vector<32x98xf32>
    %27 = arith.addf %25, %26 : vector<32x98xf32>
    %cst_13 = arith.constant 0.000000e+00 : f32
    %28 = vector.broadcast %cst_13 : f32 to vector<32x98xf32>
    %29 = arith.maximumf %27, %28 : vector<32x98xf32>
    %30 = arith.truncf %29 : vector<32x98xf32> to vector<32x98xbf16>
    %c0_14 = arith.constant 0 : index
    %c0_15 = arith.constant 0 : index
    %31 = vector.load %arg5[%c0_14, %c0_15] : memref<32x98xbf16, #tpu.memory_space<vmem>>, vector<32x98xbf16>
    tpu.vector_store %arg5[%c0_14, %c0_15], %30 {strides = array<i32>} : memref<32x98xbf16, #tpu.memory_space<vmem>>, vector<32x98xbf16>,
    return
  }
  func.func @transform_0(%arg0: i32) -> (i32, i32) {
    %c0_i32 = arith.constant 0 : i32
    %c0_i32_0 = arith.constant 0 : i32
    %c0_i32_1 = arith.constant 0 : i32
    return %c0_i32, %c0_i32_0 : i32, i32
  }
  func.func @transform_1(%arg0: i32) -> (i32, i32) {
    %c0_i32 = arith.constant 0 : i32
    %c0_i32_0 = arith.constant 0 : i32
    %c0_i32_1 = arith.constant 0 : i32
    return %c0_i32, %c0_i32_0 : i32, i32
  }
  func.func @transform_2(%arg0: i32) -> (i32, i32) {
    %c0_i32 = arith.constant 0 : i32
    %c0_i32_0 = arith.constant 0 : i32
    %c0_i32_1 = arith.constant 0 : i32
    return %c0_i32, %c0_i32_0 : i32, i32
  }
  func.func @transform_3(%arg0: i32) -> (i32, i32) {
    %c0_i32 = arith.constant 0 : i32
    %c0_i32_0 = arith.constant 0 : i32
    %c0_i32_1 = arith.constant 0 : i32
    return %c0_i32, %c0_i32_0 : i32, i32
  }
  func.func @transform_4(%arg0: i32) -> (i32, i32) {
    %c0_i32 = arith.constant 0 : i32
    %c0_i32_0 = arith.constant 0 : i32
    %c0_i32_1 = arith.constant 0 : i32
    return %c0_i32, %c0_i32_0 : i32, i32
  }
}

module attributes {stable_mosaic.version = 11 : i64} {
  func.func @_matmul_bn_act_kernel(%arg0: i32, %arg1: memref<64x288xbf16, #tpu.memory_space<vmem>>, %arg2: memref<288x98xbf16, #tpu.memory_space<vmem>>, %arg3: memref<64x1xf32, #tpu.memory_space<vmem>>, %arg4: memref<64x1xf32, #tpu.memory_space<vmem>>, %arg5: memref<64x98xbf16, #tpu.memory_space<vmem>>) attributes {dimension_semantics = [#tpu.dimension_semantics<arbitrary>], iteration_bounds = array<i64: 1>, scalar_prefetch = 0 : i64, scratch_operands = 0 : i64, tpu.core_type = #tpu.core_type<tc>, window_params = [{pipeline_mode = #tpu.pipeline_mode<synchronous>, transform_indices = @transform_0, window_bounds = array<i64: 64, 288>}, {pipeline_mode = #tpu.pipeline_mode<synchronous>, transform_indices = @transform_1, window_bounds = array<i64: 288, 98>}, {pipeline_mode = #tpu.pipeline_mode<synchronous>, transform_indices = @transform_2, window_bounds = array<i64: 64, 1>}, {pipeline_mode = #tpu.pipeline_mode<synchronous>, transform_indices = @transform_3, window_bounds = array<i64: 64, 1>}, {pipeline_mode = #tpu.pipeline_mode<synchronous>, transform_indices = @transform_4, window_bounds = array<i64: 64, 98>}]} {
    %c0 = arith.constant 0 : index
    %c0_0 = arith.constant 0 : index
    %0 = vector.load %arg1[%c0, %c0_0] : memref<64x288xbf16, #tpu.memory_space<vmem>>, vector<64x288xbf16>
    %c0_1 = arith.constant 0 : index
    %c0_2 = arith.constant 0 : index
    %1 = vector.load %arg2[%c0_1, %c0_2] : memref<288x98xbf16, #tpu.memory_space<vmem>>, vector<288x98xbf16>
    %cst = arith.constant dense<0.000000e+00> : vector<64x98xf32>
    %2 = tpu.matmul %0, %1, %cst {dimension_numbers = #tpu.dot_dimension_numbers<[1], [0], [0], [1], [0, 0, 1, 1], [], []>} : vector<64x288xbf16>, vector<288x98xbf16>, vector<64x98xf32> -> vector<64x98xf32>
    %cst_3 = arith.constant dense<0.000000e+00> : vector<64xf32>
    %3 = vector.multi_reduction <add>, %2, %cst_3 [1] : vector<64x98xf32> to vector<64xf32>
    %4 = vector.shape_cast %3 : vector<64xf32> to vector<64x1xf32>
    %cst_4 = arith.constant 9.800000e+01 : f32
    %5 = vector.broadcast %cst_4 : f32 to vector<64x1xf32>
    %6 = arith.divf %4, %5 : vector<64x1xf32>
    %7 = arith.mulf %2, %2 : vector<64x98xf32>
    %cst_5 = arith.constant dense<0.000000e+00> : vector<64xf32>
    %8 = vector.multi_reduction <add>, %7, %cst_5 [1] : vector<64x98xf32> to vector<64xf32>
    %9 = vector.shape_cast %8 : vector<64xf32> to vector<64x1xf32>
    %cst_6 = arith.constant 9.800000e+01 : f32
    %10 = vector.broadcast %cst_6 : f32 to vector<64x1xf32>
    %11 = arith.divf %9, %10 : vector<64x1xf32>
    %12 = arith.mulf %6, %6 : vector<64x1xf32>
    %13 = arith.subf %11, %12 : vector<64x1xf32>
    %cst_7 = arith.constant 0.000000e+00 : f32
    %14 = vector.broadcast %cst_7 : f32 to vector<64x1xf32>
    %15 = arith.maximumf %13, %14 : vector<64x1xf32>
    %c0_8 = arith.constant 0 : index
    %c0_9 = arith.constant 0 : index
    %16 = vector.load %arg3[%c0_8, %c0_9] : memref<64x1xf32, #tpu.memory_space<vmem>>, vector<64x1xf32>
    %cst_10 = arith.constant 9.99999974E-6 : f32
    %17 = vector.broadcast %cst_10 : f32 to vector<64x1xf32>
    %18 = arith.addf %15, %17 : vector<64x1xf32>
    %19 = math.rsqrt %18 : vector<64x1xf32>
    %20 = arith.mulf %16, %19 : vector<64x1xf32>
    %c0_11 = arith.constant 0 : index
    %c0_12 = arith.constant 0 : index
    %21 = vector.load %arg4[%c0_11, %c0_12] : memref<64x1xf32, #tpu.memory_space<vmem>>, vector<64x1xf32>
    %22 = arith.mulf %6, %20 : vector<64x1xf32>
    %23 = arith.subf %21, %22 : vector<64x1xf32>
    %24 = vector.broadcast %20 : vector<64x1xf32> to vector<64x98xf32>
    %25 = arith.mulf %2, %24 : vector<64x98xf32>
    %26 = vector.broadcast %23 : vector<64x1xf32> to vector<64x98xf32>
    %27 = arith.addf %25, %26 : vector<64x98xf32>
    %cst_13 = arith.constant 0.000000e+00 : f32
    %28 = vector.broadcast %cst_13 : f32 to vector<64x98xf32>
    %29 = arith.maximumf %27, %28 : vector<64x98xf32>
    %30 = arith.truncf %29 : vector<64x98xf32> to vector<64x98xbf16>
    %c0_14 = arith.constant 0 : index
    %c0_15 = arith.constant 0 : index
    %31 = vector.load %arg5[%c0_14, %c0_15] : memref<64x98xbf16, #tpu.memory_space<vmem>>, vector<64x98xbf16>
    tpu.vector_store %arg5[%c0_14, %c0_15], %30 {strides = array<i32>} : memref<64x98xbf16, #tpu.memory_space<vmem>>, vector<64x98xbf16>,
    return
  }
  func.func @transform_0(%arg0: i32) -> (i32, i32) {
    %c0_i32 = arith.constant 0 : i32
    %c0_i32_0 = arith.constant 0 : i32
    %c0_i32_1 = arith.constant 0 : i32
    return %c0_i32, %c0_i32_0 : i32, i32
  }
  func.func @transform_1(%arg0: i32) -> (i32, i32) {
    %c0_i32 = arith.constant 0 : i32
    %c0_i32_0 = arith.constant 0 : i32
    %c0_i32_1 = arith.constant 0 : i32
    return %c0_i32, %c0_i32_0 : i32, i32
  }
  func.func @transform_2(%arg0: i32) -> (i32, i32) {
    %c0_i32 = arith.constant 0 : i32
    %c0_i32_0 = arith.constant 0 : i32
    %c0_i32_1 = arith.constant 0 : i32
    return %c0_i32, %c0_i32_0 : i32, i32
  }
  func.func @transform_3(%arg0: i32) -> (i32, i32) {
    %c0_i32 = arith.constant 0 : i32
    %c0_i32_0 = arith.constant 0 : i32
    %c0_i32_1 = arith.constant 0 : i32
    return %c0_i32, %c0_i32_0 : i32, i32
  }
  func.func @transform_4(%arg0: i32) -> (i32, i32) {
    %c0_i32 = arith.constant 0 : i32
    %c0_i32_0 = arith.constant 0 : i32
    %c0_i32_1 = arith.constant 0 : i32
    return %c0_i32, %c0_i32_0 : i32, i32
  }
}

module attributes {stable_mosaic.version = 11 : i64} {
  func.func @_matmul_bn_act_kernel(%arg0: i32, %arg1: memref<128x576xbf16, #tpu.memory_space<vmem>>, %arg2: memref<576x50xbf16, #tpu.memory_space<vmem>>, %arg3: memref<128x1xf32, #tpu.memory_space<vmem>>, %arg4: memref<128x1xf32, #tpu.memory_space<vmem>>, %arg5: memref<128x50xbf16, #tpu.memory_space<vmem>>) attributes {dimension_semantics = [#tpu.dimension_semantics<arbitrary>], iteration_bounds = array<i64: 1>, scalar_prefetch = 0 : i64, scratch_operands = 0 : i64, tpu.core_type = #tpu.core_type<tc>, window_params = [{pipeline_mode = #tpu.pipeline_mode<synchronous>, transform_indices = @transform_0, window_bounds = array<i64: 128, 576>}, {pipeline_mode = #tpu.pipeline_mode<synchronous>, transform_indices = @transform_1, window_bounds = array<i64: 576, 50>}, {pipeline_mode = #tpu.pipeline_mode<synchronous>, transform_indices = @transform_2, window_bounds = array<i64: 128, 1>}, {pipeline_mode = #tpu.pipeline_mode<synchronous>, transform_indices = @transform_3, window_bounds = array<i64: 128, 1>}, {pipeline_mode = #tpu.pipeline_mode<synchronous>, transform_indices = @transform_4, window_bounds = array<i64: 128, 50>}]} {
    %c0 = arith.constant 0 : index
    %c0_0 = arith.constant 0 : index
    %0 = vector.load %arg1[%c0, %c0_0] : memref<128x576xbf16, #tpu.memory_space<vmem>>, vector<128x576xbf16>
    %c0_1 = arith.constant 0 : index
    %c0_2 = arith.constant 0 : index
    %1 = vector.load %arg2[%c0_1, %c0_2] : memref<576x50xbf16, #tpu.memory_space<vmem>>, vector<576x50xbf16>
    %cst = arith.constant dense<0.000000e+00> : vector<128x50xf32>
    %2 = tpu.matmul %0, %1, %cst {dimension_numbers = #tpu.dot_dimension_numbers<[1], [0], [0], [1], [0, 0, 1, 1], [], []>} : vector<128x576xbf16>, vector<576x50xbf16>, vector<128x50xf32> -> vector<128x50xf32>
    %cst_3 = arith.constant dense<0.000000e+00> : vector<128xf32>
    %3 = vector.multi_reduction <add>, %2, %cst_3 [1] : vector<128x50xf32> to vector<128xf32>
    %4 = vector.shape_cast %3 : vector<128xf32> to vector<128x1xf32>
    %cst_4 = arith.constant 5.000000e+01 : f32
    %5 = vector.broadcast %cst_4 : f32 to vector<128x1xf32>
    %6 = arith.divf %4, %5 : vector<128x1xf32>
    %7 = arith.mulf %2, %2 : vector<128x50xf32>
    %cst_5 = arith.constant dense<0.000000e+00> : vector<128xf32>
    %8 = vector.multi_reduction <add>, %7, %cst_5 [1] : vector<128x50xf32> to vector<128xf32>
    %9 = vector.shape_cast %8 : vector<128xf32> to vector<128x1xf32>
    %cst_6 = arith.constant 5.000000e+01 : f32
    %10 = vector.broadcast %cst_6 : f32 to vector<128x1xf32>
    %11 = arith.divf %9, %10 : vector<128x1xf32>
    %12 = arith.mulf %6, %6 : vector<128x1xf32>
    %13 = arith.subf %11, %12 : vector<128x1xf32>
    %cst_7 = arith.constant 0.000000e+00 : f32
    %14 = vector.broadcast %cst_7 : f32 to vector<128x1xf32>
    %15 = arith.maximumf %13, %14 : vector<128x1xf32>
    %c0_8 = arith.constant 0 : index
    %c0_9 = arith.constant 0 : index
    %16 = vector.load %arg3[%c0_8, %c0_9] : memref<128x1xf32, #tpu.memory_space<vmem>>, vector<128x1xf32>
    %cst_10 = arith.constant 9.99999974E-6 : f32
    %17 = vector.broadcast %cst_10 : f32 to vector<128x1xf32>
    %18 = arith.addf %15, %17 : vector<128x1xf32>
    %19 = math.rsqrt %18 : vector<128x1xf32>
    %20 = arith.mulf %16, %19 : vector<128x1xf32>
    %c0_11 = arith.constant 0 : index
    %c0_12 = arith.constant 0 : index
    %21 = vector.load %arg4[%c0_11, %c0_12] : memref<128x1xf32, #tpu.memory_space<vmem>>, vector<128x1xf32>
    %22 = arith.mulf %6, %20 : vector<128x1xf32>
    %23 = arith.subf %21, %22 : vector<128x1xf32>
    %24 = vector.broadcast %20 : vector<128x1xf32> to vector<128x50xf32>
    %25 = arith.mulf %2, %24 : vector<128x50xf32>
    %26 = vector.broadcast %23 : vector<128x1xf32> to vector<128x50xf32>
    %27 = arith.addf %25, %26 : vector<128x50xf32>
    %cst_13 = arith.constant 0.000000e+00 : f32
    %28 = vector.broadcast %cst_13 : f32 to vector<128x50xf32>
    %29 = arith.maximumf %27, %28 : vector<128x50xf32>
    %30 = arith.truncf %29 : vector<128x50xf32> to vector<128x50xbf16>
    %c0_14 = arith.constant 0 : index
    %c0_15 = arith.constant 0 : index
    %31 = vector.load %arg5[%c0_14, %c0_15] : memref<128x50xbf16, #tpu.memory_space<vmem>>, vector<128x50xbf16>
    tpu.vector_store %arg5[%c0_14, %c0_15], %30 {strides = array<i32>} : memref<128x50xbf16, #tpu.memory_space<vmem>>, vector<128x50xbf16>,
    return
  }
  func.func @transform_0(%arg0: i32) -> (i32, i32) {
    %c0_i32 = arith.constant 0 : i32
    %c0_i32_0 = arith.constant 0 : i32
    %c0_i32_1 = arith.constant 0 : i32
    return %c0_i32, %c0_i32_0 : i32, i32
  }
  func.func @transform_1(%arg0: i32) -> (i32, i32) {
    %c0_i32 = arith.constant 0 : i32
    %c0_i32_0 = arith.constant 0 : i32
    %c0_i32_1 = arith.constant 0 : i32
    return %c0_i32, %c0_i32_0 : i32, i32
  }
  func.func @transform_2(%arg0: i32) -> (i32, i32) {
    %c0_i32 = arith.constant 0 : i32
    %c0_i32_0 = arith.constant 0 : i32
    %c0_i32_1 = arith.constant 0 : i32
    return %c0_i32, %c0_i32_0 : i32, i32
  }
  func.func @transform_3(%arg0: i32) -> (i32, i32) {
    %c0_i32 = arith.constant 0 : i32
    %c0_i32_0 = arith.constant 0 : i32
    %c0_i32_1 = arith.constant 0 : i32
    return %c0_i32, %c0_i32_0 : i32, i32
  }
  func.func @transform_4(%arg0: i32) -> (i32, i32) {
    %c0_i32 = arith.constant 0 : i32
    %c0_i32_0 = arith.constant 0 : i32
    %c0_i32_1 = arith.constant 0 : i32
    return %c0_i32, %c0_i32_0 : i32, i32
  }
}

module attributes {stable_mosaic.version = 11 : i64} {
  func.func @_matmul_bn_act_kernel(%arg0: i32, %arg1: memref<64x1152xbf16, #tpu.memory_space<vmem>>, %arg2: memref<1152x98xbf16, #tpu.memory_space<vmem>>, %arg3: memref<64x1xf32, #tpu.memory_space<vmem>>, %arg4: memref<64x1xf32, #tpu.memory_space<vmem>>, %arg5: memref<64x98xbf16, #tpu.memory_space<vmem>>) attributes {dimension_semantics = [#tpu.dimension_semantics<arbitrary>], iteration_bounds = array<i64: 1>, scalar_prefetch = 0 : i64, scratch_operands = 0 : i64, tpu.core_type = #tpu.core_type<tc>, window_params = [{pipeline_mode = #tpu.pipeline_mode<synchronous>, transform_indices = @transform_0, window_bounds = array<i64: 64, 1152>}, {pipeline_mode = #tpu.pipeline_mode<synchronous>, transform_indices = @transform_1, window_bounds = array<i64: 1152, 98>}, {pipeline_mode = #tpu.pipeline_mode<synchronous>, transform_indices = @transform_2, window_bounds = array<i64: 64, 1>}, {pipeline_mode = #tpu.pipeline_mode<synchronous>, transform_indices = @transform_3, window_bounds = array<i64: 64, 1>}, {pipeline_mode = #tpu.pipeline_mode<synchronous>, transform_indices = @transform_4, window_bounds = array<i64: 64, 98>}]} {
    %c0 = arith.constant 0 : index
    %c0_0 = arith.constant 0 : index
    %0 = vector.load %arg1[%c0, %c0_0] : memref<64x1152xbf16, #tpu.memory_space<vmem>>, vector<64x1152xbf16>
    %c0_1 = arith.constant 0 : index
    %c0_2 = arith.constant 0 : index
    %1 = vector.load %arg2[%c0_1, %c0_2] : memref<1152x98xbf16, #tpu.memory_space<vmem>>, vector<1152x98xbf16>
    %cst = arith.constant dense<0.000000e+00> : vector<64x98xf32>
    %2 = tpu.matmul %0, %1, %cst {dimension_numbers = #tpu.dot_dimension_numbers<[1], [0], [0], [1], [0, 0, 1, 1], [], []>} : vector<64x1152xbf16>, vector<1152x98xbf16>, vector<64x98xf32> -> vector<64x98xf32>
    %cst_3 = arith.constant dense<0.000000e+00> : vector<64xf32>
    %3 = vector.multi_reduction <add>, %2, %cst_3 [1] : vector<64x98xf32> to vector<64xf32>
    %4 = vector.shape_cast %3 : vector<64xf32> to vector<64x1xf32>
    %cst_4 = arith.constant 9.800000e+01 : f32
    %5 = vector.broadcast %cst_4 : f32 to vector<64x1xf32>
    %6 = arith.divf %4, %5 : vector<64x1xf32>
    %7 = arith.mulf %2, %2 : vector<64x98xf32>
    %cst_5 = arith.constant dense<0.000000e+00> : vector<64xf32>
    %8 = vector.multi_reduction <add>, %7, %cst_5 [1] : vector<64x98xf32> to vector<64xf32>
    %9 = vector.shape_cast %8 : vector<64xf32> to vector<64x1xf32>
    %cst_6 = arith.constant 9.800000e+01 : f32
    %10 = vector.broadcast %cst_6 : f32 to vector<64x1xf32>
    %11 = arith.divf %9, %10 : vector<64x1xf32>
    %12 = arith.mulf %6, %6 : vector<64x1xf32>
    %13 = arith.subf %11, %12 : vector<64x1xf32>
    %cst_7 = arith.constant 0.000000e+00 : f32
    %14 = vector.broadcast %cst_7 : f32 to vector<64x1xf32>
    %15 = arith.maximumf %13, %14 : vector<64x1xf32>
    %c0_8 = arith.constant 0 : index
    %c0_9 = arith.constant 0 : index
    %16 = vector.load %arg3[%c0_8, %c0_9] : memref<64x1xf32, #tpu.memory_space<vmem>>, vector<64x1xf32>
    %cst_10 = arith.constant 9.99999974E-6 : f32
    %17 = vector.broadcast %cst_10 : f32 to vector<64x1xf32>
    %18 = arith.addf %15, %17 : vector<64x1xf32>
    %19 = math.rsqrt %18 : vector<64x1xf32>
    %20 = arith.mulf %16, %19 : vector<64x1xf32>
    %c0_11 = arith.constant 0 : index
    %c0_12 = arith.constant 0 : index
    %21 = vector.load %arg4[%c0_11, %c0_12] : memref<64x1xf32, #tpu.memory_space<vmem>>, vector<64x1xf32>
    %22 = arith.mulf %6, %20 : vector<64x1xf32>
    %23 = arith.subf %21, %22 : vector<64x1xf32>
    %24 = vector.broadcast %20 : vector<64x1xf32> to vector<64x98xf32>
    %25 = arith.mulf %2, %24 : vector<64x98xf32>
    %26 = vector.broadcast %23 : vector<64x1xf32> to vector<64x98xf32>
    %27 = arith.addf %25, %26 : vector<64x98xf32>
    %cst_13 = arith.constant 0.000000e+00 : f32
    %28 = vector.broadcast %cst_13 : f32 to vector<64x98xf32>
    %29 = arith.maximumf %27, %28 : vector<64x98xf32>
    %30 = arith.truncf %29 : vector<64x98xf32> to vector<64x98xbf16>
    %c0_14 = arith.constant 0 : index
    %c0_15 = arith.constant 0 : index
    %31 = vector.load %arg5[%c0_14, %c0_15] : memref<64x98xbf16, #tpu.memory_space<vmem>>, vector<64x98xbf16>
    tpu.vector_store %arg5[%c0_14, %c0_15], %30 {strides = array<i32>} : memref<64x98xbf16, #tpu.memory_space<vmem>>, vector<64x98xbf16>,
    return
  }
  func.func @transform_0(%arg0: i32) -> (i32, i32) {
    %c0_i32 = arith.constant 0 : i32
    %c0_i32_0 = arith.constant 0 : i32
    %c0_i32_1 = arith.constant 0 : i32
    return %c0_i32, %c0_i32_0 : i32, i32
  }
  func.func @transform_1(%arg0: i32) -> (i32, i32) {
    %c0_i32 = arith.constant 0 : i32
    %c0_i32_0 = arith.constant 0 : i32
    %c0_i32_1 = arith.constant 0 : i32
    return %c0_i32, %c0_i32_0 : i32, i32
  }
  func.func @transform_2(%arg0: i32) -> (i32, i32) {
    %c0_i32 = arith.constant 0 : i32
    %c0_i32_0 = arith.constant 0 : i32
    %c0_i32_1 = arith.constant 0 : i32
    return %c0_i32, %c0_i32_0 : i32, i32
  }
  func.func @transform_3(%arg0: i32) -> (i32, i32) {
    %c0_i32 = arith.constant 0 : i32
    %c0_i32_0 = arith.constant 0 : i32
    %c0_i32_1 = arith.constant 0 : i32
    return %c0_i32, %c0_i32_0 : i32, i32
  }
  func.func @transform_4(%arg0: i32) -> (i32, i32) {
    %c0_i32 = arith.constant 0 : i32
    %c0_i32_0 = arith.constant 0 : i32
    %c0_i32_1 = arith.constant 0 : i32
    return %c0_i32, %c0_i32_0 : i32, i32
  }
}

module attributes {stable_mosaic.version = 11 : i64} {
  func.func @_matmul_bn_act_kernel(%arg0: i32, %arg1: memref<32x576xbf16, #tpu.memory_space<vmem>>, %arg2: memref<576x392xbf16, #tpu.memory_space<vmem>>, %arg3: memref<32x1xf32, #tpu.memory_space<vmem>>, %arg4: memref<32x1xf32, #tpu.memory_space<vmem>>, %arg5: memref<32x392xbf16, #tpu.memory_space<vmem>>) attributes {dimension_semantics = [#tpu.dimension_semantics<arbitrary>], iteration_bounds = array<i64: 1>, scalar_prefetch = 0 : i64, scratch_operands = 0 : i64, tpu.core_type = #tpu.core_type<tc>, window_params = [{pipeline_mode = #tpu.pipeline_mode<synchronous>, transform_indices = @transform_0, window_bounds = array<i64: 32, 576>}, {pipeline_mode = #tpu.pipeline_mode<synchronous>, transform_indices = @transform_1, window_bounds = array<i64: 576, 392>}, {pipeline_mode = #tpu.pipeline_mode<synchronous>, transform_indices = @transform_2, window_bounds = array<i64: 32, 1>}, {pipeline_mode = #tpu.pipeline_mode<synchronous>, transform_indices = @transform_3, window_bounds = array<i64: 32, 1>}, {pipeline_mode = #tpu.pipeline_mode<synchronous>, transform_indices = @transform_4, window_bounds = array<i64: 32, 392>}]} {
    %c0 = arith.constant 0 : index
    %c0_0 = arith.constant 0 : index
    %0 = vector.load %arg1[%c0, %c0_0] : memref<32x576xbf16, #tpu.memory_space<vmem>>, vector<32x576xbf16>
    %c0_1 = arith.constant 0 : index
    %c0_2 = arith.constant 0 : index
    %1 = vector.load %arg2[%c0_1, %c0_2] : memref<576x392xbf16, #tpu.memory_space<vmem>>, vector<576x392xbf16>
    %cst = arith.constant dense<0.000000e+00> : vector<32x392xf32>
    %2 = tpu.matmul %0, %1, %cst {dimension_numbers = #tpu.dot_dimension_numbers<[1], [0], [0], [1], [0, 0, 1, 1], [], []>} : vector<32x576xbf16>, vector<576x392xbf16>, vector<32x392xf32> -> vector<32x392xf32>
    %cst_3 = arith.constant dense<0.000000e+00> : vector<32xf32>
    %3 = vector.multi_reduction <add>, %2, %cst_3 [1] : vector<32x392xf32> to vector<32xf32>
    %4 = vector.shape_cast %3 : vector<32xf32> to vector<32x1xf32>
    %cst_4 = arith.constant 3.920000e+02 : f32
    %5 = vector.broadcast %cst_4 : f32 to vector<32x1xf32>
    %6 = arith.divf %4, %5 : vector<32x1xf32>
    %7 = arith.mulf %2, %2 : vector<32x392xf32>
    %cst_5 = arith.constant dense<0.000000e+00> : vector<32xf32>
    %8 = vector.multi_reduction <add>, %7, %cst_5 [1] : vector<32x392xf32> to vector<32xf32>
    %9 = vector.shape_cast %8 : vector<32xf32> to vector<32x1xf32>
    %cst_6 = arith.constant 3.920000e+02 : f32
    %10 = vector.broadcast %cst_6 : f32 to vector<32x1xf32>
    %11 = arith.divf %9, %10 : vector<32x1xf32>
    %12 = arith.mulf %6, %6 : vector<32x1xf32>
    %13 = arith.subf %11, %12 : vector<32x1xf32>
    %cst_7 = arith.constant 0.000000e+00 : f32
    %14 = vector.broadcast %cst_7 : f32 to vector<32x1xf32>
    %15 = arith.maximumf %13, %14 : vector<32x1xf32>
    %c0_8 = arith.constant 0 : index
    %c0_9 = arith.constant 0 : index
    %16 = vector.load %arg3[%c0_8, %c0_9] : memref<32x1xf32, #tpu.memory_space<vmem>>, vector<32x1xf32>
    %cst_10 = arith.constant 9.99999974E-6 : f32
    %17 = vector.broadcast %cst_10 : f32 to vector<32x1xf32>
    %18 = arith.addf %15, %17 : vector<32x1xf32>
    %19 = math.rsqrt %18 : vector<32x1xf32>
    %20 = arith.mulf %16, %19 : vector<32x1xf32>
    %c0_11 = arith.constant 0 : index
    %c0_12 = arith.constant 0 : index
    %21 = vector.load %arg4[%c0_11, %c0_12] : memref<32x1xf32, #tpu.memory_space<vmem>>, vector<32x1xf32>
    %22 = arith.mulf %6, %20 : vector<32x1xf32>
    %23 = arith.subf %21, %22 : vector<32x1xf32>
    %24 = vector.broadcast %20 : vector<32x1xf32> to vector<32x392xf32>
    %25 = arith.mulf %2, %24 : vector<32x392xf32>
    %26 = vector.broadcast %23 : vector<32x1xf32> to vector<32x392xf32>
    %27 = arith.addf %25, %26 : vector<32x392xf32>
    %cst_13 = arith.constant 0.000000e+00 : f32
    %28 = vector.broadcast %cst_13 : f32 to vector<32x392xf32>
    %29 = arith.maximumf %27, %28 : vector<32x392xf32>
    %30 = arith.truncf %29 : vector<32x392xf32> to vector<32x392xbf16>
    %c0_14 = arith.constant 0 : index
    %c0_15 = arith.constant 0 : index
    %31 = vector.load %arg5[%c0_14, %c0_15] : memref<32x392xbf16, #tpu.memory_space<vmem>>, vector<32x392xbf16>
    tpu.vector_store %arg5[%c0_14, %c0_15], %30 {strides = array<i32>} : memref<32x392xbf16, #tpu.memory_space<vmem>>, vector<32x392xbf16>,
    return
  }
  func.func @transform_0(%arg0: i32) -> (i32, i32) {
    %c0_i32 = arith.constant 0 : i32
    %c0_i32_0 = arith.constant 0 : i32
    %c0_i32_1 = arith.constant 0 : i32
    return %c0_i32, %c0_i32_0 : i32, i32
  }
  func.func @transform_1(%arg0: i32) -> (i32, i32) {
    %c0_i32 = arith.constant 0 : i32
    %c0_i32_0 = arith.constant 0 : i32
    %c0_i32_1 = arith.constant 0 : i32
    return %c0_i32, %c0_i32_0 : i32, i32
  }
  func.func @transform_2(%arg0: i32) -> (i32, i32) {
    %c0_i32 = arith.constant 0 : i32
    %c0_i32_0 = arith.constant 0 : i32
    %c0_i32_1 = arith.constant 0 : i32
    return %c0_i32, %c0_i32_0 : i32, i32
  }
  func.func @transform_3(%arg0: i32) -> (i32, i32) {
    %c0_i32 = arith.constant 0 : i32
    %c0_i32_0 = arith.constant 0 : i32
    %c0_i32_1 = arith.constant 0 : i32
    return %c0_i32, %c0_i32_0 : i32, i32
  }
  func.func @transform_4(%arg0: i32) -> (i32, i32) {
    %c0_i32 = arith.constant 0 : i32
    %c0_i32_0 = arith.constant 0 : i32
    %c0_i32_1 = arith.constant 0 : i32
    return %c0_i32, %c0_i32_0 : i32, i32
  }
}

module attributes {stable_mosaic.version = 11 : i64} {
  func.func @_matmul_bn_act_kernel(%arg0: i32, %arg1: memref<16x288xbf16, #tpu.memory_space<vmem>>, %arg2: memref<288x1568xbf16, #tpu.memory_space<vmem>>, %arg3: memref<16x1xf32, #tpu.memory_space<vmem>>, %arg4: memref<16x1xf32, #tpu.memory_space<vmem>>, %arg5: memref<16x1568xbf16, #tpu.memory_space<vmem>>) attributes {dimension_semantics = [#tpu.dimension_semantics<arbitrary>], iteration_bounds = array<i64: 1>, scalar_prefetch = 0 : i64, scratch_operands = 0 : i64, tpu.core_type = #tpu.core_type<tc>, window_params = [{pipeline_mode = #tpu.pipeline_mode<synchronous>, transform_indices = @transform_0, window_bounds = array<i64: 16, 288>}, {pipeline_mode = #tpu.pipeline_mode<synchronous>, transform_indices = @transform_1, window_bounds = array<i64: 288, 1568>}, {pipeline_mode = #tpu.pipeline_mode<synchronous>, transform_indices = @transform_2, window_bounds = array<i64: 16, 1>}, {pipeline_mode = #tpu.pipeline_mode<synchronous>, transform_indices = @transform_3, window_bounds = array<i64: 16, 1>}, {pipeline_mode = #tpu.pipeline_mode<synchronous>, transform_indices = @transform_4, window_bounds = array<i64: 16, 1568>}]} {
    %c0 = arith.constant 0 : index
    %c0_0 = arith.constant 0 : index
    %0 = vector.load %arg1[%c0, %c0_0] : memref<16x288xbf16, #tpu.memory_space<vmem>>, vector<16x288xbf16>
    %c0_1 = arith.constant 0 : index
    %c0_2 = arith.constant 0 : index
    %1 = vector.load %arg2[%c0_1, %c0_2] : memref<288x1568xbf16, #tpu.memory_space<vmem>>, vector<288x1568xbf16>
    %cst = arith.constant dense<0.000000e+00> : vector<16x1568xf32>
    %2 = tpu.matmul %0, %1, %cst {dimension_numbers = #tpu.dot_dimension_numbers<[1], [0], [0], [1], [0, 0, 1, 1], [], []>} : vector<16x288xbf16>, vector<288x1568xbf16>, vector<16x1568xf32> -> vector<16x1568xf32>
    %cst_3 = arith.constant dense<0.000000e+00> : vector<16xf32>
    %3 = vector.multi_reduction <add>, %2, %cst_3 [1] : vector<16x1568xf32> to vector<16xf32>
    %4 = vector.shape_cast %3 : vector<16xf32> to vector<16x1xf32>
    %cst_4 = arith.constant 1.568000e+03 : f32
    %5 = vector.broadcast %cst_4 : f32 to vector<16x1xf32>
    %6 = arith.divf %4, %5 : vector<16x1xf32>
    %7 = arith.mulf %2, %2 : vector<16x1568xf32>
    %cst_5 = arith.constant dense<0.000000e+00> : vector<16xf32>
    %8 = vector.multi_reduction <add>, %7, %cst_5 [1] : vector<16x1568xf32> to vector<16xf32>
    %9 = vector.shape_cast %8 : vector<16xf32> to vector<16x1xf32>
    %cst_6 = arith.constant 1.568000e+03 : f32
    %10 = vector.broadcast %cst_6 : f32 to vector<16x1xf32>
    %11 = arith.divf %9, %10 : vector<16x1xf32>
    %12 = arith.mulf %6, %6 : vector<16x1xf32>
    %13 = arith.subf %11, %12 : vector<16x1xf32>
    %cst_7 = arith.constant 0.000000e+00 : f32
    %14 = vector.broadcast %cst_7 : f32 to vector<16x1xf32>
    %15 = arith.maximumf %13, %14 : vector<16x1xf32>
    %c0_8 = arith.constant 0 : index
    %c0_9 = arith.constant 0 : index
    %16 = vector.load %arg3[%c0_8, %c0_9] : memref<16x1xf32, #tpu.memory_space<vmem>>, vector<16x1xf32>
    %cst_10 = arith.constant 9.99999974E-6 : f32
    %17 = vector.broadcast %cst_10 : f32 to vector<16x1xf32>
    %18 = arith.addf %15, %17 : vector<16x1xf32>
    %19 = math.rsqrt %18 : vector<16x1xf32>
    %20 = arith.mulf %16, %19 : vector<16x1xf32>
    %c0_11 = arith.constant 0 : index
    %c0_12 = arith.constant 0 : index
    %21 = vector.load %arg4[%c0_11, %c0_12] : memref<16x1xf32, #tpu.memory_space<vmem>>, vector<16x1xf32>
    %22 = arith.mulf %6, %20 : vector<16x1xf32>
    %23 = arith.subf %21, %22 : vector<16x1xf32>
    %24 = vector.broadcast %20 : vector<16x1xf32> to vector<16x1568xf32>
    %25 = arith.mulf %2, %24 : vector<16x1568xf32>
    %26 = vector.broadcast %23 : vector<16x1xf32> to vector<16x1568xf32>
    %27 = arith.addf %25, %26 : vector<16x1568xf32>
    %cst_13 = arith.constant 0.000000e+00 : f32
    %28 = vector.broadcast %cst_13 : f32 to vector<16x1568xf32>
    %29 = arith.maximumf %27, %28 : vector<16x1568xf32>
    %30 = arith.truncf %29 : vector<16x1568xf32> to vector<16x1568xbf16>
    %c0_14 = arith.constant 0 : index
    %c0_15 = arith.constant 0 : index
    %31 = vector.load %arg5[%c0_14, %c0_15] : memref<16x1568xbf16, #tpu.memory_space<vmem>>, vector<16x1568xbf16>
    tpu.vector_store %arg5[%c0_14, %c0_15], %30 {strides = array<i32>} : memref<16x1568xbf16, #tpu.memory_space<vmem>>, vector<16x1568xbf16>,
    return
  }
  func.func @transform_0(%arg0: i32) -> (i32, i32) {
    %c0_i32 = arith.constant 0 : i32
    %c0_i32_0 = arith.constant 0 : i32
    %c0_i32_1 = arith.constant 0 : i32
    return %c0_i32, %c0_i32_0 : i32, i32
  }
  func.func @transform_1(%arg0: i32) -> (i32, i32) {
    %c0_i32 = arith.constant 0 : i32
    %c0_i32_0 = arith.constant 0 : i32
    %c0_i32_1 = arith.constant 0 : i32
    return %c0_i32, %c0_i32_0 : i32, i32
  }
  func.func @transform_2(%arg0: i32) -> (i32, i32) {
    %c0_i32 = arith.constant 0 : i32
    %c0_i32_0 = arith.constant 0 : i32
    %c0_i32_1 = arith.constant 0 : i32
    return %c0_i32, %c0_i32_0 : i32, i32
  }
  func.func @transform_3(%arg0: i32) -> (i32, i32) {
    %c0_i32 = arith.constant 0 : i32
    %c0_i32_0 = arith.constant 0 : i32
    %c0_i32_1 = arith.constant 0 : i32
    return %c0_i32, %c0_i32_0 : i32, i32
  }
  func.func @transform_4(%arg0: i32) -> (i32, i32) {
    %c0_i32 = arith.constant 0 : i32
    %c0_i32_0 = arith.constant 0 : i32
    %c0_i32_1 = arith.constant 0 : i32
    return %c0_i32, %c0_i32_0 : i32, i32
  }
}

module attributes {stable_mosaic.version = 11 : i64} {
  func.func @_matmul_bias_act_kernel(%arg0: i32, %arg1: memref<1x144xbf16, #tpu.memory_space<vmem>>, %arg2: memref<144x1568xbf16, #tpu.memory_space<vmem>>, %arg3: memref<1x1xf32, #tpu.memory_space<vmem>>, %arg4: memref<1x1568xf32, #tpu.memory_space<vmem>>) attributes {dimension_semantics = [#tpu.dimension_semantics<arbitrary>], iteration_bounds = array<i64: 1>, scalar_prefetch = 0 : i64, scratch_operands = 0 : i64, tpu.core_type = #tpu.core_type<tc>, window_params = [{pipeline_mode = #tpu.pipeline_mode<synchronous>, transform_indices = @transform_0, window_bounds = array<i64: 1, 144>}, {pipeline_mode = #tpu.pipeline_mode<synchronous>, transform_indices = @transform_1, window_bounds = array<i64: 144, 1568>}, {pipeline_mode = #tpu.pipeline_mode<synchronous>, transform_indices = @transform_2, window_bounds = array<i64: 1, 1>}, {pipeline_mode = #tpu.pipeline_mode<synchronous>, transform_indices = @transform_3, window_bounds = array<i64: 1, 1568>}]} {
    %c0 = arith.constant 0 : index
    %c0_0 = arith.constant 0 : index
    %0 = vector.load %arg1[%c0, %c0_0] : memref<1x144xbf16, #tpu.memory_space<vmem>>, vector<1x144xbf16>
    %c0_1 = arith.constant 0 : index
    %c0_2 = arith.constant 0 : index
    %1 = vector.load %arg2[%c0_1, %c0_2] : memref<144x1568xbf16, #tpu.memory_space<vmem>>, vector<144x1568xbf16>
    %cst = arith.constant dense<0.000000e+00> : vector<1x1568xf32>
    %2 = tpu.matmul %0, %1, %cst {dimension_numbers = #tpu.dot_dimension_numbers<[1], [0], [0], [1], [0, 0, 1, 1], [], []>} : vector<1x144xbf16>, vector<144x1568xbf16>, vector<1x1568xf32> -> vector<1x1568xf32>
    %c0_3 = arith.constant 0 : index
    %c0_4 = arith.constant 0 : index
    %3 = vector.load %arg3[%c0_3, %c0_4] : memref<1x1xf32, #tpu.memory_space<vmem>>, vector<1x1xf32>
    %4 = vector.broadcast %3 : vector<1x1xf32> to vector<1x1568xf32>
    %5 = arith.addf %2, %4 : vector<1x1568xf32>
    %6 = arith.negf %5 : vector<1x1568xf32>
    %7 = math.exp %6 : vector<1x1568xf32>
    %cst_5 = arith.constant 1.000000e+00 : f32
    %8 = vector.broadcast %cst_5 : f32 to vector<1x1568xf32>
    %9 = arith.addf %8, %7 : vector<1x1568xf32>
    %10 = arith.divf %8, %9 : vector<1x1568xf32>
    %c0_6 = arith.constant 0 : index
    %c0_7 = arith.constant 0 : index
    %11 = vector.load %arg4[%c0_6, %c0_7] : memref<1x1568xf32, #tpu.memory_space<vmem>>, vector<1x1568xf32>
    tpu.vector_store %arg4[%c0_6, %c0_7], %10 {strides = array<i32>} : memref<1x1568xf32, #tpu.memory_space<vmem>>, vector<1x1568xf32>,
    return
  }
  func.func @transform_0(%arg0: i32) -> (i32, i32) {
    %c0_i32 = arith.constant 0 : i32
    %c0_i32_0 = arith.constant 0 : i32
    %c0_i32_1 = arith.constant 0 : i32
    return %c0_i32, %c0_i32_0 : i32, i32
  }
  func.func @transform_1(%arg0: i32) -> (i32, i32) {
    %c0_i32 = arith.constant 0 : i32
    %c0_i32_0 = arith.constant 0 : i32
    %c0_i32_1 = arith.constant 0 : i32
    return %c0_i32, %c0_i32_0 : i32, i32
  }
  func.func @transform_2(%arg0: i32) -> (i32, i32) {
    %c0_i32 = arith.constant 0 : i32
    %c0_i32_0 = arith.constant 0 : i32
    %c0_i32_1 = arith.constant 0 : i32
    return %c0_i32, %c0_i32_0 : i32, i32
  }
  func.func @transform_3(%arg0: i32) -> (i32, i32) {
    %c0_i32 = arith.constant 0 : i32
    %c0_i32_0 = arith.constant 0 : i32
    %c0_i32_1 = arith.constant 0 : i32
    return %c0_i32, %c0_i32_0 : i32, i32
  }
}

</mosaic_0001>

<llo_original>
// kernel: autoencoder_forward.8
$region0: #{autoencoder_forward.8}
  #allocation0 [shape = 'u32[]', space=smem, size = 0x4, offset = 0x4, fixed_abs, tag = 'smem constant byte address 0x4 - core index']
  #allocation1 [shape = 'u32[144,128]{1,0:T(1,128)}', space=vmem, size = 0x12000, scoped, tag = 'internal scratch']
  %s0 = inlined_call_operand.vmem [shape: bf16[16,9], index: 0, kind: input, shape index: {}]
  %s1 = inlined_call_operand.vmem [shape: bf16[9,392], index: 1, kind: input, shape index: {}]
  %s2 = inlined_call_operand.vmem [shape: f32[16,1], index: 2, kind: input, shape index: {}]
  %s3 = inlined_call_operand.vmem [shape: f32[16,1], index: 3, kind: input, shape index: {}]
  %s4 = inlined_call_operand.vmem [shape: bf16[16,392], index: 4, kind: output, shape index: {}]
  %s5 = sld [smem:[#allocation0]]
  $region26: #{autoencoder_forward.8} parent=0
    _
  %s7 = ssub.s32 1, %s5
  %s8 = scalar_select 0, %s7, %s5
  // Predicated region
  $region2: #{autoencoder_forward.8} parent=0 // pred_check
    _
  $region3: #{autoencoder_forward.8} parent=0 // pred_check_branch
    %10 = sbr.rel (0) target = $region5
  $region4: #{autoencoder_forward.8} parent=0 // pred_region
    _
  $region5: #{autoencoder_forward.8} parent=0 // pred_fallthru
    _
  // Predicated region
  $region6: #{autoencoder_forward.8} parent=0 // pred_check
    _
  $region7: #{autoencoder_forward.8} parent=0 // pred_check_branch
    %12 = sbr.rel (0) target = $region9
  $region8: #{autoencoder_forward.8} parent=0 // pred_region
    _
  $region9: #{autoencoder_forward.8} parent=0 // pred_fallthru
    _
  // Predicated region
  $region10: #{autoencoder_forward.8} parent=0 // pred_check
    _
  $region11: #{autoencoder_forward.8} parent=0 // pred_check_branch
    %14 = sbr.rel (0) target = $region13
  $region12: #{autoencoder_forward.8} parent=0 // pred_region
    _
  $region13: #{autoencoder_forward.8} parent=0 // pred_fallthru
    _
  // Predicated region
  $region14: #{autoencoder_forward.8} parent=0 // pred_check
    _
  $region15: #{autoencoder_forward.8} parent=0 // pred_check_branch
    %16 = sbr.rel (0) target = $region17
  $region16: #{autoencoder_forward.8} parent=0 // pred_region
    _
  $region17: #{autoencoder_forward.8} parent=0 // pred_fallthru
    _
  %v18 = vld [vmem:[%s0] sm:$0xf]
  %v19 = vld [vmem:[%s0 + $0x4] sm:$0xf]
  %v20 = vld [vmem:[%s1] sm:$0xff]
  %v21 = vld [vmem:[%s1 + $0x8] sm:$0xff]
  %v22 = vld [vmem:[%s1 + $0x10] sm:$0x11]
  %v23 = vld [vmem:[%s1 + $0x18] sm:$0x11]
  %v26 = vunpack.c.l.b16 %v18
  %v27 = vunpack.c.l.b16 %v19
  %v28 = vpack.c.b16 %v27, %v26
  %v33 = vunpack.c.l.b16 %v20
  %v34 = vunpack.c.h.b16 %v20
  %v35 = vunpack.c.l.b16 %v21
  %v36 = vunpack.c.h.b16 %v21
  %v37 = vunpack.c.l.b16 %v22
  %v38 = vunpack.c.h.b16 %v22
  %v39 = vunpack.c.l.b16 %v23
  %v40 = vunpack.c.h.b16 %v23
  %v41 = vpack.c.b16 %v37, %v33
  %v42 = vpack.c.b16 %v38, %v34
  %v43 = vpack.c.b16 %v39, %v35
  %v44 = vpack.c.b16 %v40, %v36
  %vm45 = vcmask 72704
  %v47 = vsel %vm45, %v28, 0
  %vm49 = vcmask 1043456
  %vm50 = vcmask 1044480
  %v51 = vsel %vm49, 4294967295, 65535
  %v52 = vsel %vm50, %v51, 0
  %v54 = vand.u32 %v41, %v52
  %v57 = vand.u32 %v42, %v52
  %v60 = vand.u32 %v43, %v52
  %v63 = vand.u32 %v44, %v52
  %65 = vmatprep.subr.bf16.mxu0 0
  %66 = vmatpush1.bf16.msra.mxu0 0
  %67 = vmatprep.subr.bf16.mxu0 0
  %68 = vmatpush1.bf16.msra.mxu0 0
  %69 = vmatprep.subr.bf16.mxu0 0
  %70 = vmatpush1.bf16.msra.mxu0 0
  %71 = vmatprep.subr.bf16.mxu0 0
  %72 = vmatpush1.bf16.msra.mxu0 0
  %73 = vmatprep.subr.bf16.mxu0 0
  %74 = vmatpush1.bf16.msra.mxu0 0
  %75 = vmatprep.subr.bf16.mxu0 0
  %76 = vmatpush1.bf16.msra.mxu0 0
  %77 = vmatprep.subr.bf16.mxu0 0
  %78 = vmatpush1.bf16.msra.mxu0 0
  %79 = vmatprep.subr.bf16.mxu0 %v57
  %80 = vmatpush1.bf16.msra.mxu0 %v54
  %81 = vmatprep.subr.bf16.mxu0 0
  %82 = vmatpush2.bf16.msra.mxu0 0
  %83 = vmatprep.subr.bf16.mxu0 0
  %84 = vmatpush2.bf16.msra.mxu0 0
  %85 = vmatprep.subr.bf16.mxu0 0
  %86 = vmatpush2.bf16.msra.mxu0 0
  %87 = vmatprep.subr.bf16.mxu0 0
  %88 = vmatpush2.bf16.msra.mxu0 0
  %89 = vmatprep.subr.bf16.mxu0 0
  %90 = vmatpush2.bf16.msra.mxu0 0
  %91 = vmatprep.subr.bf16.mxu0 0
  %92 = vmatpush2.bf16.msra.mxu0 0
  %93 = vmatprep.subr.bf16.mxu0 0
  %94 = vmatpush2.bf16.msra.mxu0 0
  %95 = vmatprep.subr.bf16.mxu0 0
  %96 = vmatpush2.bf16.msra.mxu0 0
  %97 = vmatprep.mubr.bf16.mxu0 0
  %98 = vmatmul.mubr.bf16.gmra.mxu0 %v47
  %v99 = vpop.f32.mrf.mxu0
  %v100 = vadd.f32 0.0, %v99
  %v101 = vpop.f32.mrf.mxu0
  %v102 = vadd.f32 0.0, %v101
  %v103 = vpop.f32.mrf.mxu0
  %v104 = vadd.f32 0.0, %v103
  %v105 = vpop.f32.mrf.mxu0
  %v106 = vadd.f32 0.0, %v105
  %107 = vdwg.mxu0
  %108 = vmatprep.subr.bf16.mxu0 0
  %109 = vmatpush1.bf16.msra.mxu0 0
  %110 = vmatprep.subr.bf16.mxu0 0
  %111 = vmatpush1.bf16.msra.mxu0 0
  %112 = vmatprep.subr.bf16.mxu0 0
  %113 = vmatpush1.bf16.msra.mxu0 0
  %114 = vmatprep.subr.bf16.mxu0 0
  %115 = vmatpush1.bf16.msra.mxu0 0
  %116 = vmatprep.subr.bf16.mxu0 0
  %117 = vmatpush1.bf16.msra.mxu0 0
  %118 = vmatprep.subr.bf16.mxu0 0
  %119 = vmatpush1.bf16.msra.mxu0 0
  %120 = vmatprep.subr.bf16.mxu0 0
  %121 = vmatpush1.bf16.msra.mxu0 0
  %122 = vmatprep.subr.bf16.mxu0 %v63
  %123 = vmatpush1.bf16.msra.mxu0 %v60
  %124 = vmatprep.subr.bf16.mxu0 0
  %125 = vmatpush2.bf16.msra.mxu0 0
  %126 = vmatprep.subr.bf16.mxu0 0
  %127 = vmatpush2.bf16.msra.mxu0 0
  %128 = vmatprep.subr.bf16.mxu0 0
  %129 = vmatpush2.bf16.msra.mxu0 0
  %130 = vmatprep.subr.bf16.mxu0 0
  %131 = vmatpush2.bf16.msra.mxu0 0
  %132 = vmatprep.subr.bf16.mxu0 0
  %133 = vmatpush2.bf16.msra.mxu0 0
  %134 = vmatprep.subr.bf16.mxu0 0
  %135 = vmatpush2.bf16.msra.mxu0 0
  %136 = vmatprep.subr.bf16.mxu0 0
  %137 = vmatpush2.bf16.msra.mxu0 0
  %138 = vmatprep.subr.bf16.mxu0 0
  %139 = vmatpush2.bf16.msra.mxu0 0
  %140 = vmatprep.mubr.bf16.mxu0 0
  %141 = vmatmul.mubr.bf16.gmra.mxu0 %v47
  %v142 = vpop.f32.mrf.mxu0
  %v143 = vadd.f32 0.0, %v142
  %v144 = vpop.f32.mrf.mxu0
  %v145 = vadd.f32 0.0, %v144
  %v146 = vpop.f32.mrf.mxu0
  %v147 = vadd.f32 0.0, %v146
  %v148 = vpop.f32.mrf.mxu0
  %v149 = vadd.f32 0.0, %v148
  %150 = vdwg.mxu0
  %v151 = vadd.f32 %v100, %v102
  %v152 = vadd.f32 %v151, %v143
  %vm153 = vcmask 64512
  %v154 = vsel %vm153, %v145, 0.0
  %v155 = vadd.f32 %v152, %v154
  %156 = vadd.xlane.f32.xlu0 %v155
  %v157 = vpop.xlane.xlu0 %156
  %v158 = vadd.f32 %v104, %v106
  %v159 = vadd.f32 %v158, %v147
  %v160 = vsel %vm153, %v149, 0.0
  %v161 = vadd.f32 %v159, %v160
  %162 = vadd.xlane.f32.xlu0 %v161
  %v163 = vpop.xlane.xlu0 %162
  %v164 = vrcp.pop 392.0
  %v165 = vmul.f32 %v157, %v164
  %v166 = vmul.f32 %v163, %v164
  %v167 = vmul.f32 %v100, %v100
  %v168 = vmul.f32 %v102, %v102
  %v169 = vmul.f32 %v143, %v143
  %v170 = vmul.f32 %v145, %v145
  %v171 = vmul.f32 %v104, %v104
  %v172 = vmul.f32 %v106, %v106
  %v173 = vmul.f32 %v147, %v147
  %v174 = vmul.f32 %v149, %v149
  %v175 = vadd.f32 %v167, %v168
  %v176 = vadd.f32 %v175, %v169
  %v177 = vsel %vm153, %v170, 0.0
  %v178 = vadd.f32 %v176, %v177
  %179 = vadd.xlane.f32.xlu0 %v178
  %v180 = vpop.xlane.xlu0 %179
  %v181 = vadd.f32 %v171, %v172
  %v182 = vadd.f32 %v181, %v173
  %v183 = vsel %vm153, %v174, 0.0
  %v184 = vadd.f32 %v182, %v183
  %185 = vadd.xlane.f32.xlu0 %v184
  %v186 = vpop.xlane.xlu0 %185
  %v187 = vmul.f32 %v180, %v164
  %v188 = vmul.f32 %v186, %v164
  %v189 = vmul.f32 %v165, %v165
  %v190 = vmul.f32 %v166, %v166
  %v191 = vsub.f32 %v187, %v189
  %v192 = vsub.f32 %v188, %v190
  %v193 = vmax.f32 %v191, 0.0
  %v194 = vmax.f32 %v192, 0.0
  %v195 = vld [vmem:[%s2] sm:$0xff]
  %v196 = vld [vmem:[%s2 + $0x8] sm:$0xff]
  %v197 = vadd.f32 %v193, 1e-05
  %v198 = vadd.f32 %v194, 1e-05
  %v199 = vrsqrt.pop %v197
  %v200 = vrsqrt.pop %v198
  %v201 = vmul.f32 %v195, %v199
  %v202 = vmul.f32 %v196, %v200
  %v203 = vld [vmem:[%s3] sm:$0xff]
  %v204 = vld [vmem:[%s3 + $0x8] sm:$0xff]
  %v205 = vmul.f32 %v165, %v201
  %v206 = vmul.f32 %v166, %v202
  %v207 = vsub.f32 %v203, %v205
  %v208 = vsub.f32 %v204, %v206
  %210 = vset.pattern.permute.xlu0 0
  %211 = vperm.xlu0 %210, %v201
  %v212 = vpop.permute.xlu0 %211
  %215 = vset.pattern.permute.xlu0 0
  %216 = vperm.xlu0 %215, %v202
  %v217 = vpop.permute.xlu0 %216
  %v219 = vmul.f32 %v100, %v212
  %v220 = vmul.f32 %v102, %v212
  %v221 = vmul.f32 %v143, %v212
  %v222 = vmul.f32 %v145, %v212
  %v223 = vmul.f32 %v104, %v217
  %v224 = vmul.f32 %v106, %v217
  %v225 = vmul.f32 %v147, %v217
  %v226 = vmul.f32 %v149, %v217
  %228 = vset.pattern.permute.xlu0 0
  %229 = vperm.xlu0 %228, %v207
  %v230 = vpop.permute.xlu0 %229
  %233 = vset.pattern.permute.xlu0 0
  %234 = vperm.xlu0 %233, %v208
  %v235 = vpop.permute.xlu0 %234
  %v237 = vadd.f32 %v219, %v230
  %v238 = vadd.f32 %v220, %v230
  %v239 = vadd.f32 %v221, %v230
  %v240 = vadd.f32 %v222, %v230
  %v241 = vadd.f32 %v223, %v235
  %v242 = vadd.f32 %v224, %v235
  %v243 = vadd.f32 %v225, %v235
  %v244 = vadd.f32 %v226, %v235
  %v245 = vmax.f32 %v237, 0.0
  %v246 = vmax.f32 %v238, 0.0
  %v247 = vmax.f32 %v239, 0.0
  %v248 = vmax.f32 %v240, 0.0
  %v249 = vmax.f32 %v241, 0.0
  %v250 = vmax.f32 %v242, 0.0
  %v251 = vmax.f32 %v243, 0.0
  %v252 = vmax.f32 %v244, 0.0
  %v253 = vpack.c.bf16 %v249, %v245
  %v254 = vpack.c.bf16 %v250, %v246
  %v255 = vpack.c.bf16 %v251, %v247
  %v256 = vpack.c.bf16 %v252, %v248
  %v261 = vunpack.c.l.b16 %v253
  %v262 = vunpack.c.l.b16 %v254
  %v263 = vunpack.c.l.b16 %v255
  %v264 = vunpack.c.l.b16 %v256
  %v265 = vunpack.c.h.b16 %v253
  %v266 = vunpack.c.h.b16 %v254
  %v267 = vunpack.c.h.b16 %v255
  %v268 = vunpack.c.h.b16 %v256
  %v269 = vpack.c.b16 %v262, %v261
  %v270 = vpack.c.b16 %v264, %v263
  %v271 = vpack.c.b16 %v266, %v265
  %v272 = vpack.c.b16 %v268, %v267
  %277 = vst [vmem:[%s4] sm:$0xff] %v269
  %vm278 = vcmask 64516
  %vm279 = vmor %vm278, %vm49
  %280 = vst.msk [vmem:[%s4 + $0x8] sm:$0xff] %vm279, %v270
  %281 = vst [vmem:[%s4 + $0x10] sm:$0xff] %v271
  %282 = vst.msk [vmem:[%s4 + $0x18] sm:$0xff] %vm279, %v272
  // Predicated region
  $region18: #{autoencoder_forward.8} parent=0 // pred_check
    _
  $region19: #{autoencoder_forward.8} parent=0 // pred_check_branch
    %284 = sbr.rel (0) target = $region21
  $region20: #{autoencoder_forward.8} parent=0 // pred_region
    _
  $region21: #{autoencoder_forward.8} parent=0 // pred_fallthru
    _
  // Predicated region
  $region22: #{autoencoder_forward.8} parent=0 // pred_check
    _
  $region23: #{autoencoder_forward.8} parent=0 // pred_check_branch
    %286 = sbr.rel (0) target = $region25
  $region24: #{autoencoder_forward.8} parent=0 // pred_region
    _
  $region25: #{autoencoder_forward.8} parent=0 // pred_fallthru
    _

// kernel: autoencoder_forward.9
$region0: #{autoencoder_forward.9}
  #allocation0 [shape = 'u32[]', space=smem, size = 0x4, offset = 0x4, fixed_abs, tag = 'smem constant byte address 0x4 - core index']
  #allocation1 [shape = 'u32[144,128]{1,0:T(1,128)}', space=vmem, size = 0x12000, scoped, tag = 'internal scratch']
  %s0 = inlined_call_operand.vmem [shape: bf16[32,144], index: 0, kind: input, shape index: {}]
  %s1 = inlined_call_operand.vmem [shape: bf16[144,98], index: 1, kind: input, shape index: {}]
  %s2 = inlined_call_operand.vmem [shape: f32[32,1], index: 2, kind: input, shape index: {}]
  %s3 = inlined_call_operand.vmem [shape: f32[32,1], index: 3, kind: input, shape index: {}]
  %s4 = inlined_call_operand.vmem [shape: bf16[32,98], index: 4, kind: output, shape index: {}]
  %s5 = sld [smem:[#allocation0]]
  $region26: #{autoencoder_forward.9} parent=0
    _
  %s7 = ssub.s32 1, %s5
  %s8 = scalar_select 0, %s7, %s5
  // Predicated region
  $region2: #{autoencoder_forward.9} parent=0 // pred_check
    _
  $region3: #{autoencoder_forward.9} parent=0 // pred_check_branch
    %10 = sbr.rel (0) target = $region5
  $region4: #{autoencoder_forward.9} parent=0 // pred_region
    _
  $region5: #{autoencoder_forward.9} parent=0 // pred_fallthru
    _
  // Predicated region
  $region6: #{autoencoder_forward.9} parent=0 // pred_check
    _
  $region7: #{autoencoder_forward.9} parent=0 // pred_check_branch
    %12 = sbr.rel (0) target = $region9
  $region8: #{autoencoder_forward.9} parent=0 // pred_region
    _
  $region9: #{autoencoder_forward.9} parent=0 // pred_fallthru
    _
  // Predicated region
  $region10: #{autoencoder_forward.9} parent=0 // pred_check
    _
  $region11: #{autoencoder_forward.9} parent=0 // pred_check_branch
    %14 = sbr.rel (0) target = $region13
  $region12: #{autoencoder_forward.9} parent=0 // pred_region
    _
  $region13: #{autoencoder_forward.9} parent=0 // pred_fallthru
    _
  // Predicated region
  $region14: #{autoencoder_forward.9} parent=0 // pred_check
    _
  $region15: #{autoencoder_forward.9} parent=0 // pred_check_branch
    %16 = sbr.rel (0) target = $region17
  $region16: #{autoencoder_forward.9} parent=0 // pred_region
    _
  $region17: #{autoencoder_forward.9} parent=0 // pred_fallthru
    _
  %v18 = vld [vmem:[%s0] sm:$0xff]
  %v19 = vld [vmem:[%s0 + $0x8] sm:$0xff]
  %v20 = vld [vmem:[%s0 + $0x10] sm:$0xff]
  %v21 = vld [vmem:[%s0 + $0x18] sm:$0xff]
  %v22 = vld [vmem:[%s1] sm:$0xf]
  %v23 = vld [vmem:[%s1 + $0x4] sm:$0xf]
  %v24 = vld [vmem:[%s1 + $0x8] sm:$0xf]
  %v25 = vld [vmem:[%s1 + $0xc] sm:$0xf]
  %v26 = vld [vmem:[%s1 + $0x10] sm:$0xf]
  %v27 = vld [vmem:[%s1 + $0x14] sm:$0xf]
  %v28 = vld [vmem:[%s1 + $0x18] sm:$0xf]
  %v29 = vld [vmem:[%s1 + $0x1c] sm:$0xf]
  %v30 = vld [vmem:[%s1 + $0x20] sm:$0xf]
  %v31 = vld [vmem:[%s1 + $0x24] sm:$0xf]
  %v32 = vld [vmem:[%s1 + $0x28] sm:$0xf]
  %v33 = vld [vmem:[%s1 + $0x2c] sm:$0xf]
  %v34 = vld [vmem:[%s1 + $0x30] sm:$0xf]
  %v35 = vld [vmem:[%s1 + $0x34] sm:$0xf]
  %v36 = vld [vmem:[%s1 + $0x38] sm:$0xf]
  %v37 = vld [vmem:[%s1 + $0x3c] sm:$0xf]
  %v38 = vld [vmem:[%s1 + $0x40] sm:$0xf]
  %v39 = vld [vmem:[%s1 + $0x44] sm:$0xf]
  %v44 = vunpack.c.l.b16 %v18
  %v45 = vunpack.c.h.b16 %v18
  %v46 = vunpack.c.l.b16 %v19
  %v47 = vunpack.c.h.b16 %v19
  %v48 = vunpack.c.l.b16 %v20
  %v49 = vunpack.c.h.b16 %v20
  %v50 = vunpack.c.l.b16 %v21
  %v51 = vunpack.c.h.b16 %v21
  %v52 = vpack.c.b16 %v46, %v44
  %v53 = vpack.c.b16 %v47, %v45
  %v54 = vpack.c.b16 %v50, %v48
  %v55 = vpack.c.b16 %v51, %v49
  %v76 = vunpack.c.l.b16 %v22
  %v77 = vunpack.c.l.b16 %v23
  %v78 = vunpack.c.l.b16 %v24
  %v79 = vunpack.c.l.b16 %v25
  %v80 = vunpack.c.l.b16 %v26
  %v81 = vunpack.c.l.b16 %v27
  %v82 = vunpack.c.l.b16 %v28
  %v83 = vunpack.c.l.b16 %v29
  %v84 = vunpack.c.l.b16 %v30
  %v85 = vunpack.c.l.b16 %v31
  %v86 = vunpack.c.l.b16 %v32
  %v87 = vunpack.c.l.b16 %v33
  %v88 = vunpack.c.l.b16 %v34
  %v89 = vunpack.c.l.b16 %v35
  %v90 = vunpack.c.l.b16 %v36
  %v91 = vunpack.c.l.b16 %v37
  %v92 = vunpack.c.l.b16 %v38
  %v93 = vunpack.c.l.b16 %v39
  %v94 = vpack.c.b16 %v77, %v76
  %v95 = vpack.c.b16 %v79, %v78
  %v96 = vpack.c.b16 %v81, %v80
  %v97 = vpack.c.b16 %v83, %v82
  %v98 = vpack.c.b16 %v85, %v84
  %v99 = vpack.c.b16 %v87, %v86
  %v100 = vpack.c.b16 %v89, %v88
  %v101 = vpack.c.b16 %v91, %v90
  %v102 = vpack.c.b16 %v93, %v92
  %vm112 = vcmask 130048
  %v114 = vsel %vm112, %v53, 0
  %v117 = vsel %vm112, %v55, 0
  %119 = vmatprep.subr.bf16.mxu0 0
  %120 = vmatpush1.bf16.msra.mxu0 %v101
  %121 = vmatprep.subr.bf16.mxu0 0
  %122 = vmatpush1.bf16.msra.mxu0 %v100
  %123 = vmatprep.subr.bf16.mxu0 0
  %124 = vmatpush1.bf16.msra.mxu0 %v99
  %125 = vmatprep.subr.bf16.mxu0 0
  %126 = vmatpush1.bf16.msra.mxu0 %v98
  %127 = vmatprep.subr.bf16.mxu0 0
  %128 = vmatpush1.bf16.msra.mxu0 %v97
  %129 = vmatprep.subr.bf16.mxu0 0
  %130 = vmatpush1.bf16.msra.mxu0 %v96
  %131 = vmatprep.subr.bf16.mxu0 0
  %132 = vmatpush1.bf16.msra.mxu0 %v95
  %133 = vmatprep.subr.bf16.mxu0 0
  %134 = vmatpush1.bf16.msra.mxu0 %v94
  %135 = vmatprep.subr.bf16.mxu0 0
  %136 = vmatpush2.bf16.msra.mxu0 0
  %137 = vmatprep.subr.bf16.mxu0 0
  %138 = vmatpush2.bf16.msra.mxu0 0
  %139 = vmatprep.subr.bf16.mxu0 0
  %140 = vmatpush2.bf16.msra.mxu0 0
  %141 = vmatprep.subr.bf16.mxu0 0
  %142 = vmatpush2.bf16.msra.mxu0 0
  %143 = vmatprep.subr.bf16.mxu0 0
  %144 = vmatpush2.bf16.msra.mxu0 0
  %145 = vmatprep.subr.bf16.mxu0 0
  %146 = vmatpush2.bf16.msra.mxu0 0
  %147 = vmatprep.subr.bf16.mxu0 0
  %148 = vmatpush2.bf16.msra.mxu0 0
  %149 = vmatprep.subr.bf16.mxu0 0
  %150 = vmatpush2.bf16.msra.mxu0 %v102
  %151 = vmatprep.mubr.bf16.mxu0 %v114
  %152 = vmatmul.mubr.bf16.gmra.mxu0 %v52
  %v153 = vpop.f32.mrf.mxu0
  %v154 = vadd.f32 0.0, %v153
  %v155 = vpop.f32.mrf.mxu0
  %v156 = vpop.f32.mrf.mxu0
  %v157 = vadd.f32 0.0, %v156
  %v158 = vpop.f32.mrf.mxu0
  %159 = vmatprep.mubr.bf16.mxu0 %v117
  %160 = vmatmul.mubr.bf16.gmra.mxu0 %v54
  %v161 = vpop.f32.mrf.mxu0
  %v162 = vadd.f32 0.0, %v161
  %v163 = vpop.f32.mrf.mxu0
  %v164 = vpop.f32.mrf.mxu0
  %v165 = vadd.f32 0.0, %v164
  %v166 = vpop.f32.mrf.mxu0
  %167 = vdwg.mxu0
  %vm168 = vcmask 801792
  %v169 = vsel %vm168, %v154, 0.0
  %170 = vadd.xlane.f32.xlu0 %v169
  %v171 = vpop.xlane.xlu0 %170
  %v172 = vsel %vm168, %v157, 0.0
  %173 = vadd.xlane.f32.xlu0 %v172
  %v174 = vpop.xlane.xlu0 %173
  %v175 = vsel %vm168, %v162, 0.0
  %176 = vadd.xlane.f32.xlu0 %v175
  %v177 = vpop.xlane.xlu0 %176
  %v178 = vsel %vm168, %v165, 0.0
  %179 = vadd.xlane.f32.xlu0 %v178
  %v180 = vpop.xlane.xlu0 %179
  %v181 = vrcp.pop 98.0
  %v182 = vmul.f32 %v171, %v181
  %v183 = vmul.f32 %v174, %v181
  %v184 = vmul.f32 %v177, %v181
  %v185 = vmul.f32 %v180, %v181
  %v186 = vmul.f32 %v154, %v154
  %v187 = vmul.f32 %v157, %v157
  %v188 = vmul.f32 %v162, %v162
  %v189 = vmul.f32 %v165, %v165
  %v190 = vsel %vm168, %v186, 0.0
  %191 = vadd.xlane.f32.xlu0 %v190
  %v192 = vpop.xlane.xlu0 %191
  %v193 = vsel %vm168, %v187, 0.0
  %194 = vadd.xlane.f32.xlu0 %v193
  %v195 = vpop.xlane.xlu0 %194
  %v196 = vsel %vm168, %v188, 0.0
  %197 = vadd.xlane.f32.xlu0 %v196
  %v198 = vpop.xlane.xlu0 %197
  %v199 = vsel %vm168, %v189, 0.0
  %200 = vadd.xlane.f32.xlu0 %v199
  %v201 = vpop.xlane.xlu0 %200
  %v202 = vmul.f32 %v192, %v181
  %v203 = vmul.f32 %v195, %v181
  %v204 = vmul.f32 %v198, %v181
  %v205 = vmul.f32 %v201, %v181
  %v206 = vmul.f32 %v182, %v182
  %v207 = vmul.f32 %v183, %v183
  %v208 = vmul.f32 %v184, %v184
  %v209 = vmul.f32 %v185, %v185
  %v210 = vsub.f32 %v202, %v206
  %v211 = vsub.f32 %v203, %v207
  %v212 = vsub.f32 %v204, %v208
  %v213 = vsub.f32 %v205, %v209
  %v214 = vmax.f32 %v210, 0.0
  %v215 = vmax.f32 %v211, 0.0
  %v216 = vmax.f32 %v212, 0.0
  %v217 = vmax.f32 %v213, 0.0
  %v218 = vld [vmem:[%s2] sm:$0xff]
  %v219 = vld [vmem:[%s2 + $0x8] sm:$0xff]
  %v220 = vld [vmem:[%s2 + $0x10] sm:$0xff]
  %v221 = vld [vmem:[%s2 + $0x18] sm:$0xff]
  %v222 = vadd.f32 %v214, 1e-05
  %v223 = vadd.f32 %v215, 1e-05
  %v224 = vadd.f32 %v216, 1e-05
  %v225 = vadd.f32 %v217, 1e-05
  %v226 = vrsqrt.pop %v222
  %v227 = vrsqrt.pop %v223
  %v228 = vrsqrt.pop %v224
  %v229 = vrsqrt.pop %v225
  %v230 = vmul.f32 %v218, %v226
  %v231 = vmul.f32 %v219, %v227
  %v232 = vmul.f32 %v220, %v228
  %v233 = vmul.f32 %v221, %v229
  %v234 = vld [vmem:[%s3] sm:$0xff]
  %v235 = vld [vmem:[%s3 + $0x8] sm:$0xff]
  %v236 = vld [vmem:[%s3 + $0x10] sm:$0xff]
  %v237 = vld [vmem:[%s3 + $0x18] sm:$0xff]
  %v238 = vmul.f32 %v182, %v230
  %v239 = vmul.f32 %v183, %v231
  %v240 = vmul.f32 %v184, %v232
  %v241 = vmul.f32 %v185, %v233
  %v242 = vsub.f32 %v234, %v238
  %v243 = vsub.f32 %v235, %v239
  %v244 = vsub.f32 %v236, %v240
  %v245 = vsub.f32 %v237, %v241
  %247 = vset.pattern.permute.xlu0 0
  %248 = vperm.xlu0 %247, %v230
  %v249 = vpop.permute.xlu0 %248
  %252 = vset.pattern.permute.xlu0 0
  %253 = vperm.xlu0 %252, %v231
  %v254 = vpop.permute.xlu0 %253
  %257 = vset.pattern.permute.xlu0 0
  %258 = vperm.xlu0 %257, %v232
  %v259 = vpop.permute.xlu0 %258
  %262 = vset.pattern.permute.xlu0 0
  %263 = vperm.xlu0 %262, %v233
  %v264 = vpop.permute.xlu0 %263
  %v266 = vmul.f32 %v154, %v249
  %v267 = vmul.f32 %v157, %v254
  %v268 = vmul.f32 %v162, %v259
  %v269 = vmul.f32 %v165, %v264
  %271 = vset.pattern.permute.xlu0 0
  %272 = vperm.xlu0 %271, %v242
  %v273 = vpop.permute.xlu0 %272
  %276 = vset.pattern.permute.xlu0 0
  %277 = vperm.xlu0 %276, %v243
  %v278 = vpop.permute.xlu0 %277
  %281 = vset.pattern.permute.xlu0 0
  %282 = vperm.xlu0 %281, %v244
  %v283 = vpop.permute.xlu0 %282
  %286 = vset.pattern.permute.xlu0 0
  %287 = vperm.xlu0 %286, %v245
  %v288 = vpop.permute.xlu0 %287
  %v290 = vadd.f32 %v266, %v273
  %v291 = vadd.f32 %v267, %v278
  %v292 = vadd.f32 %v268, %v283
  %v293 = vadd.f32 %v269, %v288
  %v294 = vmax.f32 %v290, 0.0
  %v295 = vmax.f32 %v291, 0.0
  %v296 = vmax.f32 %v292, 0.0
  %v297 = vmax.f32 %v293, 0.0
  %v298 = vpack.c.bf16 %v295, %v294
  %v299 = vpack.c.bf16 %v297, %v296
  %v302 = vunpack.c.l.b16 %v298
  %v303 = vunpack.c.h.b16 %v298
  %v304 = vunpack.c.l.b16 %v299
  %v305 = vunpack.c.h.b16 %v299
  %v306 = vpack.c.b16 %v302, %v302
  %v307 = vpack.c.b16 %v303, %v303
  %v308 = vpack.c.b16 %v304, %v304
  %v309 = vpack.c.b16 %v305, %v305
  %vm314 = vcmask 797696
  %315 = vst.msk [vmem:[%s4] sm:$0xf] %vm314, %v306
  %316 = vst.msk [vmem:[%s4 + $0x4] sm:$0xf] %vm314, %v307
  %317 = vst.msk [vmem:[%s4 + $0x8] sm:$0xf] %vm314, %v308
  %318 = vst.msk [vmem:[%s4 + $0xc] sm:$0xf] %vm314, %v309
  // Predicated region
  $region18: #{autoencoder_forward.9} parent=0 // pred_check
    _
  $region19: #{autoencoder_forward.9} parent=0 // pred_check_branch
    %320 = sbr.rel (0) target = $region21
  $region20: #{autoencoder_forward.9} parent=0 // pred_region
    _
  $region21: #{autoencoder_forward.9} parent=0 // pred_fallthru
    _
  // Predicated region
  $region22: #{autoencoder_forward.9} parent=0 // pred_check
    _
  $region23: #{autoencoder_forward.9} parent=0 // pred_check_branch
    %322 = sbr.rel (0) target = $region25
  $region24: #{autoencoder_forward.9} parent=0 // pred_region
    _
  $region25: #{autoencoder_forward.9} parent=0 // pred_fallthru
    _

// kernel: autoencoder_forward.10
$region0: #{autoencoder_forward.10}
  #allocation0 [shape = 'u32[]', space=smem, size = 0x4, offset = 0x4, fixed_abs, tag = 'smem constant byte address 0x4 - core index']
  #allocation1 [shape = 'u32[144,128]{1,0:T(1,128)}', space=vmem, size = 0x12000, scoped, tag = 'internal scratch']
  %s0 = inlined_call_operand.vmem [shape: bf16[64,288], index: 0, kind: input, shape index: {}]
  %s1 = inlined_call_operand.vmem [shape: bf16[288,98], index: 1, kind: input, shape index: {}]
  %s2 = inlined_call_operand.vmem [shape: f32[64,1], index: 2, kind: input, shape index: {}]
  %s3 = inlined_call_operand.vmem [shape: f32[64,1], index: 3, kind: input, shape index: {}]
  %s4 = inlined_call_operand.vmem [shape: bf16[64,98], index: 4, kind: output, shape index: {}]
  %s5 = sld [smem:[#allocation0]]
  $region26: #{autoencoder_forward.10} parent=0
    _
  %s7 = ssub.s32 1, %s5
  %s8 = scalar_select 0, %s7, %s5
  // Predicated region
  $region2: #{autoencoder_forward.10} parent=0 // pred_check
    _
  $region3: #{autoencoder_forward.10} parent=0 // pred_check_branch
    %10 = sbr.rel (0) target = $region5
  $region4: #{autoencoder_forward.10} parent=0 // pred_region
    _
  $region5: #{autoencoder_forward.10} parent=0 // pred_fallthru
    _
  // Predicated region
  $region6: #{autoencoder_forward.10} parent=0 // pred_check
    _
  $region7: #{autoencoder_forward.10} parent=0 // pred_check_branch
    %12 = sbr.rel (0) target = $region9
  $region8: #{autoencoder_forward.10} parent=0 // pred_region
    _
  $region9: #{autoencoder_forward.10} parent=0 // pred_fallthru
    _
  // Predicated region
  $region10: #{autoencoder_forward.10} parent=0 // pred_check
    _
  $region11: #{autoencoder_forward.10} parent=0 // pred_check_branch
    %14 = sbr.rel (0) target = $region13
  $region12: #{autoencoder_forward.10} parent=0 // pred_region
    _
  $region13: #{autoencoder_forward.10} parent=0 // pred_fallthru
    _
  // Predicated region
  $region14: #{autoencoder_forward.10} parent=0 // pred_check
    _
  $region15: #{autoencoder_forward.10} parent=0 // pred_check_branch
    %16 = sbr.rel (0) target = $region17
  $region16: #{autoencoder_forward.10} parent=0 // pred_region
    _
  $region17: #{autoencoder_forward.10} parent=0 // pred_fallthru
    _
  %v18 = vld [vmem:[%s0] sm:$0xff]
  %v19 = vld [vmem:[%s0 + $0x8] sm:$0xf]
  %v20 = vld [vmem:[%s0 + $0xc] sm:$0xff]
  %v21 = vld [vmem:[%s0 + $0x14] sm:$0xf]
  %v22 = vld [vmem:[%s0 + $0x18] sm:$0xff]
  %v23 = vld [vmem:[%s0 + $0x20] sm:$0xf]
  %v24 = vld [vmem:[%s0 + $0x24] sm:$0xff]
  %v25 = vld [vmem:[%s0 + $0x2c] sm:$0xf]
  %v26 = vld [vmem:[%s0 + $0x30] sm:$0xff]
  %v27 = vld [vmem:[%s0 + $0x38] sm:$0xf]
  %v28 = vld [vmem:[%s0 + $0x3c] sm:$0xff]
  %v29 = vld [vmem:[%s0 + $0x44] sm:$0xf]
  %v30 = vld [vmem:[%s0 + $0x48] sm:$0xff]
  %v31 = vld [vmem:[%s0 + $0x50] sm:$0xf]
  %v32 = vld [vmem:[%s0 + $0x54] sm:$0xff]
  %v33 = vld [vmem:[%s0 + $0x5c] sm:$0xf]
  %v34 = vld [vmem:[%s1] sm:$0xf]
  %v35 = vld [vmem:[%s1 + $0x4] sm:$0xf]
  %v36 = vld [vmem:[%s1 + $0x8] sm:$0xf]
  %v37 = vld [vmem:[%s1 + $0xc] sm:$0xf]
  %v38 = vld [vmem:[%s1 + $0x10] sm:$0xf]
  %v39 = vld [vmem:[%s1 + $0x14] sm:$0xf]
  %v40 = vld [vmem:[%s1 + $0x18] sm:$0xf]
  %v41 = vld [vmem:[%s1 + $0x1c] sm:$0xf]
  %v42 = vld [vmem:[%s1 + $0x20] sm:$0xf]
  %v43 = vld [vmem:[%s1 + $0x24] sm:$0xf]
  %v44 = vld [vmem:[%s1 + $0x28] sm:$0xf]
  %v45 = vld [vmem:[%s1 + $0x2c] sm:$0xf]
  %v46 = vld [vmem:[%s1 + $0x30] sm:$0xf]
  %v47 = vld [vmem:[%s1 + $0x34] sm:$0xf]
  %v48 = vld [vmem:[%s1 + $0x38] sm:$0xf]
  %v49 = vld [vmem:[%s1 + $0x3c] sm:$0xf]
  %v50 = vld [vmem:[%s1 + $0x40] sm:$0xf]
  %v51 = vld [vmem:[%s1 + $0x44] sm:$0xf]
  %v52 = vld [vmem:[%s1 + $0x48] sm:$0xf]
  %v53 = vld [vmem:[%s1 + $0x4c] sm:$0xf]
  %v54 = vld [vmem:[%s1 + $0x50] sm:$0xf]
  %v55 = vld [vmem:[%s1 + $0x54] sm:$0xf]
  %v56 = vld [vmem:[%s1 + $0x58] sm:$0xf]
  %v57 = vld [vmem:[%s1 + $0x5c] sm:$0xf]
  %v58 = vld [vmem:[%s1 + $0x60] sm:$0xf]
  %v59 = vld [vmem:[%s1 + $0x64] sm:$0xf]
  %v60 = vld [vmem:[%s1 + $0x68] sm:$0xf]
  %v61 = vld [vmem:[%s1 + $0x6c] sm:$0xf]
  %v62 = vld [vmem:[%s1 + $0x70] sm:$0xf]
  %v63 = vld [vmem:[%s1 + $0x74] sm:$0xf]
  %v64 = vld [vmem:[%s1 + $0x78] sm:$0xf]
  %v65 = vld [vmem:[%s1 + $0x7c] sm:$0xf]
  %v66 = vld [vmem:[%s1 + $0x80] sm:$0xf]
  %v67 = vld [vmem:[%s1 + $0x84] sm:$0xf]
  %v68 = vld [vmem:[%s1 + $0x88] sm:$0xf]
  %v69 = vld [vmem:[%s1 + $0x8c] sm:$0xf]
  %v86 = vunpack.c.l.b16 %v18
  %v87 = vunpack.c.h.b16 %v18
  %v88 = vunpack.c.l.b16 %v19
  %v89 = vunpack.c.l.b16 %v20
  %v90 = vunpack.c.h.b16 %v20
  %v91 = vunpack.c.l.b16 %v21
  %v92 = vunpack.c.l.b16 %v22
  %v93 = vunpack.c.h.b16 %v22
  %v94 = vunpack.c.l.b16 %v23
  %v95 = vunpack.c.l.b16 %v24
  %v96 = vunpack.c.h.b16 %v24
  %v97 = vunpack.c.l.b16 %v25
  %v98 = vunpack.c.l.b16 %v26
  %v99 = vunpack.c.h.b16 %v26
  %v100 = vunpack.c.l.b16 %v27
  %v101 = vunpack.c.l.b16 %v28
  %v102 = vunpack.c.h.b16 %v28
  %v103 = vunpack.c.l.b16 %v29
  %v104 = vunpack.c.l.b16 %v30
  %v105 = vunpack.c.h.b16 %v30
  %v106 = vunpack.c.l.b16 %v31
  %v107 = vunpack.c.l.b16 %v32
  %v108 = vunpack.c.h.b16 %v32
  %v109 = vunpack.c.l.b16 %v33
  %v110 = vpack.c.b16 %v89, %v86
  %v111 = vpack.c.b16 %v90, %v87
  %v112 = vpack.c.b16 %v91, %v88
  %v113 = vpack.c.b16 %v95, %v92
  %v114 = vpack.c.b16 %v96, %v93
  %v115 = vpack.c.b16 %v97, %v94
  %v116 = vpack.c.b16 %v101, %v98
  %v117 = vpack.c.b16 %v102, %v99
  %v118 = vpack.c.b16 %v103, %v100
  %v119 = vpack.c.b16 %v107, %v104
  %v120 = vpack.c.b16 %v108, %v105
  %v121 = vpack.c.b16 %v109, %v106
  %v166 = vunpack.c.l.b16 %v34
  %v167 = vunpack.c.l.b16 %v35
  %v168 = vunpack.c.l.b16 %v36
  %v169 = vunpack.c.l.b16 %v37
  %v170 = vunpack.c.l.b16 %v38
  %v171 = vunpack.c.l.b16 %v39
  %v172 = vunpack.c.l.b16 %v40
  %v173 = vunpack.c.l.b16 %v41
  %v174 = vunpack.c.l.b16 %v42
  %v175 = vunpack.c.l.b16 %v43
  %v176 = vunpack.c.l.b16 %v44
  %v177 = vunpack.c.l.b16 %v45
  %v178 = vunpack.c.l.b16 %v46
  %v179 = vunpack.c.l.b16 %v47
  %v180 = vunpack.c.l.b16 %v48
  %v181 = vunpack.c.l.b16 %v49
  %v182 = vunpack.c.l.b16 %v50
  %v183 = vunpack.c.l.b16 %v51
  %v184 = vunpack.c.l.b16 %v52
  %v185 = vunpack.c.l.b16 %v53
  %v186 = vunpack.c.l.b16 %v54
  %v187 = vunpack.c.l.b16 %v55
  %v188 = vunpack.c.l.b16 %v56
  %v189 = vunpack.c.l.b16 %v57
  %v190 = vunpack.c.l.b16 %v58
  %v191 = vunpack.c.l.b16 %v59
  %v192 = vunpack.c.l.b16 %v60
  %v193 = vunpack.c.l.b16 %v61
  %v194 = vunpack.c.l.b16 %v62
  %v195 = vunpack.c.l.b16 %v63
  %v196 = vunpack.c.l.b16 %v64
  %v197 = vunpack.c.l.b16 %v65
  %v198 = vunpack.c.l.b16 %v66
  %v199 = vunpack.c.l.b16 %v67
  %v200 = vunpack.c.l.b16 %v68
  %v201 = vunpack.c.l.b16 %v69
  %v202 = vpack.c.b16 %v167, %v166
  %v203 = vpack.c.b16 %v169, %v168
  %v204 = vpack.c.b16 %v171, %v170
  %v205 = vpack.c.b16 %v173, %v172
  %v206 = vpack.c.b16 %v175, %v174
  %v207 = vpack.c.b16 %v177, %v176
  %v208 = vpack.c.b16 %v179, %v178
  %v209 = vpack.c.b16 %v181, %v180
  %v210 = vpack.c.b16 %v183, %v182
  %v211 = vpack.c.b16 %v185, %v184
  %v212 = vpack.c.b16 %v187, %v186
  %v213 = vpack.c.b16 %v189, %v188
  %v214 = vpack.c.b16 %v191, %v190
  %v215 = vpack.c.b16 %v193, %v192
  %v216 = vpack.c.b16 %v195, %v194
  %v217 = vpack.c.b16 %v197, %v196
  %v218 = vpack.c.b16 %v199, %v198
  %v219 = vpack.c.b16 %v201, %v200
  %vm238 = vcmask 261120
  %v240 = vsel %vm238, %v112, 0
  %v243 = vsel %vm238, %v115, 0
  %v246 = vsel %vm238, %v118, 0
  %v249 = vsel %vm238, %v121, 0
  %251 = vmatprep.subr.bf16.mxu0 0
  %252 = vmatpush1.bf16.msra.mxu0 %v209
  %253 = vmatprep.subr.bf16.mxu0 0
  %254 = vmatpush1.bf16.msra.mxu0 %v208
  %255 = vmatprep.subr.bf16.mxu0 0
  %256 = vmatpush1.bf16.msra.mxu0 %v207
  %257 = vmatprep.subr.bf16.mxu0 0
  %258 = vmatpush1.bf16.msra.mxu0 %v206
  %259 = vmatprep.subr.bf16.mxu0 0
  %260 = vmatpush1.bf16.msra.mxu0 %v205
  %261 = vmatprep.subr.bf16.mxu0 0
  %262 = vmatpush1.bf16.msra.mxu0 %v204
  %263 = vmatprep.subr.bf16.mxu0 0
  %264 = vmatpush1.bf16.msra.mxu0 %v203
  %265 = vmatprep.subr.bf16.mxu0 0
  %266 = vmatpush1.bf16.msra.mxu0 %v202
  %267 = vmatprep.subr.bf16.mxu0 0
  %268 = vmatpush2.bf16.msra.mxu0 %v217
  %269 = vmatprep.subr.bf16.mxu0 0
  %270 = vmatpush2.bf16.msra.mxu0 %v216
  %271 = vmatprep.subr.bf16.mxu0 0
  %272 = vmatpush2.bf16.msra.mxu0 %v215
  %273 = vmatprep.subr.bf16.mxu0 0
  %274 = vmatpush2.bf16.msra.mxu0 %v214
  %275 = vmatprep.subr.bf16.mxu0 0
  %276 = vmatpush2.bf16.msra.mxu0 %v213
  %277 = vmatprep.subr.bf16.mxu0 0
  %278 = vmatpush2.bf16.msra.mxu0 %v212
  %279 = vmatprep.subr.bf16.mxu0 0
  %280 = vmatpush2.bf16.msra.mxu0 %v211
  %281 = vmatprep.subr.bf16.mxu0 0
  %282 = vmatpush2.bf16.msra.mxu0 %v210
  %283 = vmatprep.mubr.bf16.mxu0 %v111
  %284 = vmatmul.mubr.bf16.gmra.mxu0 %v110
  %v285 = vpop.f32.mrf.mxu0
  %v286 = vadd.f32 0.0, %v285
  %v287 = vpop.f32.mrf.mxu0
  %v288 = vpop.f32.mrf.mxu0
  %v289 = vadd.f32 0.0, %v288
  %v290 = vpop.f32.mrf.mxu0
  %291 = vmatprep.mubr.bf16.mxu0 %v114
  %292 = vmatmul.mubr.bf16.gmra.mxu0 %v113
  %v293 = vpop.f32.mrf.mxu0
  %v294 = vadd.f32 0.0, %v293
  %v295 = vpop.f32.mrf.mxu0
  %v296 = vpop.f32.mrf.mxu0
  %v297 = vadd.f32 0.0, %v296
  %v298 = vpop.f32.mrf.mxu0
  %299 = vmatprep.mubr.bf16.mxu0 %v117
  %300 = vmatmul.mubr.bf16.gmra.mxu0 %v116
  %v301 = vpop.f32.mrf.mxu0
  %v302 = vadd.f32 0.0, %v301
  %v303 = vpop.f32.mrf.mxu0
  %v304 = vpop.f32.mrf.mxu0
  %v305 = vadd.f32 0.0, %v304
  %v306 = vpop.f32.mrf.mxu0
  %307 = vmatprep.mubr.bf16.mxu0 %v120
  %308 = vmatmul.mubr.bf16.gmra.mxu0 %v119
  %v309 = vpop.f32.mrf.mxu0
  %v310 = vadd.f32 0.0, %v309
  %v311 = vpop.f32.mrf.mxu0
  %v312 = vpop.f32.mrf.mxu0
  %v313 = vadd.f32 0.0, %v312
  %v314 = vpop.f32.mrf.mxu0
  %315 = vdwg.mxu0
  %316 = vmatprep.subr.bf16.mxu0 0
  %317 = vmatpush1.bf16.msra.mxu0 0
  %318 = vmatprep.subr.bf16.mxu0 0
  %319 = vmatpush1.bf16.msra.mxu0 0
  %320 = vmatprep.subr.bf16.mxu0 0
  %321 = vmatpush1.bf16.msra.mxu0 0
  %322 = vmatprep.subr.bf16.mxu0 0
  %323 = vmatpush1.bf16.msra.mxu0 0
  %324 = vmatprep.subr.bf16.mxu0 0
  %325 = vmatpush1.bf16.msra.mxu0 0
  %326 = vmatprep.subr.bf16.mxu0 0
  %327 = vmatpush1.bf16.msra.mxu0 0
  %328 = vmatprep.subr.bf16.mxu0 0
  %329 = vmatpush1.bf16.msra.mxu0 %v219
  %330 = vmatprep.subr.bf16.mxu0 0
  %331 = vmatpush1.bf16.msra.mxu0 %v218
  %332 = vmatprep.subr.bf16.mxu0 0
  %333 = vmatpush2.bf16.msra.mxu0 0
  %334 = vmatprep.subr.bf16.mxu0 0
  %335 = vmatpush2.bf16.msra.mxu0 0
  %336 = vmatprep.subr.bf16.mxu0 0
  %337 = vmatpush2.bf16.msra.mxu0 0
  %338 = vmatprep.subr.bf16.mxu0 0
  %339 = vmatpush2.bf16.msra.mxu0 0
  %340 = vmatprep.subr.bf16.mxu0 0
  %341 = vmatpush2.bf16.msra.mxu0 0
  %342 = vmatprep.subr.bf16.mxu0 0
  %343 = vmatpush2.bf16.msra.mxu0 0
  %344 = vmatprep.subr.bf16.mxu0 0
  %345 = vmatpush2.bf16.msra.mxu0 0
  %346 = vmatprep.subr.bf16.mxu0 0
  %347 = vmatpush2.bf16.msra.mxu0 0
  %348 = vmatprep.mubr.bf16.mxu0 0
  %349 = vmatmul.mubr.bf16.gmra.mxu0 %v240
  %v350 = vpop.f32.mrf.mxu0
  %v351 = vadd.f32 %v286, %v350
  %v352 = vpop.f32.mrf.mxu0
  %v353 = vpop.f32.mrf.mxu0
  %v354 = vadd.f32 %v289, %v353
  %v355 = vpop.f32.mrf.mxu0
  %356 = vmatprep.mubr.bf16.mxu0 0
  %357 = vmatmul.mubr.bf16.gmra.mxu0 %v243
  %v358 = vpop.f32.mrf.mxu0
  %v359 = vadd.f32 %v294, %v358
  %v360 = vpop.f32.mrf.mxu0
  %v361 = vpop.f32.mrf.mxu0
  %v362 = vadd.f32 %v297, %v361
  %v363 = vpop.f32.mrf.mxu0
  %364 = vmatprep.mubr.bf16.mxu0 0
  %365 = vmatmul.mubr.bf16.gmra.mxu0 %v246
  %v366 = vpop.f32.mrf.mxu0
  %v367 = vadd.f32 %v302, %v366
  %v368 = vpop.f32.mrf.mxu0
  %v369 = vpop.f32.mrf.mxu0
  %v370 = vadd.f32 %v305, %v369
  %v371 = vpop.f32.mrf.mxu0
  %372 = vmatprep.mubr.bf16.mxu0 0
  %373 = vmatmul.mubr.bf16.gmra.mxu0 %v249
  %v374 = vpop.f32.mrf.mxu0
  %v375 = vadd.f32 %v310, %v374
  %v376 = vpop.f32.mrf.mxu0
  %v377 = vpop.f32.mrf.mxu0
  %v378 = vadd.f32 %v313, %v377
  %v379 = vpop.f32.mrf.mxu0
  %380 = vdwg.mxu0
  %vm381 = vcmask 801792
  %v382 = vsel %vm381, %v351, 0.0
  %383 = vadd.xlane.f32.xlu0 %v382
  %v384 = vpop.xlane.xlu0 %383
  %v385 = vsel %vm381, %v354, 0.0
  %386 = vadd.xlane.f32.xlu0 %v385
  %v387 = vpop.xlane.xlu0 %386
  %v388 = vsel %vm381, %v359, 0.0
  %389 = vadd.xlane.f32.xlu0 %v388
  %v390 = vpop.xlane.xlu0 %389
  %v391 = vsel %vm381, %v362, 0.0
  %392 = vadd.xlane.f32.xlu0 %v391
  %v393 = vpop.xlane.xlu0 %392
  %v394 = vsel %vm381, %v367, 0.0
  %395 = vadd.xlane.f32.xlu0 %v394
  %v396 = vpop.xlane.xlu0 %395
  %v397 = vsel %vm381, %v370, 0.0
  %398 = vadd.xlane.f32.xlu0 %v397
  %v399 = vpop.xlane.xlu0 %398
  %v400 = vsel %vm381, %v375, 0.0
  %401 = vadd.xlane.f32.xlu0 %v400
  %v402 = vpop.xlane.xlu0 %401
  %v403 = vsel %vm381, %v378, 0.0
  %404 = vadd.xlane.f32.xlu0 %v403
  %v405 = vpop.xlane.xlu0 %404
  %v406 = vrcp.pop 98.0
  %v407 = vmul.f32 %v384, %v406
  %v408 = vmul.f32 %v387, %v406
  %v409 = vmul.f32 %v390, %v406
  %v410 = vmul.f32 %v393, %v406
  %v411 = vmul.f32 %v396, %v406
  %v412 = vmul.f32 %v399, %v406
  %v413 = vmul.f32 %v402, %v406
  %v414 = vmul.f32 %v405, %v406
  %v415 = vmul.f32 %v351, %v351
  %v416 = vmul.f32 %v354, %v354
  %v417 = vmul.f32 %v359, %v359
  %v418 = vmul.f32 %v362, %v362
  %v419 = vmul.f32 %v367, %v367
  %v420 = vmul.f32 %v370, %v370
  %v421 = vmul.f32 %v375, %v375
  %v422 = vmul.f32 %v378, %v378
  %v423 = vsel %vm381, %v415, 0.0
  %424 = vadd.xlane.f32.xlu0 %v423
  %v425 = vpop.xlane.xlu0 %424
  %v426 = vsel %vm381, %v416, 0.0
  %427 = vadd.xlane.f32.xlu0 %v426
  %v428 = vpop.xlane.xlu0 %427
  %v429 = vsel %vm381, %v417, 0.0
  %430 = vadd.xlane.f32.xlu0 %v429
  %v431 = vpop.xlane.xlu0 %430
  %v432 = vsel %vm381, %v418, 0.0
  %433 = vadd.xlane.f32.xlu0 %v432
  %v434 = vpop.xlane.xlu0 %433
  %v435 = vsel %vm381, %v419, 0.0
  %436 = vadd.xlane.f32.xlu0 %v435
  %v437 = vpop.xlane.xlu0 %436
  %v438 = vsel %vm381, %v420, 0.0
  %439 = vadd.xlane.f32.xlu0 %v438
  %v440 = vpop.xlane.xlu0 %439
  %v441 = vsel %vm381, %v421, 0.0
  %442 = vadd.xlane.f32.xlu0 %v441
  %v443 = vpop.xlane.xlu0 %442
  %v444 = vsel %vm381, %v422, 0.0
  %445 = vadd.xlane.f32.xlu0 %v444
  %v446 = vpop.xlane.xlu0 %445
  %v447 = vmul.f32 %v425, %v406
  %v448 = vmul.f32 %v428, %v406
  %v449 = vmul.f32 %v431, %v406
  %v450 = vmul.f32 %v434, %v406
  %v451 = vmul.f32 %v437, %v406
  %v452 = vmul.f32 %v440, %v406
  %v453 = vmul.f32 %v443, %v406
  %v454 = vmul.f32 %v446, %v406
  %v455 = vmul.f32 %v407, %v407
  %v456 = vmul.f32 %v408, %v408
  %v457 = vmul.f32 %v409, %v409
  %v458 = vmul.f32 %v410, %v410
  %v459 = vmul.f32 %v411, %v411
  %v460 = vmul.f32 %v412, %v412
  %v461 = vmul.f32 %v413, %v413
  %v462 = vmul.f32 %v414, %v414
  %v463 = vsub.f32 %v447, %v455
  %v464 = vsub.f32 %v448, %v456
  %v465 = vsub.f32 %v449, %v457
  %v466 = vsub.f32 %v450, %v458
  %v467 = vsub.f32 %v451, %v459
  %v468 = vsub.f32 %v452, %v460
  %v469 = vsub.f32 %v453, %v461
  %v470 = vsub.f32 %v454, %v462
  %v471 = vmax.f32 %v463, 0.0
  %v472 = vmax.f32 %v464, 0.0
  %v473 = vmax.f32 %v465, 0.0
  %v474 = vmax.f32 %v466, 0.0
  %v475 = vmax.f32 %v467, 0.0
  %v476 = vmax.f32 %v468, 0.0
  %v477 = vmax.f32 %v469, 0.0
  %v478 = vmax.f32 %v470, 0.0
  %v479 = vld [vmem:[%s2] sm:$0xff]
  %v480 = vld [vmem:[%s2 + $0x8] sm:$0xff]
  %v481 = vld [vmem:[%s2 + $0x10] sm:$0xff]
  %v482 = vld [vmem:[%s2 + $0x18] sm:$0xff]
  %v483 = vld [vmem:[%s2 + $0x20] sm:$0xff]
  %v484 = vld [vmem:[%s2 + $0x28] sm:$0xff]
  %v485 = vld [vmem:[%s2 + $0x30] sm:$0xff]
  %v486 = vld [vmem:[%s2 + $0x38] sm:$0xff]
  %v487 = vadd.f32 %v471, 1e-05
  %v488 = vadd.f32 %v472, 1e-05
  %v489 = vadd.f32 %v473, 1e-05
  %v490 = vadd.f32 %v474, 1e-05
  %v491 = vadd.f32 %v475, 1e-05
  %v492 = vadd.f32 %v476, 1e-05
  %v493 = vadd.f32 %v477, 1e-05
  %v494 = vadd.f32 %v478, 1e-05
  %v495 = vrsqrt.pop %v487
  %v496 = vrsqrt.pop %v488
  %v497 = vrsqrt.pop %v489
  %v498 = vrsqrt.pop %v490
  %v499 = vrsqrt.pop %v491
  %v500 = vrsqrt.pop %v492
  %v501 = vrsqrt.pop %v493
  %v502 = vrsqrt.pop %v494
  %v503 = vmul.f32 %v479, %v495
  %v504 = vmul.f32 %v480, %v496
  %v505 = vmul.f32 %v481, %v497
  %v506 = vmul.f32 %v482, %v498
  %v507 = vmul.f32 %v483, %v499
  %v508 = vmul.f32 %v484, %v500
  %v509 = vmul.f32 %v485, %v501
  %v510 = vmul.f32 %v486, %v502
  %v511 = vld [vmem:[%s3] sm:$0xff]
  %v512 = vld [vmem:[%s3 + $0x8] sm:$0xff]
  %v513 = vld [vmem:[%s3 + $0x10] sm:$0xff]
  %v514 = vld [vmem:[%s3 + $0x18] sm:$0xff]
  %v515 = vld [vmem:[%s3 + $0x20] sm:$0xff]
  %v516 = vld [vmem:[%s3 + $0x28] sm:$0xff]
  %v517 = vld [vmem:[%s3 + $0x30] sm:$0xff]
  %v518 = vld [vmem:[%s3 + $0x38] sm:$0xff]
  %v519 = vmul.f32 %v407, %v503
  %v520 = vmul.f32 %v408, %v504
  %v521 = vmul.f32 %v409, %v505
  %v522 = vmul.f32 %v410, %v506
  %v523 = vmul.f32 %v411, %v507
  %v524 = vmul.f32 %v412, %v508
  %v525 = vmul.f32 %v413, %v509
  %v526 = vmul.f32 %v414, %v510
  %v527 = vsub.f32 %v511, %v519
  %v528 = vsub.f32 %v512, %v520
  %v529 = vsub.f32 %v513, %v521
  %v530 = vsub.f32 %v514, %v522
  %v531 = vsub.f32 %v515, %v523
  %v532 = vsub.f32 %v516, %v524
  %v533 = vsub.f32 %v517, %v525
  %v534 = vsub.f32 %v518, %v526
  %536 = vset.pattern.permute.xlu0 0
  %537 = vperm.xlu0 %536, %v503
  %v538 = vpop.permute.xlu0 %537
  %541 = vset.pattern.permute.xlu0 0
  %542 = vperm.xlu0 %541, %v504
  %v543 = vpop.permute.xlu0 %542
  %546 = vset.pattern.permute.xlu0 0
  %547 = vperm.xlu0 %546, %v505
  %v548 = vpop.permute.xlu0 %547
  %551 = vset.pattern.permute.xlu0 0
  %552 = vperm.xlu0 %551, %v506
  %v553 = vpop.permute.xlu0 %552
  %556 = vset.pattern.permute.xlu0 0
  %557 = vperm.xlu0 %556, %v507
  %v558 = vpop.permute.xlu0 %557
  %561 = vset.pattern.permute.xlu0 0
  %562 = vperm.xlu0 %561, %v508
  %v563 = vpop.permute.xlu0 %562
  %566 = vset.pattern.permute.xlu0 0
  %567 = vperm.xlu0 %566, %v509
  %v568 = vpop.permute.xlu0 %567
  %571 = vset.pattern.permute.xlu0 0
  %572 = vperm.xlu0 %571, %v510
  %v573 = vpop.permute.xlu0 %572
  %v575 = vmul.f32 %v351, %v538
  %v576 = vmul.f32 %v354, %v543
  %v577 = vmul.f32 %v359, %v548
  %v578 = vmul.f32 %v362, %v553
  %v579 = vmul.f32 %v367, %v558
  %v580 = vmul.f32 %v370, %v563
  %v581 = vmul.f32 %v375, %v568
  %v582 = vmul.f32 %v378, %v573
  %584 = vset.pattern.permute.xlu0 0
  %585 = vperm.xlu0 %584, %v527
  %v586 = vpop.permute.xlu0 %585
  %589 = vset.pattern.permute.xlu0 0
  %590 = vperm.xlu0 %589, %v528
  %v591 = vpop.permute.xlu0 %590
  %594 = vset.pattern.permute.xlu0 0
  %595 = vperm.xlu0 %594, %v529
  %v596 = vpop.permute.xlu0 %595
  %599 = vset.pattern.permute.xlu0 0
  %600 = vperm.xlu0 %599, %v530
  %v601 = vpop.permute.xlu0 %600
  %604 = vset.pattern.permute.xlu0 0
  %605 = vperm.xlu0 %604, %v531
  %v606 = vpop.permute.xlu0 %605
  %609 = vset.pattern.permute.xlu0 0
  %610 = vperm.xlu0 %609, %v532
  %v611 = vpop.permute.xlu0 %610
  %614 = vset.pattern.permute.xlu0 0
  %615 = vperm.xlu0 %614, %v533
  %v616 = vpop.permute.xlu0 %615
  %619 = vset.pattern.permute.xlu0 0
  %620 = vperm.xlu0 %619, %v534
  %v621 = vpop.permute.xlu0 %620
  %v623 = vadd.f32 %v575, %v586
  %v624 = vadd.f32 %v576, %v591
  %v625 = vadd.f32 %v577, %v596
  %v626 = vadd.f32 %v578, %v601
  %v627 = vadd.f32 %v579, %v606
  %v628 = vadd.f32 %v580, %v611
  %v629 = vadd.f32 %v581, %v616
  %v630 = vadd.f32 %v582, %v621
  %v631 = vmax.f32 %v623, 0.0
  %v632 = vmax.f32 %v624, 0.0
  %v633 = vmax.f32 %v625, 0.0
  %v634 = vmax.f32 %v626, 0.0
  %v635 = vmax.f32 %v627, 0.0
  %v636 = vmax.f32 %v628, 0.0
  %v637 = vmax.f32 %v629, 0.0
  %v638 = vmax.f32 %v630, 0.0
  %v639 = vpack.c.bf16 %v632, %v631
  %v640 = vpack.c.bf16 %v634, %v633
  %v641 = vpack.c.bf16 %v636, %v635
  %v642 = vpack.c.bf16 %v638, %v637
  %v647 = vunpack.c.l.b16 %v639
  %v648 = vunpack.c.h.b16 %v639
  %v649 = vunpack.c.l.b16 %v640
  %v650 = vunpack.c.h.b16 %v640
  %v651 = vunpack.c.l.b16 %v641
  %v652 = vunpack.c.h.b16 %v641
  %v653 = vunpack.c.l.b16 %v642
  %v654 = vunpack.c.h.b16 %v642
  %v655 = vpack.c.b16 %v647, %v647
  %v656 = vpack.c.b16 %v648, %v648
  %v657 = vpack.c.b16 %v649, %v649
  %v658 = vpack.c.b16 %v650, %v650
  %v659 = vpack.c.b16 %v651, %v651
  %v660 = vpack.c.b16 %v652, %v652
  %v661 = vpack.c.b16 %v653, %v653
  %v662 = vpack.c.b16 %v654, %v654
  %vm671 = vcmask 797696
  %672 = vst.msk [vmem:[%s4] sm:$0xf] %vm671, %v655
  %673 = vst.msk [vmem:[%s4 + $0x4] sm:$0xf] %vm671, %v656
  %674 = vst.msk [vmem:[%s4 + $0x8] sm:$0xf] %vm671, %v657
  %675 = vst.msk [vmem:[%s4 + $0xc] sm:$0xf] %vm671, %v658
  %676 = vst.msk [vmem:[%s4 + $0x10] sm:$0xf] %vm671, %v659
  %677 = vst.msk [vmem:[%s4 + $0x14] sm:$0xf] %vm671, %v660
  %678 = vst.msk [vmem:[%s4 + $0x18] sm:$0xf] %vm671, %v661
  %679 = vst.msk [vmem:[%s4 + $0x1c] sm:$0xf] %vm671, %v662
  // Predicated region
  $region18: #{autoencoder_forward.10} parent=0 // pred_check
    _
  $region19: #{autoencoder_forward.10} parent=0 // pred_check_branch
    %681 = sbr.rel (0) target = $region21
  $region20: #{autoencoder_forward.10} parent=0 // pred_region
    _
  $region21: #{autoencoder_forward.10} parent=0 // pred_fallthru
    _
  // Predicated region
  $region22: #{autoencoder_forward.10} parent=0 // pred_check
    _
  $region23: #{autoencoder_forward.10} parent=0 // pred_check_branch
    %683 = sbr.rel (0) target = $region25
  $region24: #{autoencoder_forward.10} parent=0 // pred_region
    _
  $region25: #{autoencoder_forward.10} parent=0 // pred_fallthru
    _

// kernel: autoencoder_forward.11
$region0: #{autoencoder_forward.11}
  #allocation0 [shape = 'u32[]', space=smem, size = 0x4, offset = 0x4, fixed_abs, tag = 'smem constant byte address 0x4 - core index']
  #allocation1 [shape = 'u32[144,128]{1,0:T(1,128)}', space=vmem, size = 0x12000, scoped, tag = 'internal scratch']
  %s0 = inlined_call_operand.vmem [shape: bf16[128,576], index: 0, kind: input, shape index: {}]
  %s1 = inlined_call_operand.vmem [shape: bf16[576,50], index: 1, kind: input, shape index: {}]
  %s2 = inlined_call_operand.vmem [shape: f32[128,1], index: 2, kind: input, shape index: {}]
  %s3 = inlined_call_operand.vmem [shape: f32[128,1], index: 3, kind: input, shape index: {}]
  %s4 = inlined_call_operand.vmem [shape: bf16[128,50], index: 4, kind: output, shape index: {}]
  %s5 = sld [smem:[#allocation0]]
  $region26: #{autoencoder_forward.11} parent=0
    _
  %s7 = ssub.s32 1, %s5
  %s8 = scalar_select 0, %s7, %s5
  // Predicated region
  $region2: #{autoencoder_forward.11} parent=0 // pred_check
    _
  $region3: #{autoencoder_forward.11} parent=0 // pred_check_branch
    %10 = sbr.rel (0) target = $region5
  $region4: #{autoencoder_forward.11} parent=0 // pred_region
    _
  $region5: #{autoencoder_forward.11} parent=0 // pred_fallthru
    _
  // Predicated region
  $region6: #{autoencoder_forward.11} parent=0 // pred_check
    _
  $region7: #{autoencoder_forward.11} parent=0 // pred_check_branch
    %12 = sbr.rel (0) target = $region9
  $region8: #{autoencoder_forward.11} parent=0 // pred_region
    _
  $region9: #{autoencoder_forward.11} parent=0 // pred_fallthru
    _
  // Predicated region
  $region10: #{autoencoder_forward.11} parent=0 // pred_check
    _
  $region11: #{autoencoder_forward.11} parent=0 // pred_check_branch
    %14 = sbr.rel (0) target = $region13
  $region12: #{autoencoder_forward.11} parent=0 // pred_region
    _
  $region13: #{autoencoder_forward.11} parent=0 // pred_fallthru
    _
  // Predicated region
  $region14: #{autoencoder_forward.11} parent=0 // pred_check
    _
  $region15: #{autoencoder_forward.11} parent=0 // pred_check_branch
    %16 = sbr.rel (0) target = $region17
  $region16: #{autoencoder_forward.11} parent=0 // pred_region
    _
  $region17: #{autoencoder_forward.11} parent=0 // pred_fallthru
    _
  %v18 = vld [vmem:[%s0] sm:$0xff]
  %v19 = vld [vmem:[%s0 + $0x8] sm:$0xff]
  %v20 = vld [vmem:[%s0 + $0x10] sm:$0xf]
  %v21 = vld [vmem:[%s0 + $0x14] sm:$0xff]
  %v22 = vld [vmem:[%s0 + $0x1c] sm:$0xff]
  %v23 = vld [vmem:[%s0 + $0x24] sm:$0xf]
  %v24 = vld [vmem:[%s0 + $0x28] sm:$0xff]
  %v25 = vld [vmem:[%s0 + $0x30] sm:$0xff]
  %v26 = vld [vmem:[%s0 + $0x38] sm:$0xf]
  %v27 = vld [vmem:[%s0 + $0x3c] sm:$0xff]
  %v28 = vld [vmem:[%s0 + $0x44] sm:$0xff]
  %v29 = vld [vmem:[%s0 + $0x4c] sm:$0xf]
  %v30 = vld [vmem:[%s0 + $0x50] sm:$0xff]
  %v31 = vld [vmem:[%s0 + $0x58] sm:$0xff]
  %v32 = vld [vmem:[%s0 + $0x60] sm:$0xf]
  %v33 = vld [vmem:[%s0 + $0x64] sm:$0xff]
  %v34 = vld [vmem:[%s0 + $0x6c] sm:$0xff]
  %v35 = vld [vmem:[%s0 + $0x74] sm:$0xf]
  %v36 = vld [vmem:[%s0 + $0x78] sm:$0xff]
  %v37 = vld [vmem:[%s0 + $0x80] sm:$0xff]
  %v38 = vld [vmem:[%s0 + $0x88] sm:$0xf]
  %v39 = vld [vmem:[%s0 + $0x8c] sm:$0xff]
  %v40 = vld [vmem:[%s0 + $0x94] sm:$0xff]
  %v41 = vld [vmem:[%s0 + $0x9c] sm:$0xf]
  %v42 = vld [vmem:[%s0 + $0xa0] sm:$0xff]
  %v43 = vld [vmem:[%s0 + $0xa8] sm:$0xff]
  %v44 = vld [vmem:[%s0 + $0xb0] sm:$0xf]
  %v45 = vld [vmem:[%s0 + $0xb4] sm:$0xff]
  %v46 = vld [vmem:[%s0 + $0xbc] sm:$0xff]
  %v47 = vld [vmem:[%s0 + $0xc4] sm:$0xf]
  %v48 = vld [vmem:[%s0 + $0xc8] sm:$0xff]
  %v49 = vld [vmem:[%s0 + $0xd0] sm:$0xff]
  %v50 = vld [vmem:[%s0 + $0xd8] sm:$0xf]
  %v51 = vld [vmem:[%s0 + $0xdc] sm:$0xff]
  %v52 = vld [vmem:[%s0 + $0xe4] sm:$0xff]
  %v53 = vld [vmem:[%s0 + $0xec] sm:$0xf]
  %v54 = vld [vmem:[%s0 + $0xf0] sm:$0xff]
  %v55 = vld [vmem:[%s0 + $0xf8] sm:$0xff]
  %v56 = vld [vmem:[%s0 + $0x100] sm:$0xf]
  %v57 = vld [vmem:[%s0 + $0x104] sm:$0xff]
  %v58 = vld [vmem:[%s0 + $0x10c] sm:$0xff]
  %v59 = vld [vmem:[%s0 + $0x114] sm:$0xf]
  %v60 = vld [vmem:[%s0 + $0x118] sm:$0xff]
  %v61 = vld [vmem:[%s0 + $0x120] sm:$0xff]
  %v62 = vld [vmem:[%s0 + $0x128] sm:$0xf]
  %v63 = vld [vmem:[%s0 + $0x12c] sm:$0xff]
  %v64 = vld [vmem:[%s0 + $0x134] sm:$0xff]
  %v65 = vld [vmem:[%s0 + $0x13c] sm:$0xf]
  %v66 = vld [vmem:[%s1] sm:$0xf]
  %v67 = vld [vmem:[%s1 + $0x4] sm:$0xf]
  %v68 = vld [vmem:[%s1 + $0x8] sm:$0xf]
  %v69 = vld [vmem:[%s1 + $0xc] sm:$0xf]
  %v70 = vld [vmem:[%s1 + $0x10] sm:$0xf]
  %v71 = vld [vmem:[%s1 + $0x14] sm:$0xf]
  %v72 = vld [vmem:[%s1 + $0x18] sm:$0xf]
  %v73 = vld [vmem:[%s1 + $0x1c] sm:$0xf]
  %v74 = vld [vmem:[%s1 + $0x20] sm:$0xf]
  %v75 = vld [vmem:[%s1 + $0x24] sm:$0xf]
  %v76 = vld [vmem:[%s1 + $0x28] sm:$0xf]
  %v77 = vld [vmem:[%s1 + $0x2c] sm:$0xf]
  %v78 = vld [vmem:[%s1 + $0x30] sm:$0xf]
  %v79 = vld [vmem:[%s1 + $0x34] sm:$0xf]
  %v80 = vld [vmem:[%s1 + $0x38] sm:$0xf]
  %v81 = vld [vmem:[%s1 + $0x3c] sm:$0xf]
  %v82 = vld [vmem:[%s1 + $0x40] sm:$0xf]
  %v83 = vld [vmem:[%s1 + $0x44] sm:$0xf]
  %v84 = vld [vmem:[%s1 + $0x48] sm:$0xf]
  %v85 = vld [vmem:[%s1 + $0x4c] sm:$0xf]
  %v86 = vld [vmem:[%s1 + $0x50] sm:$0xf]
  %v87 = vld [vmem:[%s1 + $0x54] sm:$0xf]
  %v88 = vld [vmem:[%s1 + $0x58] sm:$0xf]
  %v89 = vld [vmem:[%s1 + $0x5c] sm:$0xf]
  %v90 = vld [vmem:[%s1 + $0x60] sm:$0xf]
  %v91 = vld [vmem:[%s1 + $0x64] sm:$0xf]
  %v92 = vld [vmem:[%s1 + $0x68] sm:$0xf]
  %v93 = vld [vmem:[%s1 + $0x6c] sm:$0xf]
  %v94 = vld [vmem:[%s1 + $0x70] sm:$0xf]
  %v95 = vld [vmem:[%s1 + $0x74] sm:$0xf]
  %v96 = vld [vmem:[%s1 + $0x78] sm:$0xf]
  %v97 = vld [vmem:[%s1 + $0x7c] sm:$0xf]
  %v98 = vld [vmem:[%s1 + $0x80] sm:$0xf]
  %v99 = vld [vmem:[%s1 + $0x84] sm:$0xf]
  %v100 = vld [vmem:[%s1 + $0x88] sm:$0xf]
  %v101 = vld [vmem:[%s1 + $0x8c] sm:$0xf]
  %v102 = vld [vmem:[%s1 + $0x90] sm:$0xf]
  %v103 = vld [vmem:[%s1 + $0x94] sm:$0xf]
  %v104 = vld [vmem:[%s1 + $0x98] sm:$0xf]
  %v105 = vld [vmem:[%s1 + $0x9c] sm:$0xf]
  %v106 = vld [vmem:[%s1 + $0xa0] sm:$0xf]
  %v107 = vld [vmem:[%s1 + $0xa4] sm:$0xf]
  %v108 = vld [vmem:[%s1 + $0xa8] sm:$0xf]
  %v109 = vld [vmem:[%s1 + $0xac] sm:$0xf]
  %v110 = vld [vmem:[%s1 + $0xb0] sm:$0xf]
  %v111 = vld [vmem:[%s1 + $0xb4] sm:$0xf]
  %v112 = vld [vmem:[%s1 + $0xb8] sm:$0xf]
  %v113 = vld [vmem:[%s1 + $0xbc] sm:$0xf]
  %v114 = vld [vmem:[%s1 + $0xc0] sm:$0xf]
  %v115 = vld [vmem:[%s1 + $0xc4] sm:$0xf]
  %v116 = vld [vmem:[%s1 + $0xc8] sm:$0xf]
  %v117 = vld [vmem:[%s1 + $0xcc] sm:$0xf]
  %v118 = vld [vmem:[%s1 + $0xd0] sm:$0xf]
  %v119 = vld [vmem:[%s1 + $0xd4] sm:$0xf]
  %v120 = vld [vmem:[%s1 + $0xd8] sm:$0xf]
  %v121 = vld [vmem:[%s1 + $0xdc] sm:$0xf]
  %v122 = vld [vmem:[%s1 + $0xe0] sm:$0xf]
  %v123 = vld [vmem:[%s1 + $0xe4] sm:$0xf]
  %v124 = vld [vmem:[%s1 + $0xe8] sm:$0xf]
  %v125 = vld [vmem:[%s1 + $0xec] sm:$0xf]
  %v126 = vld [vmem:[%s1 + $0xf0] sm:$0xf]
  %v127 = vld [vmem:[%s1 + $0xf4] sm:$0xf]
  %v128 = vld [vmem:[%s1 + $0xf8] sm:$0xf]
  %v129 = vld [vmem:[%s1 + $0xfc] sm:$0xf]
  %v130 = vld [vmem:[%s1 + $0x100] sm:$0xf]
  %v131 = vld [vmem:[%s1 + $0x104] sm:$0xf]
  %v132 = vld [vmem:[%s1 + $0x108] sm:$0xf]
  %v133 = vld [vmem:[%s1 + $0x10c] sm:$0xf]
  %v134 = vld [vmem:[%s1 + $0x110] sm:$0xf]
  %v135 = vld [vmem:[%s1 + $0x114] sm:$0xf]
  %v136 = vld [vmem:[%s1 + $0x118] sm:$0xf]
  %v137 = vld [vmem:[%s1 + $0x11c] sm:$0xf]
  %v186 = vunpack.c.l.b16 %v18
  %v187 = vunpack.c.h.b16 %v18
  %v188 = vunpack.c.l.b16 %v19
  %v189 = vunpack.c.h.b16 %v19
  %v190 = vunpack.c.l.b16 %v20
  %v191 = vunpack.c.l.b16 %v21
  %v192 = vunpack.c.h.b16 %v21
  %v193 = vunpack.c.l.b16 %v22
  %v194 = vunpack.c.h.b16 %v22
  %v195 = vunpack.c.l.b16 %v23
  %v196 = vunpack.c.l.b16 %v24
  %v197 = vunpack.c.h.b16 %v24
  %v198 = vunpack.c.l.b16 %v25
  %v199 = vunpack.c.h.b16 %v25
  %v200 = vunpack.c.l.b16 %v26
  %v201 = vunpack.c.l.b16 %v27
  %v202 = vunpack.c.h.b16 %v27
  %v203 = vunpack.c.l.b16 %v28
  %v204 = vunpack.c.h.b16 %v28
  %v205 = vunpack.c.l.b16 %v29
  %v206 = vunpack.c.l.b16 %v30
  %v207 = vunpack.c.h.b16 %v30
  %v208 = vunpack.c.l.b16 %v31
  %v209 = vunpack.c.h.b16 %v31
  %v210 = vunpack.c.l.b16 %v32
  %v211 = vunpack.c.l.b16 %v33
  %v212 = vunpack.c.h.b16 %v33
  %v213 = vunpack.c.l.b16 %v34
  %v214 = vunpack.c.h.b16 %v34
  %v215 = vunpack.c.l.b16 %v35
  %v216 = vunpack.c.l.b16 %v36
  %v217 = vunpack.c.h.b16 %v36
  %v218 = vunpack.c.l.b16 %v37
  %v219 = vunpack.c.h.b16 %v37
  %v220 = vunpack.c.l.b16 %v38
  %v221 = vunpack.c.l.b16 %v39
  %v222 = vunpack.c.h.b16 %v39
  %v223 = vunpack.c.l.b16 %v40
  %v224 = vunpack.c.h.b16 %v40
  %v225 = vunpack.c.l.b16 %v41
  %v226 = vunpack.c.l.b16 %v42
  %v227 = vunpack.c.h.b16 %v42
  %v228 = vunpack.c.l.b16 %v43
  %v229 = vunpack.c.h.b16 %v43
  %v230 = vunpack.c.l.b16 %v44
  %v231 = vunpack.c.l.b16 %v45
  %v232 = vunpack.c.h.b16 %v45
  %v233 = vunpack.c.l.b16 %v46
  %v234 = vunpack.c.h.b16 %v46
  %v235 = vunpack.c.l.b16 %v47
  %v236 = vunpack.c.l.b16 %v48
  %v237 = vunpack.c.h.b16 %v48
  %v238 = vunpack.c.l.b16 %v49
  %v239 = vunpack.c.h.b16 %v49
  %v240 = vunpack.c.l.b16 %v50
  %v241 = vunpack.c.l.b16 %v51
  %v242 = vunpack.c.h.b16 %v51
  %v243 = vunpack.c.l.b16 %v52
  %v244 = vunpack.c.h.b16 %v52
  %v245 = vunpack.c.l.b16 %v53
  %v246 = vunpack.c.l.b16 %v54
  %v247 = vunpack.c.h.b16 %v54
  %v248 = vunpack.c.l.b16 %v55
  %v249 = vunpack.c.h.b16 %v55
  %v250 = vunpack.c.l.b16 %v56
  %v251 = vunpack.c.l.b16 %v57
  %v252 = vunpack.c.h.b16 %v57
  %v253 = vunpack.c.l.b16 %v58
  %v254 = vunpack.c.h.b16 %v58
  %v255 = vunpack.c.l.b16 %v59
  %v256 = vunpack.c.l.b16 %v60
  %v257 = vunpack.c.h.b16 %v60
  %v258 = vunpack.c.l.b16 %v61
  %v259 = vunpack.c.h.b16 %v61
  %v260 = vunpack.c.l.b16 %v62
  %v261 = vunpack.c.l.b16 %v63
  %v262 = vunpack.c.h.b16 %v63
  %v263 = vunpack.c.l.b16 %v64
  %v264 = vunpack.c.h.b16 %v64
  %v265 = vunpack.c.l.b16 %v65
  %v266 = vpack.c.b16 %v191, %v186
  %v267 = vpack.c.b16 %v192, %v187
  %v268 = vpack.c.b16 %v193, %v188
  %v269 = vpack.c.b16 %v194, %v189
  %v270 = vpack.c.b16 %v195, %v190
  %v271 = vpack.c.b16 %v201, %v196
  %v272 = vpack.c.b16 %v202, %v197
  %v273 = vpack.c.b16 %v203, %v198
  %v274 = vpack.c.b16 %v204, %v199
  %v275 = vpack.c.b16 %v205, %v200
  %v276 = vpack.c.b16 %v211, %v206
  %v277 = vpack.c.b16 %v212, %v207
  %v278 = vpack.c.b16 %v213, %v208
  %v279 = vpack.c.b16 %v214, %v209
  %v280 = vpack.c.b16 %v215, %v210
  %v281 = vpack.c.b16 %v221, %v216
  %v282 = vpack.c.b16 %v222, %v217
  %v283 = vpack.c.b16 %v223, %v218
  %v284 = vpack.c.b16 %v224, %v219
  %v285 = vpack.c.b16 %v225, %v220
  %v286 = vpack.c.b16 %v231, %v226
  %v287 = vpack.c.b16 %v232, %v227
  %v288 = vpack.c.b16 %v233, %v228
  %v289 = vpack.c.b16 %v234, %v229
  %v290 = vpack.c.b16 %v235, %v230
  %v291 = vpack.c.b16 %v241, %v236
  %v292 = vpack.c.b16 %v242, %v237
  %v293 = vpack.c.b16 %v243, %v238
  %v294 = vpack.c.b16 %v244, %v239
  %v295 = vpack.c.b16 %v245, %v240
  %v296 = vpack.c.b16 %v251, %v246
  %v297 = vpack.c.b16 %v252, %v247
  %v298 = vpack.c.b16 %v253, %v248
  %v299 = vpack.c.b16 %v254, %v249
  %v300 = vpack.c.b16 %v255, %v250
  %v301 = vpack.c.b16 %v261, %v256
  %v302 = vpack.c.b16 %v262, %v257
  %v303 = vpack.c.b16 %v263, %v258
  %v304 = vpack.c.b16 %v264, %v259
  %v305 = vpack.c.b16 %v265, %v260
  %v410 = vunpack.c.l.b16 %v66
  %v411 = vunpack.c.l.b16 %v67
  %v412 = vunpack.c.l.b16 %v68
  %v413 = vunpack.c.l.b16 %v69
  %v414 = vunpack.c.l.b16 %v70
  %v415 = vunpack.c.l.b16 %v71
  %v416 = vunpack.c.l.b16 %v72
  %v417 = vunpack.c.l.b16 %v73
  %v418 = vunpack.c.l.b16 %v74
  %v419 = vunpack.c.l.b16 %v75
  %v420 = vunpack.c.l.b16 %v76
  %v421 = vunpack.c.l.b16 %v77
  %v422 = vunpack.c.l.b16 %v78
  %v423 = vunpack.c.l.b16 %v79
  %v424 = vunpack.c.l.b16 %v80
  %v425 = vunpack.c.l.b16 %v81
  %v426 = vunpack.c.l.b16 %v82
  %v427 = vunpack.c.l.b16 %v83
  %v428 = vunpack.c.l.b16 %v84
  %v429 = vunpack.c.l.b16 %v85
  %v430 = vunpack.c.l.b16 %v86
  %v431 = vunpack.c.l.b16 %v87
  %v432 = vunpack.c.l.b16 %v88
  %v433 = vunpack.c.l.b16 %v89
  %v434 = vunpack.c.l.b16 %v90
  %v435 = vunpack.c.l.b16 %v91
  %v436 = vunpack.c.l.b16 %v92
  %v437 = vunpack.c.l.b16 %v93
  %v438 = vunpack.c.l.b16 %v94
  %v439 = vunpack.c.l.b16 %v95
  %v440 = vunpack.c.l.b16 %v96
  %v441 = vunpack.c.l.b16 %v97
  %v442 = vunpack.c.l.b16 %v98
  %v443 = vunpack.c.l.b16 %v99
  %v444 = vunpack.c.l.b16 %v100
  %v445 = vunpack.c.l.b16 %v101
  %v446 = vunpack.c.l.b16 %v102
  %v447 = vunpack.c.l.b16 %v103
  %v448 = vunpack.c.l.b16 %v104
  %v449 = vunpack.c.l.b16 %v105
  %v450 = vunpack.c.l.b16 %v106
  %v451 = vunpack.c.l.b16 %v107
  %v452 = vunpack.c.l.b16 %v108
  %v453 = vunpack.c.l.b16 %v109
  %v454 = vunpack.c.l.b16 %v110
  %v455 = vunpack.c.l.b16 %v111
  %v456 = vunpack.c.l.b16 %v112
  %v457 = vunpack.c.l.b16 %v113
  %v458 = vunpack.c.l.b16 %v114
  %v459 = vunpack.c.l.b16 %v115
  %v460 = vunpack.c.l.b16 %v116
  %v461 = vunpack.c.l.b16 %v117
  %v462 = vunpack.c.l.b16 %v118
  %v463 = vunpack.c.l.b16 %v119
  %v464 = vunpack.c.l.b16 %v120
  %v465 = vunpack.c.l.b16 %v121
  %v466 = vunpack.c.l.b16 %v122
  %v467 = vunpack.c.l.b16 %v123
  %v468 = vunpack.c.l.b16 %v124
  %v469 = vunpack.c.l.b16 %v125
  %v470 = vunpack.c.l.b16 %v126
  %v471 = vunpack.c.l.b16 %v127
  %v472 = vunpack.c.l.b16 %v128
  %v473 = vunpack.c.l.b16 %v129
  %v474 = vunpack.c.l.b16 %v130
  %v475 = vunpack.c.l.b16 %v131
  %v476 = vunpack.c.l.b16 %v132
  %v477 = vunpack.c.l.b16 %v133
  %v478 = vunpack.c.l.b16 %v134
  %v479 = vunpack.c.l.b16 %v135
  %v480 = vunpack.c.l.b16 %v136
  %v481 = vunpack.c.l.b16 %v137
  %v482 = vpack.c.b16 %v411, %v410
  %v483 = vpack.c.b16 %v413, %v412
  %v484 = vpack.c.b16 %v415, %v414
  %v485 = vpack.c.b16 %v417, %v416
  %v486 = vpack.c.b16 %v419, %v418
  %v487 = vpack.c.b16 %v421, %v420
  %v488 = vpack.c.b16 %v423, %v422
  %v489 = vpack.c.b16 %v425, %v424
  %v490 = vpack.c.b16 %v427, %v426
  %v491 = vpack.c.b16 %v429, %v428
  %v492 = vpack.c.b16 %v431, %v430
  %v493 = vpack.c.b16 %v433, %v432
  %v494 = vpack.c.b16 %v435, %v434
  %v495 = vpack.c.b16 %v437, %v436
  %v496 = vpack.c.b16 %v439, %v438
  %v497 = vpack.c.b16 %v441, %v440
  %v498 = vpack.c.b16 %v443, %v442
  %v499 = vpack.c.b16 %v445, %v444
  %v500 = vpack.c.b16 %v447, %v446
  %v501 = vpack.c.b16 %v449, %v448
  %v502 = vpack.c.b16 %v451, %v450
  %v503 = vpack.c.b16 %v453, %v452
  %v504 = vpack.c.b16 %v455, %v454
  %v505 = vpack.c.b16 %v457, %v456
  %v506 = vpack.c.b16 %v459, %v458
  %v507 = vpack.c.b16 %v461, %v460
  %v508 = vpack.c.b16 %v463, %v462
  %v509 = vpack.c.b16 %v465, %v464
  %v510 = vpack.c.b16 %v467, %v466
  %v511 = vpack.c.b16 %v469, %v468
  %v512 = vpack.c.b16 %v471, %v470
  %v513 = vpack.c.b16 %v473, %v472
  %v514 = vpack.c.b16 %v475, %v474
  %v515 = vpack.c.b16 %v477, %v476
  %v516 = vpack.c.b16 %v479, %v478
  %v517 = vpack.c.b16 %v481, %v480
  %vm554 = vcmask 523264
  %v556 = vsel %vm554, %v270, 0
  %v559 = vsel %vm554, %v275, 0
  %v562 = vsel %vm554, %v280, 0
  %v565 = vsel %vm554, %v285, 0
  %v568 = vsel %vm554, %v290, 0
  %v571 = vsel %vm554, %v295, 0
  %v574 = vsel %vm554, %v300, 0
  %v577 = vsel %vm554, %v305, 0
  %579 = vmatprep.subr.bf16.mxu0 0
  %580 = vmatpush1.bf16.msra.mxu0 %v489
  %581 = vmatprep.subr.bf16.mxu0 0
  %582 = vmatpush1.bf16.msra.mxu0 %v488
  %583 = vmatprep.subr.bf16.mxu0 0
  %584 = vmatpush1.bf16.msra.mxu0 %v487
  %585 = vmatprep.subr.bf16.mxu0 0
  %586 = vmatpush1.bf16.msra.mxu0 %v486
  %587 = vmatprep.subr.bf16.mxu0 0
  %588 = vmatpush1.bf16.msra.mxu0 %v485
  %589 = vmatprep.subr.bf16.mxu0 0
  %590 = vmatpush1.bf16.msra.mxu0 %v484
  %591 = vmatprep.subr.bf16.mxu0 0
  %592 = vmatpush1.bf16.msra.mxu0 %v483
  %593 = vmatprep.subr.bf16.mxu0 0
  %594 = vmatpush1.bf16.msra.mxu0 %v482
  %595 = vmatprep.subr.bf16.mxu0 0
  %596 = vmatpush2.bf16.msra.mxu0 %v497
  %597 = vmatprep.subr.bf16.mxu0 0
  %598 = vmatpush2.bf16.msra.mxu0 %v496
  %599 = vmatprep.subr.bf16.mxu0 0
  %600 = vmatpush2.bf16.msra.mxu0 %v495
  %601 = vmatprep.subr.bf16.mxu0 0
  %602 = vmatpush2.bf16.msra.mxu0 %v494
  %603 = vmatprep.subr.bf16.mxu0 0
  %604 = vmatpush2.bf16.msra.mxu0 %v493
  %605 = vmatprep.subr.bf16.mxu0 0
  %606 = vmatpush2.bf16.msra.mxu0 %v492
  %607 = vmatprep.subr.bf16.mxu0 0
  %608 = vmatpush2.bf16.msra.mxu0 %v491
  %609 = vmatprep.subr.bf16.mxu0 0
  %610 = vmatpush2.bf16.msra.mxu0 %v490
  %611 = vmatprep.mubr.bf16.mxu0 %v267
  %612 = vmatmul.mubr.bf16.gmra.mxu0 %v266
  %v613 = vpop.f32.mrf.mxu0
  %v614 = vadd.f32 0.0, %v613
  %v615 = vpop.f32.mrf.mxu0
  %v616 = vpop.f32.mrf.mxu0
  %v617 = vadd.f32 0.0, %v616
  %v618 = vpop.f32.mrf.mxu0
  %619 = vmatprep.mubr.bf16.mxu0 %v272
  %620 = vmatmul.mubr.bf16.gmra.mxu0 %v271
  %v621 = vpop.f32.mrf.mxu0
  %v622 = vadd.f32 0.0, %v621
  %v623 = vpop.f32.mrf.mxu0
  %v624 = vpop.f32.mrf.mxu0
  %v625 = vadd.f32 0.0, %v624
  %v626 = vpop.f32.mrf.mxu0
  %627 = vmatprep.mubr.bf16.mxu0 %v277
  %628 = vmatmul.mubr.bf16.gmra.mxu0 %v276
  %v629 = vpop.f32.mrf.mxu0
  %v630 = vadd.f32 0.0, %v629
  %v631 = vpop.f32.mrf.mxu0
  %v632 = vpop.f32.mrf.mxu0
  %v633 = vadd.f32 0.0, %v632
  %v634 = vpop.f32.mrf.mxu0
  %635 = vmatprep.mubr.bf16.mxu0 %v282
  %636 = vmatmul.mubr.bf16.gmra.mxu0 %v281
  %v637 = vpop.f32.mrf.mxu0
  %v638 = vadd.f32 0.0, %v637
  %v639 = vpop.f32.mrf.mxu0
  %v640 = vpop.f32.mrf.mxu0
  %v641 = vadd.f32 0.0, %v640
  %v642 = vpop.f32.mrf.mxu0
  %643 = vmatprep.mubr.bf16.mxu0 %v287
  %644 = vmatmul.mubr.bf16.gmra.mxu0 %v286
  %v645 = vpop.f32.mrf.mxu0
  %v646 = vadd.f32 0.0, %v645
  %v647 = vpop.f32.mrf.mxu0
  %v648 = vpop.f32.mrf.mxu0
  %v649 = vadd.f32 0.0, %v648
  %v650 = vpop.f32.mrf.mxu0
  %651 = vmatprep.mubr.bf16.mxu0 %v292
  %652 = vmatmul.mubr.bf16.gmra.mxu0 %v291
  %v653 = vpop.f32.mrf.mxu0
  %v654 = vadd.f32 0.0, %v653
  %v655 = vpop.f32.mrf.mxu0
  %v656 = vpop.f32.mrf.mxu0
  %v657 = vadd.f32 0.0, %v656
  %v658 = vpop.f32.mrf.mxu0
  %659 = vmatprep.mubr.bf16.mxu0 %v297
  %660 = vmatmul.mubr.bf16.gmra.mxu0 %v296
  %v661 = vpop.f32.mrf.mxu0
  %v662 = vadd.f32 0.0, %v661
  %v663 = vpop.f32.mrf.mxu0
  %v664 = vpop.f32.mrf.mxu0
  %v665 = vadd.f32 0.0, %v664
  %v666 = vpop.f32.mrf.mxu0
  %667 = vmatprep.mubr.bf16.mxu0 %v302
  %668 = vmatmul.mubr.bf16.gmra.mxu0 %v301
  %v669 = vpop.f32.mrf.mxu0
  %v670 = vadd.f32 0.0, %v669
  %v671 = vpop.f32.mrf.mxu0
  %v672 = vpop.f32.mrf.mxu0
  %v673 = vadd.f32 0.0, %v672
  %v674 = vpop.f32.mrf.mxu0
  %675 = vdwg.mxu0
  %676 = vmatprep.subr.bf16.mxu0 0
  %677 = vmatpush1.bf16.msra.mxu0 %v505
  %678 = vmatprep.subr.bf16.mxu0 0
  %679 = vmatpush1.bf16.msra.mxu0 %v504
  %680 = vmatprep.subr.bf16.mxu0 0
  %681 = vmatpush1.bf16.msra.mxu0 %v503
  %682 = vmatprep.subr.bf16.mxu0 0
  %683 = vmatpush1.bf16.msra.mxu0 %v502
  %684 = vmatprep.subr.bf16.mxu0 0
  %685 = vmatpush1.bf16.msra.mxu0 %v501
  %686 = vmatprep.subr.bf16.mxu0 0
  %687 = vmatpush1.bf16.msra.mxu0 %v500
  %688 = vmatprep.subr.bf16.mxu0 0
  %689 = vmatpush1.bf16.msra.mxu0 %v499
  %690 = vmatprep.subr.bf16.mxu0 0
  %691 = vmatpush1.bf16.msra.mxu0 %v498
  %692 = vmatprep.subr.bf16.mxu0 0
  %693 = vmatpush2.bf16.msra.mxu0 %v513
  %694 = vmatprep.subr.bf16.mxu0 0
  %695 = vmatpush2.bf16.msra.mxu0 %v512
  %696 = vmatprep.subr.bf16.mxu0 0
  %697 = vmatpush2.bf16.msra.mxu0 %v511
  %698 = vmatprep.subr.bf16.mxu0 0
  %699 = vmatpush2.bf16.msra.mxu0 %v510
  %700 = vmatprep.subr.bf16.mxu0 0
  %701 = vmatpush2.bf16.msra.mxu0 %v509
  %702 = vmatprep.subr.bf16.mxu0 0
  %703 = vmatpush2.bf16.msra.mxu0 %v508
  %704 = vmatprep.subr.bf16.mxu0 0
  %705 = vmatpush2.bf16.msra.mxu0 %v507
  %706 = vmatprep.subr.bf16.mxu0 0
  %707 = vmatpush2.bf16.msra.mxu0 %v506
  %708 = vmatprep.mubr.bf16.mxu0 %v269
  %709 = vmatmul.mubr.bf16.gmra.mxu0 %v268
  %v710 = vpop.f32.mrf.mxu0
  %v711 = vadd.f32 %v614, %v710
  %v712 = vpop.f32.mrf.mxu0
  %v713 = vpop.f32.mrf.mxu0
  %v714 = vadd.f32 %v617, %v713
  %v715 = vpop.f32.mrf.mxu0
  %716 = vmatprep.mubr.bf16.mxu0 %v274
  %717 = vmatmul.mubr.bf16.gmra.mxu0 %v273
  %v718 = vpop.f32.mrf.mxu0
  %v719 = vadd.f32 %v622, %v718
  %v720 = vpop.f32.mrf.mxu0
  %v721 = vpop.f32.mrf.mxu0
  %v722 = vadd.f32 %v625, %v721
  %v723 = vpop.f32.mrf.mxu0
  %724 = vmatprep.mubr.bf16.mxu0 %v279
  %725 = vmatmul.mubr.bf16.gmra.mxu0 %v278
  %v726 = vpop.f32.mrf.mxu0
  %v727 = vadd.f32 %v630, %v726
  %v728 = vpop.f32.mrf.mxu0
  %v729 = vpop.f32.mrf.mxu0
  %v730 = vadd.f32 %v633, %v729
  %v731 = vpop.f32.mrf.mxu0
  %732 = vmatprep.mubr.bf16.mxu0 %v284
  %733 = vmatmul.mubr.bf16.gmra.mxu0 %v283
  %v734 = vpop.f32.mrf.mxu0
  %v735 = vadd.f32 %v638, %v734
  %v736 = vpop.f32.mrf.mxu0
  %v737 = vpop.f32.mrf.mxu0
  %v738 = vadd.f32 %v641, %v737
  %v739 = vpop.f32.mrf.mxu0
  %740 = vmatprep.mubr.bf16.mxu0 %v289
  %741 = vmatmul.mubr.bf16.gmra.mxu0 %v288
  %v742 = vpop.f32.mrf.mxu0
  %v743 = vadd.f32 %v646, %v742
  %v744 = vpop.f32.mrf.mxu0
  %v745 = vpop.f32.mrf.mxu0
  %v746 = vadd.f32 %v649, %v745
  %v747 = vpop.f32.mrf.mxu0
  %748 = vmatprep.mubr.bf16.mxu0 %v294
  %749 = vmatmul.mubr.bf16.gmra.mxu0 %v293
  %v750 = vpop.f32.mrf.mxu0
  %v751 = vadd.f32 %v654, %v750
  %v752 = vpop.f32.mrf.mxu0
  %v753 = vpop.f32.mrf.mxu0
  %v754 = vadd.f32 %v657, %v753
  %v755 = vpop.f32.mrf.mxu0
  %756 = vmatprep.mubr.bf16.mxu0 %v299
  %757 = vmatmul.mubr.bf16.gmra.mxu0 %v298
  %v758 = vpop.f32.mrf.mxu0
  %v759 = vadd.f32 %v662, %v758
  %v760 = vpop.f32.mrf.mxu0
  %v761 = vpop.f32.mrf.mxu0
  %v762 = vadd.f32 %v665, %v761
  %v763 = vpop.f32.mrf.mxu0
  %764 = vmatprep.mubr.bf16.mxu0 %v304
  %765 = vmatmul.mubr.bf16.gmra.mxu0 %v303
  %v766 = vpop.f32.mrf.mxu0
  %v767 = vadd.f32 %v670, %v766
  %v768 = vpop.f32.mrf.mxu0
  %v769 = vpop.f32.mrf.mxu0
  %v770 = vadd.f32 %v673, %v769
  %v771 = vpop.f32.mrf.mxu0
  %772 = vdwg.mxu0
  %773 = vmatprep.subr.bf16.mxu0 0
  %774 = vmatpush1.bf16.msra.mxu0 0
  %775 = vmatprep.subr.bf16.mxu0 0
  %776 = vmatpush1.bf16.msra.mxu0 0
  %777 = vmatprep.subr.bf16.mxu0 0
  %778 = vmatpush1.bf16.msra.mxu0 0
  %779 = vmatprep.subr.bf16.mxu0 0
  %780 = vmatpush1.bf16.msra.mxu0 0
  %781 = vmatprep.subr.bf16.mxu0 0
  %782 = vmatpush1.bf16.msra.mxu0 %v517
  %783 = vmatprep.subr.bf16.mxu0 0
  %784 = vmatpush1.bf16.msra.mxu0 %v516
  %785 = vmatprep.subr.bf16.mxu0 0
  %786 = vmatpush1.bf16.msra.mxu0 %v515
  %787 = vmatprep.subr.bf16.mxu0 0
  %788 = vmatpush1.bf16.msra.mxu0 %v514
  %789 = vmatprep.subr.bf16.mxu0 0
  %790 = vmatpush2.bf16.msra.mxu0 0
  %791 = vmatprep.subr.bf16.mxu0 0
  %792 = vmatpush2.bf16.msra.mxu0 0
  %793 = vmatprep.subr.bf16.mxu0 0
  %794 = vmatpush2.bf16.msra.mxu0 0
  %795 = vmatprep.subr.bf16.mxu0 0
  %796 = vmatpush2.bf16.msra.mxu0 0
  %797 = vmatprep.subr.bf16.mxu0 0
  %798 = vmatpush2.bf16.msra.mxu0 0
  %799 = vmatprep.subr.bf16.mxu0 0
  %800 = vmatpush2.bf16.msra.mxu0 0
  %801 = vmatprep.subr.bf16.mxu0 0
  %802 = vmatpush2.bf16.msra.mxu0 0
  %803 = vmatprep.subr.bf16.mxu0 0
  %804 = vmatpush2.bf16.msra.mxu0 0
  %805 = vmatprep.mubr.bf16.mxu0 0
  %806 = vmatmul.mubr.bf16.gmra.mxu0 %v556
  %v807 = vpop.f32.mrf.mxu0
  %v808 = vadd.f32 %v711, %v807
  %v809 = vpop.f32.mrf.mxu0
  %v810 = vpop.f32.mrf.mxu0
  %v811 = vadd.f32 %v714, %v810
  %v812 = vpop.f32.mrf.mxu0
  %813 = vmatprep.mubr.bf16.mxu0 0
  %814 = vmatmul.mubr.bf16.gmra.mxu0 %v559
  %v815 = vpop.f32.mrf.mxu0
  %v816 = vadd.f32 %v719, %v815
  %v817 = vpop.f32.mrf.mxu0
  %v818 = vpop.f32.mrf.mxu0
  %v819 = vadd.f32 %v722, %v818
  %v820 = vpop.f32.mrf.mxu0
  %821 = vmatprep.mubr.bf16.mxu0 0
  %822 = vmatmul.mubr.bf16.gmra.mxu0 %v562
  %v823 = vpop.f32.mrf.mxu0
  %v824 = vadd.f32 %v727, %v823
  %v825 = vpop.f32.mrf.mxu0
  %v826 = vpop.f32.mrf.mxu0
  %v827 = vadd.f32 %v730, %v826
  %v828 = vpop.f32.mrf.mxu0
  %829 = vmatprep.mubr.bf16.mxu0 0
  %830 = vmatmul.mubr.bf16.gmra.mxu0 %v565
  %v831 = vpop.f32.mrf.mxu0
  %v832 = vadd.f32 %v735, %v831
  %v833 = vpop.f32.mrf.mxu0
  %v834 = vpop.f32.mrf.mxu0
  %v835 = vadd.f32 %v738, %v834
  %v836 = vpop.f32.mrf.mxu0
  %837 = vmatprep.mubr.bf16.mxu0 0
  %838 = vmatmul.mubr.bf16.gmra.mxu0 %v568
  %v839 = vpop.f32.mrf.mxu0
  %v840 = vadd.f32 %v743, %v839
  %v841 = vpop.f32.mrf.mxu0
  %v842 = vpop.f32.mrf.mxu0
  %v843 = vadd.f32 %v746, %v842
  %v844 = vpop.f32.mrf.mxu0
  %845 = vmatprep.mubr.bf16.mxu0 0
  %846 = vmatmul.mubr.bf16.gmra.mxu0 %v571
  %v847 = vpop.f32.mrf.mxu0
  %v848 = vadd.f32 %v751, %v847
  %v849 = vpop.f32.mrf.mxu0
  %v850 = vpop.f32.mrf.mxu0
  %v851 = vadd.f32 %v754, %v850
  %v852 = vpop.f32.mrf.mxu0
  %853 = vmatprep.mubr.bf16.mxu0 0
  %854 = vmatmul.mubr.bf16.gmra.mxu0 %v574
  %v855 = vpop.f32.mrf.mxu0
  %v856 = vadd.f32 %v759, %v855
  %v857 = vpop.f32.mrf.mxu0
  %v858 = vpop.f32.mrf.mxu0
  %v859 = vadd.f32 %v762, %v858
  %v860 = vpop.f32.mrf.mxu0
  %861 = vmatprep.mubr.bf16.mxu0 0
  %862 = vmatmul.mubr.bf16.gmra.mxu0 %v577
  %v863 = vpop.f32.mrf.mxu0
  %v864 = vadd.f32 %v767, %v863
  %v865 = vpop.f32.mrf.mxu0
  %v866 = vpop.f32.mrf.mxu0
  %v867 = vadd.f32 %v770, %v866
  %v868 = vpop.f32.mrf.mxu0
  %869 = vdwg.mxu0
  %vm870 = vcmask 408576
  %v871 = vsel %vm870, %v808, 0.0
  %872 = vadd.xlane.f32.xlu0 %v871
  %v873 = vpop.xlane.xlu0 %872
  %v874 = vsel %vm870, %v811, 0.0
  %875 = vadd.xlane.f32.xlu0 %v874
  %v876 = vpop.xlane.xlu0 %875
  %v877 = vsel %vm870, %v816, 0.0
  %878 = vadd.xlane.f32.xlu0 %v877
  %v879 = vpop.xlane.xlu0 %878
  %v880 = vsel %vm870, %v819, 0.0
  %881 = vadd.xlane.f32.xlu0 %v880
  %v882 = vpop.xlane.xlu0 %881
  %v883 = vsel %vm870, %v824, 0.0
  %884 = vadd.xlane.f32.xlu0 %v883
  %v885 = vpop.xlane.xlu0 %884
  %v886 = vsel %vm870, %v827, 0.0
  %887 = vadd.xlane.f32.xlu0 %v886
  %v888 = vpop.xlane.xlu0 %887
  %v889 = vsel %vm870, %v832, 0.0
  %890 = vadd.xlane.f32.xlu0 %v889
  %v891 = vpop.xlane.xlu0 %890
  %v892 = vsel %vm870, %v835, 0.0
  %893 = vadd.xlane.f32.xlu0 %v892
  %v894 = vpop.xlane.xlu0 %893
  %v895 = vsel %vm870, %v840, 0.0
  %896 = vadd.xlane.f32.xlu0 %v895
  %v897 = vpop.xlane.xlu0 %896
  %v898 = vsel %vm870, %v843, 0.0
  %899 = vadd.xlane.f32.xlu0 %v898
  %v900 = vpop.xlane.xlu0 %899
  %v901 = vsel %vm870, %v848, 0.0
  %902 = vadd.xlane.f32.xlu0 %v901
  %v903 = vpop.xlane.xlu0 %902
  %v904 = vsel %vm870, %v851, 0.0
  %905 = vadd.xlane.f32.xlu0 %v904
  %v906 = vpop.xlane.xlu0 %905
  %v907 = vsel %vm870, %v856, 0.0
  %908 = vadd.xlane.f32.xlu0 %v907
  %v909 = vpop.xlane.xlu0 %908
  %v910 = vsel %vm870, %v859, 0.0
  %911 = vadd.xlane.f32.xlu0 %v910
  %v912 = vpop.xlane.xlu0 %911
  %v913 = vsel %vm870, %v864, 0.0
  %914 = vadd.xlane.f32.xlu0 %v913
  %v915 = vpop.xlane.xlu0 %914
  %v916 = vsel %vm870, %v867, 0.0
  %917 = vadd.xlane.f32.xlu0 %v916
  %v918 = vpop.xlane.xlu0 %917
  %v919 = vrcp.pop 50.0
  %v920 = vmul.f32 %v873, %v919
  %v921 = vmul.f32 %v876, %v919
  %v922 = vmul.f32 %v879, %v919
  %v923 = vmul.f32 %v882, %v919
  %v924 = vmul.f32 %v885, %v919
  %v925 = vmul.f32 %v888, %v919
  %v926 = vmul.f32 %v891, %v919
  %v927 = vmul.f32 %v894, %v919
  %v928 = vmul.f32 %v897, %v919
  %v929 = vmul.f32 %v900, %v919
  %v930 = vmul.f32 %v903, %v919
  %v931 = vmul.f32 %v906, %v919
  %v932 = vmul.f32 %v909, %v919
  %v933 = vmul.f32 %v912, %v919
  %v934 = vmul.f32 %v915, %v919
  %v935 = vmul.f32 %v918, %v919
  %v936 = vmul.f32 %v808, %v808
  %v937 = vmul.f32 %v811, %v811
  %v938 = vmul.f32 %v816, %v816
  %v939 = vmul.f32 %v819, %v819
  %v940 = vmul.f32 %v824, %v824
  %v941 = vmul.f32 %v827, %v827
  %v942 = vmul.f32 %v832, %v832
  %v943 = vmul.f32 %v835, %v835
  %v944 = vmul.f32 %v840, %v840
  %v945 = vmul.f32 %v843, %v843
  %v946 = vmul.f32 %v848, %v848
  %v947 = vmul.f32 %v851, %v851
  %v948 = vmul.f32 %v856, %v856
  %v949 = vmul.f32 %v859, %v859
  %v950 = vmul.f32 %v864, %v864
  %v951 = vmul.f32 %v867, %v867
  %v952 = vsel %vm870, %v936, 0.0
  %953 = vadd.xlane.f32.xlu0 %v952
  %v954 = vpop.xlane.xlu0 %953
  %v955 = vsel %vm870, %v937, 0.0
  %956 = vadd.xlane.f32.xlu0 %v955
  %v957 = vpop.xlane.xlu0 %956
  %v958 = vsel %vm870, %v938, 0.0
  %959 = vadd.xlane.f32.xlu0 %v958
  %v960 = vpop.xlane.xlu0 %959
  %v961 = vsel %vm870, %v939, 0.0
  %962 = vadd.xlane.f32.xlu0 %v961
  %v963 = vpop.xlane.xlu0 %962
  %v964 = vsel %vm870, %v940, 0.0
  %965 = vadd.xlane.f32.xlu0 %v964
  %v966 = vpop.xlane.xlu0 %965
  %v967 = vsel %vm870, %v941, 0.0
  %968 = vadd.xlane.f32.xlu0 %v967
  %v969 = vpop.xlane.xlu0 %968
  %v970 = vsel %vm870, %v942, 0.0
  %971 = vadd.xlane.f32.xlu0 %v970
  %v972 = vpop.xlane.xlu0 %971
  %v973 = vsel %vm870, %v943, 0.0
  %974 = vadd.xlane.f32.xlu0 %v973
  %v975 = vpop.xlane.xlu0 %974
  %v976 = vsel %vm870, %v944, 0.0
  %977 = vadd.xlane.f32.xlu0 %v976
  %v978 = vpop.xlane.xlu0 %977
  %v979 = vsel %vm870, %v945, 0.0
  %980 = vadd.xlane.f32.xlu0 %v979
  %v981 = vpop.xlane.xlu0 %980
  %v982 = vsel %vm870, %v946, 0.0
  %983 = vadd.xlane.f32.xlu0 %v982
  %v984 = vpop.xlane.xlu0 %983
  %v985 = vsel %vm870, %v947, 0.0
  %986 = vadd.xlane.f32.xlu0 %v985
  %v987 = vpop.xlane.xlu0 %986
  %v988 = vsel %vm870, %v948, 0.0
  %989 = vadd.xlane.f32.xlu0 %v988
  %v990 = vpop.xlane.xlu0 %989
  %v991 = vsel %vm870, %v949, 0.0
  %992 = vadd.xlane.f32.xlu0 %v991
  %v993 = vpop.xlane.xlu0 %992
  %v994 = vsel %vm870, %v950, 0.0
  %995 = vadd.xlane.f32.xlu0 %v994
  %v996 = vpop.xlane.xlu0 %995
  %v997 = vsel %vm870, %v951, 0.0
  %998 = vadd.xlane.f32.xlu0 %v997
  %v999 = vpop.xlane.xlu0 %998
  %v1000 = vmul.f32 %v954, %v919
  %v1001 = vmul.f32 %v957, %v919
  %v1002 = vmul.f32 %v960, %v919
  %v1003 = vmul.f32 %v963, %v919
  %v1004 = vmul.f32 %v966, %v919
  %v1005 = vmul.f32 %v969, %v919
  %v1006 = vmul.f32 %v972, %v919
  %v1007 = vmul.f32 %v975, %v919
  %v1008 = vmul.f32 %v978, %v919
  %v1009 = vmul.f32 %v981, %v919
  %v1010 = vmul.f32 %v984, %v919
  %v1011 = vmul.f32 %v987, %v919
  %v1012 = vmul.f32 %v990, %v919
  %v1013 = vmul.f32 %v993, %v919
  %v1014 = vmul.f32 %v996, %v919
  %v1015 = vmul.f32 %v999, %v919
  %v1016 = vmul.f32 %v920, %v920
  %v1017 = vmul.f32 %v921, %v921
  %v1018 = vmul.f32 %v922, %v922
  %v1019 = vmul.f32 %v923, %v923
  %v1020 = vmul.f32 %v924, %v924
  %v1021 = vmul.f32 %v925, %v925
  %v1022 = vmul.f32 %v926, %v926
  %v1023 = vmul.f32 %v927, %v927
  %v1024 = vmul.f32 %v928, %v928
  %v1025 = vmul.f32 %v929, %v929
  %v1026 = vmul.f32 %v930, %v930
  %v1027 = vmul.f32 %v931, %v931
  %v1028 = vmul.f32 %v932, %v932
  %v1029 = vmul.f32 %v933, %v933
  %v1030 = vmul.f32 %v934, %v934
  %v1031 = vmul.f32 %v935, %v935
  %v1032 = vsub.f32 %v1000, %v1016
  %v1033 = vsub.f32 %v1001, %v1017
  %v1034 = vsub.f32 %v1002, %v1018
  %v1035 = vsub.f32 %v1003, %v1019
  %v1036 = vsub.f32 %v1004, %v1020
  %v1037 = vsub.f32 %v1005, %v1021
  %v1038 = vsub.f32 %v1006, %v1022
  %v1039 = vsub.f32 %v1007, %v1023
  %v1040 = vsub.f32 %v1008, %v1024
  %v1041 = vsub.f32 %v1009, %v1025
  %v1042 = vsub.f32 %v1010, %v1026
  %v1043 = vsub.f32 %v1011, %v1027
  %v1044 = vsub.f32 %v1012, %v1028
  %v1045 = vsub.f32 %v1013, %v1029
  %v1046 = vsub.f32 %v1014, %v1030
  %v1047 = vsub.f32 %v1015, %v1031
  %v1048 = vmax.f32 %v1032, 0.0
  %v1049 = vmax.f32 %v1033, 0.0
  %v1050 = vmax.f32 %v1034, 0.0
  %v1051 = vmax.f32 %v1035, 0.0
  %v1052 = vmax.f32 %v1036, 0.0
  %v1053 = vmax.f32 %v1037, 0.0
  %v1054 = vmax.f32 %v1038, 0.0
  %v1055 = vmax.f32 %v1039, 0.0
  %v1056 = vmax.f32 %v1040, 0.0
  %v1057 = vmax.f32 %v1041, 0.0
  %v1058 = vmax.f32 %v1042, 0.0
  %v1059 = vmax.f32 %v1043, 0.0
  %v1060 = vmax.f32 %v1044, 0.0
  %v1061 = vmax.f32 %v1045, 0.0
  %v1062 = vmax.f32 %v1046, 0.0
  %v1063 = vmax.f32 %v1047, 0.0
  %v1064 = vld [vmem:[%s2] sm:$0xff]
  %v1065 = vld [vmem:[%s2 + $0x8] sm:$0xff]
  %v1066 = vld [vmem:[%s2 + $0x10] sm:$0xff]
  %v1067 = vld [vmem:[%s2 + $0x18] sm:$0xff]
  %v1068 = vld [vmem:[%s2 + $0x20] sm:$0xff]
  %v1069 = vld [vmem:[%s2 + $0x28] sm:$0xff]
  %v1070 = vld [vmem:[%s2 + $0x30] sm:$0xff]
  %v1071 = vld [vmem:[%s2 + $0x38] sm:$0xff]
  %v1072 = vld [vmem:[%s2 + $0x40] sm:$0xff]
  %v1073 = vld [vmem:[%s2 + $0x48] sm:$0xff]
  %v1074 = vld [vmem:[%s2 + $0x50] sm:$0xff]
  %v1075 = vld [vmem:[%s2 + $0x58] sm:$0xff]
  %v1076 = vld [vmem:[%s2 + $0x60] sm:$0xff]
  %v1077 = vld [vmem:[%s2 + $0x68] sm:$0xff]
  %v1078 = vld [vmem:[%s2 + $0x70] sm:$0xff]
  %v1079 = vld [vmem:[%s2 + $0x78] sm:$0xff]
  %v1080 = vadd.f32 %v1048, 1e-05
  %v1081 = vadd.f32 %v1049, 1e-05
  %v1082 = vadd.f32 %v1050, 1e-05
  %v1083 = vadd.f32 %v1051, 1e-05
  %v1084 = vadd.f32 %v1052, 1e-05
  %v1085 = vadd.f32 %v1053, 1e-05
  %v1086 = vadd.f32 %v1054, 1e-05
  %v1087 = vadd.f32 %v1055, 1e-05
  %v1088 = vadd.f32 %v1056, 1e-05
  %v1089 = vadd.f32 %v1057, 1e-05
  %v1090 = vadd.f32 %v1058, 1e-05
  %v1091 = vadd.f32 %v1059, 1e-05
  %v1092 = vadd.f32 %v1060, 1e-05
  %v1093 = vadd.f32 %v1061, 1e-05
  %v1094 = vadd.f32 %v1062, 1e-05
  %v1095 = vadd.f32 %v1063, 1e-05
  %v1096 = vrsqrt.pop %v1080
  %v1097 = vrsqrt.pop %v1081
  %v1098 = vrsqrt.pop %v1082
  %v1099 = vrsqrt.pop %v1083
  %v1100 = vrsqrt.pop %v1084
  %v1101 = vrsqrt.pop %v1085
  %v1102 = vrsqrt.pop %v1086
  %v1103 = vrsqrt.pop %v1087
  %v1104 = vrsqrt.pop %v1088
  %v1105 = vrsqrt.pop %v1089
  %v1106 = vrsqrt.pop %v1090
  %v1107 = vrsqrt.pop %v1091
  %v1108 = vrsqrt.pop %v1092
  %v1109 = vrsqrt.pop %v1093
  %v1110 = vrsqrt.pop %v1094
  %v1111 = vrsqrt.pop %v1095
  %v1112 = vmul.f32 %v1064, %v1096
  %v1113 = vmul.f32 %v1065, %v1097
  %v1114 = vmul.f32 %v1066, %v1098
  %v1115 = vmul.f32 %v1067, %v1099
  %v1116 = vmul.f32 %v1068, %v1100
  %v1117 = vmul.f32 %v1069, %v1101
  %v1118 = vmul.f32 %v1070, %v1102
  %v1119 = vmul.f32 %v1071, %v1103
  %v1120 = vmul.f32 %v1072, %v1104
  %v1121 = vmul.f32 %v1073, %v1105
  %v1122 = vmul.f32 %v1074, %v1106
  %v1123 = vmul.f32 %v1075, %v1107
  %v1124 = vmul.f32 %v1076, %v1108
  %v1125 = vmul.f32 %v1077, %v1109
  %v1126 = vmul.f32 %v1078, %v1110
  %v1127 = vmul.f32 %v1079, %v1111
  %v1128 = vld [vmem:[%s3] sm:$0xff]
  %v1129 = vld [vmem:[%s3 + $0x8] sm:$0xff]
  %v1130 = vld [vmem:[%s3 + $0x10] sm:$0xff]
  %v1131 = vld [vmem:[%s3 + $0x18] sm:$0xff]
  %v1132 = vld [vmem:[%s3 + $0x20] sm:$0xff]
  %v1133 = vld [vmem:[%s3 + $0x28] sm:$0xff]
  %v1134 = vld [vmem:[%s3 + $0x30] sm:$0xff]
  %v1135 = vld [vmem:[%s3 + $0x38] sm:$0xff]
  %v1136 = vld [vmem:[%s3 + $0x40] sm:$0xff]
  %v1137 = vld [vmem:[%s3 + $0x48] sm:$0xff]
  %v1138 = vld [vmem:[%s3 + $0x50] sm:$0xff]
  %v1139 = vld [vmem:[%s3 + $0x58] sm:$0xff]
  %v1140 = vld [vmem:[%s3 + $0x60] sm:$0xff]
  %v1141 = vld [vmem:[%s3 + $0x68] sm:$0xff]
  %v1142 = vld [vmem:[%s3 + $0x70] sm:$0xff]
  %v1143 = vld [vmem:[%s3 + $0x78] sm:$0xff]
  %v1144 = vmul.f32 %v920, %v1112
  %v1145 = vmul.f32 %v921, %v1113
  %v1146 = vmul.f32 %v922, %v1114
  %v1147 = vmul.f32 %v923, %v1115
  %v1148 = vmul.f32 %v924, %v1116
  %v1149 = vmul.f32 %v925, %v1117
  %v1150 = vmul.f32 %v926, %v1118
  %v1151 = vmul.f32 %v927, %v1119
  %v1152 = vmul.f32 %v928, %v1120
  %v1153 = vmul.f32 %v929, %v1121
  %v1154 = vmul.f32 %v930, %v1122
  %v1155 = vmul.f32 %v931, %v1123
  %v1156 = vmul.f32 %v932, %v1124
  %v1157 = vmul.f32 %v933, %v1125
  %v1158 = vmul.f32 %v934, %v1126
  %v1159 = vmul.f32 %v935, %v1127
  %v1160 = vsub.f32 %v1128, %v1144
  %v1161 = vsub.f32 %v1129, %v1145
  %v1162 = vsub.f32 %v1130, %v1146
  %v1163 = vsub.f32 %v1131, %v1147
  %v1164 = vsub.f32 %v1132, %v1148
  %v1165 = vsub.f32 %v1133, %v1149
  %v1166 = vsub.f32 %v1134, %v1150
  %v1167 = vsub.f32 %v1135, %v1151
  %v1168 = vsub.f32 %v1136, %v1152
  %v1169 = vsub.f32 %v1137, %v1153
  %v1170 = vsub.f32 %v1138, %v1154
  %v1171 = vsub.f32 %v1139, %v1155
  %v1172 = vsub.f32 %v1140, %v1156
  %v1173 = vsub.f32 %v1141, %v1157
  %v1174 = vsub.f32 %v1142, %v1158
  %v1175 = vsub.f32 %v1143, %v1159
  %1177 = vset.pattern.permute.xlu0 0
  %1178 = vperm.xlu0 %1177, %v1112
  %v1179 = vpop.permute.xlu0 %1178
  %1182 = vset.pattern.permute.xlu0 0
  %1183 = vperm.xlu0 %1182, %v1113
  %v1184 = vpop.permute.xlu0 %1183
  %1187 = vset.pattern.permute.xlu0 0
  %1188 = vperm.xlu0 %1187, %v1114
  %v1189 = vpop.permute.xlu0 %1188
  %1192 = vset.pattern.permute.xlu0 0
  %1193 = vperm.xlu0 %1192, %v1115
  %v1194 = vpop.permute.xlu0 %1193
  %1197 = vset.pattern.permute.xlu0 0
  %1198 = vperm.xlu0 %1197, %v1116
  %v1199 = vpop.permute.xlu0 %1198
  %1202 = vset.pattern.permute.xlu0 0
  %1203 = vperm.xlu0 %1202, %v1117
  %v1204 = vpop.permute.xlu0 %1203
  %1207 = vset.pattern.permute.xlu0 0
  %1208 = vperm.xlu0 %1207, %v1118
  %v1209 = vpop.permute.xlu0 %1208
  %1212 = vset.pattern.permute.xlu0 0
  %1213 = vperm.xlu0 %1212, %v1119
  %v1214 = vpop.permute.xlu0 %1213
  %1217 = vset.pattern.permute.xlu0 0
  %1218 = vperm.xlu0 %1217, %v1120
  %v1219 = vpop.permute.xlu0 %1218
  %1222 = vset.pattern.permute.xlu0 0
  %1223 = vperm.xlu0 %1222, %v1121
  %v1224 = vpop.permute.xlu0 %1223
  %1227 = vset.pattern.permute.xlu0 0
  %1228 = vperm.xlu0 %1227, %v1122
  %v1229 = vpop.permute.xlu0 %1228
  %1232 = vset.pattern.permute.xlu0 0
  %1233 = vperm.xlu0 %1232, %v1123
  %v1234 = vpop.permute.xlu0 %1233
  %1237 = vset.pattern.permute.xlu0 0
  %1238 = vperm.xlu0 %1237, %v1124
  %v1239 = vpop.permute.xlu0 %1238
  %1242 = vset.pattern.permute.xlu0 0
  %1243 = vperm.xlu0 %1242, %v1125
  %v1244 = vpop.permute.xlu0 %1243
  %1247 = vset.pattern.permute.xlu0 0
  %1248 = vperm.xlu0 %1247, %v1126
  %v1249 = vpop.permute.xlu0 %1248
  %1252 = vset.pattern.permute.xlu0 0
  %1253 = vperm.xlu0 %1252, %v1127
  %v1254 = vpop.permute.xlu0 %1253
  %v1256 = vmul.f32 %v808, %v1179
  %v1257 = vmul.f32 %v811, %v1184
  %v1258 = vmul.f32 %v816, %v1189
  %v1259 = vmul.f32 %v819, %v1194
  %v1260 = vmul.f32 %v824, %v1199
  %v1261 = vmul.f32 %v827, %v1204
  %v1262 = vmul.f32 %v832, %v1209
  %v1263 = vmul.f32 %v835, %v1214
  %v1264 = vmul.f32 %v840, %v1219
  %v1265 = vmul.f32 %v843, %v1224
  %v1266 = vmul.f32 %v848, %v1229
  %v1267 = vmul.f32 %v851, %v1234
  %v1268 = vmul.f32 %v856, %v1239
  %v1269 = vmul.f32 %v859, %v1244
  %v1270 = vmul.f32 %v864, %v1249
  %v1271 = vmul.f32 %v867, %v1254
  %1273 = vset.pattern.permute.xlu0 0
  %1274 = vperm.xlu0 %1273, %v1160
  %v1275 = vpop.permute.xlu0 %1274
  %1278 = vset.pattern.permute.xlu0 0
  %1279 = vperm.xlu0 %1278, %v1161
  %v1280 = vpop.permute.xlu0 %1279
  %1283 = vset.pattern.permute.xlu0 0
  %1284 = vperm.xlu0 %1283, %v1162
  %v1285 = vpop.permute.xlu0 %1284
  %1288 = vset.pattern.permute.xlu0 0
  %1289 = vperm.xlu0 %1288, %v1163
  %v1290 = vpop.permute.xlu0 %1289
  %1293 = vset.pattern.permute.xlu0 0
  %1294 = vperm.xlu0 %1293, %v1164
  %v1295 = vpop.permute.xlu0 %1294
  %1298 = vset.pattern.permute.xlu0 0
  %1299 = vperm.xlu0 %1298, %v1165
  %v1300 = vpop.permute.xlu0 %1299
  %1303 = vset.pattern.permute.xlu0 0
  %1304 = vperm.xlu0 %1303, %v1166
  %v1305 = vpop.permute.xlu0 %1304
  %1308 = vset.pattern.permute.xlu0 0
  %1309 = vperm.xlu0 %1308, %v1167
  %v1310 = vpop.permute.xlu0 %1309
  %1313 = vset.pattern.permute.xlu0 0
  %1314 = vperm.xlu0 %1313, %v1168
  %v1315 = vpop.permute.xlu0 %1314
  %1318 = vset.pattern.permute.xlu0 0
  %1319 = vperm.xlu0 %1318, %v1169
  %v1320 = vpop.permute.xlu0 %1319
  %1323 = vset.pattern.permute.xlu0 0
  %1324 = vperm.xlu0 %1323, %v1170
  %v1325 = vpop.permute.xlu0 %1324
  %1328 = vset.pattern.permute.xlu0 0
  %1329 = vperm.xlu0 %1328, %v1171
  %v1330 = vpop.permute.xlu0 %1329
  %1333 = vset.pattern.permute.xlu0 0
  %1334 = vperm.xlu0 %1333, %v1172
  %v1335 = vpop.permute.xlu0 %1334
  %1338 = vset.pattern.permute.xlu0 0
  %1339 = vperm.xlu0 %1338, %v1173
  %v1340 = vpop.permute.xlu0 %1339
  %1343 = vset.pattern.permute.xlu0 0
  %1344 = vperm.xlu0 %1343, %v1174
  %v1345 = vpop.permute.xlu0 %1344
  %1348 = vset.pattern.permute.xlu0 0
  %1349 = vperm.xlu0 %1348, %v1175
  %v1350 = vpop.permute.xlu0 %1349
  %v1352 = vadd.f32 %v1256, %v1275
  %v1353 = vadd.f32 %v1257, %v1280
  %v1354 = vadd.f32 %v1258, %v1285
  %v1355 = vadd.f32 %v1259, %v1290
  %v1356 = vadd.f32 %v1260, %v1295
  %v1357 = vadd.f32 %v1261, %v1300
  %v1358 = vadd.f32 %v1262, %v1305
  %v1359 = vadd.f32 %v1263, %v1310
  %v1360 = vadd.f32 %v1264, %v1315
  %v1361 = vadd.f32 %v1265, %v1320
  %v1362 = vadd.f32 %v1266, %v1325
  %v1363 = vadd.f32 %v1267, %v1330
  %v1364 = vadd.f32 %v1268, %v1335
  %v1365 = vadd.f32 %v1269, %v1340
  %v1366 = vadd.f32 %v1270, %v1345
  %v1367 = vadd.f32 %v1271, %v1350
  %v1368 = vmax.f32 %v1352, 0.0
  %v1369 = vmax.f32 %v1353, 0.0
  %v1370 = vmax.f32 %v1354, 0.0
  %v1371 = vmax.f32 %v1355, 0.0
  %v1372 = vmax.f32 %v1356, 0.0
  %v1373 = vmax.f32 %v1357, 0.0
  %v1374 = vmax.f32 %v1358, 0.0
  %v1375 = vmax.f32 %v1359, 0.0
  %v1376 = vmax.f32 %v1360, 0.0
  %v1377 = vmax.f32 %v1361, 0.0
  %v1378 = vmax.f32 %v1362, 0.0
  %v1379 = vmax.f32 %v1363, 0.0
  %v1380 = vmax.f32 %v1364, 0.0
  %v1381 = vmax.f32 %v1365, 0.0
  %v1382 = vmax.f32 %v1366, 0.0
  %v1383 = vmax.f32 %v1367, 0.0
  %v1384 = vpack.c.bf16 %v1369, %v1368
  %v1385 = vpack.c.bf16 %v1371, %v1370
  %v1386 = vpack.c.bf16 %v1373, %v1372
  %v1387 = vpack.c.bf16 %v1375, %v1374
  %v1388 = vpack.c.bf16 %v1377, %v1376
  %v1389 = vpack.c.bf16 %v1379, %v1378
  %v1390 = vpack.c.bf16 %v1381, %v1380
  %v1391 = vpack.c.bf16 %v1383, %v1382
  %v1400 = vunpack.c.l.b16 %v1384
  %v1401 = vunpack.c.h.b16 %v1384
  %v1402 = vunpack.c.l.b16 %v1385
  %v1403 = vunpack.c.h.b16 %v1385
  %v1404 = vunpack.c.l.b16 %v1386
  %v1405 = vunpack.c.h.b16 %v1386
  %v1406 = vunpack.c.l.b16 %v1387
  %v1407 = vunpack.c.h.b16 %v1387
  %v1408 = vunpack.c.l.b16 %v1388
  %v1409 = vunpack.c.h.b16 %v1388
  %v1410 = vunpack.c.l.b16 %v1389
  %v1411 = vunpack.c.h.b16 %v1389
  %v1412 = vunpack.c.l.b16 %v1390
  %v1413 = vunpack.c.h.b16 %v1390
  %v1414 = vunpack.c.l.b16 %v1391
  %v1415 = vunpack.c.h.b16 %v1391
  %v1416 = vpack.c.b16 %v1400, %v1400
  %v1417 = vpack.c.b16 %v1401, %v1401
  %v1418 = vpack.c.b16 %v1402, %v1402
  %v1419 = vpack.c.b16 %v1403, %v1403
  %v1420 = vpack.c.b16 %v1404, %v1404
  %v1421 = vpack.c.b16 %v1405, %v1405
  %v1422 = vpack.c.b16 %v1406, %v1406
  %v1423 = vpack.c.b16 %v1407, %v1407
  %v1424 = vpack.c.b16 %v1408, %v1408
  %v1425 = vpack.c.b16 %v1409, %v1409
  %v1426 = vpack.c.b16 %v1410, %v1410
  %v1427 = vpack.c.b16 %v1411, %v1411
  %v1428 = vpack.c.b16 %v1412, %v1412
  %v1429 = vpack.c.b16 %v1413, %v1413
  %v1430 = vpack.c.b16 %v1414, %v1414
  %v1431 = vpack.c.b16 %v1415, %v1415
  %vm1448 = vcmask 404480
  %1449 = vst.msk [vmem:[%s4] sm:$0xf] %vm1448, %v1416
  %1450 = vst.msk [vmem:[%s4 + $0x4] sm:$0xf] %vm1448, %v1417
  %1451 = vst.msk [vmem:[%s4 + $0x8] sm:$0xf] %vm1448, %v1418
  %1452 = vst.msk [vmem:[%s4 + $0xc] sm:$0xf] %vm1448, %v1419
  %1453 = vst.msk [vmem:[%s4 + $0x10] sm:$0xf] %vm1448, %v1420
  %1454 = vst.msk [vmem:[%s4 + $0x14] sm:$0xf] %vm1448, %v1421
  %1455 = vst.msk [vmem:[%s4 + $0x18] sm:$0xf] %vm1448, %v1422
  %1456 = vst.msk [vmem:[%s4 + $0x1c] sm:$0xf] %vm1448, %v1423
  %1457 = vst.msk [vmem:[%s4 + $0x20] sm:$0xf] %vm1448, %v1424
  %1458 = vst.msk [vmem:[%s4 + $0x24] sm:$0xf] %vm1448, %v1425
  %1459 = vst.msk [vmem:[%s4 + $0x28] sm:$0xf] %vm1448, %v1426
  %1460 = vst.msk [vmem:[%s4 + $0x2c] sm:$0xf] %vm1448, %v1427
  %1461 = vst.msk [vmem:[%s4 + $0x30] sm:$0xf] %vm1448, %v1428
  %1462 = vst.msk [vmem:[%s4 + $0x34] sm:$0xf] %vm1448, %v1429
  %1463 = vst.msk [vmem:[%s4 + $0x38] sm:$0xf] %vm1448, %v1430
  %1464 = vst.msk [vmem:[%s4 + $0x3c] sm:$0xf] %vm1448, %v1431
  // Predicated region
  $region18: #{autoencoder_forward.11} parent=0 // pred_check
    _
  $region19: #{autoencoder_forward.11} parent=0 // pred_check_branch
    %1466 = sbr.rel (0) target = $region21
  $region20: #{autoencoder_forward.11} parent=0 // pred_region
    _
  $region21: #{autoencoder_forward.11} parent=0 // pred_fallthru
    _
  // Predicated region
  $region22: #{autoencoder_forward.11} parent=0 // pred_check
    _
  $region23: #{autoencoder_forward.11} parent=0 // pred_check_branch
    %1468 = sbr.rel (0) target = $region25
  $region24: #{autoencoder_forward.11} parent=0 // pred_region
    _
  $region25: #{autoencoder_forward.11} parent=0 // pred_fallthru
    _

// kernel: autoencoder_forward.12
$region0: #{autoencoder_forward.12}
  #allocation0 [shape = 'u32[]', space=smem, size = 0x4, offset = 0x4, fixed_abs, tag = 'smem constant byte address 0x4 - core index']
  #allocation1 [shape = 'u32[144,128]{1,0:T(1,128)}', space=vmem, size = 0x12000, scoped, tag = 'internal scratch']
  %s0 = inlined_call_operand.vmem [shape: bf16[64,1152], index: 0, kind: input, shape index: {}]
  %s1 = inlined_call_operand.vmem [shape: bf16[1152,98], index: 1, kind: input, shape index: {}]
  %s2 = inlined_call_operand.vmem [shape: f32[64,1], index: 2, kind: input, shape index: {}]
  %s3 = inlined_call_operand.vmem [shape: f32[64,1], index: 3, kind: input, shape index: {}]
  %s4 = inlined_call_operand.vmem [shape: bf16[64,98], index: 4, kind: output, shape index: {}]
  %s5 = sld [smem:[#allocation0]]
  $region26: #{autoencoder_forward.12} parent=0
    _
  %s7 = ssub.s32 1, %s5
  %s8 = scalar_select 0, %s7, %s5
  // Predicated region
  $region2: #{autoencoder_forward.12} parent=0 // pred_check
    _
  $region3: #{autoencoder_forward.12} parent=0 // pred_check_branch
    %10 = sbr.rel (0) target = $region5
  $region4: #{autoencoder_forward.12} parent=0 // pred_region
    _
  $region5: #{autoencoder_forward.12} parent=0 // pred_fallthru
    _
  // Predicated region
  $region6: #{autoencoder_forward.12} parent=0 // pred_check
    _
  $region7: #{autoencoder_forward.12} parent=0 // pred_check_branch
    %12 = sbr.rel (0) target = $region9
  $region8: #{autoencoder_forward.12} parent=0 // pred_region
    _
  $region9: #{autoencoder_forward.12} parent=0 // pred_fallthru
    _
  // Predicated region
  $region10: #{autoencoder_forward.12} parent=0 // pred_check
    _
  $region11: #{autoencoder_forward.12} parent=0 // pred_check_branch
    %14 = sbr.rel (0) target = $region13
  $region12: #{autoencoder_forward.12} parent=0 // pred_region
    _
  $region13: #{autoencoder_forward.12} parent=0 // pred_fallthru
    _
  // Predicated region
  $region14: #{autoencoder_forward.12} parent=0 // pred_check
    _
  $region15: #{autoencoder_forward.12} parent=0 // pred_check_branch
    %16 = sbr.rel (0) target = $region17
  $region16: #{autoencoder_forward.12} parent=0 // pred_region
    _
  $region17: #{autoencoder_forward.12} parent=0 // pred_fallthru
    _
  %v18 = vld [vmem:[%s0] sm:$0xff]
  %v19 = vld [vmem:[%s0 + $0x8] sm:$0xff]
  %v20 = vld [vmem:[%s0 + $0x10] sm:$0xff]
  %v21 = vld [vmem:[%s0 + $0x18] sm:$0xff]
  %v22 = vld [vmem:[%s0 + $0x20] sm:$0xf]
  %v23 = vld [vmem:[%s0 + $0x24] sm:$0xff]
  %v24 = vld [vmem:[%s0 + $0x2c] sm:$0xff]
  %v25 = vld [vmem:[%s0 + $0x34] sm:$0xff]
  %v26 = vld [vmem:[%s0 + $0x3c] sm:$0xff]
  %v27 = vld [vmem:[%s0 + $0x44] sm:$0xf]
  %v28 = vld [vmem:[%s0 + $0x48] sm:$0xff]
  %v29 = vld [vmem:[%s0 + $0x50] sm:$0xff]
  %v30 = vld [vmem:[%s0 + $0x58] sm:$0xff]
  %v31 = vld [vmem:[%s0 + $0x60] sm:$0xff]
  %v32 = vld [vmem:[%s0 + $0x68] sm:$0xf]
  %v33 = vld [vmem:[%s0 + $0x6c] sm:$0xff]
  %v34 = vld [vmem:[%s0 + $0x74] sm:$0xff]
  %v35 = vld [vmem:[%s0 + $0x7c] sm:$0xff]
  %v36 = vld [vmem:[%s0 + $0x84] sm:$0xff]
  %v37 = vld [vmem:[%s0 + $0x8c] sm:$0xf]
  %v38 = vld [vmem:[%s0 + $0x90] sm:$0xff]
  %v39 = vld [vmem:[%s0 + $0x98] sm:$0xff]
  %v40 = vld [vmem:[%s0 + $0xa0] sm:$0xff]
  %v41 = vld [vmem:[%s0 + $0xa8] sm:$0xff]
  %v42 = vld [vmem:[%s0 + $0xb0] sm:$0xf]
  %v43 = vld [vmem:[%s0 + $0xb4] sm:$0xff]
  %v44 = vld [vmem:[%s0 + $0xbc] sm:$0xff]
  %v45 = vld [vmem:[%s0 + $0xc4] sm:$0xff]
  %v46 = vld [vmem:[%s0 + $0xcc] sm:$0xff]
  %v47 = vld [vmem:[%s0 + $0xd4] sm:$0xf]
  %v48 = vld [vmem:[%s0 + $0xd8] sm:$0xff]
  %v49 = vld [vmem:[%s0 + $0xe0] sm:$0xff]
  %v50 = vld [vmem:[%s0 + $0xe8] sm:$0xff]
  %v51 = vld [vmem:[%s0 + $0xf0] sm:$0xff]
  %v52 = vld [vmem:[%s0 + $0xf8] sm:$0xf]
  %v53 = vld [vmem:[%s0 + $0xfc] sm:$0xff]
  %v54 = vld [vmem:[%s0 + $0x104] sm:$0xff]
  %v55 = vld [vmem:[%s0 + $0x10c] sm:$0xff]
  %v56 = vld [vmem:[%s0 + $0x114] sm:$0xff]
  %v57 = vld [vmem:[%s0 + $0x11c] sm:$0xf]
  %v58 = vld [vmem:[%s1] sm:$0xf]
  %v59 = vld [vmem:[%s1 + $0x4] sm:$0xf]
  %v60 = vld [vmem:[%s1 + $0x8] sm:$0xf]
  %v61 = vld [vmem:[%s1 + $0xc] sm:$0xf]
  %v62 = vld [vmem:[%s1 + $0x10] sm:$0xf]
  %v63 = vld [vmem:[%s1 + $0x14] sm:$0xf]
  %v64 = vld [vmem:[%s1 + $0x18] sm:$0xf]
  %v65 = vld [vmem:[%s1 + $0x1c] sm:$0xf]
  %v66 = vld [vmem:[%s1 + $0x20] sm:$0xf]
  %v67 = vld [vmem:[%s1 + $0x24] sm:$0xf]
  %v68 = vld [vmem:[%s1 + $0x28] sm:$0xf]
  %v69 = vld [vmem:[%s1 + $0x2c] sm:$0xf]
  %v70 = vld [vmem:[%s1 + $0x30] sm:$0xf]
  %v71 = vld [vmem:[%s1 + $0x34] sm:$0xf]
  %v72 = vld [vmem:[%s1 + $0x38] sm:$0xf]
  %v73 = vld [vmem:[%s1 + $0x3c] sm:$0xf]
  %v74 = vld [vmem:[%s1 + $0x40] sm:$0xf]
  %v75 = vld [vmem:[%s1 + $0x44] sm:$0xf]
  %v76 = vld [vmem:[%s1 + $0x48] sm:$0xf]
  %v77 = vld [vmem:[%s1 + $0x4c] sm:$0xf]
  %v78 = vld [vmem:[%s1 + $0x50] sm:$0xf]
  %v79 = vld [vmem:[%s1 + $0x54] sm:$0xf]
  %v80 = vld [vmem:[%s1 + $0x58] sm:$0xf]
  %v81 = vld [vmem:[%s1 + $0x5c] sm:$0xf]
  %v82 = vld [vmem:[%s1 + $0x60] sm:$0xf]
  %v83 = vld [vmem:[%s1 + $0x64] sm:$0xf]
  %v84 = vld [vmem:[%s1 + $0x68] sm:$0xf]
  %v85 = vld [vmem:[%s1 + $0x6c] sm:$0xf]
  %v86 = vld [vmem:[%s1 + $0x70] sm:$0xf]
  %v87 = vld [vmem:[%s1 + $0x74] sm:$0xf]
  %v88 = vld [vmem:[%s1 + $0x78] sm:$0xf]
  %v89 = vld [vmem:[%s1 + $0x7c] sm:$0xf]
  %v90 = vld [vmem:[%s1 + $0x80] sm:$0xf]
  %v91 = vld [vmem:[%s1 + $0x84] sm:$0xf]
  %v92 = vld [vmem:[%s1 + $0x88] sm:$0xf]
  %v93 = vld [vmem:[%s1 + $0x8c] sm:$0xf]
  %v94 = vld [vmem:[%s1 + $0x90] sm:$0xf]
  %v95 = vld [vmem:[%s1 + $0x94] sm:$0xf]
  %v96 = vld [vmem:[%s1 + $0x98] sm:$0xf]
  %v97 = vld [vmem:[%s1 + $0x9c] sm:$0xf]
  %v98 = vld [vmem:[%s1 + $0xa0] sm:$0xf]
  %v99 = vld [vmem:[%s1 + $0xa4] sm:$0xf]
  %v100 = vld [vmem:[%s1 + $0xa8] sm:$0xf]
  %v101 = vld [vmem:[%s1 + $0xac] sm:$0xf]
  %v102 = vld [vmem:[%s1 + $0xb0] sm:$0xf]
  %v103 = vld [vmem:[%s1 + $0xb4] sm:$0xf]
  %v104 = vld [vmem:[%s1 + $0xb8] sm:$0xf]
  %v105 = vld [vmem:[%s1 + $0xbc] sm:$0xf]
  %v106 = vld [vmem:[%s1 + $0xc0] sm:$0xf]
  %v107 = vld [vmem:[%s1 + $0xc4] sm:$0xf]
  %v108 = vld [vmem:[%s1 + $0xc8] sm:$0xf]
  %v109 = vld [vmem:[%s1 + $0xcc] sm:$0xf]
  %v110 = vld [vmem:[%s1 + $0xd0] sm:$0xf]
  %v111 = vld [vmem:[%s1 + $0xd4] sm:$0xf]
  %v112 = vld [vmem:[%s1 + $0xd8] sm:$0xf]
  %v113 = vld [vmem:[%s1 + $0xdc] sm:$0xf]
  %v114 = vld [vmem:[%s1 + $0xe0] sm:$0xf]
  %v115 = vld [vmem:[%s1 + $0xe4] sm:$0xf]
  %v116 = vld [vmem:[%s1 + $0xe8] sm:$0xf]
  %v117 = vld [vmem:[%s1 + $0xec] sm:$0xf]
  %v118 = vld [vmem:[%s1 + $0xf0] sm:$0xf]
  %v119 = vld [vmem:[%s1 + $0xf4] sm:$0xf]
  %v120 = vld [vmem:[%s1 + $0xf8] sm:$0xf]
  %v121 = vld [vmem:[%s1 + $0xfc] sm:$0xf]
  %v122 = vld [vmem:[%s1 + $0x100] sm:$0xf]
  %v123 = vld [vmem:[%s1 + $0x104] sm:$0xf]
  %v124 = vld [vmem:[%s1 + $0x108] sm:$0xf]
  %v125 = vld [vmem:[%s1 + $0x10c] sm:$0xf]
  %v126 = vld [vmem:[%s1 + $0x110] sm:$0xf]
  %v127 = vld [vmem:[%s1 + $0x114] sm:$0xf]
  %v128 = vld [vmem:[%s1 + $0x118] sm:$0xf]
  %v129 = vld [vmem:[%s1 + $0x11c] sm:$0xf]
  %v130 = vld [vmem:[%s1 + $0x120] sm:$0xf]
  %v131 = vld [vmem:[%s1 + $0x124] sm:$0xf]
  %v132 = vld [vmem:[%s1 + $0x128] sm:$0xf]
  %v133 = vld [vmem:[%s1 + $0x12c] sm:$0xf]
  %v134 = vld [vmem:[%s1 + $0x130] sm:$0xf]
  %v135 = vld [vmem:[%s1 + $0x134] sm:$0xf]
  %v136 = vld [vmem:[%s1 + $0x138] sm:$0xf]
  %v137 = vld [vmem:[%s1 + $0x13c] sm:$0xf]
  %v138 = vld [vmem:[%s1 + $0x140] sm:$0xf]
  %v139 = vld [vmem:[%s1 + $0x144] sm:$0xf]
  %v140 = vld [vmem:[%s1 + $0x148] sm:$0xf]
  %v141 = vld [vmem:[%s1 + $0x14c] sm:$0xf]
  %v142 = vld [vmem:[%s1 + $0x150] sm:$0xf]
  %v143 = vld [vmem:[%s1 + $0x154] sm:$0xf]
  %v144 = vld [vmem:[%s1 + $0x158] sm:$0xf]
  %v145 = vld [vmem:[%s1 + $0x15c] sm:$0xf]
  %v146 = vld [vmem:[%s1 + $0x160] sm:$0xf]
  %v147 = vld [vmem:[%s1 + $0x164] sm:$0xf]
  %v148 = vld [vmem:[%s1 + $0x168] sm:$0xf]
  %v149 = vld [vmem:[%s1 + $0x16c] sm:$0xf]
  %v150 = vld [vmem:[%s1 + $0x170] sm:$0xf]
  %v151 = vld [vmem:[%s1 + $0x174] sm:$0xf]
  %v152 = vld [vmem:[%s1 + $0x178] sm:$0xf]
  %v153 = vld [vmem:[%s1 + $0x17c] sm:$0xf]
  %v154 = vld [vmem:[%s1 + $0x180] sm:$0xf]
  %v155 = vld [vmem:[%s1 + $0x184] sm:$0xf]
  %v156 = vld [vmem:[%s1 + $0x188] sm:$0xf]
  %v157 = vld [vmem:[%s1 + $0x18c] sm:$0xf]
  %v158 = vld [vmem:[%s1 + $0x190] sm:$0xf]
  %v159 = vld [vmem:[%s1 + $0x194] sm:$0xf]
  %v160 = vld [vmem:[%s1 + $0x198] sm:$0xf]
  %v161 = vld [vmem:[%s1 + $0x19c] sm:$0xf]
  %v162 = vld [vmem:[%s1 + $0x1a0] sm:$0xf]
  %v163 = vld [vmem:[%s1 + $0x1a4] sm:$0xf]
  %v164 = vld [vmem:[%s1 + $0x1a8] sm:$0xf]
  %v165 = vld [vmem:[%s1 + $0x1ac] sm:$0xf]
  %v166 = vld [vmem:[%s1 + $0x1b0] sm:$0xf]
  %v167 = vld [vmem:[%s1 + $0x1b4] sm:$0xf]
  %v168 = vld [vmem:[%s1 + $0x1b8] sm:$0xf]
  %v169 = vld [vmem:[%s1 + $0x1bc] sm:$0xf]
  %v170 = vld [vmem:[%s1 + $0x1c0] sm:$0xf]
  %v171 = vld [vmem:[%s1 + $0x1c4] sm:$0xf]
  %v172 = vld [vmem:[%s1 + $0x1c8] sm:$0xf]
  %v173 = vld [vmem:[%s1 + $0x1cc] sm:$0xf]
  %v174 = vld [vmem:[%s1 + $0x1d0] sm:$0xf]
  %v175 = vld [vmem:[%s1 + $0x1d4] sm:$0xf]
  %v176 = vld [vmem:[%s1 + $0x1d8] sm:$0xf]
  %v177 = vld [vmem:[%s1 + $0x1dc] sm:$0xf]
  %v178 = vld [vmem:[%s1 + $0x1e0] sm:$0xf]
  %v179 = vld [vmem:[%s1 + $0x1e4] sm:$0xf]
  %v180 = vld [vmem:[%s1 + $0x1e8] sm:$0xf]
  %v181 = vld [vmem:[%s1 + $0x1ec] sm:$0xf]
  %v182 = vld [vmem:[%s1 + $0x1f0] sm:$0xf]
  %v183 = vld [vmem:[%s1 + $0x1f4] sm:$0xf]
  %v184 = vld [vmem:[%s1 + $0x1f8] sm:$0xf]
  %v185 = vld [vmem:[%s1 + $0x1fc] sm:$0xf]
  %v186 = vld [vmem:[%s1 + $0x200] sm:$0xf]
  %v187 = vld [vmem:[%s1 + $0x204] sm:$0xf]
  %v188 = vld [vmem:[%s1 + $0x208] sm:$0xf]
  %v189 = vld [vmem:[%s1 + $0x20c] sm:$0xf]
  %v190 = vld [vmem:[%s1 + $0x210] sm:$0xf]
  %v191 = vld [vmem:[%s1 + $0x214] sm:$0xf]
  %v192 = vld [vmem:[%s1 + $0x218] sm:$0xf]
  %v193 = vld [vmem:[%s1 + $0x21c] sm:$0xf]
  %v194 = vld [vmem:[%s1 + $0x220] sm:$0xf]
  %v195 = vld [vmem:[%s1 + $0x224] sm:$0xf]
  %v196 = vld [vmem:[%s1 + $0x228] sm:$0xf]
  %v197 = vld [vmem:[%s1 + $0x22c] sm:$0xf]
  %v198 = vld [vmem:[%s1 + $0x230] sm:$0xf]
  %v199 = vld [vmem:[%s1 + $0x234] sm:$0xf]
  %v200 = vld [vmem:[%s1 + $0x238] sm:$0xf]
  %v201 = vld [vmem:[%s1 + $0x23c] sm:$0xf]
  %v242 = vunpack.c.l.b16 %v18
  %v243 = vunpack.c.h.b16 %v18
  %v244 = vunpack.c.l.b16 %v19
  %v245 = vunpack.c.h.b16 %v19
  %v246 = vunpack.c.l.b16 %v20
  %v247 = vunpack.c.h.b16 %v20
  %v248 = vunpack.c.l.b16 %v21
  %v249 = vunpack.c.h.b16 %v21
  %v250 = vunpack.c.l.b16 %v22
  %v251 = vunpack.c.l.b16 %v23
  %v252 = vunpack.c.h.b16 %v23
  %v253 = vunpack.c.l.b16 %v24
  %v254 = vunpack.c.h.b16 %v24
  %v255 = vunpack.c.l.b16 %v25
  %v256 = vunpack.c.h.b16 %v25
  %v257 = vunpack.c.l.b16 %v26
  %v258 = vunpack.c.h.b16 %v26
  %v259 = vunpack.c.l.b16 %v27
  %v260 = vunpack.c.l.b16 %v28
  %v261 = vunpack.c.h.b16 %v28
  %v262 = vunpack.c.l.b16 %v29
  %v263 = vunpack.c.h.b16 %v29
  %v264 = vunpack.c.l.b16 %v30
  %v265 = vunpack.c.h.b16 %v30
  %v266 = vunpack.c.l.b16 %v31
  %v267 = vunpack.c.h.b16 %v31
  %v268 = vunpack.c.l.b16 %v32
  %v269 = vunpack.c.l.b16 %v33
  %v270 = vunpack.c.h.b16 %v33
  %v271 = vunpack.c.l.b16 %v34
  %v272 = vunpack.c.h.b16 %v34
  %v273 = vunpack.c.l.b16 %v35
  %v274 = vunpack.c.h.b16 %v35
  %v275 = vunpack.c.l.b16 %v36
  %v276 = vunpack.c.h.b16 %v36
  %v277 = vunpack.c.l.b16 %v37
  %v278 = vunpack.c.l.b16 %v38
  %v279 = vunpack.c.h.b16 %v38
  %v280 = vunpack.c.l.b16 %v39
  %v281 = vunpack.c.h.b16 %v39
  %v282 = vunpack.c.l.b16 %v40
  %v283 = vunpack.c.h.b16 %v40
  %v284 = vunpack.c.l.b16 %v41
  %v285 = vunpack.c.h.b16 %v41
  %v286 = vunpack.c.l.b16 %v42
  %v287 = vunpack.c.l.b16 %v43
  %v288 = vunpack.c.h.b16 %v43
  %v289 = vunpack.c.l.b16 %v44
  %v290 = vunpack.c.h.b16 %v44
  %v291 = vunpack.c.l.b16 %v45
  %v292 = vunpack.c.h.b16 %v45
  %v293 = vunpack.c.l.b16 %v46
  %v294 = vunpack.c.h.b16 %v46
  %v295 = vunpack.c.l.b16 %v47
  %v296 = vunpack.c.l.b16 %v48
  %v297 = vunpack.c.h.b16 %v48
  %v298 = vunpack.c.l.b16 %v49
  %v299 = vunpack.c.h.b16 %v49
  %v300 = vunpack.c.l.b16 %v50
  %v301 = vunpack.c.h.b16 %v50
  %v302 = vunpack.c.l.b16 %v51
  %v303 = vunpack.c.h.b16 %v51
  %v304 = vunpack.c.l.b16 %v52
  %v305 = vunpack.c.l.b16 %v53
  %v306 = vunpack.c.h.b16 %v53
  %v307 = vunpack.c.l.b16 %v54
  %v308 = vunpack.c.h.b16 %v54
  %v309 = vunpack.c.l.b16 %v55
  %v310 = vunpack.c.h.b16 %v55
  %v311 = vunpack.c.l.b16 %v56
  %v312 = vunpack.c.h.b16 %v56
  %v313 = vunpack.c.l.b16 %v57
  %v314 = vpack.c.b16 %v251, %v242
  %v315 = vpack.c.b16 %v252, %v243
  %v316 = vpack.c.b16 %v253, %v244
  %v317 = vpack.c.b16 %v254, %v245
  %v318 = vpack.c.b16 %v255, %v246
  %v319 = vpack.c.b16 %v256, %v247
  %v320 = vpack.c.b16 %v257, %v248
  %v321 = vpack.c.b16 %v258, %v249
  %v322 = vpack.c.b16 %v259, %v250
  %v323 = vpack.c.b16 %v269, %v260
  %v324 = vpack.c.b16 %v270, %v261
  %v325 = vpack.c.b16 %v271, %v262
  %v326 = vpack.c.b16 %v272, %v263
  %v327 = vpack.c.b16 %v273, %v264
  %v328 = vpack.c.b16 %v274, %v265
  %v329 = vpack.c.b16 %v275, %v266
  %v330 = vpack.c.b16 %v276, %v267
  %v331 = vpack.c.b16 %v277, %v268
  %v332 = vpack.c.b16 %v287, %v278
  %v333 = vpack.c.b16 %v288, %v279
  %v334 = vpack.c.b16 %v289, %v280
  %v335 = vpack.c.b16 %v290, %v281
  %v336 = vpack.c.b16 %v291, %v282
  %v337 = vpack.c.b16 %v292, %v283
  %v338 = vpack.c.b16 %v293, %v284
  %v339 = vpack.c.b16 %v294, %v285
  %v340 = vpack.c.b16 %v295, %v286
  %v341 = vpack.c.b16 %v305, %v296
  %v342 = vpack.c.b16 %v306, %v297
  %v343 = vpack.c.b16 %v307, %v298
  %v344 = vpack.c.b16 %v308, %v299
  %v345 = vpack.c.b16 %v309, %v300
  %v346 = vpack.c.b16 %v310, %v301
  %v347 = vpack.c.b16 %v311, %v302
  %v348 = vpack.c.b16 %v312, %v303
  %v349 = vpack.c.b16 %v313, %v304
  %v530 = vunpack.c.l.b16 %v58
  %v531 = vunpack.c.l.b16 %v59
  %v532 = vunpack.c.l.b16 %v60
  %v533 = vunpack.c.l.b16 %v61
  %v534 = vunpack.c.l.b16 %v62
  %v535 = vunpack.c.l.b16 %v63
  %v536 = vunpack.c.l.b16 %v64
  %v537 = vunpack.c.l.b16 %v65
  %v538 = vunpack.c.l.b16 %v66
  %v539 = vunpack.c.l.b16 %v67
  %v540 = vunpack.c.l.b16 %v68
  %v541 = vunpack.c.l.b16 %v69
  %v542 = vunpack.c.l.b16 %v70
  %v543 = vunpack.c.l.b16 %v71
  %v544 = vunpack.c.l.b16 %v72
  %v545 = vunpack.c.l.b16 %v73
  %v546 = vunpack.c.l.b16 %v74
  %v547 = vunpack.c.l.b16 %v75
  %v548 = vunpack.c.l.b16 %v76
  %v549 = vunpack.c.l.b16 %v77
  %v550 = vunpack.c.l.b16 %v78
  %v551 = vunpack.c.l.b16 %v79
  %v552 = vunpack.c.l.b16 %v80
  %v553 = vunpack.c.l.b16 %v81
  %v554 = vunpack.c.l.b16 %v82
  %v555 = vunpack.c.l.b16 %v83
  %v556 = vunpack.c.l.b16 %v84
  %v557 = vunpack.c.l.b16 %v85
  %v558 = vunpack.c.l.b16 %v86
  %v559 = vunpack.c.l.b16 %v87
  %v560 = vunpack.c.l.b16 %v88
  %v561 = vunpack.c.l.b16 %v89
  %v562 = vunpack.c.l.b16 %v90
  %v563 = vunpack.c.l.b16 %v91
  %v564 = vunpack.c.l.b16 %v92
  %v565 = vunpack.c.l.b16 %v93
  %v566 = vunpack.c.l.b16 %v94
  %v567 = vunpack.c.l.b16 %v95
  %v568 = vunpack.c.l.b16 %v96
  %v569 = vunpack.c.l.b16 %v97
  %v570 = vunpack.c.l.b16 %v98
  %v571 = vunpack.c.l.b16 %v99
  %v572 = vunpack.c.l.b16 %v100
  %v573 = vunpack.c.l.b16 %v101
  %v574 = vunpack.c.l.b16 %v102
  %v575 = vunpack.c.l.b16 %v103
  %v576 = vunpack.c.l.b16 %v104
  %v577 = vunpack.c.l.b16 %v105
  %v578 = vunpack.c.l.b16 %v106
  %v579 = vunpack.c.l.b16 %v107
  %v580 = vunpack.c.l.b16 %v108
  %v581 = vunpack.c.l.b16 %v109
  %v582 = vunpack.c.l.b16 %v110
  %v583 = vunpack.c.l.b16 %v111
  %v584 = vunpack.c.l.b16 %v112
  %v585 = vunpack.c.l.b16 %v113
  %v586 = vunpack.c.l.b16 %v114
  %v587 = vunpack.c.l.b16 %v115
  %v588 = vunpack.c.l.b16 %v116
  %v589 = vunpack.c.l.b16 %v117
  %v590 = vunpack.c.l.b16 %v118
  %v591 = vunpack.c.l.b16 %v119
  %v592 = vunpack.c.l.b16 %v120
  %v593 = vunpack.c.l.b16 %v121
  %v594 = vunpack.c.l.b16 %v122
  %v595 = vunpack.c.l.b16 %v123
  %v596 = vunpack.c.l.b16 %v124
  %v597 = vunpack.c.l.b16 %v125
  %v598 = vunpack.c.l.b16 %v126
  %v599 = vunpack.c.l.b16 %v127
  %v600 = vunpack.c.l.b16 %v128
  %v601 = vunpack.c.l.b16 %v129
  %v602 = vunpack.c.l.b16 %v130
  %v603 = vunpack.c.l.b16 %v131
  %v604 = vunpack.c.l.b16 %v132
  %v605 = vunpack.c.l.b16 %v133
  %v606 = vunpack.c.l.b16 %v134
  %v607 = vunpack.c.l.b16 %v135
  %v608 = vunpack.c.l.b16 %v136
  %v609 = vunpack.c.l.b16 %v137
  %v610 = vunpack.c.l.b16 %v138
  %v611 = vunpack.c.l.b16 %v139
  %v612 = vunpack.c.l.b16 %v140
  %v613 = vunpack.c.l.b16 %v141
  %v614 = vunpack.c.l.b16 %v142
  %v615 = vunpack.c.l.b16 %v143
  %v616 = vunpack.c.l.b16 %v144
  %v617 = vunpack.c.l.b16 %v145
  %v618 = vunpack.c.l.b16 %v146
  %v619 = vunpack.c.l.b16 %v147
  %v620 = vunpack.c.l.b16 %v148
  %v621 = vunpack.c.l.b16 %v149
  %v622 = vunpack.c.l.b16 %v150
  %v623 = vunpack.c.l.b16 %v151
  %v624 = vunpack.c.l.b16 %v152
  %v625 = vunpack.c.l.b16 %v153
  %v626 = vunpack.c.l.b16 %v154
  %v627 = vunpack.c.l.b16 %v155
  %v628 = vunpack.c.l.b16 %v156
  %v629 = vunpack.c.l.b16 %v157
  %v630 = vunpack.c.l.b16 %v158
  %v631 = vunpack.c.l.b16 %v159
  %v632 = vunpack.c.l.b16 %v160
  %v633 = vunpack.c.l.b16 %v161
  %v634 = vunpack.c.l.b16 %v162
  %v635 = vunpack.c.l.b16 %v163
  %v636 = vunpack.c.l.b16 %v164
  %v637 = vunpack.c.l.b16 %v165
  %v638 = vunpack.c.l.b16 %v166
  %v639 = vunpack.c.l.b16 %v167
  %v640 = vunpack.c.l.b16 %v168
  %v641 = vunpack.c.l.b16 %v169
  %v642 = vunpack.c.l.b16 %v170
  %v643 = vunpack.c.l.b16 %v171
  %v644 = vunpack.c.l.b16 %v172
  %v645 = vunpack.c.l.b16 %v173
  %v646 = vunpack.c.l.b16 %v174
  %v647 = vunpack.c.l.b16 %v175
  %v648 = vunpack.c.l.b16 %v176
  %v649 = vunpack.c.l.b16 %v177
  %v650 = vunpack.c.l.b16 %v178
  %v651 = vunpack.c.l.b16 %v179
  %v652 = vunpack.c.l.b16 %v180
  %v653 = vunpack.c.l.b16 %v181
  %v654 = vunpack.c.l.b16 %v182
  %v655 = vunpack.c.l.b16 %v183
  %v656 = vunpack.c.l.b16 %v184
  %v657 = vunpack.c.l.b16 %v185
  %v658 = vunpack.c.l.b16 %v186
  %v659 = vunpack.c.l.b16 %v187
  %v660 = vunpack.c.l.b16 %v188
  %v661 = vunpack.c.l.b16 %v189
  %v662 = vunpack.c.l.b16 %v190
  %v663 = vunpack.c.l.b16 %v191
  %v664 = vunpack.c.l.b16 %v192
  %v665 = vunpack.c.l.b16 %v193
  %v666 = vunpack.c.l.b16 %v194
  %v667 = vunpack.c.l.b16 %v195
  %v668 = vunpack.c.l.b16 %v196
  %v669 = vunpack.c.l.b16 %v197
  %v670 = vunpack.c.l.b16 %v198
  %v671 = vunpack.c.l.b16 %v199
  %v672 = vunpack.c.l.b16 %v200
  %v673 = vunpack.c.l.b16 %v201
  %v674 = vpack.c.b16 %v531, %v530
  %v675 = vpack.c.b16 %v533, %v532
  %v676 = vpack.c.b16 %v535, %v534
  %v677 = vpack.c.b16 %v537, %v536
  %v678 = vpack.c.b16 %v539, %v538
  %v679 = vpack.c.b16 %v541, %v540
  %v680 = vpack.c.b16 %v543, %v542
  %v681 = vpack.c.b16 %v545, %v544
  %v682 = vpack.c.b16 %v547, %v546
  %v683 = vpack.c.b16 %v549, %v548
  %v684 = vpack.c.b16 %v551, %v550
  %v685 = vpack.c.b16 %v553, %v552
  %v686 = vpack.c.b16 %v555, %v554
  %v687 = vpack.c.b16 %v557, %v556
  %v688 = vpack.c.b16 %v559, %v558
  %v689 = vpack.c.b16 %v561, %v560
  %v690 = vpack.c.b16 %v563, %v562
  %v691 = vpack.c.b16 %v565, %v564
  %v692 = vpack.c.b16 %v567, %v566
  %v693 = vpack.c.b16 %v569, %v568
  %v694 = vpack.c.b16 %v571, %v570
  %v695 = vpack.c.b16 %v573, %v572
  %v696 = vpack.c.b16 %v575, %v574
  %v697 = vpack.c.b16 %v577, %v576
  %v698 = vpack.c.b16 %v579, %v578
  %v699 = vpack.c.b16 %v581, %v580
  %v700 = vpack.c.b16 %v583, %v582
  %v701 = vpack.c.b16 %v585, %v584
  %v702 = vpack.c.b16 %v587, %v586
  %v703 = vpack.c.b16 %v589, %v588
  %v704 = vpack.c.b16 %v591, %v590
  %v705 = vpack.c.b16 %v593, %v592
  %v706 = vpack.c.b16 %v595, %v594
  %v707 = vpack.c.b16 %v597, %v596
  %v708 = vpack.c.b16 %v599, %v598
  %v709 = vpack.c.b16 %v601, %v600
  %v710 = vpack.c.b16 %v603, %v602
  %v711 = vpack.c.b16 %v605, %v604
  %v712 = vpack.c.b16 %v607, %v606
  %v713 = vpack.c.b16 %v609, %v608
  %v714 = vpack.c.b16 %v611, %v610
  %v715 = vpack.c.b16 %v613, %v612
  %v716 = vpack.c.b16 %v615, %v614
  %v717 = vpack.c.b16 %v617, %v616
  %v718 = vpack.c.b16 %v619, %v618
  %v719 = vpack.c.b16 %v621, %v620
  %v720 = vpack.c.b16 %v623, %v622
  %v721 = vpack.c.b16 %v625, %v624
  %v722 = vpack.c.b16 %v627, %v626
  %v723 = vpack.c.b16 %v629, %v628
  %v724 = vpack.c.b16 %v631, %v630
  %v725 = vpack.c.b16 %v633, %v632
  %v726 = vpack.c.b16 %v635, %v634
  %v727 = vpack.c.b16 %v637, %v636
  %v728 = vpack.c.b16 %v639, %v638
  %v729 = vpack.c.b16 %v641, %v640
  %v730 = vpack.c.b16 %v643, %v642
  %v731 = vpack.c.b16 %v645, %v644
  %v732 = vpack.c.b16 %v647, %v646
  %v733 = vpack.c.b16 %v649, %v648
  %v734 = vpack.c.b16 %v651, %v650
  %v735 = vpack.c.b16 %v653, %v652
  %v736 = vpack.c.b16 %v655, %v654
  %v737 = vpack.c.b16 %v657, %v656
  %v738 = vpack.c.b16 %v659, %v658
  %v739 = vpack.c.b16 %v661, %v660
  %v740 = vpack.c.b16 %v663, %v662
  %v741 = vpack.c.b16 %v665, %v664
  %v742 = vpack.c.b16 %v667, %v666
  %v743 = vpack.c.b16 %v669, %v668
  %v744 = vpack.c.b16 %v671, %v670
  %v745 = vpack.c.b16 %v673, %v672
  %818 = vmatprep.subr.bf16.mxu0 0
  %819 = vmatpush1.bf16.msra.mxu0 %v681
  %820 = vmatprep.subr.bf16.mxu0 0
  %821 = vmatpush1.bf16.msra.mxu0 %v680
  %822 = vmatprep.subr.bf16.mxu0 0
  %823 = vmatpush1.bf16.msra.mxu0 %v679
  %824 = vmatprep.subr.bf16.mxu0 0
  %825 = vmatpush1.bf16.msra.mxu0 %v678
  %826 = vmatprep.subr.bf16.mxu0 0
  %827 = vmatpush1.bf16.msra.mxu0 %v677
  %828 = vmatprep.subr.bf16.mxu0 0
  %829 = vmatpush1.bf16.msra.mxu0 %v676
  %830 = vmatprep.subr.bf16.mxu0 0
  %831 = vmatpush1.bf16.msra.mxu0 %v675
  %832 = vmatprep.subr.bf16.mxu0 0
  %833 = vmatpush1.bf16.msra.mxu0 %v674
  %834 = vmatprep.subr.bf16.mxu0 0
  %835 = vmatpush2.bf16.msra.mxu0 %v689
  %836 = vmatprep.subr.bf16.mxu0 0
  %837 = vmatpush2.bf16.msra.mxu0 %v688
  %838 = vmatprep.subr.bf16.mxu0 0
  %839 = vmatpush2.bf16.msra.mxu0 %v687
  %840 = vmatprep.subr.bf16.mxu0 0
  %841 = vmatpush2.bf16.msra.mxu0 %v686
  %842 = vmatprep.subr.bf16.mxu0 0
  %843 = vmatpush2.bf16.msra.mxu0 %v685
  %844 = vmatprep.subr.bf16.mxu0 0
  %845 = vmatpush2.bf16.msra.mxu0 %v684
  %846 = vmatprep.subr.bf16.mxu0 0
  %847 = vmatpush2.bf16.msra.mxu0 %v683
  %848 = vmatprep.subr.bf16.mxu0 0
  %849 = vmatpush2.bf16.msra.mxu0 %v682
  %850 = vmatprep.mubr.bf16.mxu0 %v315
  %851 = vmatmul.mubr.bf16.gmra.mxu0 %v314
  %v852 = vpop.f32.mrf.mxu0
  %v853 = vadd.f32 0.0, %v852
  %v854 = vpop.f32.mrf.mxu0
  %v855 = vpop.f32.mrf.mxu0
  %v856 = vadd.f32 0.0, %v855
  %v857 = vpop.f32.mrf.mxu0
  %858 = vmatprep.mubr.bf16.mxu0 %v324
  %859 = vmatmul.mubr.bf16.gmra.mxu0 %v323
  %v860 = vpop.f32.mrf.mxu0
  %v861 = vadd.f32 0.0, %v860
  %v862 = vpop.f32.mrf.mxu0
  %v863 = vpop.f32.mrf.mxu0
  %v864 = vadd.f32 0.0, %v863
  %v865 = vpop.f32.mrf.mxu0
  %866 = vmatprep.mubr.bf16.mxu0 %v333
  %867 = vmatmul.mubr.bf16.gmra.mxu0 %v332
  %v868 = vpop.f32.mrf.mxu0
  %v869 = vadd.f32 0.0, %v868
  %v870 = vpop.f32.mrf.mxu0
  %v871 = vpop.f32.mrf.mxu0
  %v872 = vadd.f32 0.0, %v871
  %v873 = vpop.f32.mrf.mxu0
  %874 = vmatprep.mubr.bf16.mxu0 %v342
  %875 = vmatmul.mubr.bf16.gmra.mxu0 %v341
  %v876 = vpop.f32.mrf.mxu0
  %v877 = vadd.f32 0.0, %v876
  %v878 = vpop.f32.mrf.mxu0
  %v879 = vpop.f32.mrf.mxu0
  %v880 = vadd.f32 0.0, %v879
  %v881 = vpop.f32.mrf.mxu0
  %882 = vdwg.mxu0
  %883 = vmatprep.subr.bf16.mxu0 0
  %884 = vmatpush1.bf16.msra.mxu0 %v697
  %885 = vmatprep.subr.bf16.mxu0 0
  %886 = vmatpush1.bf16.msra.mxu0 %v696
  %887 = vmatprep.subr.bf16.mxu0 0
  %888 = vmatpush1.bf16.msra.mxu0 %v695
  %889 = vmatprep.subr.bf16.mxu0 0
  %890 = vmatpush1.bf16.msra.mxu0 %v694
  %891 = vmatprep.subr.bf16.mxu0 0
  %892 = vmatpush1.bf16.msra.mxu0 %v693
  %893 = vmatprep.subr.bf16.mxu0 0
  %894 = vmatpush1.bf16.msra.mxu0 %v692
  %895 = vmatprep.subr.bf16.mxu0 0
  %896 = vmatpush1.bf16.msra.mxu0 %v691
  %897 = vmatprep.subr.bf16.mxu0 0
  %898 = vmatpush1.bf16.msra.mxu0 %v690
  %899 = vmatprep.subr.bf16.mxu0 0
  %900 = vmatpush2.bf16.msra.mxu0 %v705
  %901 = vmatprep.subr.bf16.mxu0 0
  %902 = vmatpush2.bf16.msra.mxu0 %v704
  %903 = vmatprep.subr.bf16.mxu0 0
  %904 = vmatpush2.bf16.msra.mxu0 %v703
  %905 = vmatprep.subr.bf16.mxu0 0
  %906 = vmatpush2.bf16.msra.mxu0 %v702
  %907 = vmatprep.subr.bf16.mxu0 0
  %908 = vmatpush2.bf16.msra.mxu0 %v701
  %909 = vmatprep.subr.bf16.mxu0 0
  %910 = vmatpush2.bf16.msra.mxu0 %v700
  %911 = vmatprep.subr.bf16.mxu0 0
  %912 = vmatpush2.bf16.msra.mxu0 %v699
  %913 = vmatprep.subr.bf16.mxu0 0
  %914 = vmatpush2.bf16.msra.mxu0 %v698
  %915 = vmatprep.mubr.bf16.mxu0 %v317
  %916 = vmatmul.mubr.bf16.gmra.mxu0 %v316
  %v917 = vpop.f32.mrf.mxu0
  %v918 = vadd.f32 %v853, %v917
  %v919 = vpop.f32.mrf.mxu0
  %v920 = vpop.f32.mrf.mxu0
  %v921 = vadd.f32 %v856, %v920
  %v922 = vpop.f32.mrf.mxu0
  %923 = vmatprep.mubr.bf16.mxu0 %v326
  %924 = vmatmul.mubr.bf16.gmra.mxu0 %v325
  %v925 = vpop.f32.mrf.mxu0
  %v926 = vadd.f32 %v861, %v925
  %v927 = vpop.f32.mrf.mxu0
  %v928 = vpop.f32.mrf.mxu0
  %v929 = vadd.f32 %v864, %v928
  %v930 = vpop.f32.mrf.mxu0
  %931 = vmatprep.mubr.bf16.mxu0 %v335
  %932 = vmatmul.mubr.bf16.gmra.mxu0 %v334
  %v933 = vpop.f32.mrf.mxu0
  %v934 = vadd.f32 %v869, %v933
  %v935 = vpop.f32.mrf.mxu0
  %v936 = vpop.f32.mrf.mxu0
  %v937 = vadd.f32 %v872, %v936
  %v938 = vpop.f32.mrf.mxu0
  %939 = vmatprep.mubr.bf16.mxu0 %v344
  %940 = vmatmul.mubr.bf16.gmra.mxu0 %v343
  %v941 = vpop.f32.mrf.mxu0
  %v942 = vadd.f32 %v877, %v941
  %v943 = vpop.f32.mrf.mxu0
  %v944 = vpop.f32.mrf.mxu0
  %v945 = vadd.f32 %v880, %v944
  %v946 = vpop.f32.mrf.mxu0
  %947 = vdwg.mxu0
  %948 = vmatprep.subr.bf16.mxu0 0
  %949 = vmatpush1.bf16.msra.mxu0 %v713
  %950 = vmatprep.subr.bf16.mxu0 0
  %951 = vmatpush1.bf16.msra.mxu0 %v712
  %952 = vmatprep.subr.bf16.mxu0 0
  %953 = vmatpush1.bf16.msra.mxu0 %v711
  %954 = vmatprep.subr.bf16.mxu0 0
  %955 = vmatpush1.bf16.msra.mxu0 %v710
  %956 = vmatprep.subr.bf16.mxu0 0
  %957 = vmatpush1.bf16.msra.mxu0 %v709
  %958 = vmatprep.subr.bf16.mxu0 0
  %959 = vmatpush1.bf16.msra.mxu0 %v708
  %960 = vmatprep.subr.bf16.mxu0 0
  %961 = vmatpush1.bf16.msra.mxu0 %v707
  %962 = vmatprep.subr.bf16.mxu0 0
  %963 = vmatpush1.bf16.msra.mxu0 %v706
  %964 = vmatprep.subr.bf16.mxu0 0
  %965 = vmatpush2.bf16.msra.mxu0 %v721
  %966 = vmatprep.subr.bf16.mxu0 0
  %967 = vmatpush2.bf16.msra.mxu0 %v720
  %968 = vmatprep.subr.bf16.mxu0 0
  %969 = vmatpush2.bf16.msra.mxu0 %v719
  %970 = vmatprep.subr.bf16.mxu0 0
  %971 = vmatpush2.bf16.msra.mxu0 %v718
  %972 = vmatprep.subr.bf16.mxu0 0
  %973 = vmatpush2.bf16.msra.mxu0 %v717
  %974 = vmatprep.subr.bf16.mxu0 0
  %975 = vmatpush2.bf16.msra.mxu0 %v716
  %976 = vmatprep.subr.bf16.mxu0 0
  %977 = vmatpush2.bf16.msra.mxu0 %v715
  %978 = vmatprep.subr.bf16.mxu0 0
  %979 = vmatpush2.bf16.msra.mxu0 %v714
  %980 = vmatprep.mubr.bf16.mxu0 %v319
  %981 = vmatmul.mubr.bf16.gmra.mxu0 %v318
  %v982 = vpop.f32.mrf.mxu0
  %v983 = vadd.f32 %v918, %v982
  %v984 = vpop.f32.mrf.mxu0
  %v985 = vpop.f32.mrf.mxu0
  %v986 = vadd.f32 %v921, %v985
  %v987 = vpop.f32.mrf.mxu0
  %988 = vmatprep.mubr.bf16.mxu0 %v328
  %989 = vmatmul.mubr.bf16.gmra.mxu0 %v327
  %v990 = vpop.f32.mrf.mxu0
  %v991 = vadd.f32 %v926, %v990
  %v992 = vpop.f32.mrf.mxu0
  %v993 = vpop.f32.mrf.mxu0
  %v994 = vadd.f32 %v929, %v993
  %v995 = vpop.f32.mrf.mxu0
  %996 = vmatprep.mubr.bf16.mxu0 %v337
  %997 = vmatmul.mubr.bf16.gmra.mxu0 %v336
  %v998 = vpop.f32.mrf.mxu0
  %v999 = vadd.f32 %v934, %v998
  %v1000 = vpop.f32.mrf.mxu0
  %v1001 = vpop.f32.mrf.mxu0
  %v1002 = vadd.f32 %v937, %v1001
  %v1003 = vpop.f32.mrf.mxu0
  %1004 = vmatprep.mubr.bf16.mxu0 %v346
  %1005 = vmatmul.mubr.bf16.gmra.mxu0 %v345
  %v1006 = vpop.f32.mrf.mxu0
  %v1007 = vadd.f32 %v942, %v1006
  %v1008 = vpop.f32.mrf.mxu0
  %v1009 = vpop.f32.mrf.mxu0
  %v1010 = vadd.f32 %v945, %v1009
  %v1011 = vpop.f32.mrf.mxu0
  %1012 = vdwg.mxu0
  %1013 = vmatprep.subr.bf16.mxu0 0
  %1014 = vmatpush1.bf16.msra.mxu0 %v729
  %1015 = vmatprep.subr.bf16.mxu0 0
  %1016 = vmatpush1.bf16.msra.mxu0 %v728
  %1017 = vmatprep.subr.bf16.mxu0 0
  %1018 = vmatpush1.bf16.msra.mxu0 %v727
  %1019 = vmatprep.subr.bf16.mxu0 0
  %1020 = vmatpush1.bf16.msra.mxu0 %v726
  %1021 = vmatprep.subr.bf16.mxu0 0
  %1022 = vmatpush1.bf16.msra.mxu0 %v725
  %1023 = vmatprep.subr.bf16.mxu0 0
  %1024 = vmatpush1.bf16.msra.mxu0 %v724
  %1025 = vmatprep.subr.bf16.mxu0 0
  %1026 = vmatpush1.bf16.msra.mxu0 %v723
  %1027 = vmatprep.subr.bf16.mxu0 0
  %1028 = vmatpush1.bf16.msra.mxu0 %v722
  %1029 = vmatprep.subr.bf16.mxu0 0
  %1030 = vmatpush2.bf16.msra.mxu0 %v737
  %1031 = vmatprep.subr.bf16.mxu0 0
  %1032 = vmatpush2.bf16.msra.mxu0 %v736
  %1033 = vmatprep.subr.bf16.mxu0 0
  %1034 = vmatpush2.bf16.msra.mxu0 %v735
  %1035 = vmatprep.subr.bf16.mxu0 0
  %1036 = vmatpush2.bf16.msra.mxu0 %v734
  %1037 = vmatprep.subr.bf16.mxu0 0
  %1038 = vmatpush2.bf16.msra.mxu0 %v733
  %1039 = vmatprep.subr.bf16.mxu0 0
  %1040 = vmatpush2.bf16.msra.mxu0 %v732
  %1041 = vmatprep.subr.bf16.mxu0 0
  %1042 = vmatpush2.bf16.msra.mxu0 %v731
  %1043 = vmatprep.subr.bf16.mxu0 0
  %1044 = vmatpush2.bf16.msra.mxu0 %v730
  %1045 = vmatprep.mubr.bf16.mxu0 %v321
  %1046 = vmatmul.mubr.bf16.gmra.mxu0 %v320
  %v1047 = vpop.f32.mrf.mxu0
  %v1048 = vadd.f32 %v983, %v1047
  %v1049 = vpop.f32.mrf.mxu0
  %v1050 = vpop.f32.mrf.mxu0
  %v1051 = vadd.f32 %v986, %v1050
  %v1052 = vpop.f32.mrf.mxu0
  %1053 = vmatprep.mubr.bf16.mxu0 %v330
  %1054 = vmatmul.mubr.bf16.gmra.mxu0 %v329
  %v1055 = vpop.f32.mrf.mxu0
  %v1056 = vadd.f32 %v991, %v1055
  %v1057 = vpop.f32.mrf.mxu0
  %v1058 = vpop.f32.mrf.mxu0
  %v1059 = vadd.f32 %v994, %v1058
  %v1060 = vpop.f32.mrf.mxu0
  %1061 = vmatprep.mubr.bf16.mxu0 %v339
  %1062 = vmatmul.mubr.bf16.gmra.mxu0 %v338
  %v1063 = vpop.f32.mrf.mxu0
  %v1064 = vadd.f32 %v999, %v1063
  %v1065 = vpop.f32.mrf.mxu0
  %v1066 = vpop.f32.mrf.mxu0
  %v1067 = vadd.f32 %v1002, %v1066
  %v1068 = vpop.f32.mrf.mxu0
  %1069 = vmatprep.mubr.bf16.mxu0 %v348
  %1070 = vmatmul.mubr.bf16.gmra.mxu0 %v347
  %v1071 = vpop.f32.mrf.mxu0
  %v1072 = vadd.f32 %v1007, %v1071
  %v1073 = vpop.f32.mrf.mxu0
  %v1074 = vpop.f32.mrf.mxu0
  %v1075 = vadd.f32 %v1010, %v1074
  %v1076 = vpop.f32.mrf.mxu0
  %1077 = vdwg.mxu0
  %1078 = vmatprep.subr.bf16.mxu0 0
  %1079 = vmatpush1.bf16.msra.mxu0 %v745
  %1080 = vmatprep.subr.bf16.mxu0 0
  %1081 = vmatpush1.bf16.msra.mxu0 %v744
  %1082 = vmatprep.subr.bf16.mxu0 0
  %1083 = vmatpush1.bf16.msra.mxu0 %v743
  %1084 = vmatprep.subr.bf16.mxu0 0
  %1085 = vmatpush1.bf16.msra.mxu0 %v742
  %1086 = vmatprep.subr.bf16.mxu0 0
  %1087 = vmatpush1.bf16.msra.mxu0 %v741
  %1088 = vmatprep.subr.bf16.mxu0 0
  %1089 = vmatpush1.bf16.msra.mxu0 %v740
  %1090 = vmatprep.subr.bf16.mxu0 0
  %1091 = vmatpush1.bf16.msra.mxu0 %v739
  %1092 = vmatprep.subr.bf16.mxu0 0
  %1093 = vmatpush1.bf16.msra.mxu0 %v738
  %1094 = vmatprep.subr.bf16.mxu0 0
  %1095 = vmatpush2.bf16.msra.mxu0 0
  %1096 = vmatprep.subr.bf16.mxu0 0
  %1097 = vmatpush2.bf16.msra.mxu0 0
  %1098 = vmatprep.subr.bf16.mxu0 0
  %1099 = vmatpush2.bf16.msra.mxu0 0
  %1100 = vmatprep.subr.bf16.mxu0 0
  %1101 = vmatpush2.bf16.msra.mxu0 0
  %1102 = vmatprep.subr.bf16.mxu0 0
  %1103 = vmatpush2.bf16.msra.mxu0 0
  %1104 = vmatprep.subr.bf16.mxu0 0
  %1105 = vmatpush2.bf16.msra.mxu0 0
  %1106 = vmatprep.subr.bf16.mxu0 0
  %1107 = vmatpush2.bf16.msra.mxu0 0
  %1108 = vmatprep.subr.bf16.mxu0 0
  %1109 = vmatpush2.bf16.msra.mxu0 0
  %1110 = vmatprep.mubr.bf16.mxu0 0
  %1111 = vmatmul.mubr.bf16.gmra.mxu0 %v322
  %v1112 = vpop.f32.mrf.mxu0
  %v1113 = vadd.f32 %v1048, %v1112
  %v1114 = vpop.f32.mrf.mxu0
  %v1115 = vpop.f32.mrf.mxu0
  %v1116 = vadd.f32 %v1051, %v1115
  %v1117 = vpop.f32.mrf.mxu0
  %1118 = vmatprep.mubr.bf16.mxu0 0
  %1119 = vmatmul.mubr.bf16.gmra.mxu0 %v331
  %v1120 = vpop.f32.mrf.mxu0
  %v1121 = vadd.f32 %v1056, %v1120
  %v1122 = vpop.f32.mrf.mxu0
  %v1123 = vpop.f32.mrf.mxu0
  %v1124 = vadd.f32 %v1059, %v1123
  %v1125 = vpop.f32.mrf.mxu0
  %1126 = vmatprep.mubr.bf16.mxu0 0
  %1127 = vmatmul.mubr.bf16.gmra.mxu0 %v340
  %v1128 = vpop.f32.mrf.mxu0
  %v1129 = vadd.f32 %v1064, %v1128
  %v1130 = vpop.f32.mrf.mxu0
  %v1131 = vpop.f32.mrf.mxu0
  %v1132 = vadd.f32 %v1067, %v1131
  %v1133 = vpop.f32.mrf.mxu0
  %1134 = vmatprep.mubr.bf16.mxu0 0
  %1135 = vmatmul.mubr.bf16.gmra.mxu0 %v349
  %v1136 = vpop.f32.mrf.mxu0
  %v1137 = vadd.f32 %v1072, %v1136
  %v1138 = vpop.f32.mrf.mxu0
  %v1139 = vpop.f32.mrf.mxu0
  %v1140 = vadd.f32 %v1075, %v1139
  %v1141 = vpop.f32.mrf.mxu0
  %1142 = vdwg.mxu0
  %vm1143 = vcmask 801792
  %v1144 = vsel %vm1143, %v1113, 0.0
  %1145 = vadd.xlane.f32.xlu0 %v1144
  %v1146 = vpop.xlane.xlu0 %1145
  %v1147 = vsel %vm1143, %v1116, 0.0
  %1148 = vadd.xlane.f32.xlu0 %v1147
  %v1149 = vpop.xlane.xlu0 %1148
  %v1150 = vsel %vm1143, %v1121, 0.0
  %1151 = vadd.xlane.f32.xlu0 %v1150
  %v1152 = vpop.xlane.xlu0 %1151
  %v1153 = vsel %vm1143, %v1124, 0.0
  %1154 = vadd.xlane.f32.xlu0 %v1153
  %v1155 = vpop.xlane.xlu0 %1154
  %v1156 = vsel %vm1143, %v1129, 0.0
  %1157 = vadd.xlane.f32.xlu0 %v1156
  %v1158 = vpop.xlane.xlu0 %1157
  %v1159 = vsel %vm1143, %v1132, 0.0
  %1160 = vadd.xlane.f32.xlu0 %v1159
  %v1161 = vpop.xlane.xlu0 %1160
  %v1162 = vsel %vm1143, %v1137, 0.0
  %1163 = vadd.xlane.f32.xlu0 %v1162
  %v1164 = vpop.xlane.xlu0 %1163
  %v1165 = vsel %vm1143, %v1140, 0.0
  %1166 = vadd.xlane.f32.xlu0 %v1165
  %v1167 = vpop.xlane.xlu0 %1166
  %v1168 = vrcp.pop 98.0
  %v1169 = vmul.f32 %v1146, %v1168
  %v1170 = vmul.f32 %v1149, %v1168
  %v1171 = vmul.f32 %v1152, %v1168
  %v1172 = vmul.f32 %v1155, %v1168
  %v1173 = vmul.f32 %v1158, %v1168
  %v1174 = vmul.f32 %v1161, %v1168
  %v1175 = vmul.f32 %v1164, %v1168
  %v1176 = vmul.f32 %v1167, %v1168
  %v1177 = vmul.f32 %v1113, %v1113
  %v1178 = vmul.f32 %v1116, %v1116
  %v1179 = vmul.f32 %v1121, %v1121
  %v1180 = vmul.f32 %v1124, %v1124
  %v1181 = vmul.f32 %v1129, %v1129
  %v1182 = vmul.f32 %v1132, %v1132
  %v1183 = vmul.f32 %v1137, %v1137
  %v1184 = vmul.f32 %v1140, %v1140
  %v1185 = vsel %vm1143, %v1177, 0.0
  %1186 = vadd.xlane.f32.xlu0 %v1185
  %v1187 = vpop.xlane.xlu0 %1186
  %v1188 = vsel %vm1143, %v1178, 0.0
  %1189 = vadd.xlane.f32.xlu0 %v1188
  %v1190 = vpop.xlane.xlu0 %1189
  %v1191 = vsel %vm1143, %v1179, 0.0
  %1192 = vadd.xlane.f32.xlu0 %v1191
  %v1193 = vpop.xlane.xlu0 %1192
  %v1194 = vsel %vm1143, %v1180, 0.0
  %1195 = vadd.xlane.f32.xlu0 %v1194
  %v1196 = vpop.xlane.xlu0 %1195
  %v1197 = vsel %vm1143, %v1181, 0.0
  %1198 = vadd.xlane.f32.xlu0 %v1197
  %v1199 = vpop.xlane.xlu0 %1198
  %v1200 = vsel %vm1143, %v1182, 0.0
  %1201 = vadd.xlane.f32.xlu0 %v1200
  %v1202 = vpop.xlane.xlu0 %1201
  %v1203 = vsel %vm1143, %v1183, 0.0
  %1204 = vadd.xlane.f32.xlu0 %v1203
  %v1205 = vpop.xlane.xlu0 %1204
  %v1206 = vsel %vm1143, %v1184, 0.0
  %1207 = vadd.xlane.f32.xlu0 %v1206
  %v1208 = vpop.xlane.xlu0 %1207
  %v1209 = vmul.f32 %v1187, %v1168
  %v1210 = vmul.f32 %v1190, %v1168
  %v1211 = vmul.f32 %v1193, %v1168
  %v1212 = vmul.f32 %v1196, %v1168
  %v1213 = vmul.f32 %v1199, %v1168
  %v1214 = vmul.f32 %v1202, %v1168
  %v1215 = vmul.f32 %v1205, %v1168
  %v1216 = vmul.f32 %v1208, %v1168
  %v1217 = vmul.f32 %v1169, %v1169
  %v1218 = vmul.f32 %v1170, %v1170
  %v1219 = vmul.f32 %v1171, %v1171
  %v1220 = vmul.f32 %v1172, %v1172
  %v1221 = vmul.f32 %v1173, %v1173
  %v1222 = vmul.f32 %v1174, %v1174
  %v1223 = vmul.f32 %v1175, %v1175
  %v1224 = vmul.f32 %v1176, %v1176
  %v1225 = vsub.f32 %v1209, %v1217
  %v1226 = vsub.f32 %v1210, %v1218
  %v1227 = vsub.f32 %v1211, %v1219
  %v1228 = vsub.f32 %v1212, %v1220
  %v1229 = vsub.f32 %v1213, %v1221
  %v1230 = vsub.f32 %v1214, %v1222
  %v1231 = vsub.f32 %v1215, %v1223
  %v1232 = vsub.f32 %v1216, %v1224
  %v1233 = vmax.f32 %v1225, 0.0
  %v1234 = vmax.f32 %v1226, 0.0
  %v1235 = vmax.f32 %v1227, 0.0
  %v1236 = vmax.f32 %v1228, 0.0
  %v1237 = vmax.f32 %v1229, 0.0
  %v1238 = vmax.f32 %v1230, 0.0
  %v1239 = vmax.f32 %v1231, 0.0
  %v1240 = vmax.f32 %v1232, 0.0
  %v1241 = vld [vmem:[%s2] sm:$0xff]
  %v1242 = vld [vmem:[%s2 + $0x8] sm:$0xff]
  %v1243 = vld [vmem:[%s2 + $0x10] sm:$0xff]
  %v1244 = vld [vmem:[%s2 + $0x18] sm:$0xff]
  %v1245 = vld [vmem:[%s2 + $0x20] sm:$0xff]
  %v1246 = vld [vmem:[%s2 + $0x28] sm:$0xff]
  %v1247 = vld [vmem:[%s2 + $0x30] sm:$0xff]
  %v1248 = vld [vmem:[%s2 + $0x38] sm:$0xff]
  %v1249 = vadd.f32 %v1233, 1e-05
  %v1250 = vadd.f32 %v1234, 1e-05
  %v1251 = vadd.f32 %v1235, 1e-05
  %v1252 = vadd.f32 %v1236, 1e-05
  %v1253 = vadd.f32 %v1237, 1e-05
  %v1254 = vadd.f32 %v1238, 1e-05
  %v1255 = vadd.f32 %v1239, 1e-05
  %v1256 = vadd.f32 %v1240, 1e-05
  %v1257 = vrsqrt.pop %v1249
  %v1258 = vrsqrt.pop %v1250
  %v1259 = vrsqrt.pop %v1251
  %v1260 = vrsqrt.pop %v1252
  %v1261 = vrsqrt.pop %v1253
  %v1262 = vrsqrt.pop %v1254
  %v1263 = vrsqrt.pop %v1255
  %v1264 = vrsqrt.pop %v1256
  %v1265 = vmul.f32 %v1241, %v1257
  %v1266 = vmul.f32 %v1242, %v1258
  %v1267 = vmul.f32 %v1243, %v1259
  %v1268 = vmul.f32 %v1244, %v1260
  %v1269 = vmul.f32 %v1245, %v1261
  %v1270 = vmul.f32 %v1246, %v1262
  %v1271 = vmul.f32 %v1247, %v1263
  %v1272 = vmul.f32 %v1248, %v1264
  %v1273 = vld [vmem:[%s3] sm:$0xff]
  %v1274 = vld [vmem:[%s3 + $0x8] sm:$0xff]
  %v1275 = vld [vmem:[%s3 + $0x10] sm:$0xff]
  %v1276 = vld [vmem:[%s3 + $0x18] sm:$0xff]
  %v1277 = vld [vmem:[%s3 + $0x20] sm:$0xff]
  %v1278 = vld [vmem:[%s3 + $0x28] sm:$0xff]
  %v1279 = vld [vmem:[%s3 + $0x30] sm:$0xff]
  %v1280 = vld [vmem:[%s3 + $0x38] sm:$0xff]
  %v1281 = vmul.f32 %v1169, %v1265
  %v1282 = vmul.f32 %v1170, %v1266
  %v1283 = vmul.f32 %v1171, %v1267
  %v1284 = vmul.f32 %v1172, %v1268
  %v1285 = vmul.f32 %v1173, %v1269
  %v1286 = vmul.f32 %v1174, %v1270
  %v1287 = vmul.f32 %v1175, %v1271
  %v1288 = vmul.f32 %v1176, %v1272
  %v1289 = vsub.f32 %v1273, %v1281
  %v1290 = vsub.f32 %v1274, %v1282
  %v1291 = vsub.f32 %v1275, %v1283
  %v1292 = vsub.f32 %v1276, %v1284
  %v1293 = vsub.f32 %v1277, %v1285
  %v1294 = vsub.f32 %v1278, %v1286
  %v1295 = vsub.f32 %v1279, %v1287
  %v1296 = vsub.f32 %v1280, %v1288
  %1298 = vset.pattern.permute.xlu0 0
  %1299 = vperm.xlu0 %1298, %v1265
  %v1300 = vpop.permute.xlu0 %1299
  %1303 = vset.pattern.permute.xlu0 0
  %1304 = vperm.xlu0 %1303, %v1266
  %v1305 = vpop.permute.xlu0 %1304
  %1308 = vset.pattern.permute.xlu0 0
  %1309 = vperm.xlu0 %1308, %v1267
  %v1310 = vpop.permute.xlu0 %1309
  %1313 = vset.pattern.permute.xlu0 0
  %1314 = vperm.xlu0 %1313, %v1268
  %v1315 = vpop.permute.xlu0 %1314
  %1318 = vset.pattern.permute.xlu0 0
  %1319 = vperm.xlu0 %1318, %v1269
  %v1320 = vpop.permute.xlu0 %1319
  %1323 = vset.pattern.permute.xlu0 0
  %1324 = vperm.xlu0 %1323, %v1270
  %v1325 = vpop.permute.xlu0 %1324
  %1328 = vset.pattern.permute.xlu0 0
  %1329 = vperm.xlu0 %1328, %v1271
  %v1330 = vpop.permute.xlu0 %1329
  %1333 = vset.pattern.permute.xlu0 0
  %1334 = vperm.xlu0 %1333, %v1272
  %v1335 = vpop.permute.xlu0 %1334
  %v1337 = vmul.f32 %v1113, %v1300
  %v1338 = vmul.f32 %v1116, %v1305
  %v1339 = vmul.f32 %v1121, %v1310
  %v1340 = vmul.f32 %v1124, %v1315
  %v1341 = vmul.f32 %v1129, %v1320
  %v1342 = vmul.f32 %v1132, %v1325
  %v1343 = vmul.f32 %v1137, %v1330
  %v1344 = vmul.f32 %v1140, %v1335
  %1346 = vset.pattern.permute.xlu0 0
  %1347 = vperm.xlu0 %1346, %v1289
  %v1348 = vpop.permute.xlu0 %1347
  %1351 = vset.pattern.permute.xlu0 0
  %1352 = vperm.xlu0 %1351, %v1290
  %v1353 = vpop.permute.xlu0 %1352
  %1356 = vset.pattern.permute.xlu0 0
  %1357 = vperm.xlu0 %1356, %v1291
  %v1358 = vpop.permute.xlu0 %1357
  %1361 = vset.pattern.permute.xlu0 0
  %1362 = vperm.xlu0 %1361, %v1292
  %v1363 = vpop.permute.xlu0 %1362
  %1366 = vset.pattern.permute.xlu0 0
  %1367 = vperm.xlu0 %1366, %v1293
  %v1368 = vpop.permute.xlu0 %1367
  %1371 = vset.pattern.permute.xlu0 0
  %1372 = vperm.xlu0 %1371, %v1294
  %v1373 = vpop.permute.xlu0 %1372
  %1376 = vset.pattern.permute.xlu0 0
  %1377 = vperm.xlu0 %1376, %v1295
  %v1378 = vpop.permute.xlu0 %1377
  %1381 = vset.pattern.permute.xlu0 0
  %1382 = vperm.xlu0 %1381, %v1296
  %v1383 = vpop.permute.xlu0 %1382
  %v1385 = vadd.f32 %v1337, %v1348
  %v1386 = vadd.f32 %v1338, %v1353
  %v1387 = vadd.f32 %v1339, %v1358
  %v1388 = vadd.f32 %v1340, %v1363
  %v1389 = vadd.f32 %v1341, %v1368
  %v1390 = vadd.f32 %v1342, %v1373
  %v1391 = vadd.f32 %v1343, %v1378
  %v1392 = vadd.f32 %v1344, %v1383
  %v1393 = vmax.f32 %v1385, 0.0
  %v1394 = vmax.f32 %v1386, 0.0
  %v1395 = vmax.f32 %v1387, 0.0
  %v1396 = vmax.f32 %v1388, 0.0
  %v1397 = vmax.f32 %v1389, 0.0
  %v1398 = vmax.f32 %v1390, 0.0
  %v1399 = vmax.f32 %v1391, 0.0
  %v1400 = vmax.f32 %v1392, 0.0
  %v1401 = vpack.c.bf16 %v1394, %v1393
  %v1402 = vpack.c.bf16 %v1396, %v1395
  %v1403 = vpack.c.bf16 %v1398, %v1397
  %v1404 = vpack.c.bf16 %v1400, %v1399
  %v1409 = vunpack.c.l.b16 %v1401
  %v1410 = vunpack.c.h.b16 %v1401
  %v1411 = vunpack.c.l.b16 %v1402
  %v1412 = vunpack.c.h.b16 %v1402
  %v1413 = vunpack.c.l.b16 %v1403
  %v1414 = vunpack.c.h.b16 %v1403
  %v1415 = vunpack.c.l.b16 %v1404
  %v1416 = vunpack.c.h.b16 %v1404
  %v1417 = vpack.c.b16 %v1409, %v1409
  %v1418 = vpack.c.b16 %v1410, %v1410
  %v1419 = vpack.c.b16 %v1411, %v1411
  %v1420 = vpack.c.b16 %v1412, %v1412
  %v1421 = vpack.c.b16 %v1413, %v1413
  %v1422 = vpack.c.b16 %v1414, %v1414
  %v1423 = vpack.c.b16 %v1415, %v1415
  %v1424 = vpack.c.b16 %v1416, %v1416
  %vm1433 = vcmask 797696
  %1434 = vst.msk [vmem:[%s4] sm:$0xf] %vm1433, %v1417
  %1435 = vst.msk [vmem:[%s4 + $0x4] sm:$0xf] %vm1433, %v1418
  %1436 = vst.msk [vmem:[%s4 + $0x8] sm:$0xf] %vm1433, %v1419
  %1437 = vst.msk [vmem:[%s4 + $0xc] sm:$0xf] %vm1433, %v1420
  %1438 = vst.msk [vmem:[%s4 + $0x10] sm:$0xf] %vm1433, %v1421
  %1439 = vst.msk [vmem:[%s4 + $0x14] sm:$0xf] %vm1433, %v1422
  %1440 = vst.msk [vmem:[%s4 + $0x18] sm:$0xf] %vm1433, %v1423
  %1441 = vst.msk [vmem:[%s4 + $0x1c] sm:$0xf] %vm1433, %v1424
  // Predicated region
  $region18: #{autoencoder_forward.12} parent=0 // pred_check
    _
  $region19: #{autoencoder_forward.12} parent=0 // pred_check_branch
    %1443 = sbr.rel (0) target = $region21
  $region20: #{autoencoder_forward.12} parent=0 // pred_region
    _
  $region21: #{autoencoder_forward.12} parent=0 // pred_fallthru
    _
  // Predicated region
  $region22: #{autoencoder_forward.12} parent=0 // pred_check
    _
  $region23: #{autoencoder_forward.12} parent=0 // pred_check_branch
    %1445 = sbr.rel (0) target = $region25
  $region24: #{autoencoder_forward.12} parent=0 // pred_region
    _
  $region25: #{autoencoder_forward.12} parent=0 // pred_fallthru
    _

// kernel: autoencoder_forward.13
$region0: #{autoencoder_forward.13}
  #allocation0 [shape = 'u32[]', space=smem, size = 0x4, offset = 0x4, fixed_abs, tag = 'smem constant byte address 0x4 - core index']
  #allocation1 [shape = 'u32[144,128]{1,0:T(1,128)}', space=vmem, size = 0x12000, scoped, tag = 'internal scratch']
  %s0 = inlined_call_operand.vmem [shape: bf16[32,576], index: 0, kind: input, shape index: {}]
  %s1 = inlined_call_operand.vmem [shape: bf16[576,392], index: 1, kind: input, shape index: {}]
  %s2 = inlined_call_operand.vmem [shape: f32[32,1], index: 2, kind: input, shape index: {}]
  %s3 = inlined_call_operand.vmem [shape: f32[32,1], index: 3, kind: input, shape index: {}]
  %s4 = inlined_call_operand.vmem [shape: bf16[32,392], index: 4, kind: output, shape index: {}]
  %s5 = sld [smem:[#allocation0]]
  $region26: #{autoencoder_forward.13} parent=0
    _
  %s7 = ssub.s32 1, %s5
  %s8 = scalar_select 0, %s7, %s5
  // Predicated region
  $region2: #{autoencoder_forward.13} parent=0 // pred_check
    _
  $region3: #{autoencoder_forward.13} parent=0 // pred_check_branch
    %10 = sbr.rel (0) target = $region5
  $region4: #{autoencoder_forward.13} parent=0 // pred_region
    _
  $region5: #{autoencoder_forward.13} parent=0 // pred_fallthru
    _
  // Predicated region
  $region6: #{autoencoder_forward.13} parent=0 // pred_check
    _
  $region7: #{autoencoder_forward.13} parent=0 // pred_check_branch
    %12 = sbr.rel (0) target = $region9
  $region8: #{autoencoder_forward.13} parent=0 // pred_region
    _
  $region9: #{autoencoder_forward.13} parent=0 // pred_fallthru
    _
  // Predicated region
  $region10: #{autoencoder_forward.13} parent=0 // pred_check
    _
  $region11: #{autoencoder_forward.13} parent=0 // pred_check_branch
    %14 = sbr.rel (0) target = $region13
  $region12: #{autoencoder_forward.13} parent=0 // pred_region
    _
  $region13: #{autoencoder_forward.13} parent=0 // pred_fallthru
    _
  // Predicated region
  $region14: #{autoencoder_forward.13} parent=0 // pred_check
    _
  $region15: #{autoencoder_forward.13} parent=0 // pred_check_branch
    %16 = sbr.rel (0) target = $region17
  $region16: #{autoencoder_forward.13} parent=0 // pred_region
    _
  $region17: #{autoencoder_forward.13} parent=0 // pred_fallthru
    _
  %v18 = vld [vmem:[%s0] sm:$0xff]
  %v19 = vld [vmem:[%s0 + $0x8] sm:$0xff]
  %v20 = vld [vmem:[%s0 + $0x10] sm:$0xf]
  %v21 = vld [vmem:[%s0 + $0x14] sm:$0xff]
  %v22 = vld [vmem:[%s0 + $0x1c] sm:$0xff]
  %v23 = vld [vmem:[%s0 + $0x24] sm:$0xf]
  %v24 = vld [vmem:[%s0 + $0x28] sm:$0xff]
  %v25 = vld [vmem:[%s0 + $0x30] sm:$0xff]
  %v26 = vld [vmem:[%s0 + $0x38] sm:$0xf]
  %v27 = vld [vmem:[%s0 + $0x3c] sm:$0xff]
  %v28 = vld [vmem:[%s0 + $0x44] sm:$0xff]
  %v29 = vld [vmem:[%s0 + $0x4c] sm:$0xf]
  %v30 = vld [vmem:[%s1] sm:$0xff]
  %v31 = vld [vmem:[%s1 + $0x8] sm:$0xff]
  %v32 = vld [vmem:[%s1 + $0x10] sm:$0xff]
  %v33 = vld [vmem:[%s1 + $0x18] sm:$0xff]
  %v34 = vld [vmem:[%s1 + $0x20] sm:$0xff]
  %v35 = vld [vmem:[%s1 + $0x28] sm:$0xff]
  %v36 = vld [vmem:[%s1 + $0x30] sm:$0xff]
  %v37 = vld [vmem:[%s1 + $0x38] sm:$0xff]
  %v38 = vld [vmem:[%s1 + $0x40] sm:$0xff]
  %v39 = vld [vmem:[%s1 + $0x48] sm:$0xff]
  %v40 = vld [vmem:[%s1 + $0x50] sm:$0xff]
  %v41 = vld [vmem:[%s1 + $0x58] sm:$0xff]
  %v42 = vld [vmem:[%s1 + $0x60] sm:$0xff]
  %v43 = vld [vmem:[%s1 + $0x68] sm:$0xff]
  %v44 = vld [vmem:[%s1 + $0x70] sm:$0xff]
  %v45 = vld [vmem:[%s1 + $0x78] sm:$0xff]
  %v46 = vld [vmem:[%s1 + $0x80] sm:$0xff]
  %v47 = vld [vmem:[%s1 + $0x88] sm:$0xff]
  %v48 = vld [vmem:[%s1 + $0x90] sm:$0xff]
  %v49 = vld [vmem:[%s1 + $0x98] sm:$0xff]
  %v50 = vld [vmem:[%s1 + $0xa0] sm:$0xff]
  %v51 = vld [vmem:[%s1 + $0xa8] sm:$0xff]
  %v52 = vld [vmem:[%s1 + $0xb0] sm:$0xff]
  %v53 = vld [vmem:[%s1 + $0xb8] sm:$0xff]
  %v54 = vld [vmem:[%s1 + $0xc0] sm:$0xff]
  %v55 = vld [vmem:[%s1 + $0xc8] sm:$0xff]
  %v56 = vld [vmem:[%s1 + $0xd0] sm:$0xff]
  %v57 = vld [vmem:[%s1 + $0xd8] sm:$0xff]
  %v58 = vld [vmem:[%s1 + $0xe0] sm:$0xff]
  %v59 = vld [vmem:[%s1 + $0xe8] sm:$0xff]
  %v60 = vld [vmem:[%s1 + $0xf0] sm:$0xff]
  %v61 = vld [vmem:[%s1 + $0xf8] sm:$0xff]
  %v62 = vld [vmem:[%s1 + $0x100] sm:$0xff]
  %v63 = vld [vmem:[%s1 + $0x108] sm:$0xff]
  %v64 = vld [vmem:[%s1 + $0x110] sm:$0xff]
  %v65 = vld [vmem:[%s1 + $0x118] sm:$0xff]
  %v66 = vld [vmem:[%s1 + $0x120] sm:$0xff]
  %v67 = vld [vmem:[%s1 + $0x128] sm:$0xff]
  %v68 = vld [vmem:[%s1 + $0x130] sm:$0xff]
  %v69 = vld [vmem:[%s1 + $0x138] sm:$0xff]
  %v70 = vld [vmem:[%s1 + $0x140] sm:$0xff]
  %v71 = vld [vmem:[%s1 + $0x148] sm:$0xff]
  %v72 = vld [vmem:[%s1 + $0x150] sm:$0xff]
  %v73 = vld [vmem:[%s1 + $0x158] sm:$0xff]
  %v74 = vld [vmem:[%s1 + $0x160] sm:$0xff]
  %v75 = vld [vmem:[%s1 + $0x168] sm:$0xff]
  %v76 = vld [vmem:[%s1 + $0x170] sm:$0xff]
  %v77 = vld [vmem:[%s1 + $0x178] sm:$0xff]
  %v78 = vld [vmem:[%s1 + $0x180] sm:$0xff]
  %v79 = vld [vmem:[%s1 + $0x188] sm:$0xff]
  %v80 = vld [vmem:[%s1 + $0x190] sm:$0xff]
  %v81 = vld [vmem:[%s1 + $0x198] sm:$0xff]
  %v82 = vld [vmem:[%s1 + $0x1a0] sm:$0xff]
  %v83 = vld [vmem:[%s1 + $0x1a8] sm:$0xff]
  %v84 = vld [vmem:[%s1 + $0x1b0] sm:$0xff]
  %v85 = vld [vmem:[%s1 + $0x1b8] sm:$0xff]
  %v86 = vld [vmem:[%s1 + $0x1c0] sm:$0xff]
  %v87 = vld [vmem:[%s1 + $0x1c8] sm:$0xff]
  %v88 = vld [vmem:[%s1 + $0x1d0] sm:$0xff]
  %v89 = vld [vmem:[%s1 + $0x1d8] sm:$0xff]
  %v90 = vld [vmem:[%s1 + $0x1e0] sm:$0xff]
  %v91 = vld [vmem:[%s1 + $0x1e8] sm:$0xff]
  %v92 = vld [vmem:[%s1 + $0x1f0] sm:$0xff]
  %v93 = vld [vmem:[%s1 + $0x1f8] sm:$0xff]
  %v94 = vld [vmem:[%s1 + $0x200] sm:$0xff]
  %v95 = vld [vmem:[%s1 + $0x208] sm:$0xff]
  %v96 = vld [vmem:[%s1 + $0x210] sm:$0xff]
  %v97 = vld [vmem:[%s1 + $0x218] sm:$0xff]
  %v98 = vld [vmem:[%s1 + $0x220] sm:$0xff]
  %v99 = vld [vmem:[%s1 + $0x228] sm:$0xff]
  %v100 = vld [vmem:[%s1 + $0x230] sm:$0xff]
  %v101 = vld [vmem:[%s1 + $0x238] sm:$0xff]
  %v102 = vld [vmem:[%s1 + $0x240] sm:$0xff]
  %v103 = vld [vmem:[%s1 + $0x248] sm:$0xff]
  %v104 = vld [vmem:[%s1 + $0x250] sm:$0xff]
  %v105 = vld [vmem:[%s1 + $0x258] sm:$0xff]
  %v106 = vld [vmem:[%s1 + $0x260] sm:$0xff]
  %v107 = vld [vmem:[%s1 + $0x268] sm:$0xff]
  %v108 = vld [vmem:[%s1 + $0x270] sm:$0xff]
  %v109 = vld [vmem:[%s1 + $0x278] sm:$0xff]
  %v110 = vld [vmem:[%s1 + $0x280] sm:$0xff]
  %v111 = vld [vmem:[%s1 + $0x288] sm:$0xff]
  %v112 = vld [vmem:[%s1 + $0x290] sm:$0xff]
  %v113 = vld [vmem:[%s1 + $0x298] sm:$0xff]
  %v114 = vld [vmem:[%s1 + $0x2a0] sm:$0xff]
  %v115 = vld [vmem:[%s1 + $0x2a8] sm:$0xff]
  %v116 = vld [vmem:[%s1 + $0x2b0] sm:$0xff]
  %v117 = vld [vmem:[%s1 + $0x2b8] sm:$0xff]
  %v118 = vld [vmem:[%s1 + $0x2c0] sm:$0xff]
  %v119 = vld [vmem:[%s1 + $0x2c8] sm:$0xff]
  %v120 = vld [vmem:[%s1 + $0x2d0] sm:$0xff]
  %v121 = vld [vmem:[%s1 + $0x2d8] sm:$0xff]
  %v122 = vld [vmem:[%s1 + $0x2e0] sm:$0xff]
  %v123 = vld [vmem:[%s1 + $0x2e8] sm:$0xff]
  %v124 = vld [vmem:[%s1 + $0x2f0] sm:$0xff]
  %v125 = vld [vmem:[%s1 + $0x2f8] sm:$0xff]
  %v126 = vld [vmem:[%s1 + $0x300] sm:$0xff]
  %v127 = vld [vmem:[%s1 + $0x308] sm:$0xff]
  %v128 = vld [vmem:[%s1 + $0x310] sm:$0xff]
  %v129 = vld [vmem:[%s1 + $0x318] sm:$0xff]
  %v130 = vld [vmem:[%s1 + $0x320] sm:$0xff]
  %v131 = vld [vmem:[%s1 + $0x328] sm:$0xff]
  %v132 = vld [vmem:[%s1 + $0x330] sm:$0xff]
  %v133 = vld [vmem:[%s1 + $0x338] sm:$0xff]
  %v134 = vld [vmem:[%s1 + $0x340] sm:$0xff]
  %v135 = vld [vmem:[%s1 + $0x348] sm:$0xff]
  %v136 = vld [vmem:[%s1 + $0x350] sm:$0xff]
  %v137 = vld [vmem:[%s1 + $0x358] sm:$0xff]
  %v138 = vld [vmem:[%s1 + $0x360] sm:$0xff]
  %v139 = vld [vmem:[%s1 + $0x368] sm:$0xff]
  %v140 = vld [vmem:[%s1 + $0x370] sm:$0xff]
  %v141 = vld [vmem:[%s1 + $0x378] sm:$0xff]
  %v142 = vld [vmem:[%s1 + $0x380] sm:$0xff]
  %v143 = vld [vmem:[%s1 + $0x388] sm:$0xff]
  %v144 = vld [vmem:[%s1 + $0x390] sm:$0xff]
  %v145 = vld [vmem:[%s1 + $0x398] sm:$0xff]
  %v146 = vld [vmem:[%s1 + $0x3a0] sm:$0xff]
  %v147 = vld [vmem:[%s1 + $0x3a8] sm:$0xff]
  %v148 = vld [vmem:[%s1 + $0x3b0] sm:$0xff]
  %v149 = vld [vmem:[%s1 + $0x3b8] sm:$0xff]
  %v150 = vld [vmem:[%s1 + $0x3c0] sm:$0xff]
  %v151 = vld [vmem:[%s1 + $0x3c8] sm:$0xff]
  %v152 = vld [vmem:[%s1 + $0x3d0] sm:$0xff]
  %v153 = vld [vmem:[%s1 + $0x3d8] sm:$0xff]
  %v154 = vld [vmem:[%s1 + $0x3e0] sm:$0xff]
  %v155 = vld [vmem:[%s1 + $0x3e8] sm:$0xff]
  %v156 = vld [vmem:[%s1 + $0x3f0] sm:$0xff]
  %v157 = vld [vmem:[%s1 + $0x3f8] sm:$0xff]
  %v158 = vld [vmem:[%s1 + $0x400] sm:$0xff]
  %v159 = vld [vmem:[%s1 + $0x408] sm:$0xff]
  %v160 = vld [vmem:[%s1 + $0x410] sm:$0xff]
  %v161 = vld [vmem:[%s1 + $0x418] sm:$0xff]
  %v162 = vld [vmem:[%s1 + $0x420] sm:$0xff]
  %v163 = vld [vmem:[%s1 + $0x428] sm:$0xff]
  %v164 = vld [vmem:[%s1 + $0x430] sm:$0xff]
  %v165 = vld [vmem:[%s1 + $0x438] sm:$0xff]
  %v166 = vld [vmem:[%s1 + $0x440] sm:$0xff]
  %v167 = vld [vmem:[%s1 + $0x448] sm:$0xff]
  %v168 = vld [vmem:[%s1 + $0x450] sm:$0xff]
  %v169 = vld [vmem:[%s1 + $0x458] sm:$0xff]
  %v170 = vld [vmem:[%s1 + $0x460] sm:$0xff]
  %v171 = vld [vmem:[%s1 + $0x468] sm:$0xff]
  %v172 = vld [vmem:[%s1 + $0x470] sm:$0xff]
  %v173 = vld [vmem:[%s1 + $0x478] sm:$0xff]
  %v186 = vunpack.c.l.b16 %v18
  %v187 = vunpack.c.h.b16 %v18
  %v188 = vunpack.c.l.b16 %v19
  %v189 = vunpack.c.h.b16 %v19
  %v190 = vunpack.c.l.b16 %v20
  %v191 = vunpack.c.l.b16 %v21
  %v192 = vunpack.c.h.b16 %v21
  %v193 = vunpack.c.l.b16 %v22
  %v194 = vunpack.c.h.b16 %v22
  %v195 = vunpack.c.l.b16 %v23
  %v196 = vunpack.c.l.b16 %v24
  %v197 = vunpack.c.h.b16 %v24
  %v198 = vunpack.c.l.b16 %v25
  %v199 = vunpack.c.h.b16 %v25
  %v200 = vunpack.c.l.b16 %v26
  %v201 = vunpack.c.l.b16 %v27
  %v202 = vunpack.c.h.b16 %v27
  %v203 = vunpack.c.l.b16 %v28
  %v204 = vunpack.c.h.b16 %v28
  %v205 = vunpack.c.l.b16 %v29
  %v206 = vpack.c.b16 %v191, %v186
  %v207 = vpack.c.b16 %v192, %v187
  %v208 = vpack.c.b16 %v193, %v188
  %v209 = vpack.c.b16 %v194, %v189
  %v210 = vpack.c.b16 %v195, %v190
  %v211 = vpack.c.b16 %v201, %v196
  %v212 = vpack.c.b16 %v202, %v197
  %v213 = vpack.c.b16 %v203, %v198
  %v214 = vpack.c.b16 %v204, %v199
  %v215 = vpack.c.b16 %v205, %v200
  %v368 = vunpack.c.l.b16 %v30
  %v369 = vunpack.c.h.b16 %v30
  %v370 = vunpack.c.l.b16 %v31
  %v371 = vunpack.c.h.b16 %v31
  %v372 = vunpack.c.l.b16 %v32
  %v373 = vunpack.c.h.b16 %v32
  %v374 = vunpack.c.l.b16 %v33
  %v375 = vunpack.c.h.b16 %v33
  %v376 = vunpack.c.l.b16 %v34
  %v377 = vunpack.c.h.b16 %v34
  %v378 = vunpack.c.l.b16 %v35
  %v379 = vunpack.c.h.b16 %v35
  %v380 = vunpack.c.l.b16 %v36
  %v381 = vunpack.c.h.b16 %v36
  %v382 = vunpack.c.l.b16 %v37
  %v383 = vunpack.c.h.b16 %v37
  %v384 = vunpack.c.l.b16 %v38
  %v385 = vunpack.c.h.b16 %v38
  %v386 = vunpack.c.l.b16 %v39
  %v387 = vunpack.c.h.b16 %v39
  %v388 = vunpack.c.l.b16 %v40
  %v389 = vunpack.c.h.b16 %v40
  %v390 = vunpack.c.l.b16 %v41
  %v391 = vunpack.c.h.b16 %v41
  %v392 = vunpack.c.l.b16 %v42
  %v393 = vunpack.c.h.b16 %v42
  %v394 = vunpack.c.l.b16 %v43
  %v395 = vunpack.c.h.b16 %v43
  %v396 = vunpack.c.l.b16 %v44
  %v397 = vunpack.c.h.b16 %v44
  %v398 = vunpack.c.l.b16 %v45
  %v399 = vunpack.c.h.b16 %v45
  %v400 = vunpack.c.l.b16 %v46
  %v401 = vunpack.c.h.b16 %v46
  %v402 = vunpack.c.l.b16 %v47
  %v403 = vunpack.c.h.b16 %v47
  %v404 = vunpack.c.l.b16 %v48
  %v405 = vunpack.c.h.b16 %v48
  %v406 = vunpack.c.l.b16 %v49
  %v407 = vunpack.c.h.b16 %v49
  %v408 = vunpack.c.l.b16 %v50
  %v409 = vunpack.c.h.b16 %v50
  %v410 = vunpack.c.l.b16 %v51
  %v411 = vunpack.c.h.b16 %v51
  %v412 = vunpack.c.l.b16 %v52
  %v413 = vunpack.c.h.b16 %v52
  %v414 = vunpack.c.l.b16 %v53
  %v415 = vunpack.c.h.b16 %v53
  %v416 = vunpack.c.l.b16 %v54
  %v417 = vunpack.c.h.b16 %v54
  %v418 = vunpack.c.l.b16 %v55
  %v419 = vunpack.c.h.b16 %v55
  %v420 = vunpack.c.l.b16 %v56
  %v421 = vunpack.c.h.b16 %v56
  %v422 = vunpack.c.l.b16 %v57
  %v423 = vunpack.c.h.b16 %v57
  %v424 = vunpack.c.l.b16 %v58
  %v425 = vunpack.c.h.b16 %v58
  %v426 = vunpack.c.l.b16 %v59
  %v427 = vunpack.c.h.b16 %v59
  %v428 = vunpack.c.l.b16 %v60
  %v429 = vunpack.c.h.b16 %v60
  %v430 = vunpack.c.l.b16 %v61
  %v431 = vunpack.c.h.b16 %v61
  %v432 = vunpack.c.l.b16 %v62
  %v433 = vunpack.c.h.b16 %v62
  %v434 = vunpack.c.l.b16 %v63
  %v435 = vunpack.c.h.b16 %v63
  %v436 = vunpack.c.l.b16 %v64
  %v437 = vunpack.c.h.b16 %v64
  %v438 = vunpack.c.l.b16 %v65
  %v439 = vunpack.c.h.b16 %v65
  %v440 = vunpack.c.l.b16 %v66
  %v441 = vunpack.c.h.b16 %v66
  %v442 = vunpack.c.l.b16 %v67
  %v443 = vunpack.c.h.b16 %v67
  %v444 = vunpack.c.l.b16 %v68
  %v445 = vunpack.c.h.b16 %v68
  %v446 = vunpack.c.l.b16 %v69
  %v447 = vunpack.c.h.b16 %v69
  %v448 = vunpack.c.l.b16 %v70
  %v449 = vunpack.c.h.b16 %v70
  %v450 = vunpack.c.l.b16 %v71
  %v451 = vunpack.c.h.b16 %v71
  %v452 = vunpack.c.l.b16 %v72
  %v453 = vunpack.c.h.b16 %v72
  %v454 = vunpack.c.l.b16 %v73
  %v455 = vunpack.c.h.b16 %v73
  %v456 = vunpack.c.l.b16 %v74
  %v457 = vunpack.c.h.b16 %v74
  %v458 = vunpack.c.l.b16 %v75
  %v459 = vunpack.c.h.b16 %v75
  %v460 = vunpack.c.l.b16 %v76
  %v461 = vunpack.c.h.b16 %v76
  %v462 = vunpack.c.l.b16 %v77
  %v463 = vunpack.c.h.b16 %v77
  %v464 = vunpack.c.l.b16 %v78
  %v465 = vunpack.c.h.b16 %v78
  %v466 = vunpack.c.l.b16 %v79
  %v467 = vunpack.c.h.b16 %v79
  %v468 = vunpack.c.l.b16 %v80
  %v469 = vunpack.c.h.b16 %v80
  %v470 = vunpack.c.l.b16 %v81
  %v471 = vunpack.c.h.b16 %v81
  %v472 = vunpack.c.l.b16 %v82
  %v473 = vunpack.c.h.b16 %v82
  %v474 = vunpack.c.l.b16 %v83
  %v475 = vunpack.c.h.b16 %v83
  %v476 = vunpack.c.l.b16 %v84
  %v477 = vunpack.c.h.b16 %v84
  %v478 = vunpack.c.l.b16 %v85
  %v479 = vunpack.c.h.b16 %v85
  %v480 = vunpack.c.l.b16 %v86
  %v481 = vunpack.c.h.b16 %v86
  %v482 = vunpack.c.l.b16 %v87
  %v483 = vunpack.c.h.b16 %v87
  %v484 = vunpack.c.l.b16 %v88
  %v485 = vunpack.c.h.b16 %v88
  %v486 = vunpack.c.l.b16 %v89
  %v487 = vunpack.c.h.b16 %v89
  %v488 = vunpack.c.l.b16 %v90
  %v489 = vunpack.c.h.b16 %v90
  %v490 = vunpack.c.l.b16 %v91
  %v491 = vunpack.c.h.b16 %v91
  %v492 = vunpack.c.l.b16 %v92
  %v493 = vunpack.c.h.b16 %v92
  %v494 = vunpack.c.l.b16 %v93
  %v495 = vunpack.c.h.b16 %v93
  %v496 = vunpack.c.l.b16 %v94
  %v497 = vunpack.c.h.b16 %v94
  %v498 = vunpack.c.l.b16 %v95
  %v499 = vunpack.c.h.b16 %v95
  %v500 = vunpack.c.l.b16 %v96
  %v501 = vunpack.c.h.b16 %v96
  %v502 = vunpack.c.l.b16 %v97
  %v503 = vunpack.c.h.b16 %v97
  %v504 = vunpack.c.l.b16 %v98
  %v505 = vunpack.c.h.b16 %v98
  %v506 = vunpack.c.l.b16 %v99
  %v507 = vunpack.c.h.b16 %v99
  %v508 = vunpack.c.l.b16 %v100
  %v509 = vunpack.c.h.b16 %v100
  %v510 = vunpack.c.l.b16 %v101
  %v511 = vunpack.c.h.b16 %v101
  %v512 = vunpack.c.l.b16 %v102
  %v513 = vunpack.c.h.b16 %v102
  %v514 = vunpack.c.l.b16 %v103
  %v515 = vunpack.c.h.b16 %v103
  %v516 = vunpack.c.l.b16 %v104
  %v517 = vunpack.c.h.b16 %v104
  %v518 = vunpack.c.l.b16 %v105
  %v519 = vunpack.c.h.b16 %v105
  %v520 = vunpack.c.l.b16 %v106
  %v521 = vunpack.c.h.b16 %v106
  %v522 = vunpack.c.l.b16 %v107
  %v523 = vunpack.c.h.b16 %v107
  %v524 = vunpack.c.l.b16 %v108
  %v525 = vunpack.c.h.b16 %v108
  %v526 = vunpack.c.l.b16 %v109
  %v527 = vunpack.c.h.b16 %v109
  %v528 = vunpack.c.l.b16 %v110
  %v529 = vunpack.c.h.b16 %v110
  %v530 = vunpack.c.l.b16 %v111
  %v531 = vunpack.c.h.b16 %v111
  %v532 = vunpack.c.l.b16 %v112
  %v533 = vunpack.c.h.b16 %v112
  %v534 = vunpack.c.l.b16 %v113
  %v535 = vunpack.c.h.b16 %v113
  %v536 = vunpack.c.l.b16 %v114
  %v537 = vunpack.c.h.b16 %v114
  %v538 = vunpack.c.l.b16 %v115
  %v539 = vunpack.c.h.b16 %v115
  %v540 = vunpack.c.l.b16 %v116
  %v541 = vunpack.c.h.b16 %v116
  %v542 = vunpack.c.l.b16 %v117
  %v543 = vunpack.c.h.b16 %v117
  %v544 = vunpack.c.l.b16 %v118
  %v545 = vunpack.c.h.b16 %v118
  %v546 = vunpack.c.l.b16 %v119
  %v547 = vunpack.c.h.b16 %v119
  %v548 = vunpack.c.l.b16 %v120
  %v549 = vunpack.c.h.b16 %v120
  %v550 = vunpack.c.l.b16 %v121
  %v551 = vunpack.c.h.b16 %v121
  %v552 = vunpack.c.l.b16 %v122
  %v553 = vunpack.c.h.b16 %v122
  %v554 = vunpack.c.l.b16 %v123
  %v555 = vunpack.c.h.b16 %v123
  %v556 = vunpack.c.l.b16 %v124
  %v557 = vunpack.c.h.b16 %v124
  %v558 = vunpack.c.l.b16 %v125
  %v559 = vunpack.c.h.b16 %v125
  %v560 = vunpack.c.l.b16 %v126
  %v561 = vunpack.c.h.b16 %v126
  %v562 = vunpack.c.l.b16 %v127
  %v563 = vunpack.c.h.b16 %v127
  %v564 = vunpack.c.l.b16 %v128
  %v565 = vunpack.c.h.b16 %v128
  %v566 = vunpack.c.l.b16 %v129
  %v567 = vunpack.c.h.b16 %v129
  %v568 = vunpack.c.l.b16 %v130
  %v569 = vunpack.c.h.b16 %v130
  %v570 = vunpack.c.l.b16 %v131
  %v571 = vunpack.c.h.b16 %v131
  %v572 = vunpack.c.l.b16 %v132
  %v573 = vunpack.c.h.b16 %v132
  %v574 = vunpack.c.l.b16 %v133
  %v575 = vunpack.c.h.b16 %v133
  %v576 = vunpack.c.l.b16 %v134
  %v577 = vunpack.c.h.b16 %v134
  %v578 = vunpack.c.l.b16 %v135
  %v579 = vunpack.c.h.b16 %v135
  %v580 = vunpack.c.l.b16 %v136
  %v581 = vunpack.c.h.b16 %v136
  %v582 = vunpack.c.l.b16 %v137
  %v583 = vunpack.c.h.b16 %v137
  %v584 = vunpack.c.l.b16 %v138
  %v585 = vunpack.c.h.b16 %v138
  %v586 = vunpack.c.l.b16 %v139
  %v587 = vunpack.c.h.b16 %v139
  %v588 = vunpack.c.l.b16 %v140
  %v589 = vunpack.c.h.b16 %v140
  %v590 = vunpack.c.l.b16 %v141
  %v591 = vunpack.c.h.b16 %v141
  %v592 = vunpack.c.l.b16 %v142
  %v593 = vunpack.c.h.b16 %v142
  %v594 = vunpack.c.l.b16 %v143
  %v595 = vunpack.c.h.b16 %v143
  %v596 = vunpack.c.l.b16 %v144
  %v597 = vunpack.c.h.b16 %v144
  %v598 = vunpack.c.l.b16 %v145
  %v599 = vunpack.c.h.b16 %v145
  %v600 = vunpack.c.l.b16 %v146
  %v601 = vunpack.c.h.b16 %v146
  %v602 = vunpack.c.l.b16 %v147
  %v603 = vunpack.c.h.b16 %v147
  %v604 = vunpack.c.l.b16 %v148
  %v605 = vunpack.c.h.b16 %v148
  %v606 = vunpack.c.l.b16 %v149
  %v607 = vunpack.c.h.b16 %v149
  %v608 = vunpack.c.l.b16 %v150
  %v609 = vunpack.c.h.b16 %v150
  %v610 = vunpack.c.l.b16 %v151
  %v611 = vunpack.c.h.b16 %v151
  %v612 = vunpack.c.l.b16 %v152
  %v613 = vunpack.c.h.b16 %v152
  %v614 = vunpack.c.l.b16 %v153
  %v615 = vunpack.c.h.b16 %v153
  %v616 = vunpack.c.l.b16 %v154
  %v617 = vunpack.c.h.b16 %v154
  %v618 = vunpack.c.l.b16 %v155
  %v619 = vunpack.c.h.b16 %v155
  %v620 = vunpack.c.l.b16 %v156
  %v621 = vunpack.c.h.b16 %v156
  %v622 = vunpack.c.l.b16 %v157
  %v623 = vunpack.c.h.b16 %v157
  %v624 = vunpack.c.l.b16 %v158
  %v625 = vunpack.c.h.b16 %v158
  %v626 = vunpack.c.l.b16 %v159
  %v627 = vunpack.c.h.b16 %v159
  %v628 = vunpack.c.l.b16 %v160
  %v629 = vunpack.c.h.b16 %v160
  %v630 = vunpack.c.l.b16 %v161
  %v631 = vunpack.c.h.b16 %v161
  %v632 = vunpack.c.l.b16 %v162
  %v633 = vunpack.c.h.b16 %v162
  %v634 = vunpack.c.l.b16 %v163
  %v635 = vunpack.c.h.b16 %v163
  %v636 = vunpack.c.l.b16 %v164
  %v637 = vunpack.c.h.b16 %v164
  %v638 = vunpack.c.l.b16 %v165
  %v639 = vunpack.c.h.b16 %v165
  %v640 = vunpack.c.l.b16 %v166
  %v641 = vunpack.c.h.b16 %v166
  %v642 = vunpack.c.l.b16 %v167
  %v643 = vunpack.c.h.b16 %v167
  %v644 = vunpack.c.l.b16 %v168
  %v645 = vunpack.c.h.b16 %v168
  %v646 = vunpack.c.l.b16 %v169
  %v647 = vunpack.c.h.b16 %v169
  %v648 = vunpack.c.l.b16 %v170
  %v649 = vunpack.c.h.b16 %v170
  %v650 = vunpack.c.l.b16 %v171
  %v651 = vunpack.c.h.b16 %v171
  %v652 = vunpack.c.l.b16 %v172
  %v653 = vunpack.c.h.b16 %v172
  %v654 = vunpack.c.l.b16 %v173
  %v655 = vunpack.c.h.b16 %v173
  %v656 = vpack.c.b16 %v372, %v368
  %v657 = vpack.c.b16 %v373, %v369
  %v658 = vpack.c.b16 %v374, %v370
  %v659 = vpack.c.b16 %v375, %v371
  %v660 = vpack.c.b16 %v380, %v376
  %v661 = vpack.c.b16 %v381, %v377
  %v662 = vpack.c.b16 %v382, %v378
  %v663 = vpack.c.b16 %v383, %v379
  %v664 = vpack.c.b16 %v388, %v384
  %v665 = vpack.c.b16 %v389, %v385
  %v666 = vpack.c.b16 %v390, %v386
  %v667 = vpack.c.b16 %v391, %v387
  %v668 = vpack.c.b16 %v396, %v392
  %v669 = vpack.c.b16 %v397, %v393
  %v670 = vpack.c.b16 %v398, %v394
  %v671 = vpack.c.b16 %v399, %v395
  %v672 = vpack.c.b16 %v404, %v400
  %v673 = vpack.c.b16 %v405, %v401
  %v674 = vpack.c.b16 %v406, %v402
  %v675 = vpack.c.b16 %v407, %v403
  %v676 = vpack.c.b16 %v412, %v408
  %v677 = vpack.c.b16 %v413, %v409
  %v678 = vpack.c.b16 %v414, %v410
  %v679 = vpack.c.b16 %v415, %v411
  %v680 = vpack.c.b16 %v420, %v416
  %v681 = vpack.c.b16 %v421, %v417
  %v682 = vpack.c.b16 %v422, %v418
  %v683 = vpack.c.b16 %v423, %v419
  %v684 = vpack.c.b16 %v428, %v424
  %v685 = vpack.c.b16 %v429, %v425
  %v686 = vpack.c.b16 %v430, %v426
  %v687 = vpack.c.b16 %v431, %v427
  %v688 = vpack.c.b16 %v436, %v432
  %v689 = vpack.c.b16 %v437, %v433
  %v690 = vpack.c.b16 %v438, %v434
  %v691 = vpack.c.b16 %v439, %v435
  %v692 = vpack.c.b16 %v444, %v440
  %v693 = vpack.c.b16 %v445, %v441
  %v694 = vpack.c.b16 %v446, %v442
  %v695 = vpack.c.b16 %v447, %v443
  %v696 = vpack.c.b16 %v452, %v448
  %v697 = vpack.c.b16 %v453, %v449
  %v698 = vpack.c.b16 %v454, %v450
  %v699 = vpack.c.b16 %v455, %v451
  %v700 = vpack.c.b16 %v460, %v456
  %v701 = vpack.c.b16 %v461, %v457
  %v702 = vpack.c.b16 %v462, %v458
  %v703 = vpack.c.b16 %v463, %v459
  %v704 = vpack.c.b16 %v468, %v464
  %v705 = vpack.c.b16 %v469, %v465
  %v706 = vpack.c.b16 %v470, %v466
  %v707 = vpack.c.b16 %v471, %v467
  %v708 = vpack.c.b16 %v476, %v472
  %v709 = vpack.c.b16 %v477, %v473
  %v710 = vpack.c.b16 %v478, %v474
  %v711 = vpack.c.b16 %v479, %v475
  %v712 = vpack.c.b16 %v484, %v480
  %v713 = vpack.c.b16 %v485, %v481
  %v714 = vpack.c.b16 %v486, %v482
  %v715 = vpack.c.b16 %v487, %v483
  %v716 = vpack.c.b16 %v492, %v488
  %v717 = vpack.c.b16 %v493, %v489
  %v718 = vpack.c.b16 %v494, %v490
  %v719 = vpack.c.b16 %v495, %v491
  %v720 = vpack.c.b16 %v500, %v496
  %v721 = vpack.c.b16 %v501, %v497
  %v722 = vpack.c.b16 %v502, %v498
  %v723 = vpack.c.b16 %v503, %v499
  %v724 = vpack.c.b16 %v508, %v504
  %v725 = vpack.c.b16 %v509, %v505
  %v726 = vpack.c.b16 %v510, %v506
  %v727 = vpack.c.b16 %v511, %v507
  %v728 = vpack.c.b16 %v516, %v512
  %v729 = vpack.c.b16 %v517, %v513
  %v730 = vpack.c.b16 %v518, %v514
  %v731 = vpack.c.b16 %v519, %v515
  %v732 = vpack.c.b16 %v524, %v520
  %v733 = vpack.c.b16 %v525, %v521
  %v734 = vpack.c.b16 %v526, %v522
  %v735 = vpack.c.b16 %v527, %v523
  %v736 = vpack.c.b16 %v532, %v528
  %v737 = vpack.c.b16 %v533, %v529
  %v738 = vpack.c.b16 %v534, %v530
  %v739 = vpack.c.b16 %v535, %v531
  %v740 = vpack.c.b16 %v540, %v536
  %v741 = vpack.c.b16 %v541, %v537
  %v742 = vpack.c.b16 %v542, %v538
  %v743 = vpack.c.b16 %v543, %v539
  %v744 = vpack.c.b16 %v548, %v544
  %v745 = vpack.c.b16 %v549, %v545
  %v746 = vpack.c.b16 %v550, %v546
  %v747 = vpack.c.b16 %v551, %v547
  %v748 = vpack.c.b16 %v556, %v552
  %v749 = vpack.c.b16 %v557, %v553
  %v750 = vpack.c.b16 %v558, %v554
  %v751 = vpack.c.b16 %v559, %v555
  %v752 = vpack.c.b16 %v564, %v560
  %v753 = vpack.c.b16 %v565, %v561
  %v754 = vpack.c.b16 %v566, %v562
  %v755 = vpack.c.b16 %v567, %v563
  %v756 = vpack.c.b16 %v572, %v568
  %v757 = vpack.c.b16 %v573, %v569
  %v758 = vpack.c.b16 %v574, %v570
  %v759 = vpack.c.b16 %v575, %v571
  %v760 = vpack.c.b16 %v580, %v576
  %v761 = vpack.c.b16 %v581, %v577
  %v762 = vpack.c.b16 %v582, %v578
  %v763 = vpack.c.b16 %v583, %v579
  %v764 = vpack.c.b16 %v588, %v584
  %v765 = vpack.c.b16 %v589, %v585
  %v766 = vpack.c.b16 %v590, %v586
  %v767 = vpack.c.b16 %v591, %v587
  %v768 = vpack.c.b16 %v596, %v592
  %v769 = vpack.c.b16 %v597, %v593
  %v770 = vpack.c.b16 %v598, %v594
  %v771 = vpack.c.b16 %v599, %v595
  %v772 = vpack.c.b16 %v604, %v600
  %v773 = vpack.c.b16 %v605, %v601
  %v774 = vpack.c.b16 %v606, %v602
  %v775 = vpack.c.b16 %v607, %v603
  %v776 = vpack.c.b16 %v612, %v608
  %v777 = vpack.c.b16 %v613, %v609
  %v778 = vpack.c.b16 %v614, %v610
  %v779 = vpack.c.b16 %v615, %v611
  %v780 = vpack.c.b16 %v620, %v616
  %v781 = vpack.c.b16 %v621, %v617
  %v782 = vpack.c.b16 %v622, %v618
  %v783 = vpack.c.b16 %v623, %v619
  %v784 = vpack.c.b16 %v628, %v624
  %v785 = vpack.c.b16 %v629, %v625
  %v786 = vpack.c.b16 %v630, %v626
  %v787 = vpack.c.b16 %v631, %v627
  %v788 = vpack.c.b16 %v636, %v632
  %v789 = vpack.c.b16 %v637, %v633
  %v790 = vpack.c.b16 %v638, %v634
  %v791 = vpack.c.b16 %v639, %v635
  %v792 = vpack.c.b16 %v644, %v640
  %v793 = vpack.c.b16 %v645, %v641
  %v794 = vpack.c.b16 %v646, %v642
  %v795 = vpack.c.b16 %v647, %v643
  %v796 = vpack.c.b16 %v652, %v648
  %v797 = vpack.c.b16 %v653, %v649
  %v798 = vpack.c.b16 %v654, %v650
  %v799 = vpack.c.b16 %v655, %v651
  %vm944 = vcmask 523264
  %v946 = vsel %vm944, %v210, 0
  %v949 = vsel %vm944, %v215, 0
  %951 = vmatprep.subr.bf16.mxu0 %v685
  %952 = vmatpush1.bf16.msra.mxu0 %v684
  %953 = vmatprep.subr.bf16.mxu0 %v681
  %954 = vmatpush1.bf16.msra.mxu0 %v680
  %955 = vmatprep.subr.bf16.mxu0 %v677
  %956 = vmatpush1.bf16.msra.mxu0 %v676
  %957 = vmatprep.subr.bf16.mxu0 %v673
  %958 = vmatpush1.bf16.msra.mxu0 %v672
  %959 = vmatprep.subr.bf16.mxu0 %v669
  %960 = vmatpush1.bf16.msra.mxu0 %v668
  %961 = vmatprep.subr.bf16.mxu0 %v665
  %962 = vmatpush1.bf16.msra.mxu0 %v664
  %963 = vmatprep.subr.bf16.mxu0 %v661
  %964 = vmatpush1.bf16.msra.mxu0 %v660
  %965 = vmatprep.subr.bf16.mxu0 %v657
  %966 = vmatpush1.bf16.msra.mxu0 %v656
  %967 = vmatprep.subr.bf16.mxu0 %v717
  %968 = vmatpush2.bf16.msra.mxu0 %v716
  %969 = vmatprep.subr.bf16.mxu0 %v713
  %970 = vmatpush2.bf16.msra.mxu0 %v712
  %971 = vmatprep.subr.bf16.mxu0 %v709
  %972 = vmatpush2.bf16.msra.mxu0 %v708
  %973 = vmatprep.subr.bf16.mxu0 %v705
  %974 = vmatpush2.bf16.msra.mxu0 %v704
  %975 = vmatprep.subr.bf16.mxu0 %v701
  %976 = vmatpush2.bf16.msra.mxu0 %v700
  %977 = vmatprep.subr.bf16.mxu0 %v697
  %978 = vmatpush2.bf16.msra.mxu0 %v696
  %979 = vmatprep.subr.bf16.mxu0 %v693
  %980 = vmatpush2.bf16.msra.mxu0 %v692
  %981 = vmatprep.subr.bf16.mxu0 %v689
  %982 = vmatpush2.bf16.msra.mxu0 %v688
  %983 = vmatprep.mubr.bf16.mxu0 %v207
  %984 = vmatmul.mubr.bf16.gmra.mxu0 %v206
  %v985 = vpop.f32.mrf.mxu0
  %v986 = vadd.f32 0.0, %v985
  %v987 = vpop.f32.mrf.mxu0
  %v988 = vadd.f32 0.0, %v987
  %v989 = vpop.f32.mrf.mxu0
  %v990 = vadd.f32 0.0, %v989
  %v991 = vpop.f32.mrf.mxu0
  %v992 = vadd.f32 0.0, %v991
  %993 = vmatprep.mubr.bf16.mxu0 %v212
  %994 = vmatmul.mubr.bf16.gmra.mxu0 %v211
  %v995 = vpop.f32.mrf.mxu0
  %v996 = vadd.f32 0.0, %v995
  %v997 = vpop.f32.mrf.mxu0
  %v998 = vadd.f32 0.0, %v997
  %v999 = vpop.f32.mrf.mxu0
  %v1000 = vadd.f32 0.0, %v999
  %v1001 = vpop.f32.mrf.mxu0
  %v1002 = vadd.f32 0.0, %v1001
  %1003 = vdwg.mxu0
  %1004 = vmatprep.subr.bf16.mxu0 %v749
  %1005 = vmatpush1.bf16.msra.mxu0 %v748
  %1006 = vmatprep.subr.bf16.mxu0 %v745
  %1007 = vmatpush1.bf16.msra.mxu0 %v744
  %1008 = vmatprep.subr.bf16.mxu0 %v741
  %1009 = vmatpush1.bf16.msra.mxu0 %v740
  %1010 = vmatprep.subr.bf16.mxu0 %v737
  %1011 = vmatpush1.bf16.msra.mxu0 %v736
  %1012 = vmatprep.subr.bf16.mxu0 %v733
  %1013 = vmatpush1.bf16.msra.mxu0 %v732
  %1014 = vmatprep.subr.bf16.mxu0 %v729
  %1015 = vmatpush1.bf16.msra.mxu0 %v728
  %1016 = vmatprep.subr.bf16.mxu0 %v725
  %1017 = vmatpush1.bf16.msra.mxu0 %v724
  %1018 = vmatprep.subr.bf16.mxu0 %v721
  %1019 = vmatpush1.bf16.msra.mxu0 %v720
  %1020 = vmatprep.subr.bf16.mxu0 %v781
  %1021 = vmatpush2.bf16.msra.mxu0 %v780
  %1022 = vmatprep.subr.bf16.mxu0 %v777
  %1023 = vmatpush2.bf16.msra.mxu0 %v776
  %1024 = vmatprep.subr.bf16.mxu0 %v773
  %1025 = vmatpush2.bf16.msra.mxu0 %v772
  %1026 = vmatprep.subr.bf16.mxu0 %v769
  %1027 = vmatpush2.bf16.msra.mxu0 %v768
  %1028 = vmatprep.subr.bf16.mxu0 %v765
  %1029 = vmatpush2.bf16.msra.mxu0 %v764
  %1030 = vmatprep.subr.bf16.mxu0 %v761
  %1031 = vmatpush2.bf16.msra.mxu0 %v760
  %1032 = vmatprep.subr.bf16.mxu0 %v757
  %1033 = vmatpush2.bf16.msra.mxu0 %v756
  %1034 = vmatprep.subr.bf16.mxu0 %v753
  %1035 = vmatpush2.bf16.msra.mxu0 %v752
  %1036 = vmatprep.mubr.bf16.mxu0 %v209
  %1037 = vmatmul.mubr.bf16.gmra.mxu0 %v208
  %v1038 = vpop.f32.mrf.mxu0
  %v1039 = vadd.f32 %v986, %v1038
  %v1040 = vpop.f32.mrf.mxu0
  %v1041 = vadd.f32 %v988, %v1040
  %v1042 = vpop.f32.mrf.mxu0
  %v1043 = vadd.f32 %v990, %v1042
  %v1044 = vpop.f32.mrf.mxu0
  %v1045 = vadd.f32 %v992, %v1044
  %1046 = vmatprep.mubr.bf16.mxu0 %v214
  %1047 = vmatmul.mubr.bf16.gmra.mxu0 %v213
  %v1048 = vpop.f32.mrf.mxu0
  %v1049 = vadd.f32 %v996, %v1048
  %v1050 = vpop.f32.mrf.mxu0
  %v1051 = vadd.f32 %v998, %v1050
  %v1052 = vpop.f32.mrf.mxu0
  %v1053 = vadd.f32 %v1000, %v1052
  %v1054 = vpop.f32.mrf.mxu0
  %v1055 = vadd.f32 %v1002, %v1054
  %1056 = vdwg.mxu0
  %1057 = vmatprep.subr.bf16.mxu0 0
  %1058 = vmatpush1.bf16.msra.mxu0 0
  %1059 = vmatprep.subr.bf16.mxu0 0
  %1060 = vmatpush1.bf16.msra.mxu0 0
  %1061 = vmatprep.subr.bf16.mxu0 0
  %1062 = vmatpush1.bf16.msra.mxu0 0
  %1063 = vmatprep.subr.bf16.mxu0 0
  %1064 = vmatpush1.bf16.msra.mxu0 0
  %1065 = vmatprep.subr.bf16.mxu0 %v797
  %1066 = vmatpush1.bf16.msra.mxu0 %v796
  %1067 = vmatprep.subr.bf16.mxu0 %v793
  %1068 = vmatpush1.bf16.msra.mxu0 %v792
  %1069 = vmatprep.subr.bf16.mxu0 %v789
  %1070 = vmatpush1.bf16.msra.mxu0 %v788
  %1071 = vmatprep.subr.bf16.mxu0 %v785
  %1072 = vmatpush1.bf16.msra.mxu0 %v784
  %1073 = vmatprep.subr.bf16.mxu0 0
  %1074 = vmatpush2.bf16.msra.mxu0 0
  %1075 = vmatprep.subr.bf16.mxu0 0
  %1076 = vmatpush2.bf16.msra.mxu0 0
  %1077 = vmatprep.subr.bf16.mxu0 0
  %1078 = vmatpush2.bf16.msra.mxu0 0
  %1079 = vmatprep.subr.bf16.mxu0 0
  %1080 = vmatpush2.bf16.msra.mxu0 0
  %1081 = vmatprep.subr.bf16.mxu0 0
  %1082 = vmatpush2.bf16.msra.mxu0 0
  %1083 = vmatprep.subr.bf16.mxu0 0
  %1084 = vmatpush2.bf16.msra.mxu0 0
  %1085 = vmatprep.subr.bf16.mxu0 0
  %1086 = vmatpush2.bf16.msra.mxu0 0
  %1087 = vmatprep.subr.bf16.mxu0 0
  %1088 = vmatpush2.bf16.msra.mxu0 0
  %1089 = vmatprep.mubr.bf16.mxu0 0
  %1090 = vmatmul.mubr.bf16.gmra.mxu0 %v946
  %v1091 = vpop.f32.mrf.mxu0
  %v1092 = vadd.f32 %v1039, %v1091
  %v1093 = vpop.f32.mrf.mxu0
  %v1094 = vadd.f32 %v1041, %v1093
  %v1095 = vpop.f32.mrf.mxu0
  %v1096 = vadd.f32 %v1043, %v1095
  %v1097 = vpop.f32.mrf.mxu0
  %v1098 = vadd.f32 %v1045, %v1097
  %1099 = vmatprep.mubr.bf16.mxu0 0
  %1100 = vmatmul.mubr.bf16.gmra.mxu0 %v949
  %v1101 = vpop.f32.mrf.mxu0
  %v1102 = vadd.f32 %v1049, %v1101
  %v1103 = vpop.f32.mrf.mxu0
  %v1104 = vadd.f32 %v1051, %v1103
  %v1105 = vpop.f32.mrf.mxu0
  %v1106 = vadd.f32 %v1053, %v1105
  %v1107 = vpop.f32.mrf.mxu0
  %v1108 = vadd.f32 %v1055, %v1107
  %1109 = vdwg.mxu0
  %1110 = vmatprep.subr.bf16.mxu0 %v687
  %1111 = vmatpush1.bf16.msra.mxu0 %v686
  %1112 = vmatprep.subr.bf16.mxu0 %v683
  %1113 = vmatpush1.bf16.msra.mxu0 %v682
  %1114 = vmatprep.subr.bf16.mxu0 %v679
  %1115 = vmatpush1.bf16.msra.mxu0 %v678
  %1116 = vmatprep.subr.bf16.mxu0 %v675
  %1117 = vmatpush1.bf16.msra.mxu0 %v674
  %1118 = vmatprep.subr.bf16.mxu0 %v671
  %1119 = vmatpush1.bf16.msra.mxu0 %v670
  %1120 = vmatprep.subr.bf16.mxu0 %v667
  %1121 = vmatpush1.bf16.msra.mxu0 %v666
  %1122 = vmatprep.subr.bf16.mxu0 %v663
  %1123 = vmatpush1.bf16.msra.mxu0 %v662
  %1124 = vmatprep.subr.bf16.mxu0 %v659
  %1125 = vmatpush1.bf16.msra.mxu0 %v658
  %1126 = vmatprep.subr.bf16.mxu0 %v719
  %1127 = vmatpush2.bf16.msra.mxu0 %v718
  %1128 = vmatprep.subr.bf16.mxu0 %v715
  %1129 = vmatpush2.bf16.msra.mxu0 %v714
  %1130 = vmatprep.subr.bf16.mxu0 %v711
  %1131 = vmatpush2.bf16.msra.mxu0 %v710
  %1132 = vmatprep.subr.bf16.mxu0 %v707
  %1133 = vmatpush2.bf16.msra.mxu0 %v706
  %1134 = vmatprep.subr.bf16.mxu0 %v703
  %1135 = vmatpush2.bf16.msra.mxu0 %v702
  %1136 = vmatprep.subr.bf16.mxu0 %v699
  %1137 = vmatpush2.bf16.msra.mxu0 %v698
  %1138 = vmatprep.subr.bf16.mxu0 %v695
  %1139 = vmatpush2.bf16.msra.mxu0 %v694
  %1140 = vmatprep.subr.bf16.mxu0 %v691
  %1141 = vmatpush2.bf16.msra.mxu0 %v690
  %1142 = vmatprep.mubr.bf16.mxu0 %v207
  %1143 = vmatmul.mubr.bf16.gmra.mxu0 %v206
  %v1144 = vpop.f32.mrf.mxu0
  %v1145 = vadd.f32 0.0, %v1144
  %v1146 = vpop.f32.mrf.mxu0
  %v1147 = vadd.f32 0.0, %v1146
  %v1148 = vpop.f32.mrf.mxu0
  %v1149 = vadd.f32 0.0, %v1148
  %v1150 = vpop.f32.mrf.mxu0
  %v1151 = vadd.f32 0.0, %v1150
  %1152 = vmatprep.mubr.bf16.mxu0 %v212
  %1153 = vmatmul.mubr.bf16.gmra.mxu0 %v211
  %v1154 = vpop.f32.mrf.mxu0
  %v1155 = vadd.f32 0.0, %v1154
  %v1156 = vpop.f32.mrf.mxu0
  %v1157 = vadd.f32 0.0, %v1156
  %v1158 = vpop.f32.mrf.mxu0
  %v1159 = vadd.f32 0.0, %v1158
  %v1160 = vpop.f32.mrf.mxu0
  %v1161 = vadd.f32 0.0, %v1160
  %1162 = vdwg.mxu0
  %1163 = vmatprep.subr.bf16.mxu0 %v751
  %1164 = vmatpush1.bf16.msra.mxu0 %v750
  %1165 = vmatprep.subr.bf16.mxu0 %v747
  %1166 = vmatpush1.bf16.msra.mxu0 %v746
  %1167 = vmatprep.subr.bf16.mxu0 %v743
  %1168 = vmatpush1.bf16.msra.mxu0 %v742
  %1169 = vmatprep.subr.bf16.mxu0 %v739
  %1170 = vmatpush1.bf16.msra.mxu0 %v738
  %1171 = vmatprep.subr.bf16.mxu0 %v735
  %1172 = vmatpush1.bf16.msra.mxu0 %v734
  %1173 = vmatprep.subr.bf16.mxu0 %v731
  %1174 = vmatpush1.bf16.msra.mxu0 %v730
  %1175 = vmatprep.subr.bf16.mxu0 %v727
  %1176 = vmatpush1.bf16.msra.mxu0 %v726
  %1177 = vmatprep.subr.bf16.mxu0 %v723
  %1178 = vmatpush1.bf16.msra.mxu0 %v722
  %1179 = vmatprep.subr.bf16.mxu0 %v783
  %1180 = vmatpush2.bf16.msra.mxu0 %v782
  %1181 = vmatprep.subr.bf16.mxu0 %v779
  %1182 = vmatpush2.bf16.msra.mxu0 %v778
  %1183 = vmatprep.subr.bf16.mxu0 %v775
  %1184 = vmatpush2.bf16.msra.mxu0 %v774
  %1185 = vmatprep.subr.bf16.mxu0 %v771
  %1186 = vmatpush2.bf16.msra.mxu0 %v770
  %1187 = vmatprep.subr.bf16.mxu0 %v767
  %1188 = vmatpush2.bf16.msra.mxu0 %v766
  %1189 = vmatprep.subr.bf16.mxu0 %v763
  %1190 = vmatpush2.bf16.msra.mxu0 %v762
  %1191 = vmatprep.subr.bf16.mxu0 %v759
  %1192 = vmatpush2.bf16.msra.mxu0 %v758
  %1193 = vmatprep.subr.bf16.mxu0 %v755
  %1194 = vmatpush2.bf16.msra.mxu0 %v754
  %1195 = vmatprep.mubr.bf16.mxu0 %v209
  %1196 = vmatmul.mubr.bf16.gmra.mxu0 %v208
  %v1197 = vpop.f32.mrf.mxu0
  %v1198 = vadd.f32 %v1145, %v1197
  %v1199 = vpop.f32.mrf.mxu0
  %v1200 = vadd.f32 %v1147, %v1199
  %v1201 = vpop.f32.mrf.mxu0
  %v1202 = vadd.f32 %v1149, %v1201
  %v1203 = vpop.f32.mrf.mxu0
  %v1204 = vadd.f32 %v1151, %v1203
  %1205 = vmatprep.mubr.bf16.mxu0 %v214
  %1206 = vmatmul.mubr.bf16.gmra.mxu0 %v213
  %v1207 = vpop.f32.mrf.mxu0
  %v1208 = vadd.f32 %v1155, %v1207
  %v1209 = vpop.f32.mrf.mxu0
  %v1210 = vadd.f32 %v1157, %v1209
  %v1211 = vpop.f32.mrf.mxu0
  %v1212 = vadd.f32 %v1159, %v1211
  %v1213 = vpop.f32.mrf.mxu0
  %v1214 = vadd.f32 %v1161, %v1213
  %1215 = vdwg.mxu0
  %1216 = vmatprep.subr.bf16.mxu0 0
  %1217 = vmatpush1.bf16.msra.mxu0 0
  %1218 = vmatprep.subr.bf16.mxu0 0
  %1219 = vmatpush1.bf16.msra.mxu0 0
  %1220 = vmatprep.subr.bf16.mxu0 0
  %1221 = vmatpush1.bf16.msra.mxu0 0
  %1222 = vmatprep.subr.bf16.mxu0 0
  %1223 = vmatpush1.bf16.msra.mxu0 0
  %1224 = vmatprep.subr.bf16.mxu0 %v799
  %1225 = vmatpush1.bf16.msra.mxu0 %v798
  %1226 = vmatprep.subr.bf16.mxu0 %v795
  %1227 = vmatpush1.bf16.msra.mxu0 %v794
  %1228 = vmatprep.subr.bf16.mxu0 %v791
  %1229 = vmatpush1.bf16.msra.mxu0 %v790
  %1230 = vmatprep.subr.bf16.mxu0 %v787
  %1231 = vmatpush1.bf16.msra.mxu0 %v786
  %1232 = vmatprep.subr.bf16.mxu0 0
  %1233 = vmatpush2.bf16.msra.mxu0 0
  %1234 = vmatprep.subr.bf16.mxu0 0
  %1235 = vmatpush2.bf16.msra.mxu0 0
  %1236 = vmatprep.subr.bf16.mxu0 0
  %1237 = vmatpush2.bf16.msra.mxu0 0
  %1238 = vmatprep.subr.bf16.mxu0 0
  %1239 = vmatpush2.bf16.msra.mxu0 0
  %1240 = vmatprep.subr.bf16.mxu0 0
  %1241 = vmatpush2.bf16.msra.mxu0 0
  %1242 = vmatprep.subr.bf16.mxu0 0
  %1243 = vmatpush2.bf16.msra.mxu0 0
  %1244 = vmatprep.subr.bf16.mxu0 0
  %1245 = vmatpush2.bf16.msra.mxu0 0
  %1246 = vmatprep.subr.bf16.mxu0 0
  %1247 = vmatpush2.bf16.msra.mxu0 0
  %1248 = vmatprep.mubr.bf16.mxu0 0
  %1249 = vmatmul.mubr.bf16.gmra.mxu0 %v946
  %v1250 = vpop.f32.mrf.mxu0
  %v1251 = vadd.f32 %v1198, %v1250
  %v1252 = vpop.f32.mrf.mxu0
  %v1253 = vadd.f32 %v1200, %v1252
  %v1254 = vpop.f32.mrf.mxu0
  %v1255 = vadd.f32 %v1202, %v1254
  %v1256 = vpop.f32.mrf.mxu0
  %v1257 = vadd.f32 %v1204, %v1256
  %1258 = vmatprep.mubr.bf16.mxu0 0
  %1259 = vmatmul.mubr.bf16.gmra.mxu0 %v949
  %v1260 = vpop.f32.mrf.mxu0
  %v1261 = vadd.f32 %v1208, %v1260
  %v1262 = vpop.f32.mrf.mxu0
  %v1263 = vadd.f32 %v1210, %v1262
  %v1264 = vpop.f32.mrf.mxu0
  %v1265 = vadd.f32 %v1212, %v1264
  %v1266 = vpop.f32.mrf.mxu0
  %v1267 = vadd.f32 %v1214, %v1266
  %1268 = vdwg.mxu0
  %v1269 = vadd.f32 %v1092, %v1094
  %v1270 = vadd.f32 %v1269, %v1251
  %vm1271 = vcmask 64512
  %v1272 = vsel %vm1271, %v1253, 0.0
  %v1273 = vadd.f32 %v1270, %v1272
  %1274 = vadd.xlane.f32.xlu0 %v1273
  %v1275 = vpop.xlane.xlu0 %1274
  %v1276 = vadd.f32 %v1096, %v1098
  %v1277 = vadd.f32 %v1276, %v1255
  %v1278 = vsel %vm1271, %v1257, 0.0
  %v1279 = vadd.f32 %v1277, %v1278
  %1280 = vadd.xlane.f32.xlu0 %v1279
  %v1281 = vpop.xlane.xlu0 %1280
  %v1282 = vadd.f32 %v1102, %v1104
  %v1283 = vadd.f32 %v1282, %v1261
  %v1284 = vsel %vm1271, %v1263, 0.0
  %v1285 = vadd.f32 %v1283, %v1284
  %1286 = vadd.xlane.f32.xlu0 %v1285
  %v1287 = vpop.xlane.xlu0 %1286
  %v1288 = vadd.f32 %v1106, %v1108
  %v1289 = vadd.f32 %v1288, %v1265
  %v1290 = vsel %vm1271, %v1267, 0.0
  %v1291 = vadd.f32 %v1289, %v1290
  %1292 = vadd.xlane.f32.xlu0 %v1291
  %v1293 = vpop.xlane.xlu0 %1292
  %v1294 = vrcp.pop 392.0
  %v1295 = vmul.f32 %v1275, %v1294
  %v1296 = vmul.f32 %v1281, %v1294
  %v1297 = vmul.f32 %v1287, %v1294
  %v1298 = vmul.f32 %v1293, %v1294
  %v1299 = vmul.f32 %v1092, %v1092
  %v1300 = vmul.f32 %v1094, %v1094
  %v1301 = vmul.f32 %v1251, %v1251
  %v1302 = vmul.f32 %v1253, %v1253
  %v1303 = vmul.f32 %v1096, %v1096
  %v1304 = vmul.f32 %v1098, %v1098
  %v1305 = vmul.f32 %v1255, %v1255
  %v1306 = vmul.f32 %v1257, %v1257
  %v1307 = vmul.f32 %v1102, %v1102
  %v1308 = vmul.f32 %v1104, %v1104
  %v1309 = vmul.f32 %v1261, %v1261
  %v1310 = vmul.f32 %v1263, %v1263
  %v1311 = vmul.f32 %v1106, %v1106
  %v1312 = vmul.f32 %v1108, %v1108
  %v1313 = vmul.f32 %v1265, %v1265
  %v1314 = vmul.f32 %v1267, %v1267
  %v1315 = vadd.f32 %v1299, %v1300
  %v1316 = vadd.f32 %v1315, %v1301
  %v1317 = vsel %vm1271, %v1302, 0.0
  %v1318 = vadd.f32 %v1316, %v1317
  %1319 = vadd.xlane.f32.xlu0 %v1318
  %v1320 = vpop.xlane.xlu0 %1319
  %v1321 = vadd.f32 %v1303, %v1304
  %v1322 = vadd.f32 %v1321, %v1305
  %v1323 = vsel %vm1271, %v1306, 0.0
  %v1324 = vadd.f32 %v1322, %v1323
  %1325 = vadd.xlane.f32.xlu0 %v1324
  %v1326 = vpop.xlane.xlu0 %1325
  %v1327 = vadd.f32 %v1307, %v1308
  %v1328 = vadd.f32 %v1327, %v1309
  %v1329 = vsel %vm1271, %v1310, 0.0
  %v1330 = vadd.f32 %v1328, %v1329
  %1331 = vadd.xlane.f32.xlu0 %v1330
  %v1332 = vpop.xlane.xlu0 %1331
  %v1333 = vadd.f32 %v1311, %v1312
  %v1334 = vadd.f32 %v1333, %v1313
  %v1335 = vsel %vm1271, %v1314, 0.0
  %v1336 = vadd.f32 %v1334, %v1335
  %1337 = vadd.xlane.f32.xlu0 %v1336
  %v1338 = vpop.xlane.xlu0 %1337
  %v1339 = vmul.f32 %v1320, %v1294
  %v1340 = vmul.f32 %v1326, %v1294
  %v1341 = vmul.f32 %v1332, %v1294
  %v1342 = vmul.f32 %v1338, %v1294
  %v1343 = vmul.f32 %v1295, %v1295
  %v1344 = vmul.f32 %v1296, %v1296
  %v1345 = vmul.f32 %v1297, %v1297
  %v1346 = vmul.f32 %v1298, %v1298
  %v1347 = vsub.f32 %v1339, %v1343
  %v1348 = vsub.f32 %v1340, %v1344
  %v1349 = vsub.f32 %v1341, %v1345
  %v1350 = vsub.f32 %v1342, %v1346
  %v1351 = vmax.f32 %v1347, 0.0
  %v1352 = vmax.f32 %v1348, 0.0
  %v1353 = vmax.f32 %v1349, 0.0
  %v1354 = vmax.f32 %v1350, 0.0
  %v1355 = vld [vmem:[%s2] sm:$0xff]
  %v1356 = vld [vmem:[%s2 + $0x8] sm:$0xff]
  %v1357 = vld [vmem:[%s2 + $0x10] sm:$0xff]
  %v1358 = vld [vmem:[%s2 + $0x18] sm:$0xff]
  %v1359 = vadd.f32 %v1351, 1e-05
  %v1360 = vadd.f32 %v1352, 1e-05
  %v1361 = vadd.f32 %v1353, 1e-05
  %v1362 = vadd.f32 %v1354, 1e-05
  %v1363 = vrsqrt.pop %v1359
  %v1364 = vrsqrt.pop %v1360
  %v1365 = vrsqrt.pop %v1361
  %v1366 = vrsqrt.pop %v1362
  %v1367 = vmul.f32 %v1355, %v1363
  %v1368 = vmul.f32 %v1356, %v1364
  %v1369 = vmul.f32 %v1357, %v1365
  %v1370 = vmul.f32 %v1358, %v1366
  %v1371 = vld [vmem:[%s3] sm:$0xff]
  %v1372 = vld [vmem:[%s3 + $0x8] sm:$0xff]
  %v1373 = vld [vmem:[%s3 + $0x10] sm:$0xff]
  %v1374 = vld [vmem:[%s3 + $0x18] sm:$0xff]
  %v1375 = vmul.f32 %v1295, %v1367
  %v1376 = vmul.f32 %v1296, %v1368
  %v1377 = vmul.f32 %v1297, %v1369
  %v1378 = vmul.f32 %v1298, %v1370
  %v1379 = vsub.f32 %v1371, %v1375
  %v1380 = vsub.f32 %v1372, %v1376
  %v1381 = vsub.f32 %v1373, %v1377
  %v1382 = vsub.f32 %v1374, %v1378
  %1384 = vset.pattern.permute.xlu0 0
  %1385 = vperm.xlu0 %1384, %v1367
  %v1386 = vpop.permute.xlu0 %1385
  %1389 = vset.pattern.permute.xlu0 0
  %1390 = vperm.xlu0 %1389, %v1368
  %v1391 = vpop.permute.xlu0 %1390
  %1394 = vset.pattern.permute.xlu0 0
  %1395 = vperm.xlu0 %1394, %v1369
  %v1396 = vpop.permute.xlu0 %1395
  %1399 = vset.pattern.permute.xlu0 0
  %1400 = vperm.xlu0 %1399, %v1370
  %v1401 = vpop.permute.xlu0 %1400
  %v1403 = vmul.f32 %v1092, %v1386
  %v1404 = vmul.f32 %v1094, %v1386
  %v1405 = vmul.f32 %v1251, %v1386
  %v1406 = vmul.f32 %v1253, %v1386
  %v1407 = vmul.f32 %v1096, %v1391
  %v1408 = vmul.f32 %v1098, %v1391
  %v1409 = vmul.f32 %v1255, %v1391
  %v1410 = vmul.f32 %v1257, %v1391
  %v1411 = vmul.f32 %v1102, %v1396
  %v1412 = vmul.f32 %v1104, %v1396
  %v1413 = vmul.f32 %v1261, %v1396
  %v1414 = vmul.f32 %v1263, %v1396
  %v1415 = vmul.f32 %v1106, %v1401
  %v1416 = vmul.f32 %v1108, %v1401
  %v1417 = vmul.f32 %v1265, %v1401
  %v1418 = vmul.f32 %v1267, %v1401
  %1420 = vset.pattern.permute.xlu0 0
  %1421 = vperm.xlu0 %1420, %v1379
  %v1422 = vpop.permute.xlu0 %1421
  %1425 = vset.pattern.permute.xlu0 0
  %1426 = vperm.xlu0 %1425, %v1380
  %v1427 = vpop.permute.xlu0 %1426
  %1430 = vset.pattern.permute.xlu0 0
  %1431 = vperm.xlu0 %1430, %v1381
  %v1432 = vpop.permute.xlu0 %1431
  %1435 = vset.pattern.permute.xlu0 0
  %1436 = vperm.xlu0 %1435, %v1382
  %v1437 = vpop.permute.xlu0 %1436
  %v1439 = vadd.f32 %v1403, %v1422
  %v1440 = vadd.f32 %v1404, %v1422
  %v1441 = vadd.f32 %v1405, %v1422
  %v1442 = vadd.f32 %v1406, %v1422
  %v1443 = vadd.f32 %v1407, %v1427
  %v1444 = vadd.f32 %v1408, %v1427
  %v1445 = vadd.f32 %v1409, %v1427
  %v1446 = vadd.f32 %v1410, %v1427
  %v1447 = vadd.f32 %v1411, %v1432
  %v1448 = vadd.f32 %v1412, %v1432
  %v1449 = vadd.f32 %v1413, %v1432
  %v1450 = vadd.f32 %v1414, %v1432
  %v1451 = vadd.f32 %v1415, %v1437
  %v1452 = vadd.f32 %v1416, %v1437
  %v1453 = vadd.f32 %v1417, %v1437
  %v1454 = vadd.f32 %v1418, %v1437
  %v1455 = vmax.f32 %v1439, 0.0
  %v1456 = vmax.f32 %v1440, 0.0
  %v1457 = vmax.f32 %v1441, 0.0
  %v1458 = vmax.f32 %v1442, 0.0
  %v1459 = vmax.f32 %v1443, 0.0
  %v1460 = vmax.f32 %v1444, 0.0
  %v1461 = vmax.f32 %v1445, 0.0
  %v1462 = vmax.f32 %v1446, 0.0
  %v1463 = vmax.f32 %v1447, 0.0
  %v1464 = vmax.f32 %v1448, 0.0
  %v1465 = vmax.f32 %v1449, 0.0
  %v1466 = vmax.f32 %v1450, 0.0
  %v1467 = vmax.f32 %v1451, 0.0
  %v1468 = vmax.f32 %v1452, 0.0
  %v1469 = vmax.f32 %v1453, 0.0
  %v1470 = vmax.f32 %v1454, 0.0
  %v1471 = vpack.c.bf16 %v1459, %v1455
  %v1472 = vpack.c.bf16 %v1460, %v1456
  %v1473 = vpack.c.bf16 %v1461, %v1457
  %v1474 = vpack.c.bf16 %v1462, %v1458
  %v1475 = vpack.c.bf16 %v1467, %v1463
  %v1476 = vpack.c.bf16 %v1468, %v1464
  %v1477 = vpack.c.bf16 %v1469, %v1465
  %v1478 = vpack.c.bf16 %v1470, %v1466
  %v1487 = vunpack.c.l.b16 %v1471
  %v1488 = vunpack.c.l.b16 %v1472
  %v1489 = vunpack.c.l.b16 %v1473
  %v1490 = vunpack.c.l.b16 %v1474
  %v1491 = vunpack.c.h.b16 %v1471
  %v1492 = vunpack.c.h.b16 %v1472
  %v1493 = vunpack.c.h.b16 %v1473
  %v1494 = vunpack.c.h.b16 %v1474
  %v1495 = vunpack.c.l.b16 %v1475
  %v1496 = vunpack.c.l.b16 %v1476
  %v1497 = vunpack.c.l.b16 %v1477
  %v1498 = vunpack.c.l.b16 %v1478
  %v1499 = vunpack.c.h.b16 %v1475
  %v1500 = vunpack.c.h.b16 %v1476
  %v1501 = vunpack.c.h.b16 %v1477
  %v1502 = vunpack.c.h.b16 %v1478
  %v1503 = vpack.c.b16 %v1488, %v1487
  %v1504 = vpack.c.b16 %v1490, %v1489
  %v1505 = vpack.c.b16 %v1492, %v1491
  %v1506 = vpack.c.b16 %v1494, %v1493
  %v1507 = vpack.c.b16 %v1496, %v1495
  %v1508 = vpack.c.b16 %v1498, %v1497
  %v1509 = vpack.c.b16 %v1500, %v1499
  %v1510 = vpack.c.b16 %v1502, %v1501
  %1519 = vst [vmem:[%s4] sm:$0xff] %v1503
  %vm1520 = vcmask 1043456
  %vm1521 = vcmask 64516
  %vm1522 = vmor %vm1521, %vm1520
  %1523 = vst.msk [vmem:[%s4 + $0x8] sm:$0xff] %vm1522, %v1504
  %1524 = vst [vmem:[%s4 + $0x10] sm:$0xff] %v1505
  %1525 = vst.msk [vmem:[%s4 + $0x18] sm:$0xff] %vm1522, %v1506
  %1526 = vst [vmem:[%s4 + $0x20] sm:$0xff] %v1507
  %1527 = vst.msk [vmem:[%s4 + $0x28] sm:$0xff] %vm1522, %v1508
  %1528 = vst [vmem:[%s4 + $0x30] sm:$0xff] %v1509
  %1529 = vst.msk [vmem:[%s4 + $0x38] sm:$0xff] %vm1522, %v1510
  // Predicated region
  $region18: #{autoencoder_forward.13} parent=0 // pred_check
    _
  $region19: #{autoencoder_forward.13} parent=0 // pred_check_branch
    %1531 = sbr.rel (0) target = $region21
  $region20: #{autoencoder_forward.13} parent=0 // pred_region
    _
  $region21: #{autoencoder_forward.13} parent=0 // pred_fallthru
    _
  // Predicated region
  $region22: #{autoencoder_forward.13} parent=0 // pred_check
    _
  $region23: #{autoencoder_forward.13} parent=0 // pred_check_branch
    %1533 = sbr.rel (0) target = $region25
  $region24: #{autoencoder_forward.13} parent=0 // pred_region
    _
  $region25: #{autoencoder_forward.13} parent=0 // pred_fallthru
    _

// kernel: autoencoder_forward.14
$region0: #{autoencoder_forward.14}
  #allocation0 [shape = 'u32[]', space=smem, size = 0x4, offset = 0x4, fixed_abs, tag = 'smem constant byte address 0x4 - core index']
  #allocation1 [shape = 'u32[144,128]{1,0:T(1,128)}', space=vmem, size = 0x12000, scoped, tag = 'internal scratch']
  %s0 = inlined_call_operand.vmem [shape: bf16[16,288], index: 0, kind: input, shape index: {}]
  %s1 = inlined_call_operand.vmem [shape: bf16[288,1568], index: 1, kind: input, shape index: {}]
  %s2 = inlined_call_operand.vmem [shape: f32[16,1], index: 2, kind: input, shape index: {}]
  %s3 = inlined_call_operand.vmem [shape: f32[16,1], index: 3, kind: input, shape index: {}]
  %s4 = inlined_call_operand.vmem [shape: bf16[16,1568], index: 4, kind: output, shape index: {}]
  %s5 = sld [smem:[#allocation0]]
  $region26: #{autoencoder_forward.14} parent=0
    _
  %s7 = ssub.s32 1, %s5
  %s8 = scalar_select 0, %s7, %s5
  // Predicated region
  $region2: #{autoencoder_forward.14} parent=0 // pred_check
    _
  $region3: #{autoencoder_forward.14} parent=0 // pred_check_branch
    %10 = sbr.rel (0) target = $region5
  $region4: #{autoencoder_forward.14} parent=0 // pred_region
    _
  $region5: #{autoencoder_forward.14} parent=0 // pred_fallthru
    _
  // Predicated region
  $region6: #{autoencoder_forward.14} parent=0 // pred_check
    _
  $region7: #{autoencoder_forward.14} parent=0 // pred_check_branch
    %12 = sbr.rel (0) target = $region9
  $region8: #{autoencoder_forward.14} parent=0 // pred_region
    _
  $region9: #{autoencoder_forward.14} parent=0 // pred_fallthru
    _
  // Predicated region
  $region10: #{autoencoder_forward.14} parent=0 // pred_check
    _
  $region11: #{autoencoder_forward.14} parent=0 // pred_check_branch
    %14 = sbr.rel (0) target = $region13
  $region12: #{autoencoder_forward.14} parent=0 // pred_region
    _
  $region13: #{autoencoder_forward.14} parent=0 // pred_fallthru
    _
  // Predicated region
  $region14: #{autoencoder_forward.14} parent=0 // pred_check
    _
  $region15: #{autoencoder_forward.14} parent=0 // pred_check_branch
    %16 = sbr.rel (0) target = $region17
  $region16: #{autoencoder_forward.14} parent=0 // pred_region
    _
  $region17: #{autoencoder_forward.14} parent=0 // pred_fallthru
    _
  %v18 = vld [vmem:[%s0] sm:$0xff]
  %v19 = vld [vmem:[%s0 + $0x8] sm:$0xf]
  %v20 = vld [vmem:[%s0 + $0xc] sm:$0xff]
  %v21 = vld [vmem:[%s0 + $0x14] sm:$0xf]
  %v22 = vld [vmem:[%s1] sm:$0xff]
  %v23 = vld [vmem:[%s1 + $0x8] sm:$0xff]
  %v24 = vld [vmem:[%s1 + $0x10] sm:$0xff]
  %v25 = vld [vmem:[%s1 + $0x18] sm:$0xff]
  %v26 = vld [vmem:[%s1 + $0x20] sm:$0xff]
  %v27 = vld [vmem:[%s1 + $0x28] sm:$0xff]
  %v28 = vld [vmem:[%s1 + $0x30] sm:$0xf]
  %v29 = vld [vmem:[%s1 + $0x34] sm:$0xff]
  %v30 = vld [vmem:[%s1 + $0x3c] sm:$0xff]
  %v31 = vld [vmem:[%s1 + $0x44] sm:$0xff]
  %v32 = vld [vmem:[%s1 + $0x4c] sm:$0xff]
  %v33 = vld [vmem:[%s1 + $0x54] sm:$0xff]
  %v34 = vld [vmem:[%s1 + $0x5c] sm:$0xff]
  %v35 = vld [vmem:[%s1 + $0x64] sm:$0xf]
  %v36 = vld [vmem:[%s1 + $0x68] sm:$0xff]
  %v37 = vld [vmem:[%s1 + $0x70] sm:$0xff]
  %v38 = vld [vmem:[%s1 + $0x78] sm:$0xff]
  %v39 = vld [vmem:[%s1 + $0x80] sm:$0xff]
  %v40 = vld [vmem:[%s1 + $0x88] sm:$0xff]
  %v41 = vld [vmem:[%s1 + $0x90] sm:$0xff]
  %v42 = vld [vmem:[%s1 + $0x98] sm:$0xf]
  %v43 = vld [vmem:[%s1 + $0x9c] sm:$0xff]
  %v44 = vld [vmem:[%s1 + $0xa4] sm:$0xff]
  %v45 = vld [vmem:[%s1 + $0xac] sm:$0xff]
  %v46 = vld [vmem:[%s1 + $0xb4] sm:$0xff]
  %v47 = vld [vmem:[%s1 + $0xbc] sm:$0xff]
  %v48 = vld [vmem:[%s1 + $0xc4] sm:$0xff]
  %v49 = vld [vmem:[%s1 + $0xcc] sm:$0xf]
  %v50 = vld [vmem:[%s1 + $0xd0] sm:$0xff]
  %v51 = vld [vmem:[%s1 + $0xd8] sm:$0xff]
  %v52 = vld [vmem:[%s1 + $0xe0] sm:$0xff]
  %v53 = vld [vmem:[%s1 + $0xe8] sm:$0xff]
  %v54 = vld [vmem:[%s1 + $0xf0] sm:$0xff]
  %v55 = vld [vmem:[%s1 + $0xf8] sm:$0xff]
  %v56 = vld [vmem:[%s1 + $0x100] sm:$0xf]
  %v57 = vld [vmem:[%s1 + $0x104] sm:$0xff]
  %v58 = vld [vmem:[%s1 + $0x10c] sm:$0xff]
  %v59 = vld [vmem:[%s1 + $0x114] sm:$0xff]
  %v60 = vld [vmem:[%s1 + $0x11c] sm:$0xff]
  %v61 = vld [vmem:[%s1 + $0x124] sm:$0xff]
  %v62 = vld [vmem:[%s1 + $0x12c] sm:$0xff]
  %v63 = vld [vmem:[%s1 + $0x134] sm:$0xf]
  %v64 = vld [vmem:[%s1 + $0x138] sm:$0xff]
  %v65 = vld [vmem:[%s1 + $0x140] sm:$0xff]
  %v66 = vld [vmem:[%s1 + $0x148] sm:$0xff]
  %v67 = vld [vmem:[%s1 + $0x150] sm:$0xff]
  %v68 = vld [vmem:[%s1 + $0x158] sm:$0xff]
  %v69 = vld [vmem:[%s1 + $0x160] sm:$0xff]
  %v70 = vld [vmem:[%s1 + $0x168] sm:$0xf]
  %v71 = vld [vmem:[%s1 + $0x16c] sm:$0xff]
  %v72 = vld [vmem:[%s1 + $0x174] sm:$0xff]
  %v73 = vld [vmem:[%s1 + $0x17c] sm:$0xff]
  %v74 = vld [vmem:[%s1 + $0x184] sm:$0xff]
  %v75 = vld [vmem:[%s1 + $0x18c] sm:$0xff]
  %v76 = vld [vmem:[%s1 + $0x194] sm:$0xff]
  %v77 = vld [vmem:[%s1 + $0x19c] sm:$0xf]
  %v78 = vld [vmem:[%s1 + $0x1a0] sm:$0xff]
  %v79 = vld [vmem:[%s1 + $0x1a8] sm:$0xff]
  %v80 = vld [vmem:[%s1 + $0x1b0] sm:$0xff]
  %v81 = vld [vmem:[%s1 + $0x1b8] sm:$0xff]
  %v82 = vld [vmem:[%s1 + $0x1c0] sm:$0xff]
  %v83 = vld [vmem:[%s1 + $0x1c8] sm:$0xff]
  %v84 = vld [vmem:[%s1 + $0x1d0] sm:$0xf]
  %v85 = vld [vmem:[%s1 + $0x1d4] sm:$0xff]
  %v86 = vld [vmem:[%s1 + $0x1dc] sm:$0xff]
  %v87 = vld [vmem:[%s1 + $0x1e4] sm:$0xff]
  %v88 = vld [vmem:[%s1 + $0x1ec] sm:$0xff]
  %v89 = vld [vmem:[%s1 + $0x1f4] sm:$0xff]
  %v90 = vld [vmem:[%s1 + $0x1fc] sm:$0xff]
  %v91 = vld [vmem:[%s1 + $0x204] sm:$0xf]
  %v92 = vld [vmem:[%s1 + $0x208] sm:$0xff]
  %v93 = vld [vmem:[%s1 + $0x210] sm:$0xff]
  %v94 = vld [vmem:[%s1 + $0x218] sm:$0xff]
  %v95 = vld [vmem:[%s1 + $0x220] sm:$0xff]
  %v96 = vld [vmem:[%s1 + $0x228] sm:$0xff]
  %v97 = vld [vmem:[%s1 + $0x230] sm:$0xff]
  %v98 = vld [vmem:[%s1 + $0x238] sm:$0xf]
  %v99 = vld [vmem:[%s1 + $0x23c] sm:$0xff]
  %v100 = vld [vmem:[%s1 + $0x244] sm:$0xff]
  %v101 = vld [vmem:[%s1 + $0x24c] sm:$0xff]
  %v102 = vld [vmem:[%s1 + $0x254] sm:$0xff]
  %v103 = vld [vmem:[%s1 + $0x25c] sm:$0xff]
  %v104 = vld [vmem:[%s1 + $0x264] sm:$0xff]
  %v105 = vld [vmem:[%s1 + $0x26c] sm:$0xf]
  %v106 = vld [vmem:[%s1 + $0x270] sm:$0xff]
  %v107 = vld [vmem:[%s1 + $0x278] sm:$0xff]
  %v108 = vld [vmem:[%s1 + $0x280] sm:$0xff]
  %v109 = vld [vmem:[%s1 + $0x288] sm:$0xff]
  %v110 = vld [vmem:[%s1 + $0x290] sm:$0xff]
  %v111 = vld [vmem:[%s1 + $0x298] sm:$0xff]
  %v112 = vld [vmem:[%s1 + $0x2a0] sm:$0xf]
  %v113 = vld [vmem:[%s1 + $0x2a4] sm:$0xff]
  %v114 = vld [vmem:[%s1 + $0x2ac] sm:$0xff]
  %v115 = vld [vmem:[%s1 + $0x2b4] sm:$0xff]
  %v116 = vld [vmem:[%s1 + $0x2bc] sm:$0xff]
  %v117 = vld [vmem:[%s1 + $0x2c4] sm:$0xff]
  %v118 = vld [vmem:[%s1 + $0x2cc] sm:$0xff]
  %v119 = vld [vmem:[%s1 + $0x2d4] sm:$0xf]
  %v120 = vld [vmem:[%s1 + $0x2d8] sm:$0xff]
  %v121 = vld [vmem:[%s1 + $0x2e0] sm:$0xff]
  %v122 = vld [vmem:[%s1 + $0x2e8] sm:$0xff]
  %v123 = vld [vmem:[%s1 + $0x2f0] sm:$0xff]
  %v124 = vld [vmem:[%s1 + $0x2f8] sm:$0xff]
  %v125 = vld [vmem:[%s1 + $0x300] sm:$0xff]
  %v126 = vld [vmem:[%s1 + $0x308] sm:$0xf]
  %v127 = vld [vmem:[%s1 + $0x30c] sm:$0xff]
  %v128 = vld [vmem:[%s1 + $0x314] sm:$0xff]
  %v129 = vld [vmem:[%s1 + $0x31c] sm:$0xff]
  %v130 = vld [vmem:[%s1 + $0x324] sm:$0xff]
  %v131 = vld [vmem:[%s1 + $0x32c] sm:$0xff]
  %v132 = vld [vmem:[%s1 + $0x334] sm:$0xff]
  %v133 = vld [vmem:[%s1 + $0x33c] sm:$0xf]
  %v134 = vld [vmem:[%s1 + $0x340] sm:$0xff]
  %v135 = vld [vmem:[%s1 + $0x348] sm:$0xff]
  %v136 = vld [vmem:[%s1 + $0x350] sm:$0xff]
  %v137 = vld [vmem:[%s1 + $0x358] sm:$0xff]
  %v138 = vld [vmem:[%s1 + $0x360] sm:$0xff]
  %v139 = vld [vmem:[%s1 + $0x368] sm:$0xff]
  %v140 = vld [vmem:[%s1 + $0x370] sm:$0xf]
  %v141 = vld [vmem:[%s1 + $0x374] sm:$0xff]
  %v142 = vld [vmem:[%s1 + $0x37c] sm:$0xff]
  %v143 = vld [vmem:[%s1 + $0x384] sm:$0xff]
  %v144 = vld [vmem:[%s1 + $0x38c] sm:$0xff]
  %v145 = vld [vmem:[%s1 + $0x394] sm:$0xff]
  %v146 = vld [vmem:[%s1 + $0x39c] sm:$0xff]
  %v147 = vld [vmem:[%s1 + $0x3a4] sm:$0xf]
  %v148 = vld [vmem:[%s1 + $0x3a8] sm:$0xff]
  %v149 = vld [vmem:[%s1 + $0x3b0] sm:$0xff]
  %v150 = vld [vmem:[%s1 + $0x3b8] sm:$0xff]
  %v151 = vld [vmem:[%s1 + $0x3c0] sm:$0xff]
  %v152 = vld [vmem:[%s1 + $0x3c8] sm:$0xff]
  %v153 = vld [vmem:[%s1 + $0x3d0] sm:$0xff]
  %v154 = vld [vmem:[%s1 + $0x3d8] sm:$0xf]
  %v155 = vld [vmem:[%s1 + $0x3dc] sm:$0xff]
  %v156 = vld [vmem:[%s1 + $0x3e4] sm:$0xff]
  %v157 = vld [vmem:[%s1 + $0x3ec] sm:$0xff]
  %v158 = vld [vmem:[%s1 + $0x3f4] sm:$0xff]
  %v159 = vld [vmem:[%s1 + $0x3fc] sm:$0xff]
  %v160 = vld [vmem:[%s1 + $0x404] sm:$0xff]
  %v161 = vld [vmem:[%s1 + $0x40c] sm:$0xf]
  %v162 = vld [vmem:[%s1 + $0x410] sm:$0xff]
  %v163 = vld [vmem:[%s1 + $0x418] sm:$0xff]
  %v164 = vld [vmem:[%s1 + $0x420] sm:$0xff]
  %v165 = vld [vmem:[%s1 + $0x428] sm:$0xff]
  %v166 = vld [vmem:[%s1 + $0x430] sm:$0xff]
  %v167 = vld [vmem:[%s1 + $0x438] sm:$0xff]
  %v168 = vld [vmem:[%s1 + $0x440] sm:$0xf]
  %v169 = vld [vmem:[%s1 + $0x444] sm:$0xff]
  %v170 = vld [vmem:[%s1 + $0x44c] sm:$0xff]
  %v171 = vld [vmem:[%s1 + $0x454] sm:$0xff]
  %v172 = vld [vmem:[%s1 + $0x45c] sm:$0xff]
  %v173 = vld [vmem:[%s1 + $0x464] sm:$0xff]
  %v174 = vld [vmem:[%s1 + $0x46c] sm:$0xff]
  %v175 = vld [vmem:[%s1 + $0x474] sm:$0xf]
  %v176 = vld [vmem:[%s1 + $0x478] sm:$0xff]
  %v177 = vld [vmem:[%s1 + $0x480] sm:$0xff]
  %v178 = vld [vmem:[%s1 + $0x488] sm:$0xff]
  %v179 = vld [vmem:[%s1 + $0x490] sm:$0xff]
  %v180 = vld [vmem:[%s1 + $0x498] sm:$0xff]
  %v181 = vld [vmem:[%s1 + $0x4a0] sm:$0xff]
  %v182 = vld [vmem:[%s1 + $0x4a8] sm:$0xf]
  %v183 = vld [vmem:[%s1 + $0x4ac] sm:$0xff]
  %v184 = vld [vmem:[%s1 + $0x4b4] sm:$0xff]
  %v185 = vld [vmem:[%s1 + $0x4bc] sm:$0xff]
  %v186 = vld [vmem:[%s1 + $0x4c4] sm:$0xff]
  %v187 = vld [vmem:[%s1 + $0x4cc] sm:$0xff]
  %v188 = vld [vmem:[%s1 + $0x4d4] sm:$0xff]
  %v189 = vld [vmem:[%s1 + $0x4dc] sm:$0xf]
  %v190 = vld [vmem:[%s1 + $0x4e0] sm:$0xff]
  %v191 = vld [vmem:[%s1 + $0x4e8] sm:$0xff]
  %v192 = vld [vmem:[%s1 + $0x4f0] sm:$0xff]
  %v193 = vld [vmem:[%s1 + $0x4f8] sm:$0xff]
  %v194 = vld [vmem:[%s1 + $0x500] sm:$0xff]
  %v195 = vld [vmem:[%s1 + $0x508] sm:$0xff]
  %v196 = vld [vmem:[%s1 + $0x510] sm:$0xf]
  %v197 = vld [vmem:[%s1 + $0x514] sm:$0xff]
  %v198 = vld [vmem:[%s1 + $0x51c] sm:$0xff]
  %v199 = vld [vmem:[%s1 + $0x524] sm:$0xff]
  %v200 = vld [vmem:[%s1 + $0x52c] sm:$0xff]
  %v201 = vld [vmem:[%s1 + $0x534] sm:$0xff]
  %v202 = vld [vmem:[%s1 + $0x53c] sm:$0xff]
  %v203 = vld [vmem:[%s1 + $0x544] sm:$0xf]
  %v204 = vld [vmem:[%s1 + $0x548] sm:$0xff]
  %v205 = vld [vmem:[%s1 + $0x550] sm:$0xff]
  %v206 = vld [vmem:[%s1 + $0x558] sm:$0xff]
  %v207 = vld [vmem:[%s1 + $0x560] sm:$0xff]
  %v208 = vld [vmem:[%s1 + $0x568] sm:$0xff]
  %v209 = vld [vmem:[%s1 + $0x570] sm:$0xff]
  %v210 = vld [vmem:[%s1 + $0x578] sm:$0xf]
  %v211 = vld [vmem:[%s1 + $0x57c] sm:$0xff]
  %v212 = vld [vmem:[%s1 + $0x584] sm:$0xff]
  %v213 = vld [vmem:[%s1 + $0x58c] sm:$0xff]
  %v214 = vld [vmem:[%s1 + $0x594] sm:$0xff]
  %v215 = vld [vmem:[%s1 + $0x59c] sm:$0xff]
  %v216 = vld [vmem:[%s1 + $0x5a4] sm:$0xff]
  %v217 = vld [vmem:[%s1 + $0x5ac] sm:$0xf]
  %v218 = vld [vmem:[%s1 + $0x5b0] sm:$0xff]
  %v219 = vld [vmem:[%s1 + $0x5b8] sm:$0xff]
  %v220 = vld [vmem:[%s1 + $0x5c0] sm:$0xff]
  %v221 = vld [vmem:[%s1 + $0x5c8] sm:$0xff]
  %v222 = vld [vmem:[%s1 + $0x5d0] sm:$0xff]
  %v223 = vld [vmem:[%s1 + $0x5d8] sm:$0xff]
  %v224 = vld [vmem:[%s1 + $0x5e0] sm:$0xf]
  %v225 = vld [vmem:[%s1 + $0x5e4] sm:$0xff]
  %v226 = vld [vmem:[%s1 + $0x5ec] sm:$0xff]
  %v227 = vld [vmem:[%s1 + $0x5f4] sm:$0xff]
  %v228 = vld [vmem:[%s1 + $0x5fc] sm:$0xff]
  %v229 = vld [vmem:[%s1 + $0x604] sm:$0xff]
  %v230 = vld [vmem:[%s1 + $0x60c] sm:$0xff]
  %v231 = vld [vmem:[%s1 + $0x614] sm:$0xf]
  %v232 = vld [vmem:[%s1 + $0x618] sm:$0xff]
  %v233 = vld [vmem:[%s1 + $0x620] sm:$0xff]
  %v234 = vld [vmem:[%s1 + $0x628] sm:$0xff]
  %v235 = vld [vmem:[%s1 + $0x630] sm:$0xff]
  %v236 = vld [vmem:[%s1 + $0x638] sm:$0xff]
  %v237 = vld [vmem:[%s1 + $0x640] sm:$0xff]
  %v238 = vld [vmem:[%s1 + $0x648] sm:$0xf]
  %v239 = vld [vmem:[%s1 + $0x64c] sm:$0xff]
  %v240 = vld [vmem:[%s1 + $0x654] sm:$0xff]
  %v241 = vld [vmem:[%s1 + $0x65c] sm:$0xff]
  %v242 = vld [vmem:[%s1 + $0x664] sm:$0xff]
  %v243 = vld [vmem:[%s1 + $0x66c] sm:$0xff]
  %v244 = vld [vmem:[%s1 + $0x674] sm:$0xff]
  %v245 = vld [vmem:[%s1 + $0x67c] sm:$0xf]
  %v246 = vld [vmem:[%s1 + $0x680] sm:$0xff]
  %v247 = vld [vmem:[%s1 + $0x688] sm:$0xff]
  %v248 = vld [vmem:[%s1 + $0x690] sm:$0xff]
  %v249 = vld [vmem:[%s1 + $0x698] sm:$0xff]
  %v250 = vld [vmem:[%s1 + $0x6a0] sm:$0xff]
  %v251 = vld [vmem:[%s1 + $0x6a8] sm:$0xff]
  %v252 = vld [vmem:[%s1 + $0x6b0] sm:$0xf]
  %v253 = vld [vmem:[%s1 + $0x6b4] sm:$0xff]
  %v254 = vld [vmem:[%s1 + $0x6bc] sm:$0xff]
  %v255 = vld [vmem:[%s1 + $0x6c4] sm:$0xff]
  %v256 = vld [vmem:[%s1 + $0x6cc] sm:$0xff]
  %v257 = vld [vmem:[%s1 + $0x6d4] sm:$0xff]
  %v258 = vld [vmem:[%s1 + $0x6dc] sm:$0xff]
  %v259 = vld [vmem:[%s1 + $0x6e4] sm:$0xf]
  %v260 = vld [vmem:[%s1 + $0x6e8] sm:$0xff]
  %v261 = vld [vmem:[%s1 + $0x6f0] sm:$0xff]
  %v262 = vld [vmem:[%s1 + $0x6f8] sm:$0xff]
  %v263 = vld [vmem:[%s1 + $0x700] sm:$0xff]
  %v264 = vld [vmem:[%s1 + $0x708] sm:$0xff]
  %v265 = vld [vmem:[%s1 + $0x710] sm:$0xff]
  %v266 = vld [vmem:[%s1 + $0x718] sm:$0xf]
  %v267 = vld [vmem:[%s1 + $0x71c] sm:$0xff]
  %v268 = vld [vmem:[%s1 + $0x724] sm:$0xff]
  %v269 = vld [vmem:[%s1 + $0x72c] sm:$0xff]
  %v270 = vld [vmem:[%s1 + $0x734] sm:$0xff]
  %v271 = vld [vmem:[%s1 + $0x73c] sm:$0xff]
  %v272 = vld [vmem:[%s1 + $0x744] sm:$0xff]
  %v273 = vld [vmem:[%s1 + $0x74c] sm:$0xf]
  %v278 = vunpack.c.l.b16 %v18
  %v279 = vunpack.c.h.b16 %v18
  %v280 = vunpack.c.l.b16 %v19
  %v281 = vunpack.c.l.b16 %v20
  %v282 = vunpack.c.h.b16 %v20
  %v283 = vunpack.c.l.b16 %v21
  %v284 = vpack.c.b16 %v281, %v278
  %v285 = vpack.c.b16 %v282, %v279
  %v286 = vpack.c.b16 %v283, %v280
  %v541 = vunpack.c.l.b16 %v22
  %v542 = vunpack.c.h.b16 %v22
  %v543 = vunpack.c.l.b16 %v23
  %v544 = vunpack.c.h.b16 %v23
  %v545 = vunpack.c.l.b16 %v24
  %v546 = vunpack.c.h.b16 %v24
  %v547 = vunpack.c.l.b16 %v25
  %v548 = vunpack.c.h.b16 %v25
  %v549 = vunpack.c.l.b16 %v26
  %v550 = vunpack.c.h.b16 %v26
  %v551 = vunpack.c.l.b16 %v27
  %v552 = vunpack.c.h.b16 %v27
  %v553 = vunpack.c.l.b16 %v28
  %v554 = vunpack.c.l.b16 %v29
  %v555 = vunpack.c.h.b16 %v29
  %v556 = vunpack.c.l.b16 %v30
  %v557 = vunpack.c.h.b16 %v30
  %v558 = vunpack.c.l.b16 %v31
  %v559 = vunpack.c.h.b16 %v31
  %v560 = vunpack.c.l.b16 %v32
  %v561 = vunpack.c.h.b16 %v32
  %v562 = vunpack.c.l.b16 %v33
  %v563 = vunpack.c.h.b16 %v33
  %v564 = vunpack.c.l.b16 %v34
  %v565 = vunpack.c.h.b16 %v34
  %v566 = vunpack.c.l.b16 %v35
  %v567 = vunpack.c.l.b16 %v36
  %v568 = vunpack.c.h.b16 %v36
  %v569 = vunpack.c.l.b16 %v37
  %v570 = vunpack.c.h.b16 %v37
  %v571 = vunpack.c.l.b16 %v38
  %v572 = vunpack.c.h.b16 %v38
  %v573 = vunpack.c.l.b16 %v39
  %v574 = vunpack.c.h.b16 %v39
  %v575 = vunpack.c.l.b16 %v40
  %v576 = vunpack.c.h.b16 %v40
  %v577 = vunpack.c.l.b16 %v41
  %v578 = vunpack.c.h.b16 %v41
  %v579 = vunpack.c.l.b16 %v42
  %v580 = vunpack.c.l.b16 %v43
  %v581 = vunpack.c.h.b16 %v43
  %v582 = vunpack.c.l.b16 %v44
  %v583 = vunpack.c.h.b16 %v44
  %v584 = vunpack.c.l.b16 %v45
  %v585 = vunpack.c.h.b16 %v45
  %v586 = vunpack.c.l.b16 %v46
  %v587 = vunpack.c.h.b16 %v46
  %v588 = vunpack.c.l.b16 %v47
  %v589 = vunpack.c.h.b16 %v47
  %v590 = vunpack.c.l.b16 %v48
  %v591 = vunpack.c.h.b16 %v48
  %v592 = vunpack.c.l.b16 %v49
  %v593 = vunpack.c.l.b16 %v50
  %v594 = vunpack.c.h.b16 %v50
  %v595 = vunpack.c.l.b16 %v51
  %v596 = vunpack.c.h.b16 %v51
  %v597 = vunpack.c.l.b16 %v52
  %v598 = vunpack.c.h.b16 %v52
  %v599 = vunpack.c.l.b16 %v53
  %v600 = vunpack.c.h.b16 %v53
  %v601 = vunpack.c.l.b16 %v54
  %v602 = vunpack.c.h.b16 %v54
  %v603 = vunpack.c.l.b16 %v55
  %v604 = vunpack.c.h.b16 %v55
  %v605 = vunpack.c.l.b16 %v56
  %v606 = vunpack.c.l.b16 %v57
  %v607 = vunpack.c.h.b16 %v57
  %v608 = vunpack.c.l.b16 %v58
  %v609 = vunpack.c.h.b16 %v58
  %v610 = vunpack.c.l.b16 %v59
  %v611 = vunpack.c.h.b16 %v59
  %v612 = vunpack.c.l.b16 %v60
  %v613 = vunpack.c.h.b16 %v60
  %v614 = vunpack.c.l.b16 %v61
  %v615 = vunpack.c.h.b16 %v61
  %v616 = vunpack.c.l.b16 %v62
  %v617 = vunpack.c.h.b16 %v62
  %v618 = vunpack.c.l.b16 %v63
  %v619 = vunpack.c.l.b16 %v64
  %v620 = vunpack.c.h.b16 %v64
  %v621 = vunpack.c.l.b16 %v65
  %v622 = vunpack.c.h.b16 %v65
  %v623 = vunpack.c.l.b16 %v66
  %v624 = vunpack.c.h.b16 %v66
  %v625 = vunpack.c.l.b16 %v67
  %v626 = vunpack.c.h.b16 %v67
  %v627 = vunpack.c.l.b16 %v68
  %v628 = vunpack.c.h.b16 %v68
  %v629 = vunpack.c.l.b16 %v69
  %v630 = vunpack.c.h.b16 %v69
  %v631 = vunpack.c.l.b16 %v70
  %v632 = vunpack.c.l.b16 %v71
  %v633 = vunpack.c.h.b16 %v71
  %v634 = vunpack.c.l.b16 %v72
  %v635 = vunpack.c.h.b16 %v72
  %v636 = vunpack.c.l.b16 %v73
  %v637 = vunpack.c.h.b16 %v73
  %v638 = vunpack.c.l.b16 %v74
  %v639 = vunpack.c.h.b16 %v74
  %v640 = vunpack.c.l.b16 %v75
  %v641 = vunpack.c.h.b16 %v75
  %v642 = vunpack.c.l.b16 %v76
  %v643 = vunpack.c.h.b16 %v76
  %v644 = vunpack.c.l.b16 %v77
  %v645 = vunpack.c.l.b16 %v78
  %v646 = vunpack.c.h.b16 %v78
  %v647 = vunpack.c.l.b16 %v79
  %v648 = vunpack.c.h.b16 %v79
  %v649 = vunpack.c.l.b16 %v80
  %v650 = vunpack.c.h.b16 %v80
  %v651 = vunpack.c.l.b16 %v81
  %v652 = vunpack.c.h.b16 %v81
  %v653 = vunpack.c.l.b16 %v82
  %v654 = vunpack.c.h.b16 %v82
  %v655 = vunpack.c.l.b16 %v83
  %v656 = vunpack.c.h.b16 %v83
  %v657 = vunpack.c.l.b16 %v84
  %v658 = vunpack.c.l.b16 %v85
  %v659 = vunpack.c.h.b16 %v85
  %v660 = vunpack.c.l.b16 %v86
  %v661 = vunpack.c.h.b16 %v86
  %v662 = vunpack.c.l.b16 %v87
  %v663 = vunpack.c.h.b16 %v87
  %v664 = vunpack.c.l.b16 %v88
  %v665 = vunpack.c.h.b16 %v88
  %v666 = vunpack.c.l.b16 %v89
  %v667 = vunpack.c.h.b16 %v89
  %v668 = vunpack.c.l.b16 %v90
  %v669 = vunpack.c.h.b16 %v90
  %v670 = vunpack.c.l.b16 %v91
  %v671 = vunpack.c.l.b16 %v92
  %v672 = vunpack.c.h.b16 %v92
  %v673 = vunpack.c.l.b16 %v93
  %v674 = vunpack.c.h.b16 %v93
  %v675 = vunpack.c.l.b16 %v94
  %v676 = vunpack.c.h.b16 %v94
  %v677 = vunpack.c.l.b16 %v95
  %v678 = vunpack.c.h.b16 %v95
  %v679 = vunpack.c.l.b16 %v96
  %v680 = vunpack.c.h.b16 %v96
  %v681 = vunpack.c.l.b16 %v97
  %v682 = vunpack.c.h.b16 %v97
  %v683 = vunpack.c.l.b16 %v98
  %v684 = vunpack.c.l.b16 %v99
  %v685 = vunpack.c.h.b16 %v99
  %v686 = vunpack.c.l.b16 %v100
  %v687 = vunpack.c.h.b16 %v100
  %v688 = vunpack.c.l.b16 %v101
  %v689 = vunpack.c.h.b16 %v101
  %v690 = vunpack.c.l.b16 %v102
  %v691 = vunpack.c.h.b16 %v102
  %v692 = vunpack.c.l.b16 %v103
  %v693 = vunpack.c.h.b16 %v103
  %v694 = vunpack.c.l.b16 %v104
  %v695 = vunpack.c.h.b16 %v104
  %v696 = vunpack.c.l.b16 %v105
  %v697 = vunpack.c.l.b16 %v106
  %v698 = vunpack.c.h.b16 %v106
  %v699 = vunpack.c.l.b16 %v107
  %v700 = vunpack.c.h.b16 %v107
  %v701 = vunpack.c.l.b16 %v108
  %v702 = vunpack.c.h.b16 %v108
  %v703 = vunpack.c.l.b16 %v109
  %v704 = vunpack.c.h.b16 %v109
  %v705 = vunpack.c.l.b16 %v110
  %v706 = vunpack.c.h.b16 %v110
  %v707 = vunpack.c.l.b16 %v111
  %v708 = vunpack.c.h.b16 %v111
  %v709 = vunpack.c.l.b16 %v112
  %v710 = vunpack.c.l.b16 %v113
  %v711 = vunpack.c.h.b16 %v113
  %v712 = vunpack.c.l.b16 %v114
  %v713 = vunpack.c.h.b16 %v114
  %v714 = vunpack.c.l.b16 %v115
  %v715 = vunpack.c.h.b16 %v115
  %v716 = vunpack.c.l.b16 %v116
  %v717 = vunpack.c.h.b16 %v116
  %v718 = vunpack.c.l.b16 %v117
  %v719 = vunpack.c.h.b16 %v117
  %v720 = vunpack.c.l.b16 %v118
  %v721 = vunpack.c.h.b16 %v118
  %v722 = vunpack.c.l.b16 %v119
  %v723 = vunpack.c.l.b16 %v120
  %v724 = vunpack.c.h.b16 %v120
  %v725 = vunpack.c.l.b16 %v121
  %v726 = vunpack.c.h.b16 %v121
  %v727 = vunpack.c.l.b16 %v122
  %v728 = vunpack.c.h.b16 %v122
  %v729 = vunpack.c.l.b16 %v123
  %v730 = vunpack.c.h.b16 %v123
  %v731 = vunpack.c.l.b16 %v124
  %v732 = vunpack.c.h.b16 %v124
  %v733 = vunpack.c.l.b16 %v125
  %v734 = vunpack.c.h.b16 %v125
  %v735 = vunpack.c.l.b16 %v126
  %v736 = vunpack.c.l.b16 %v127
  %v737 = vunpack.c.h.b16 %v127
  %v738 = vunpack.c.l.b16 %v128
  %v739 = vunpack.c.h.b16 %v128
  %v740 = vunpack.c.l.b16 %v129
  %v741 = vunpack.c.h.b16 %v129
  %v742 = vunpack.c.l.b16 %v130
  %v743 = vunpack.c.h.b16 %v130
  %v744 = vunpack.c.l.b16 %v131
  %v745 = vunpack.c.h.b16 %v131
  %v746 = vunpack.c.l.b16 %v132
  %v747 = vunpack.c.h.b16 %v132
  %v748 = vunpack.c.l.b16 %v133
  %v749 = vunpack.c.l.b16 %v134
  %v750 = vunpack.c.h.b16 %v134
  %v751 = vunpack.c.l.b16 %v135
  %v752 = vunpack.c.h.b16 %v135
  %v753 = vunpack.c.l.b16 %v136
  %v754 = vunpack.c.h.b16 %v136
  %v755 = vunpack.c.l.b16 %v137
  %v756 = vunpack.c.h.b16 %v137
  %v757 = vunpack.c.l.b16 %v138
  %v758 = vunpack.c.h.b16 %v138
  %v759 = vunpack.c.l.b16 %v139
  %v760 = vunpack.c.h.b16 %v139
  %v761 = vunpack.c.l.b16 %v140
  %v762 = vunpack.c.l.b16 %v141
  %v763 = vunpack.c.h.b16 %v141
  %v764 = vunpack.c.l.b16 %v142
  %v765 = vunpack.c.h.b16 %v142
  %v766 = vunpack.c.l.b16 %v143
  %v767 = vunpack.c.h.b16 %v143
  %v768 = vunpack.c.l.b16 %v144
  %v769 = vunpack.c.h.b16 %v144
  %v770 = vunpack.c.l.b16 %v145
  %v771 = vunpack.c.h.b16 %v145
  %v772 = vunpack.c.l.b16 %v146
  %v773 = vunpack.c.h.b16 %v146
  %v774 = vunpack.c.l.b16 %v147
  %v775 = vunpack.c.l.b16 %v148
  %v776 = vunpack.c.h.b16 %v148
  %v777 = vunpack.c.l.b16 %v149
  %v778 = vunpack.c.h.b16 %v149
  %v779 = vunpack.c.l.b16 %v150
  %v780 = vunpack.c.h.b16 %v150
  %v781 = vunpack.c.l.b16 %v151
  %v782 = vunpack.c.h.b16 %v151
  %v783 = vunpack.c.l.b16 %v152
  %v784 = vunpack.c.h.b16 %v152
  %v785 = vunpack.c.l.b16 %v153
  %v786 = vunpack.c.h.b16 %v153
  %v787 = vunpack.c.l.b16 %v154
  %v788 = vunpack.c.l.b16 %v155
  %v789 = vunpack.c.h.b16 %v155
  %v790 = vunpack.c.l.b16 %v156
  %v791 = vunpack.c.h.b16 %v156
  %v792 = vunpack.c.l.b16 %v157
  %v793 = vunpack.c.h.b16 %v157
  %v794 = vunpack.c.l.b16 %v158
  %v795 = vunpack.c.h.b16 %v158
  %v796 = vunpack.c.l.b16 %v159
  %v797 = vunpack.c.h.b16 %v159
  %v798 = vunpack.c.l.b16 %v160
  %v799 = vunpack.c.h.b16 %v160
  %v800 = vunpack.c.l.b16 %v161
  %v801 = vunpack.c.l.b16 %v162
  %v802 = vunpack.c.h.b16 %v162
  %v803 = vunpack.c.l.b16 %v163
  %v804 = vunpack.c.h.b16 %v163
  %v805 = vunpack.c.l.b16 %v164
  %v806 = vunpack.c.h.b16 %v164
  %v807 = vunpack.c.l.b16 %v165
  %v808 = vunpack.c.h.b16 %v165
  %v809 = vunpack.c.l.b16 %v166
  %v810 = vunpack.c.h.b16 %v166
  %v811 = vunpack.c.l.b16 %v167
  %v812 = vunpack.c.h.b16 %v167
  %v813 = vunpack.c.l.b16 %v168
  %v814 = vunpack.c.l.b16 %v169
  %v815 = vunpack.c.h.b16 %v169
  %v816 = vunpack.c.l.b16 %v170
  %v817 = vunpack.c.h.b16 %v170
  %v818 = vunpack.c.l.b16 %v171
  %v819 = vunpack.c.h.b16 %v171
  %v820 = vunpack.c.l.b16 %v172
  %v821 = vunpack.c.h.b16 %v172
  %v822 = vunpack.c.l.b16 %v173
  %v823 = vunpack.c.h.b16 %v173
  %v824 = vunpack.c.l.b16 %v174
  %v825 = vunpack.c.h.b16 %v174
  %v826 = vunpack.c.l.b16 %v175
  %v827 = vunpack.c.l.b16 %v176
  %v828 = vunpack.c.h.b16 %v176
  %v829 = vunpack.c.l.b16 %v177
  %v830 = vunpack.c.h.b16 %v177
  %v831 = vunpack.c.l.b16 %v178
  %v832 = vunpack.c.h.b16 %v178
  %v833 = vunpack.c.l.b16 %v179
  %v834 = vunpack.c.h.b16 %v179
  %v835 = vunpack.c.l.b16 %v180
  %v836 = vunpack.c.h.b16 %v180
  %v837 = vunpack.c.l.b16 %v181
  %v838 = vunpack.c.h.b16 %v181
  %v839 = vunpack.c.l.b16 %v182
  %v840 = vunpack.c.l.b16 %v183
  %v841 = vunpack.c.h.b16 %v183
  %v842 = vunpack.c.l.b16 %v184
  %v843 = vunpack.c.h.b16 %v184
  %v844 = vunpack.c.l.b16 %v185
  %v845 = vunpack.c.h.b16 %v185
  %v846 = vunpack.c.l.b16 %v186
  %v847 = vunpack.c.h.b16 %v186
  %v848 = vunpack.c.l.b16 %v187
  %v849 = vunpack.c.h.b16 %v187
  %v850 = vunpack.c.l.b16 %v188
  %v851 = vunpack.c.h.b16 %v188
  %v852 = vunpack.c.l.b16 %v189
  %v853 = vunpack.c.l.b16 %v190
  %v854 = vunpack.c.h.b16 %v190
  %v855 = vunpack.c.l.b16 %v191
  %v856 = vunpack.c.h.b16 %v191
  %v857 = vunpack.c.l.b16 %v192
  %v858 = vunpack.c.h.b16 %v192
  %v859 = vunpack.c.l.b16 %v193
  %v860 = vunpack.c.h.b16 %v193
  %v861 = vunpack.c.l.b16 %v194
  %v862 = vunpack.c.h.b16 %v194
  %v863 = vunpack.c.l.b16 %v195
  %v864 = vunpack.c.h.b16 %v195
  %v865 = vunpack.c.l.b16 %v196
  %v866 = vunpack.c.l.b16 %v197
  %v867 = vunpack.c.h.b16 %v197
  %v868 = vunpack.c.l.b16 %v198
  %v869 = vunpack.c.h.b16 %v198
  %v870 = vunpack.c.l.b16 %v199
  %v871 = vunpack.c.h.b16 %v199
  %v872 = vunpack.c.l.b16 %v200
  %v873 = vunpack.c.h.b16 %v200
  %v874 = vunpack.c.l.b16 %v201
  %v875 = vunpack.c.h.b16 %v201
  %v876 = vunpack.c.l.b16 %v202
  %v877 = vunpack.c.h.b16 %v202
  %v878 = vunpack.c.l.b16 %v203
  %v879 = vunpack.c.l.b16 %v204
  %v880 = vunpack.c.h.b16 %v204
  %v881 = vunpack.c.l.b16 %v205
  %v882 = vunpack.c.h.b16 %v205
  %v883 = vunpack.c.l.b16 %v206
  %v884 = vunpack.c.h.b16 %v206
  %v885 = vunpack.c.l.b16 %v207
  %v886 = vunpack.c.h.b16 %v207
  %v887 = vunpack.c.l.b16 %v208
  %v888 = vunpack.c.h.b16 %v208
  %v889 = vunpack.c.l.b16 %v209
  %v890 = vunpack.c.h.b16 %v209
  %v891 = vunpack.c.l.b16 %v210
  %v892 = vunpack.c.l.b16 %v211
  %v893 = vunpack.c.h.b16 %v211
  %v894 = vunpack.c.l.b16 %v212
  %v895 = vunpack.c.h.b16 %v212
  %v896 = vunpack.c.l.b16 %v213
  %v897 = vunpack.c.h.b16 %v213
  %v898 = vunpack.c.l.b16 %v214
  %v899 = vunpack.c.h.b16 %v214
  %v900 = vunpack.c.l.b16 %v215
  %v901 = vunpack.c.h.b16 %v215
  %v902 = vunpack.c.l.b16 %v216
  %v903 = vunpack.c.h.b16 %v216
  %v904 = vunpack.c.l.b16 %v217
  %v905 = vunpack.c.l.b16 %v218
  %v906 = vunpack.c.h.b16 %v218
  %v907 = vunpack.c.l.b16 %v219
  %v908 = vunpack.c.h.b16 %v219
  %v909 = vunpack.c.l.b16 %v220
  %v910 = vunpack.c.h.b16 %v220
  %v911 = vunpack.c.l.b16 %v221
  %v912 = vunpack.c.h.b16 %v221
  %v913 = vunpack.c.l.b16 %v222
  %v914 = vunpack.c.h.b16 %v222
  %v915 = vunpack.c.l.b16 %v223
  %v916 = vunpack.c.h.b16 %v223
  %v917 = vunpack.c.l.b16 %v224
  %v918 = vunpack.c.l.b16 %v225
  %v919 = vunpack.c.h.b16 %v225
  %v920 = vunpack.c.l.b16 %v226
  %v921 = vunpack.c.h.b16 %v226
  %v922 = vunpack.c.l.b16 %v227
  %v923 = vunpack.c.h.b16 %v227
  %v924 = vunpack.c.l.b16 %v228
  %v925 = vunpack.c.h.b16 %v228
  %v926 = vunpack.c.l.b16 %v229
  %v927 = vunpack.c.h.b16 %v229
  %v928 = vunpack.c.l.b16 %v230
  %v929 = vunpack.c.h.b16 %v230
  %v930 = vunpack.c.l.b16 %v231
  %v931 = vunpack.c.l.b16 %v232
  %v932 = vunpack.c.h.b16 %v232
  %v933 = vunpack.c.l.b16 %v233
  %v934 = vunpack.c.h.b16 %v233
  %v935 = vunpack.c.l.b16 %v234
  %v936 = vunpack.c.h.b16 %v234
  %v937 = vunpack.c.l.b16 %v235
  %v938 = vunpack.c.h.b16 %v235
  %v939 = vunpack.c.l.b16 %v236
  %v940 = vunpack.c.h.b16 %v236
  %v941 = vunpack.c.l.b16 %v237
  %v942 = vunpack.c.h.b16 %v237
  %v943 = vunpack.c.l.b16 %v238
  %v944 = vunpack.c.l.b16 %v239
  %v945 = vunpack.c.h.b16 %v239
  %v946 = vunpack.c.l.b16 %v240
  %v947 = vunpack.c.h.b16 %v240
  %v948 = vunpack.c.l.b16 %v241
  %v949 = vunpack.c.h.b16 %v241
  %v950 = vunpack.c.l.b16 %v242
  %v951 = vunpack.c.h.b16 %v242
  %v952 = vunpack.c.l.b16 %v243
  %v953 = vunpack.c.h.b16 %v243
  %v954 = vunpack.c.l.b16 %v244
  %v955 = vunpack.c.h.b16 %v244
  %v956 = vunpack.c.l.b16 %v245
  %v957 = vunpack.c.l.b16 %v246
  %v958 = vunpack.c.h.b16 %v246
  %v959 = vunpack.c.l.b16 %v247
  %v960 = vunpack.c.h.b16 %v247
  %v961 = vunpack.c.l.b16 %v248
  %v962 = vunpack.c.h.b16 %v248
  %v963 = vunpack.c.l.b16 %v249
  %v964 = vunpack.c.h.b16 %v249
  %v965 = vunpack.c.l.b16 %v250
  %v966 = vunpack.c.h.b16 %v250
  %v967 = vunpack.c.l.b16 %v251
  %v968 = vunpack.c.h.b16 %v251
  %v969 = vunpack.c.l.b16 %v252
  %v970 = vunpack.c.l.b16 %v253
  %v971 = vunpack.c.h.b16 %v253
  %v972 = vunpack.c.l.b16 %v254
  %v973 = vunpack.c.h.b16 %v254
  %v974 = vunpack.c.l.b16 %v255
  %v975 = vunpack.c.h.b16 %v255
  %v976 = vunpack.c.l.b16 %v256
  %v977 = vunpack.c.h.b16 %v256
  %v978 = vunpack.c.l.b16 %v257
  %v979 = vunpack.c.h.b16 %v257
  %v980 = vunpack.c.l.b16 %v258
  %v981 = vunpack.c.h.b16 %v258
  %v982 = vunpack.c.l.b16 %v259
  %v983 = vunpack.c.l.b16 %v260
  %v984 = vunpack.c.h.b16 %v260
  %v985 = vunpack.c.l.b16 %v261
  %v986 = vunpack.c.h.b16 %v261
  %v987 = vunpack.c.l.b16 %v262
  %v988 = vunpack.c.h.b16 %v262
  %v989 = vunpack.c.l.b16 %v263
  %v990 = vunpack.c.h.b16 %v263
  %v991 = vunpack.c.l.b16 %v264
  %v992 = vunpack.c.h.b16 %v264
  %v993 = vunpack.c.l.b16 %v265
  %v994 = vunpack.c.h.b16 %v265
  %v995 = vunpack.c.l.b16 %v266
  %v996 = vunpack.c.l.b16 %v267
  %v997 = vunpack.c.h.b16 %v267
  %v998 = vunpack.c.l.b16 %v268
  %v999 = vunpack.c.h.b16 %v268
  %v1000 = vunpack.c.l.b16 %v269
  %v1001 = vunpack.c.h.b16 %v269
  %v1002 = vunpack.c.l.b16 %v270
  %v1003 = vunpack.c.h.b16 %v270
  %v1004 = vunpack.c.l.b16 %v271
  %v1005 = vunpack.c.h.b16 %v271
  %v1006 = vunpack.c.l.b16 %v272
  %v1007 = vunpack.c.h.b16 %v272
  %v1008 = vunpack.c.l.b16 %v273
  %v1009 = vpack.c.b16 %v554, %v541
  %v1010 = vpack.c.b16 %v555, %v542
  %v1011 = vpack.c.b16 %v556, %v543
  %v1012 = vpack.c.b16 %v557, %v544
  %v1013 = vpack.c.b16 %v558, %v545
  %v1014 = vpack.c.b16 %v559, %v546
  %v1015 = vpack.c.b16 %v560, %v547
  %v1016 = vpack.c.b16 %v561, %v548
  %v1017 = vpack.c.b16 %v562, %v549
  %v1018 = vpack.c.b16 %v563, %v550
  %v1019 = vpack.c.b16 %v564, %v551
  %v1020 = vpack.c.b16 %v565, %v552
  %v1021 = vpack.c.b16 %v566, %v553
  %v1022 = vpack.c.b16 %v580, %v567
  %v1023 = vpack.c.b16 %v581, %v568
  %v1024 = vpack.c.b16 %v582, %v569
  %v1025 = vpack.c.b16 %v583, %v570
  %v1026 = vpack.c.b16 %v584, %v571
  %v1027 = vpack.c.b16 %v585, %v572
  %v1028 = vpack.c.b16 %v586, %v573
  %v1029 = vpack.c.b16 %v587, %v574
  %v1030 = vpack.c.b16 %v588, %v575
  %v1031 = vpack.c.b16 %v589, %v576
  %v1032 = vpack.c.b16 %v590, %v577
  %v1033 = vpack.c.b16 %v591, %v578
  %v1034 = vpack.c.b16 %v592, %v579
  %v1035 = vpack.c.b16 %v606, %v593
  %v1036 = vpack.c.b16 %v607, %v594
  %v1037 = vpack.c.b16 %v608, %v595
  %v1038 = vpack.c.b16 %v609, %v596
  %v1039 = vpack.c.b16 %v610, %v597
  %v1040 = vpack.c.b16 %v611, %v598
  %v1041 = vpack.c.b16 %v612, %v599
  %v1042 = vpack.c.b16 %v613, %v600
  %v1043 = vpack.c.b16 %v614, %v601
  %v1044 = vpack.c.b16 %v615, %v602
  %v1045 = vpack.c.b16 %v616, %v603
  %v1046 = vpack.c.b16 %v617, %v604
  %v1047 = vpack.c.b16 %v618, %v605
  %v1048 = vpack.c.b16 %v632, %v619
  %v1049 = vpack.c.b16 %v633, %v620
  %v1050 = vpack.c.b16 %v634, %v621
  %v1051 = vpack.c.b16 %v635, %v622
  %v1052 = vpack.c.b16 %v636, %v623
  %v1053 = vpack.c.b16 %v637, %v624
  %v1054 = vpack.c.b16 %v638, %v625
  %v1055 = vpack.c.b16 %v639, %v626
  %v1056 = vpack.c.b16 %v640, %v627
  %v1057 = vpack.c.b16 %v641, %v628
  %v1058 = vpack.c.b16 %v642, %v629
  %v1059 = vpack.c.b16 %v643, %v630
  %v1060 = vpack.c.b16 %v644, %v631
  %v1061 = vpack.c.b16 %v658, %v645
  %v1062 = vpack.c.b16 %v659, %v646
  %v1063 = vpack.c.b16 %v660, %v647
  %v1064 = vpack.c.b16 %v661, %v648
  %v1065 = vpack.c.b16 %v662, %v649
  %v1066 = vpack.c.b16 %v663, %v650
  %v1067 = vpack.c.b16 %v664, %v651
  %v1068 = vpack.c.b16 %v665, %v652
  %v1069 = vpack.c.b16 %v666, %v653
  %v1070 = vpack.c.b16 %v667, %v654
  %v1071 = vpack.c.b16 %v668, %v655
  %v1072 = vpack.c.b16 %v669, %v656
  %v1073 = vpack.c.b16 %v670, %v657
  %v1074 = vpack.c.b16 %v684, %v671
  %v1075 = vpack.c.b16 %v685, %v672
  %v1076 = vpack.c.b16 %v686, %v673
  %v1077 = vpack.c.b16 %v687, %v674
  %v1078 = vpack.c.b16 %v688, %v675
  %v1079 = vpack.c.b16 %v689, %v676
  %v1080 = vpack.c.b16 %v690, %v677
  %v1081 = vpack.c.b16 %v691, %v678
  %v1082 = vpack.c.b16 %v692, %v679
  %v1083 = vpack.c.b16 %v693, %v680
  %v1084 = vpack.c.b16 %v694, %v681
  %v1085 = vpack.c.b16 %v695, %v682
  %v1086 = vpack.c.b16 %v696, %v683
  %v1087 = vpack.c.b16 %v710, %v697
  %v1088 = vpack.c.b16 %v711, %v698
  %v1089 = vpack.c.b16 %v712, %v699
  %v1090 = vpack.c.b16 %v713, %v700
  %v1091 = vpack.c.b16 %v714, %v701
  %v1092 = vpack.c.b16 %v715, %v702
  %v1093 = vpack.c.b16 %v716, %v703
  %v1094 = vpack.c.b16 %v717, %v704
  %v1095 = vpack.c.b16 %v718, %v705
  %v1096 = vpack.c.b16 %v719, %v706
  %v1097 = vpack.c.b16 %v720, %v707
  %v1098 = vpack.c.b16 %v721, %v708
  %v1099 = vpack.c.b16 %v722, %v709
  %v1100 = vpack.c.b16 %v736, %v723
  %v1101 = vpack.c.b16 %v737, %v724
  %v1102 = vpack.c.b16 %v738, %v725
  %v1103 = vpack.c.b16 %v739, %v726
  %v1104 = vpack.c.b16 %v740, %v727
  %v1105 = vpack.c.b16 %v741, %v728
  %v1106 = vpack.c.b16 %v742, %v729
  %v1107 = vpack.c.b16 %v743, %v730
  %v1108 = vpack.c.b16 %v744, %v731
  %v1109 = vpack.c.b16 %v745, %v732
  %v1110 = vpack.c.b16 %v746, %v733
  %v1111 = vpack.c.b16 %v747, %v734
  %v1112 = vpack.c.b16 %v748, %v735
  %v1113 = vpack.c.b16 %v762, %v749
  %v1114 = vpack.c.b16 %v763, %v750
  %v1115 = vpack.c.b16 %v764, %v751
  %v1116 = vpack.c.b16 %v765, %v752
  %v1117 = vpack.c.b16 %v766, %v753
  %v1118 = vpack.c.b16 %v767, %v754
  %v1119 = vpack.c.b16 %v768, %v755
  %v1120 = vpack.c.b16 %v769, %v756
  %v1121 = vpack.c.b16 %v770, %v757
  %v1122 = vpack.c.b16 %v771, %v758
  %v1123 = vpack.c.b16 %v772, %v759
  %v1124 = vpack.c.b16 %v773, %v760
  %v1125 = vpack.c.b16 %v774, %v761
  %v1126 = vpack.c.b16 %v788, %v775
  %v1127 = vpack.c.b16 %v789, %v776
  %v1128 = vpack.c.b16 %v790, %v777
  %v1129 = vpack.c.b16 %v791, %v778
  %v1130 = vpack.c.b16 %v792, %v779
  %v1131 = vpack.c.b16 %v793, %v780
  %v1132 = vpack.c.b16 %v794, %v781
  %v1133 = vpack.c.b16 %v795, %v782
  %v1134 = vpack.c.b16 %v796, %v783
  %v1135 = vpack.c.b16 %v797, %v784
  %v1136 = vpack.c.b16 %v798, %v785
  %v1137 = vpack.c.b16 %v799, %v786
  %v1138 = vpack.c.b16 %v800, %v787
  %v1139 = vpack.c.b16 %v814, %v801
  %v1140 = vpack.c.b16 %v815, %v802
  %v1141 = vpack.c.b16 %v816, %v803
  %v1142 = vpack.c.b16 %v817, %v804
  %v1143 = vpack.c.b16 %v818, %v805
  %v1144 = vpack.c.b16 %v819, %v806
  %v1145 = vpack.c.b16 %v820, %v807
  %v1146 = vpack.c.b16 %v821, %v808
  %v1147 = vpack.c.b16 %v822, %v809
  %v1148 = vpack.c.b16 %v823, %v810
  %v1149 = vpack.c.b16 %v824, %v811
  %v1150 = vpack.c.b16 %v825, %v812
  %v1151 = vpack.c.b16 %v826, %v813
  %v1152 = vpack.c.b16 %v840, %v827
  %v1153 = vpack.c.b16 %v841, %v828
  %v1154 = vpack.c.b16 %v842, %v829
  %v1155 = vpack.c.b16 %v843, %v830
  %v1156 = vpack.c.b16 %v844, %v831
  %v1157 = vpack.c.b16 %v845, %v832
  %v1158 = vpack.c.b16 %v846, %v833
  %v1159 = vpack.c.b16 %v847, %v834
  %v1160 = vpack.c.b16 %v848, %v835
  %v1161 = vpack.c.b16 %v849, %v836
  %v1162 = vpack.c.b16 %v850, %v837
  %v1163 = vpack.c.b16 %v851, %v838
  %v1164 = vpack.c.b16 %v852, %v839
  %v1165 = vpack.c.b16 %v866, %v853
  %v1166 = vpack.c.b16 %v867, %v854
  %v1167 = vpack.c.b16 %v868, %v855
  %v1168 = vpack.c.b16 %v869, %v856
  %v1169 = vpack.c.b16 %v870, %v857
  %v1170 = vpack.c.b16 %v871, %v858
  %v1171 = vpack.c.b16 %v872, %v859
  %v1172 = vpack.c.b16 %v873, %v860
  %v1173 = vpack.c.b16 %v874, %v861
  %v1174 = vpack.c.b16 %v875, %v862
  %v1175 = vpack.c.b16 %v876, %v863
  %v1176 = vpack.c.b16 %v877, %v864
  %v1177 = vpack.c.b16 %v878, %v865
  %v1178 = vpack.c.b16 %v892, %v879
  %v1179 = vpack.c.b16 %v893, %v880
  %v1180 = vpack.c.b16 %v894, %v881
  %v1181 = vpack.c.b16 %v895, %v882
  %v1182 = vpack.c.b16 %v896, %v883
  %v1183 = vpack.c.b16 %v897, %v884
  %v1184 = vpack.c.b16 %v898, %v885
  %v1185 = vpack.c.b16 %v899, %v886
  %v1186 = vpack.c.b16 %v900, %v887
  %v1187 = vpack.c.b16 %v901, %v888
  %v1188 = vpack.c.b16 %v902, %v889
  %v1189 = vpack.c.b16 %v903, %v890
  %v1190 = vpack.c.b16 %v904, %v891
  %v1191 = vpack.c.b16 %v918, %v905
  %v1192 = vpack.c.b16 %v919, %v906
  %v1193 = vpack.c.b16 %v920, %v907
  %v1194 = vpack.c.b16 %v921, %v908
  %v1195 = vpack.c.b16 %v922, %v909
  %v1196 = vpack.c.b16 %v923, %v910
  %v1197 = vpack.c.b16 %v924, %v911
  %v1198 = vpack.c.b16 %v925, %v912
  %v1199 = vpack.c.b16 %v926, %v913
  %v1200 = vpack.c.b16 %v927, %v914
  %v1201 = vpack.c.b16 %v928, %v915
  %v1202 = vpack.c.b16 %v929, %v916
  %v1203 = vpack.c.b16 %v930, %v917
  %v1204 = vpack.c.b16 %v944, %v931
  %v1205 = vpack.c.b16 %v945, %v932
  %v1206 = vpack.c.b16 %v946, %v933
  %v1207 = vpack.c.b16 %v947, %v934
  %v1208 = vpack.c.b16 %v948, %v935
  %v1209 = vpack.c.b16 %v949, %v936
  %v1210 = vpack.c.b16 %v950, %v937
  %v1211 = vpack.c.b16 %v951, %v938
  %v1212 = vpack.c.b16 %v952, %v939
  %v1213 = vpack.c.b16 %v953, %v940
  %v1214 = vpack.c.b16 %v954, %v941
  %v1215 = vpack.c.b16 %v955, %v942
  %v1216 = vpack.c.b16 %v956, %v943
  %v1217 = vpack.c.b16 %v970, %v957
  %v1218 = vpack.c.b16 %v971, %v958
  %v1219 = vpack.c.b16 %v972, %v959
  %v1220 = vpack.c.b16 %v973, %v960
  %v1221 = vpack.c.b16 %v974, %v961
  %v1222 = vpack.c.b16 %v975, %v962
  %v1223 = vpack.c.b16 %v976, %v963
  %v1224 = vpack.c.b16 %v977, %v964
  %v1225 = vpack.c.b16 %v978, %v965
  %v1226 = vpack.c.b16 %v979, %v966
  %v1227 = vpack.c.b16 %v980, %v967
  %v1228 = vpack.c.b16 %v981, %v968
  %v1229 = vpack.c.b16 %v982, %v969
  %v1230 = vpack.c.b16 %v996, %v983
  %v1231 = vpack.c.b16 %v997, %v984
  %v1232 = vpack.c.b16 %v998, %v985
  %v1233 = vpack.c.b16 %v999, %v986
  %v1234 = vpack.c.b16 %v1000, %v987
  %v1235 = vpack.c.b16 %v1001, %v988
  %v1236 = vpack.c.b16 %v1002, %v989
  %v1237 = vpack.c.b16 %v1003, %v990
  %v1238 = vpack.c.b16 %v1004, %v991
  %v1239 = vpack.c.b16 %v1005, %v992
  %v1240 = vpack.c.b16 %v1006, %v993
  %v1241 = vpack.c.b16 %v1007, %v994
  %v1242 = vpack.c.b16 %v1008, %v995
  %vm1477 = vcmask 261120
  %v1479 = vsel %vm1477, %v286, 0
  %1481 = vmatprep.subr.bf16.mxu0 %v1101
  %1482 = vmatpush1.bf16.msra.mxu0 %v1100
  %1483 = vmatprep.subr.bf16.mxu0 %v1088
  %1484 = vmatpush1.bf16.msra.mxu0 %v1087
  %1485 = vmatprep.subr.bf16.mxu0 %v1075
  %1486 = vmatpush1.bf16.msra.mxu0 %v1074
  %1487 = vmatprep.subr.bf16.mxu0 %v1062
  %1488 = vmatpush1.bf16.msra.mxu0 %v1061
  %1489 = vmatprep.subr.bf16.mxu0 %v1049
  %1490 = vmatpush1.bf16.msra.mxu0 %v1048
  %1491 = vmatprep.subr.bf16.mxu0 %v1036
  %1492 = vmatpush1.bf16.msra.mxu0 %v1035
  %1493 = vmatprep.subr.bf16.mxu0 %v1023
  %1494 = vmatpush1.bf16.msra.mxu0 %v1022
  %1495 = vmatprep.subr.bf16.mxu0 %v1010
  %1496 = vmatpush1.bf16.msra.mxu0 %v1009
  %1497 = vmatprep.subr.bf16.mxu0 %v1205
  %1498 = vmatpush2.bf16.msra.mxu0 %v1204
  %1499 = vmatprep.subr.bf16.mxu0 %v1192
  %1500 = vmatpush2.bf16.msra.mxu0 %v1191
  %1501 = vmatprep.subr.bf16.mxu0 %v1179
  %1502 = vmatpush2.bf16.msra.mxu0 %v1178
  %1503 = vmatprep.subr.bf16.mxu0 %v1166
  %1504 = vmatpush2.bf16.msra.mxu0 %v1165
  %1505 = vmatprep.subr.bf16.mxu0 %v1153
  %1506 = vmatpush2.bf16.msra.mxu0 %v1152
  %1507 = vmatprep.subr.bf16.mxu0 %v1140
  %1508 = vmatpush2.bf16.msra.mxu0 %v1139
  %1509 = vmatprep.subr.bf16.mxu0 %v1127
  %1510 = vmatpush2.bf16.msra.mxu0 %v1126
  %1511 = vmatprep.subr.bf16.mxu0 %v1114
  %1512 = vmatpush2.bf16.msra.mxu0 %v1113
  %1513 = vmatprep.mubr.bf16.mxu0 %v285
  %1514 = vmatmul.mubr.bf16.gmra.mxu0 %v284
  %v1515 = vpop.f32.mrf.mxu0
  %v1516 = vadd.f32 0.0, %v1515
  %v1517 = vpop.f32.mrf.mxu0
  %v1518 = vadd.f32 0.0, %v1517
  %v1519 = vpop.f32.mrf.mxu0
  %v1520 = vadd.f32 0.0, %v1519
  %v1521 = vpop.f32.mrf.mxu0
  %v1522 = vadd.f32 0.0, %v1521
  %1523 = vdwg.mxu0
  %1524 = vmatprep.subr.bf16.mxu0 0
  %1525 = vmatpush1.bf16.msra.mxu0 0
  %1526 = vmatprep.subr.bf16.mxu0 0
  %1527 = vmatpush1.bf16.msra.mxu0 0
  %1528 = vmatprep.subr.bf16.mxu0 0
  %1529 = vmatpush1.bf16.msra.mxu0 0
  %1530 = vmatprep.subr.bf16.mxu0 0
  %1531 = vmatpush1.bf16.msra.mxu0 0
  %1532 = vmatprep.subr.bf16.mxu0 0
  %1533 = vmatpush1.bf16.msra.mxu0 0
  %1534 = vmatprep.subr.bf16.mxu0 0
  %1535 = vmatpush1.bf16.msra.mxu0 0
  %1536 = vmatprep.subr.bf16.mxu0 %v1231
  %1537 = vmatpush1.bf16.msra.mxu0 %v1230
  %1538 = vmatprep.subr.bf16.mxu0 %v1218
  %1539 = vmatpush1.bf16.msra.mxu0 %v1217
  %1540 = vmatprep.subr.bf16.mxu0 0
  %1541 = vmatpush2.bf16.msra.mxu0 0
  %1542 = vmatprep.subr.bf16.mxu0 0
  %1543 = vmatpush2.bf16.msra.mxu0 0
  %1544 = vmatprep.subr.bf16.mxu0 0
  %1545 = vmatpush2.bf16.msra.mxu0 0
  %1546 = vmatprep.subr.bf16.mxu0 0
  %1547 = vmatpush2.bf16.msra.mxu0 0
  %1548 = vmatprep.subr.bf16.mxu0 0
  %1549 = vmatpush2.bf16.msra.mxu0 0
  %1550 = vmatprep.subr.bf16.mxu0 0
  %1551 = vmatpush2.bf16.msra.mxu0 0
  %1552 = vmatprep.subr.bf16.mxu0 0
  %1553 = vmatpush2.bf16.msra.mxu0 0
  %1554 = vmatprep.subr.bf16.mxu0 0
  %1555 = vmatpush2.bf16.msra.mxu0 0
  %1556 = vmatprep.mubr.bf16.mxu0 0
  %1557 = vmatmul.mubr.bf16.gmra.mxu0 %v1479
  %v1558 = vpop.f32.mrf.mxu0
  %v1559 = vadd.f32 %v1516, %v1558
  %v1560 = vpop.f32.mrf.mxu0
  %v1561 = vadd.f32 %v1518, %v1560
  %v1562 = vpop.f32.mrf.mxu0
  %v1563 = vadd.f32 %v1520, %v1562
  %v1564 = vpop.f32.mrf.mxu0
  %v1565 = vadd.f32 %v1522, %v1564
  %1566 = vdwg.mxu0
  %1567 = vmatprep.subr.bf16.mxu0 %v1103
  %1568 = vmatpush1.bf16.msra.mxu0 %v1102
  %1569 = vmatprep.subr.bf16.mxu0 %v1090
  %1570 = vmatpush1.bf16.msra.mxu0 %v1089
  %1571 = vmatprep.subr.bf16.mxu0 %v1077
  %1572 = vmatpush1.bf16.msra.mxu0 %v1076
  %1573 = vmatprep.subr.bf16.mxu0 %v1064
  %1574 = vmatpush1.bf16.msra.mxu0 %v1063
  %1575 = vmatprep.subr.bf16.mxu0 %v1051
  %1576 = vmatpush1.bf16.msra.mxu0 %v1050
  %1577 = vmatprep.subr.bf16.mxu0 %v1038
  %1578 = vmatpush1.bf16.msra.mxu0 %v1037
  %1579 = vmatprep.subr.bf16.mxu0 %v1025
  %1580 = vmatpush1.bf16.msra.mxu0 %v1024
  %1581 = vmatprep.subr.bf16.mxu0 %v1012
  %1582 = vmatpush1.bf16.msra.mxu0 %v1011
  %1583 = vmatprep.subr.bf16.mxu0 %v1207
  %1584 = vmatpush2.bf16.msra.mxu0 %v1206
  %1585 = vmatprep.subr.bf16.mxu0 %v1194
  %1586 = vmatpush2.bf16.msra.mxu0 %v1193
  %1587 = vmatprep.subr.bf16.mxu0 %v1181
  %1588 = vmatpush2.bf16.msra.mxu0 %v1180
  %1589 = vmatprep.subr.bf16.mxu0 %v1168
  %1590 = vmatpush2.bf16.msra.mxu0 %v1167
  %1591 = vmatprep.subr.bf16.mxu0 %v1155
  %1592 = vmatpush2.bf16.msra.mxu0 %v1154
  %1593 = vmatprep.subr.bf16.mxu0 %v1142
  %1594 = vmatpush2.bf16.msra.mxu0 %v1141
  %1595 = vmatprep.subr.bf16.mxu0 %v1129
  %1596 = vmatpush2.bf16.msra.mxu0 %v1128
  %1597 = vmatprep.subr.bf16.mxu0 %v1116
  %1598 = vmatpush2.bf16.msra.mxu0 %v1115
  %1599 = vmatprep.mubr.bf16.mxu0 %v285
  %1600 = vmatmul.mubr.bf16.gmra.mxu0 %v284
  %v1601 = vpop.f32.mrf.mxu0
  %v1602 = vadd.f32 0.0, %v1601
  %v1603 = vpop.f32.mrf.mxu0
  %v1604 = vadd.f32 0.0, %v1603
  %v1605 = vpop.f32.mrf.mxu0
  %v1606 = vadd.f32 0.0, %v1605
  %v1607 = vpop.f32.mrf.mxu0
  %v1608 = vadd.f32 0.0, %v1607
  %1609 = vdwg.mxu0
  %1610 = vmatprep.subr.bf16.mxu0 0
  %1611 = vmatpush1.bf16.msra.mxu0 0
  %1612 = vmatprep.subr.bf16.mxu0 0
  %1613 = vmatpush1.bf16.msra.mxu0 0
  %1614 = vmatprep.subr.bf16.mxu0 0
  %1615 = vmatpush1.bf16.msra.mxu0 0
  %1616 = vmatprep.subr.bf16.mxu0 0
  %1617 = vmatpush1.bf16.msra.mxu0 0
  %1618 = vmatprep.subr.bf16.mxu0 0
  %1619 = vmatpush1.bf16.msra.mxu0 0
  %1620 = vmatprep.subr.bf16.mxu0 0
  %1621 = vmatpush1.bf16.msra.mxu0 0
  %1622 = vmatprep.subr.bf16.mxu0 %v1233
  %1623 = vmatpush1.bf16.msra.mxu0 %v1232
  %1624 = vmatprep.subr.bf16.mxu0 %v1220
  %1625 = vmatpush1.bf16.msra.mxu0 %v1219
  %1626 = vmatprep.subr.bf16.mxu0 0
  %1627 = vmatpush2.bf16.msra.mxu0 0
  %1628 = vmatprep.subr.bf16.mxu0 0
  %1629 = vmatpush2.bf16.msra.mxu0 0
  %1630 = vmatprep.subr.bf16.mxu0 0
  %1631 = vmatpush2.bf16.msra.mxu0 0
  %1632 = vmatprep.subr.bf16.mxu0 0
  %1633 = vmatpush2.bf16.msra.mxu0 0
  %1634 = vmatprep.subr.bf16.mxu0 0
  %1635 = vmatpush2.bf16.msra.mxu0 0
  %1636 = vmatprep.subr.bf16.mxu0 0
  %1637 = vmatpush2.bf16.msra.mxu0 0
  %1638 = vmatprep.subr.bf16.mxu0 0
  %1639 = vmatpush2.bf16.msra.mxu0 0
  %1640 = vmatprep.subr.bf16.mxu0 0
  %1641 = vmatpush2.bf16.msra.mxu0 0
  %1642 = vmatprep.mubr.bf16.mxu0 0
  %1643 = vmatmul.mubr.bf16.gmra.mxu0 %v1479
  %v1644 = vpop.f32.mrf.mxu0
  %v1645 = vadd.f32 %v1602, %v1644
  %v1646 = vpop.f32.mrf.mxu0
  %v1647 = vadd.f32 %v1604, %v1646
  %v1648 = vpop.f32.mrf.mxu0
  %v1649 = vadd.f32 %v1606, %v1648
  %v1650 = vpop.f32.mrf.mxu0
  %v1651 = vadd.f32 %v1608, %v1650
  %1652 = vdwg.mxu0
  %1653 = vmatprep.subr.bf16.mxu0 %v1105
  %1654 = vmatpush1.bf16.msra.mxu0 %v1104
  %1655 = vmatprep.subr.bf16.mxu0 %v1092
  %1656 = vmatpush1.bf16.msra.mxu0 %v1091
  %1657 = vmatprep.subr.bf16.mxu0 %v1079
  %1658 = vmatpush1.bf16.msra.mxu0 %v1078
  %1659 = vmatprep.subr.bf16.mxu0 %v1066
  %1660 = vmatpush1.bf16.msra.mxu0 %v1065
  %1661 = vmatprep.subr.bf16.mxu0 %v1053
  %1662 = vmatpush1.bf16.msra.mxu0 %v1052
  %1663 = vmatprep.subr.bf16.mxu0 %v1040
  %1664 = vmatpush1.bf16.msra.mxu0 %v1039
  %1665 = vmatprep.subr.bf16.mxu0 %v1027
  %1666 = vmatpush1.bf16.msra.mxu0 %v1026
  %1667 = vmatprep.subr.bf16.mxu0 %v1014
  %1668 = vmatpush1.bf16.msra.mxu0 %v1013
  %1669 = vmatprep.subr.bf16.mxu0 %v1209
  %1670 = vmatpush2.bf16.msra.mxu0 %v1208
  %1671 = vmatprep.subr.bf16.mxu0 %v1196
  %1672 = vmatpush2.bf16.msra.mxu0 %v1195
  %1673 = vmatprep.subr.bf16.mxu0 %v1183
  %1674 = vmatpush2.bf16.msra.mxu0 %v1182
  %1675 = vmatprep.subr.bf16.mxu0 %v1170
  %1676 = vmatpush2.bf16.msra.mxu0 %v1169
  %1677 = vmatprep.subr.bf16.mxu0 %v1157
  %1678 = vmatpush2.bf16.msra.mxu0 %v1156
  %1679 = vmatprep.subr.bf16.mxu0 %v1144
  %1680 = vmatpush2.bf16.msra.mxu0 %v1143
  %1681 = vmatprep.subr.bf16.mxu0 %v1131
  %1682 = vmatpush2.bf16.msra.mxu0 %v1130
  %1683 = vmatprep.subr.bf16.mxu0 %v1118
  %1684 = vmatpush2.bf16.msra.mxu0 %v1117
  %1685 = vmatprep.mubr.bf16.mxu0 %v285
  %1686 = vmatmul.mubr.bf16.gmra.mxu0 %v284
  %v1687 = vpop.f32.mrf.mxu0
  %v1688 = vadd.f32 0.0, %v1687
  %v1689 = vpop.f32.mrf.mxu0
  %v1690 = vadd.f32 0.0, %v1689
  %v1691 = vpop.f32.mrf.mxu0
  %v1692 = vadd.f32 0.0, %v1691
  %v1693 = vpop.f32.mrf.mxu0
  %v1694 = vadd.f32 0.0, %v1693
  %1695 = vdwg.mxu0
  %1696 = vmatprep.subr.bf16.mxu0 0
  %1697 = vmatpush1.bf16.msra.mxu0 0
  %1698 = vmatprep.subr.bf16.mxu0 0
  %1699 = vmatpush1.bf16.msra.mxu0 0
  %1700 = vmatprep.subr.bf16.mxu0 0
  %1701 = vmatpush1.bf16.msra.mxu0 0
  %1702 = vmatprep.subr.bf16.mxu0 0
  %1703 = vmatpush1.bf16.msra.mxu0 0
  %1704 = vmatprep.subr.bf16.mxu0 0
  %1705 = vmatpush1.bf16.msra.mxu0 0
  %1706 = vmatprep.subr.bf16.mxu0 0
  %1707 = vmatpush1.bf16.msra.mxu0 0
  %1708 = vmatprep.subr.bf16.mxu0 %v1235
  %1709 = vmatpush1.bf16.msra.mxu0 %v1234
  %1710 = vmatprep.subr.bf16.mxu0 %v1222
  %1711 = vmatpush1.bf16.msra.mxu0 %v1221
  %1712 = vmatprep.subr.bf16.mxu0 0
  %1713 = vmatpush2.bf16.msra.mxu0 0
  %1714 = vmatprep.subr.bf16.mxu0 0
  %1715 = vmatpush2.bf16.msra.mxu0 0
  %1716 = vmatprep.subr.bf16.mxu0 0
  %1717 = vmatpush2.bf16.msra.mxu0 0
  %1718 = vmatprep.subr.bf16.mxu0 0
  %1719 = vmatpush2.bf16.msra.mxu0 0
  %1720 = vmatprep.subr.bf16.mxu0 0
  %1721 = vmatpush2.bf16.msra.mxu0 0
  %1722 = vmatprep.subr.bf16.mxu0 0
  %1723 = vmatpush2.bf16.msra.mxu0 0
  %1724 = vmatprep.subr.bf16.mxu0 0
  %1725 = vmatpush2.bf16.msra.mxu0 0
  %1726 = vmatprep.subr.bf16.mxu0 0
  %1727 = vmatpush2.bf16.msra.mxu0 0
  %1728 = vmatprep.mubr.bf16.mxu0 0
  %1729 = vmatmul.mubr.bf16.gmra.mxu0 %v1479
  %v1730 = vpop.f32.mrf.mxu0
  %v1731 = vadd.f32 %v1688, %v1730
  %v1732 = vpop.f32.mrf.mxu0
  %v1733 = vadd.f32 %v1690, %v1732
  %v1734 = vpop.f32.mrf.mxu0
  %v1735 = vadd.f32 %v1692, %v1734
  %v1736 = vpop.f32.mrf.mxu0
  %v1737 = vadd.f32 %v1694, %v1736
  %1738 = vdwg.mxu0
  %1739 = vmatprep.subr.bf16.mxu0 %v1107
  %1740 = vmatpush1.bf16.msra.mxu0 %v1106
  %1741 = vmatprep.subr.bf16.mxu0 %v1094
  %1742 = vmatpush1.bf16.msra.mxu0 %v1093
  %1743 = vmatprep.subr.bf16.mxu0 %v1081
  %1744 = vmatpush1.bf16.msra.mxu0 %v1080
  %1745 = vmatprep.subr.bf16.mxu0 %v1068
  %1746 = vmatpush1.bf16.msra.mxu0 %v1067
  %1747 = vmatprep.subr.bf16.mxu0 %v1055
  %1748 = vmatpush1.bf16.msra.mxu0 %v1054
  %1749 = vmatprep.subr.bf16.mxu0 %v1042
  %1750 = vmatpush1.bf16.msra.mxu0 %v1041
  %1751 = vmatprep.subr.bf16.mxu0 %v1029
  %1752 = vmatpush1.bf16.msra.mxu0 %v1028
  %1753 = vmatprep.subr.bf16.mxu0 %v1016
  %1754 = vmatpush1.bf16.msra.mxu0 %v1015
  %1755 = vmatprep.subr.bf16.mxu0 %v1211
  %1756 = vmatpush2.bf16.msra.mxu0 %v1210
  %1757 = vmatprep.subr.bf16.mxu0 %v1198
  %1758 = vmatpush2.bf16.msra.mxu0 %v1197
  %1759 = vmatprep.subr.bf16.mxu0 %v1185
  %1760 = vmatpush2.bf16.msra.mxu0 %v1184
  %1761 = vmatprep.subr.bf16.mxu0 %v1172
  %1762 = vmatpush2.bf16.msra.mxu0 %v1171
  %1763 = vmatprep.subr.bf16.mxu0 %v1159
  %1764 = vmatpush2.bf16.msra.mxu0 %v1158
  %1765 = vmatprep.subr.bf16.mxu0 %v1146
  %1766 = vmatpush2.bf16.msra.mxu0 %v1145
  %1767 = vmatprep.subr.bf16.mxu0 %v1133
  %1768 = vmatpush2.bf16.msra.mxu0 %v1132
  %1769 = vmatprep.subr.bf16.mxu0 %v1120
  %1770 = vmatpush2.bf16.msra.mxu0 %v1119
  %1771 = vmatprep.mubr.bf16.mxu0 %v285
  %1772 = vmatmul.mubr.bf16.gmra.mxu0 %v284
  %v1773 = vpop.f32.mrf.mxu0
  %v1774 = vadd.f32 0.0, %v1773
  %v1775 = vpop.f32.mrf.mxu0
  %v1776 = vadd.f32 0.0, %v1775
  %v1777 = vpop.f32.mrf.mxu0
  %v1778 = vadd.f32 0.0, %v1777
  %v1779 = vpop.f32.mrf.mxu0
  %v1780 = vadd.f32 0.0, %v1779
  %1781 = vdwg.mxu0
  %1782 = vmatprep.subr.bf16.mxu0 0
  %1783 = vmatpush1.bf16.msra.mxu0 0
  %1784 = vmatprep.subr.bf16.mxu0 0
  %1785 = vmatpush1.bf16.msra.mxu0 0
  %1786 = vmatprep.subr.bf16.mxu0 0
  %1787 = vmatpush1.bf16.msra.mxu0 0
  %1788 = vmatprep.subr.bf16.mxu0 0
  %1789 = vmatpush1.bf16.msra.mxu0 0
  %1790 = vmatprep.subr.bf16.mxu0 0
  %1791 = vmatpush1.bf16.msra.mxu0 0
  %1792 = vmatprep.subr.bf16.mxu0 0
  %1793 = vmatpush1.bf16.msra.mxu0 0
  %1794 = vmatprep.subr.bf16.mxu0 %v1237
  %1795 = vmatpush1.bf16.msra.mxu0 %v1236
  %1796 = vmatprep.subr.bf16.mxu0 %v1224
  %1797 = vmatpush1.bf16.msra.mxu0 %v1223
  %1798 = vmatprep.subr.bf16.mxu0 0
  %1799 = vmatpush2.bf16.msra.mxu0 0
  %1800 = vmatprep.subr.bf16.mxu0 0
  %1801 = vmatpush2.bf16.msra.mxu0 0
  %1802 = vmatprep.subr.bf16.mxu0 0
  %1803 = vmatpush2.bf16.msra.mxu0 0
  %1804 = vmatprep.subr.bf16.mxu0 0
  %1805 = vmatpush2.bf16.msra.mxu0 0
  %1806 = vmatprep.subr.bf16.mxu0 0
  %1807 = vmatpush2.bf16.msra.mxu0 0
  %1808 = vmatprep.subr.bf16.mxu0 0
  %1809 = vmatpush2.bf16.msra.mxu0 0
  %1810 = vmatprep.subr.bf16.mxu0 0
  %1811 = vmatpush2.bf16.msra.mxu0 0
  %1812 = vmatprep.subr.bf16.mxu0 0
  %1813 = vmatpush2.bf16.msra.mxu0 0
  %1814 = vmatprep.mubr.bf16.mxu0 0
  %1815 = vmatmul.mubr.bf16.gmra.mxu0 %v1479
  %v1816 = vpop.f32.mrf.mxu0
  %v1817 = vadd.f32 %v1774, %v1816
  %v1818 = vpop.f32.mrf.mxu0
  %v1819 = vadd.f32 %v1776, %v1818
  %v1820 = vpop.f32.mrf.mxu0
  %v1821 = vadd.f32 %v1778, %v1820
  %v1822 = vpop.f32.mrf.mxu0
  %v1823 = vadd.f32 %v1780, %v1822
  %1824 = vdwg.mxu0
  %1825 = vmatprep.subr.bf16.mxu0 %v1109
  %1826 = vmatpush1.bf16.msra.mxu0 %v1108
  %1827 = vmatprep.subr.bf16.mxu0 %v1096
  %1828 = vmatpush1.bf16.msra.mxu0 %v1095
  %1829 = vmatprep.subr.bf16.mxu0 %v1083
  %1830 = vmatpush1.bf16.msra.mxu0 %v1082
  %1831 = vmatprep.subr.bf16.mxu0 %v1070
  %1832 = vmatpush1.bf16.msra.mxu0 %v1069
  %1833 = vmatprep.subr.bf16.mxu0 %v1057
  %1834 = vmatpush1.bf16.msra.mxu0 %v1056
  %1835 = vmatprep.subr.bf16.mxu0 %v1044
  %1836 = vmatpush1.bf16.msra.mxu0 %v1043
  %1837 = vmatprep.subr.bf16.mxu0 %v1031
  %1838 = vmatpush1.bf16.msra.mxu0 %v1030
  %1839 = vmatprep.subr.bf16.mxu0 %v1018
  %1840 = vmatpush1.bf16.msra.mxu0 %v1017
  %1841 = vmatprep.subr.bf16.mxu0 %v1213
  %1842 = vmatpush2.bf16.msra.mxu0 %v1212
  %1843 = vmatprep.subr.bf16.mxu0 %v1200
  %1844 = vmatpush2.bf16.msra.mxu0 %v1199
  %1845 = vmatprep.subr.bf16.mxu0 %v1187
  %1846 = vmatpush2.bf16.msra.mxu0 %v1186
  %1847 = vmatprep.subr.bf16.mxu0 %v1174
  %1848 = vmatpush2.bf16.msra.mxu0 %v1173
  %1849 = vmatprep.subr.bf16.mxu0 %v1161
  %1850 = vmatpush2.bf16.msra.mxu0 %v1160
  %1851 = vmatprep.subr.bf16.mxu0 %v1148
  %1852 = vmatpush2.bf16.msra.mxu0 %v1147
  %1853 = vmatprep.subr.bf16.mxu0 %v1135
  %1854 = vmatpush2.bf16.msra.mxu0 %v1134
  %1855 = vmatprep.subr.bf16.mxu0 %v1122
  %1856 = vmatpush2.bf16.msra.mxu0 %v1121
  %1857 = vmatprep.mubr.bf16.mxu0 %v285
  %1858 = vmatmul.mubr.bf16.gmra.mxu0 %v284
  %v1859 = vpop.f32.mrf.mxu0
  %v1860 = vadd.f32 0.0, %v1859
  %v1861 = vpop.f32.mrf.mxu0
  %v1862 = vadd.f32 0.0, %v1861
  %v1863 = vpop.f32.mrf.mxu0
  %v1864 = vadd.f32 0.0, %v1863
  %v1865 = vpop.f32.mrf.mxu0
  %v1866 = vadd.f32 0.0, %v1865
  %1867 = vdwg.mxu0
  %1868 = vmatprep.subr.bf16.mxu0 0
  %1869 = vmatpush1.bf16.msra.mxu0 0
  %1870 = vmatprep.subr.bf16.mxu0 0
  %1871 = vmatpush1.bf16.msra.mxu0 0
  %1872 = vmatprep.subr.bf16.mxu0 0
  %1873 = vmatpush1.bf16.msra.mxu0 0
  %1874 = vmatprep.subr.bf16.mxu0 0
  %1875 = vmatpush1.bf16.msra.mxu0 0
  %1876 = vmatprep.subr.bf16.mxu0 0
  %1877 = vmatpush1.bf16.msra.mxu0 0
  %1878 = vmatprep.subr.bf16.mxu0 0
  %1879 = vmatpush1.bf16.msra.mxu0 0
  %1880 = vmatprep.subr.bf16.mxu0 %v1239
  %1881 = vmatpush1.bf16.msra.mxu0 %v1238
  %1882 = vmatprep.subr.bf16.mxu0 %v1226
  %1883 = vmatpush1.bf16.msra.mxu0 %v1225
  %1884 = vmatprep.subr.bf16.mxu0 0
  %1885 = vmatpush2.bf16.msra.mxu0 0
  %1886 = vmatprep.subr.bf16.mxu0 0
  %1887 = vmatpush2.bf16.msra.mxu0 0
  %1888 = vmatprep.subr.bf16.mxu0 0
  %1889 = vmatpush2.bf16.msra.mxu0 0
  %1890 = vmatprep.subr.bf16.mxu0 0
  %1891 = vmatpush2.bf16.msra.mxu0 0
  %1892 = vmatprep.subr.bf16.mxu0 0
  %1893 = vmatpush2.bf16.msra.mxu0 0
  %1894 = vmatprep.subr.bf16.mxu0 0
  %1895 = vmatpush2.bf16.msra.mxu0 0
  %1896 = vmatprep.subr.bf16.mxu0 0
  %1897 = vmatpush2.bf16.msra.mxu0 0
  %1898 = vmatprep.subr.bf16.mxu0 0
  %1899 = vmatpush2.bf16.msra.mxu0 0
  %1900 = vmatprep.mubr.bf16.mxu0 0
  %1901 = vmatmul.mubr.bf16.gmra.mxu0 %v1479
  %v1902 = vpop.f32.mrf.mxu0
  %v1903 = vadd.f32 %v1860, %v1902
  %v1904 = vpop.f32.mrf.mxu0
  %v1905 = vadd.f32 %v1862, %v1904
  %v1906 = vpop.f32.mrf.mxu0
  %v1907 = vadd.f32 %v1864, %v1906
  %v1908 = vpop.f32.mrf.mxu0
  %v1909 = vadd.f32 %v1866, %v1908
  %1910 = vdwg.mxu0
  %1911 = vmatprep.subr.bf16.mxu0 %v1111
  %1912 = vmatpush1.bf16.msra.mxu0 %v1110
  %1913 = vmatprep.subr.bf16.mxu0 %v1098
  %1914 = vmatpush1.bf16.msra.mxu0 %v1097
  %1915 = vmatprep.subr.bf16.mxu0 %v1085
  %1916 = vmatpush1.bf16.msra.mxu0 %v1084
  %1917 = vmatprep.subr.bf16.mxu0 %v1072
  %1918 = vmatpush1.bf16.msra.mxu0 %v1071
  %1919 = vmatprep.subr.bf16.mxu0 %v1059
  %1920 = vmatpush1.bf16.msra.mxu0 %v1058
  %1921 = vmatprep.subr.bf16.mxu0 %v1046
  %1922 = vmatpush1.bf16.msra.mxu0 %v1045
  %1923 = vmatprep.subr.bf16.mxu0 %v1033
  %1924 = vmatpush1.bf16.msra.mxu0 %v1032
  %1925 = vmatprep.subr.bf16.mxu0 %v1020
  %1926 = vmatpush1.bf16.msra.mxu0 %v1019
  %1927 = vmatprep.subr.bf16.mxu0 %v1215
  %1928 = vmatpush2.bf16.msra.mxu0 %v1214
  %1929 = vmatprep.subr.bf16.mxu0 %v1202
  %1930 = vmatpush2.bf16.msra.mxu0 %v1201
  %1931 = vmatprep.subr.bf16.mxu0 %v1189
  %1932 = vmatpush2.bf16.msra.mxu0 %v1188
  %1933 = vmatprep.subr.bf16.mxu0 %v1176
  %1934 = vmatpush2.bf16.msra.mxu0 %v1175
  %1935 = vmatprep.subr.bf16.mxu0 %v1163
  %1936 = vmatpush2.bf16.msra.mxu0 %v1162
  %1937 = vmatprep.subr.bf16.mxu0 %v1150
  %1938 = vmatpush2.bf16.msra.mxu0 %v1149
  %1939 = vmatprep.subr.bf16.mxu0 %v1137
  %1940 = vmatpush2.bf16.msra.mxu0 %v1136
  %1941 = vmatprep.subr.bf16.mxu0 %v1124
  %1942 = vmatpush2.bf16.msra.mxu0 %v1123
  %1943 = vmatprep.mubr.bf16.mxu0 %v285
  %1944 = vmatmul.mubr.bf16.gmra.mxu0 %v284
  %v1945 = vpop.f32.mrf.mxu0
  %v1946 = vadd.f32 0.0, %v1945
  %v1947 = vpop.f32.mrf.mxu0
  %v1948 = vadd.f32 0.0, %v1947
  %v1949 = vpop.f32.mrf.mxu0
  %v1950 = vadd.f32 0.0, %v1949
  %v1951 = vpop.f32.mrf.mxu0
  %v1952 = vadd.f32 0.0, %v1951
  %1953 = vdwg.mxu0
  %1954 = vmatprep.subr.bf16.mxu0 0
  %1955 = vmatpush1.bf16.msra.mxu0 0
  %1956 = vmatprep.subr.bf16.mxu0 0
  %1957 = vmatpush1.bf16.msra.mxu0 0
  %1958 = vmatprep.subr.bf16.mxu0 0
  %1959 = vmatpush1.bf16.msra.mxu0 0
  %1960 = vmatprep.subr.bf16.mxu0 0
  %1961 = vmatpush1.bf16.msra.mxu0 0
  %1962 = vmatprep.subr.bf16.mxu0 0
  %1963 = vmatpush1.bf16.msra.mxu0 0
  %1964 = vmatprep.subr.bf16.mxu0 0
  %1965 = vmatpush1.bf16.msra.mxu0 0
  %1966 = vmatprep.subr.bf16.mxu0 %v1241
  %1967 = vmatpush1.bf16.msra.mxu0 %v1240
  %1968 = vmatprep.subr.bf16.mxu0 %v1228
  %1969 = vmatpush1.bf16.msra.mxu0 %v1227
  %1970 = vmatprep.subr.bf16.mxu0 0
  %1971 = vmatpush2.bf16.msra.mxu0 0
  %1972 = vmatprep.subr.bf16.mxu0 0
  %1973 = vmatpush2.bf16.msra.mxu0 0
  %1974 = vmatprep.subr.bf16.mxu0 0
  %1975 = vmatpush2.bf16.msra.mxu0 0
  %1976 = vmatprep.subr.bf16.mxu0 0
  %1977 = vmatpush2.bf16.msra.mxu0 0
  %1978 = vmatprep.subr.bf16.mxu0 0
  %1979 = vmatpush2.bf16.msra.mxu0 0
  %1980 = vmatprep.subr.bf16.mxu0 0
  %1981 = vmatpush2.bf16.msra.mxu0 0
  %1982 = vmatprep.subr.bf16.mxu0 0
  %1983 = vmatpush2.bf16.msra.mxu0 0
  %1984 = vmatprep.subr.bf16.mxu0 0
  %1985 = vmatpush2.bf16.msra.mxu0 0
  %1986 = vmatprep.mubr.bf16.mxu0 0
  %1987 = vmatmul.mubr.bf16.gmra.mxu0 %v1479
  %v1988 = vpop.f32.mrf.mxu0
  %v1989 = vadd.f32 %v1946, %v1988
  %v1990 = vpop.f32.mrf.mxu0
  %v1991 = vadd.f32 %v1948, %v1990
  %v1992 = vpop.f32.mrf.mxu0
  %v1993 = vadd.f32 %v1950, %v1992
  %v1994 = vpop.f32.mrf.mxu0
  %v1995 = vadd.f32 %v1952, %v1994
  %1996 = vdwg.mxu0
  %1997 = vmatprep.subr.bf16.mxu0 0
  %1998 = vmatpush1.bf16.msra.mxu0 %v1112
  %1999 = vmatprep.subr.bf16.mxu0 0
  %2000 = vmatpush1.bf16.msra.mxu0 %v1099
  %2001 = vmatprep.subr.bf16.mxu0 0
  %2002 = vmatpush1.bf16.msra.mxu0 %v1086
  %2003 = vmatprep.subr.bf16.mxu0 0
  %2004 = vmatpush1.bf16.msra.mxu0 %v1073
  %2005 = vmatprep.subr.bf16.mxu0 0
  %2006 = vmatpush1.bf16.msra.mxu0 %v1060
  %2007 = vmatprep.subr.bf16.mxu0 0
  %2008 = vmatpush1.bf16.msra.mxu0 %v1047
  %2009 = vmatprep.subr.bf16.mxu0 0
  %2010 = vmatpush1.bf16.msra.mxu0 %v1034
  %2011 = vmatprep.subr.bf16.mxu0 0
  %2012 = vmatpush1.bf16.msra.mxu0 %v1021
  %2013 = vmatprep.subr.bf16.mxu0 0
  %2014 = vmatpush2.bf16.msra.mxu0 %v1216
  %2015 = vmatprep.subr.bf16.mxu0 0
  %2016 = vmatpush2.bf16.msra.mxu0 %v1203
  %2017 = vmatprep.subr.bf16.mxu0 0
  %2018 = vmatpush2.bf16.msra.mxu0 %v1190
  %2019 = vmatprep.subr.bf16.mxu0 0
  %2020 = vmatpush2.bf16.msra.mxu0 %v1177
  %2021 = vmatprep.subr.bf16.mxu0 0
  %2022 = vmatpush2.bf16.msra.mxu0 %v1164
  %2023 = vmatprep.subr.bf16.mxu0 0
  %2024 = vmatpush2.bf16.msra.mxu0 %v1151
  %2025 = vmatprep.subr.bf16.mxu0 0
  %2026 = vmatpush2.bf16.msra.mxu0 %v1138
  %2027 = vmatprep.subr.bf16.mxu0 0
  %2028 = vmatpush2.bf16.msra.mxu0 %v1125
  %2029 = vmatprep.mubr.bf16.mxu0 %v285
  %2030 = vmatmul.mubr.bf16.gmra.mxu0 %v284
  %v2031 = vpop.f32.mrf.mxu0
  %v2032 = vadd.f32 0.0, %v2031
  %v2033 = vpop.f32.mrf.mxu0
  %v2034 = vpop.f32.mrf.mxu0
  %v2035 = vadd.f32 0.0, %v2034
  %v2036 = vpop.f32.mrf.mxu0
  %2037 = vdwg.mxu0
  %2038 = vmatprep.subr.bf16.mxu0 0
  %2039 = vmatpush1.bf16.msra.mxu0 0
  %2040 = vmatprep.subr.bf16.mxu0 0
  %2041 = vmatpush1.bf16.msra.mxu0 0
  %2042 = vmatprep.subr.bf16.mxu0 0
  %2043 = vmatpush1.bf16.msra.mxu0 0
  %2044 = vmatprep.subr.bf16.mxu0 0
  %2045 = vmatpush1.bf16.msra.mxu0 0
  %2046 = vmatprep.subr.bf16.mxu0 0
  %2047 = vmatpush1.bf16.msra.mxu0 0
  %2048 = vmatprep.subr.bf16.mxu0 0
  %2049 = vmatpush1.bf16.msra.mxu0 0
  %2050 = vmatprep.subr.bf16.mxu0 0
  %2051 = vmatpush1.bf16.msra.mxu0 %v1242
  %2052 = vmatprep.subr.bf16.mxu0 0
  %2053 = vmatpush1.bf16.msra.mxu0 %v1229
  %2054 = vmatprep.subr.bf16.mxu0 0
  %2055 = vmatpush2.bf16.msra.mxu0 0
  %2056 = vmatprep.subr.bf16.mxu0 0
  %2057 = vmatpush2.bf16.msra.mxu0 0
  %2058 = vmatprep.subr.bf16.mxu0 0
  %2059 = vmatpush2.bf16.msra.mxu0 0
  %2060 = vmatprep.subr.bf16.mxu0 0
  %2061 = vmatpush2.bf16.msra.mxu0 0
  %2062 = vmatprep.subr.bf16.mxu0 0
  %2063 = vmatpush2.bf16.msra.mxu0 0
  %2064 = vmatprep.subr.bf16.mxu0 0
  %2065 = vmatpush2.bf16.msra.mxu0 0
  %2066 = vmatprep.subr.bf16.mxu0 0
  %2067 = vmatpush2.bf16.msra.mxu0 0
  %2068 = vmatprep.subr.bf16.mxu0 0
  %2069 = vmatpush2.bf16.msra.mxu0 0
  %2070 = vmatprep.mubr.bf16.mxu0 0
  %2071 = vmatmul.mubr.bf16.gmra.mxu0 %v1479
  %v2072 = vpop.f32.mrf.mxu0
  %v2073 = vadd.f32 %v2032, %v2072
  %v2074 = vpop.f32.mrf.mxu0
  %v2075 = vpop.f32.mrf.mxu0
  %v2076 = vadd.f32 %v2035, %v2075
  %v2077 = vpop.f32.mrf.mxu0
  %2078 = vdwg.mxu0
  %v2079 = vadd.f32 %v1559, %v1561
  %v2080 = vadd.f32 %v2079, %v1645
  %v2081 = vadd.f32 %v2080, %v1647
  %v2082 = vadd.f32 %v2081, %v1731
  %v2083 = vadd.f32 %v2082, %v1733
  %v2084 = vadd.f32 %v2083, %v1817
  %v2085 = vadd.f32 %v2084, %v1819
  %v2086 = vadd.f32 %v2085, %v1903
  %v2087 = vadd.f32 %v2086, %v1905
  %v2088 = vadd.f32 %v2087, %v1989
  %v2089 = vadd.f32 %v2088, %v1991
  %v2090 = vsel %vm1477, %v2073, 0.0
  %v2091 = vadd.f32 %v2089, %v2090
  %2092 = vadd.xlane.f32.xlu0 %v2091
  %v2093 = vpop.xlane.xlu0 %2092
  %v2094 = vadd.f32 %v1563, %v1565
  %v2095 = vadd.f32 %v2094, %v1649
  %v2096 = vadd.f32 %v2095, %v1651
  %v2097 = vadd.f32 %v2096, %v1735
  %v2098 = vadd.f32 %v2097, %v1737
  %v2099 = vadd.f32 %v2098, %v1821
  %v2100 = vadd.f32 %v2099, %v1823
  %v2101 = vadd.f32 %v2100, %v1907
  %v2102 = vadd.f32 %v2101, %v1909
  %v2103 = vadd.f32 %v2102, %v1993
  %v2104 = vadd.f32 %v2103, %v1995
  %v2105 = vsel %vm1477, %v2076, 0.0
  %v2106 = vadd.f32 %v2104, %v2105
  %2107 = vadd.xlane.f32.xlu0 %v2106
  %v2108 = vpop.xlane.xlu0 %2107
  %v2109 = vrcp.pop 1568.0
  %v2110 = vmul.f32 %v2093, %v2109
  %v2111 = vmul.f32 %v2108, %v2109
  %v2112 = vmul.f32 %v1559, %v1559
  %v2113 = vmul.f32 %v1561, %v1561
  %v2114 = vmul.f32 %v1645, %v1645
  %v2115 = vmul.f32 %v1647, %v1647
  %v2116 = vmul.f32 %v1731, %v1731
  %v2117 = vmul.f32 %v1733, %v1733
  %v2118 = vmul.f32 %v1817, %v1817
  %v2119 = vmul.f32 %v1819, %v1819
  %v2120 = vmul.f32 %v1903, %v1903
  %v2121 = vmul.f32 %v1905, %v1905
  %v2122 = vmul.f32 %v1989, %v1989
  %v2123 = vmul.f32 %v1991, %v1991
  %v2124 = vmul.f32 %v2073, %v2073
  %v2125 = vmul.f32 %v1563, %v1563
  %v2126 = vmul.f32 %v1565, %v1565
  %v2127 = vmul.f32 %v1649, %v1649
  %v2128 = vmul.f32 %v1651, %v1651
  %v2129 = vmul.f32 %v1735, %v1735
  %v2130 = vmul.f32 %v1737, %v1737
  %v2131 = vmul.f32 %v1821, %v1821
  %v2132 = vmul.f32 %v1823, %v1823
  %v2133 = vmul.f32 %v1907, %v1907
  %v2134 = vmul.f32 %v1909, %v1909
  %v2135 = vmul.f32 %v1993, %v1993
  %v2136 = vmul.f32 %v1995, %v1995
  %v2137 = vmul.f32 %v2076, %v2076
  %v2138 = vadd.f32 %v2112, %v2113
  %v2139 = vadd.f32 %v2138, %v2114
  %v2140 = vadd.f32 %v2139, %v2115
  %v2141 = vadd.f32 %v2140, %v2116
  %v2142 = vadd.f32 %v2141, %v2117
  %v2143 = vadd.f32 %v2142, %v2118
  %v2144 = vadd.f32 %v2143, %v2119
  %v2145 = vadd.f32 %v2144, %v2120
  %v2146 = vadd.f32 %v2145, %v2121
  %v2147 = vadd.f32 %v2146, %v2122
  %v2148 = vadd.f32 %v2147, %v2123
  %v2149 = vsel %vm1477, %v2124, 0.0
  %v2150 = vadd.f32 %v2148, %v2149
  %2151 = vadd.xlane.f32.xlu0 %v2150
  %v2152 = vpop.xlane.xlu0 %2151
  %v2153 = vadd.f32 %v2125, %v2126
  %v2154 = vadd.f32 %v2153, %v2127
  %v2155 = vadd.f32 %v2154, %v2128
  %v2156 = vadd.f32 %v2155, %v2129
  %v2157 = vadd.f32 %v2156, %v2130
  %v2158 = vadd.f32 %v2157, %v2131
  %v2159 = vadd.f32 %v2158, %v2132
  %v2160 = vadd.f32 %v2159, %v2133
  %v2161 = vadd.f32 %v2160, %v2134
  %v2162 = vadd.f32 %v2161, %v2135
  %v2163 = vadd.f32 %v2162, %v2136
  %v2164 = vsel %vm1477, %v2137, 0.0
  %v2165 = vadd.f32 %v2163, %v2164
  %2166 = vadd.xlane.f32.xlu0 %v2165
  %v2167 = vpop.xlane.xlu0 %2166
  %v2168 = vmul.f32 %v2152, %v2109
  %v2169 = vmul.f32 %v2167, %v2109
  %v2170 = vmul.f32 %v2110, %v2110
  %v2171 = vmul.f32 %v2111, %v2111
  %v2172 = vsub.f32 %v2168, %v2170
  %v2173 = vsub.f32 %v2169, %v2171
  %v2174 = vmax.f32 %v2172, 0.0
  %v2175 = vmax.f32 %v2173, 0.0
  %v2176 = vld [vmem:[%s2] sm:$0xff]
  %v2177 = vld [vmem:[%s2 + $0x8] sm:$0xff]
  %v2178 = vadd.f32 %v2174, 1e-05
  %v2179 = vadd.f32 %v2175, 1e-05
  %v2180 = vrsqrt.pop %v2178
  %v2181 = vrsqrt.pop %v2179
  %v2182 = vmul.f32 %v2176, %v2180
  %v2183 = vmul.f32 %v2177, %v2181
  %v2184 = vld [vmem:[%s3] sm:$0xff]
  %v2185 = vld [vmem:[%s3 + $0x8] sm:$0xff]
  %v2186 = vmul.f32 %v2110, %v2182
  %v2187 = vmul.f32 %v2111, %v2183
  %v2188 = vsub.f32 %v2184, %v2186
  %v2189 = vsub.f32 %v2185, %v2187
  %2191 = vset.pattern.permute.xlu0 0
  %2192 = vperm.xlu0 %2191, %v2182
  %v2193 = vpop.permute.xlu0 %2192
  %2196 = vset.pattern.permute.xlu0 0
  %2197 = vperm.xlu0 %2196, %v2183
  %v2198 = vpop.permute.xlu0 %2197
  %v2200 = vmul.f32 %v1559, %v2193
  %v2201 = vmul.f32 %v1561, %v2193
  %v2202 = vmul.f32 %v1645, %v2193
  %v2203 = vmul.f32 %v1647, %v2193
  %v2204 = vmul.f32 %v1731, %v2193
  %v2205 = vmul.f32 %v1733, %v2193
  %v2206 = vmul.f32 %v1817, %v2193
  %v2207 = vmul.f32 %v1819, %v2193
  %v2208 = vmul.f32 %v1903, %v2193
  %v2209 = vmul.f32 %v1905, %v2193
  %v2210 = vmul.f32 %v1989, %v2193
  %v2211 = vmul.f32 %v1991, %v2193
  %v2212 = vmul.f32 %v2073, %v2193
  %v2213 = vmul.f32 %v1563, %v2198
  %v2214 = vmul.f32 %v1565, %v2198
  %v2215 = vmul.f32 %v1649, %v2198
  %v2216 = vmul.f32 %v1651, %v2198
  %v2217 = vmul.f32 %v1735, %v2198
  %v2218 = vmul.f32 %v1737, %v2198
  %v2219 = vmul.f32 %v1821, %v2198
  %v2220 = vmul.f32 %v1823, %v2198
  %v2221 = vmul.f32 %v1907, %v2198
  %v2222 = vmul.f32 %v1909, %v2198
  %v2223 = vmul.f32 %v1993, %v2198
  %v2224 = vmul.f32 %v1995, %v2198
  %v2225 = vmul.f32 %v2076, %v2198
  %2227 = vset.pattern.permute.xlu0 0
  %2228 = vperm.xlu0 %2227, %v2188
  %v2229 = vpop.permute.xlu0 %2228
  %2232 = vset.pattern.permute.xlu0 0
  %2233 = vperm.xlu0 %2232, %v2189
  %v2234 = vpop.permute.xlu0 %2233
  %v2236 = vadd.f32 %v2200, %v2229
  %v2237 = vadd.f32 %v2201, %v2229
  %v2238 = vadd.f32 %v2202, %v2229
  %v2239 = vadd.f32 %v2203, %v2229
  %v2240 = vadd.f32 %v2204, %v2229
  %v2241 = vadd.f32 %v2205, %v2229
  %v2242 = vadd.f32 %v2206, %v2229
  %v2243 = vadd.f32 %v2207, %v2229
  %v2244 = vadd.f32 %v2208, %v2229
  %v2245 = vadd.f32 %v2209, %v2229
  %v2246 = vadd.f32 %v2210, %v2229
  %v2247 = vadd.f32 %v2211, %v2229
  %v2248 = vadd.f32 %v2212, %v2229
  %v2249 = vadd.f32 %v2213, %v2234
  %v2250 = vadd.f32 %v2214, %v2234
  %v2251 = vadd.f32 %v2215, %v2234
  %v2252 = vadd.f32 %v2216, %v2234
  %v2253 = vadd.f32 %v2217, %v2234
  %v2254 = vadd.f32 %v2218, %v2234
  %v2255 = vadd.f32 %v2219, %v2234
  %v2256 = vadd.f32 %v2220, %v2234
  %v2257 = vadd.f32 %v2221, %v2234
  %v2258 = vadd.f32 %v2222, %v2234
  %v2259 = vadd.f32 %v2223, %v2234
  %v2260 = vadd.f32 %v2224, %v2234
  %v2261 = vadd.f32 %v2225, %v2234
  %v2262 = vmax.f32 %v2236, 0.0
  %v2263 = vmax.f32 %v2237, 0.0
  %v2264 = vmax.f32 %v2238, 0.0
  %v2265 = vmax.f32 %v2239, 0.0
  %v2266 = vmax.f32 %v2240, 0.0
  %v2267 = vmax.f32 %v2241, 0.0
  %v2268 = vmax.f32 %v2242, 0.0
  %v2269 = vmax.f32 %v2243, 0.0
  %v2270 = vmax.f32 %v2244, 0.0
  %v2271 = vmax.f32 %v2245, 0.0
  %v2272 = vmax.f32 %v2246, 0.0
  %v2273 = vmax.f32 %v2247, 0.0
  %v2274 = vmax.f32 %v2248, 0.0
  %v2275 = vmax.f32 %v2249, 0.0
  %v2276 = vmax.f32 %v2250, 0.0
  %v2277 = vmax.f32 %v2251, 0.0
  %v2278 = vmax.f32 %v2252, 0.0
  %v2279 = vmax.f32 %v2253, 0.0
  %v2280 = vmax.f32 %v2254, 0.0
  %v2281 = vmax.f32 %v2255, 0.0
  %v2282 = vmax.f32 %v2256, 0.0
  %v2283 = vmax.f32 %v2257, 0.0
  %v2284 = vmax.f32 %v2258, 0.0
  %v2285 = vmax.f32 %v2259, 0.0
  %v2286 = vmax.f32 %v2260, 0.0
  %v2287 = vmax.f32 %v2261, 0.0
  %v2288 = vpack.c.bf16 %v2275, %v2262
  %v2289 = vpack.c.bf16 %v2276, %v2263
  %v2290 = vpack.c.bf16 %v2277, %v2264
  %v2291 = vpack.c.bf16 %v2278, %v2265
  %v2292 = vpack.c.bf16 %v2279, %v2266
  %v2293 = vpack.c.bf16 %v2280, %v2267
  %v2294 = vpack.c.bf16 %v2281, %v2268
  %v2295 = vpack.c.bf16 %v2282, %v2269
  %v2296 = vpack.c.bf16 %v2283, %v2270
  %v2297 = vpack.c.bf16 %v2284, %v2271
  %v2298 = vpack.c.bf16 %v2285, %v2272
  %v2299 = vpack.c.bf16 %v2286, %v2273
  %v2300 = vpack.c.bf16 %v2287, %v2274
  %v2314 = vunpack.c.l.b16 %v2288
  %v2315 = vunpack.c.l.b16 %v2289
  %v2316 = vunpack.c.l.b16 %v2290
  %v2317 = vunpack.c.l.b16 %v2291
  %v2318 = vunpack.c.l.b16 %v2292
  %v2319 = vunpack.c.l.b16 %v2293
  %v2320 = vunpack.c.l.b16 %v2294
  %v2321 = vunpack.c.l.b16 %v2295
  %v2322 = vunpack.c.l.b16 %v2296
  %v2323 = vunpack.c.l.b16 %v2297
  %v2324 = vunpack.c.l.b16 %v2298
  %v2325 = vunpack.c.l.b16 %v2299
  %v2326 = vunpack.c.l.b16 %v2300
  %v2327 = vunpack.c.h.b16 %v2288
  %v2328 = vunpack.c.h.b16 %v2289
  %v2329 = vunpack.c.h.b16 %v2290
  %v2330 = vunpack.c.h.b16 %v2291
  %v2331 = vunpack.c.h.b16 %v2292
  %v2332 = vunpack.c.h.b16 %v2293
  %v2333 = vunpack.c.h.b16 %v2294
  %v2334 = vunpack.c.h.b16 %v2295
  %v2335 = vunpack.c.h.b16 %v2296
  %v2336 = vunpack.c.h.b16 %v2297
  %v2337 = vunpack.c.h.b16 %v2298
  %v2338 = vunpack.c.h.b16 %v2299
  %v2339 = vunpack.c.h.b16 %v2300
  %v2340 = vpack.c.b16 %v2315, %v2314
  %v2341 = vpack.c.b16 %v2317, %v2316
  %v2342 = vpack.c.b16 %v2319, %v2318
  %v2343 = vpack.c.b16 %v2321, %v2320
  %v2344 = vpack.c.b16 %v2323, %v2322
  %v2345 = vpack.c.b16 %v2325, %v2324
  %v2346 = vpack.c.b16 %v2326, %v2326
  %v2347 = vpack.c.b16 %v2328, %v2327
  %v2348 = vpack.c.b16 %v2330, %v2329
  %v2349 = vpack.c.b16 %v2332, %v2331
  %v2350 = vpack.c.b16 %v2334, %v2333
  %v2351 = vpack.c.b16 %v2336, %v2335
  %v2352 = vpack.c.b16 %v2338, %v2337
  %v2353 = vpack.c.b16 %v2339, %v2339
  %2368 = vst [vmem:[%s4] sm:$0xff] %v2340
  %2369 = vst [vmem:[%s4 + $0x8] sm:$0xff] %v2341
  %2370 = vst [vmem:[%s4 + $0x10] sm:$0xff] %v2342
  %2371 = vst [vmem:[%s4 + $0x18] sm:$0xff] %v2343
  %2372 = vst [vmem:[%s4 + $0x20] sm:$0xff] %v2344
  %2373 = vst [vmem:[%s4 + $0x28] sm:$0xff] %v2345
  %vm2374 = vcmask 257024
  %2375 = vst.msk [vmem:[%s4 + $0x30] sm:$0xf] %vm2374, %v2346
  %2376 = vst [vmem:[%s4 + $0x34] sm:$0xff] %v2347
  %2377 = vst [vmem:[%s4 + $0x3c] sm:$0xff] %v2348
  %2378 = vst [vmem:[%s4 + $0x44] sm:$0xff] %v2349
  %2379 = vst [vmem:[%s4 + $0x4c] sm:$0xff] %v2350
  %2380 = vst [vmem:[%s4 + $0x54] sm:$0xff] %v2351
  %2381 = vst [vmem:[%s4 + $0x5c] sm:$0xff] %v2352
  %2382 = vst.msk [vmem:[%s4 + $0x64] sm:$0xf] %vm2374, %v2353
  // Predicated region
  $region18: #{autoencoder_forward.14} parent=0 // pred_check
    _
  $region19: #{autoencoder_forward.14} parent=0 // pred_check_branch
    %2384 = sbr.rel (0) target = $region21
  $region20: #{autoencoder_forward.14} parent=0 // pred_region
    _
  $region21: #{autoencoder_forward.14} parent=0 // pred_fallthru
    _
  // Predicated region
  $region22: #{autoencoder_forward.14} parent=0 // pred_check
    _
  $region23: #{autoencoder_forward.14} parent=0 // pred_check_branch
    %2386 = sbr.rel (0) target = $region25
  $region24: #{autoencoder_forward.14} parent=0 // pred_region
    _
  $region25: #{autoencoder_forward.14} parent=0 // pred_fallthru
    _

// kernel: autoencoder_forward.15
$region0: #{autoencoder_forward.15}
  #allocation0 [shape = 'u32[]', space=smem, size = 0x4, offset = 0x4, fixed_abs, tag = 'smem constant byte address 0x4 - core index']
  #allocation1 [shape = 'u32[144,128]{1,0:T(1,128)}', space=vmem, size = 0x12000, scoped, tag = 'internal scratch']
  #allocation2 [shape = 'f32[1,1]{1,0:T(1,128)S(1)}', space=vmem, size = 0x200, scoped, tag = 'scoped memory for autoencoder_forward.15']
  %s0 = inlined_call_operand.vmem [shape: bf16[1,144], index: 0, kind: input, shape index: {}]
  %s1 = inlined_call_operand.vmem [shape: bf16[144,1568], index: 1, kind: input, shape index: {}]
  %s2 = inlined_call_operand.<no memory space> [shape: f32[1,1], index: 2, kind: input, shape index: {}]
  %s3 = inlined_call_operand.vmem [shape: f32[1,1568], index: 3, kind: output, shape index: {}]
  %s4 = sld [smem:[#allocation0]]
  $region22: #{autoencoder_forward.15} parent=0
    _
  %s6 = ssub.s32 1, %s4
  %s7 = scalar_select 0, %s6, %s4
  %v8 = vstv %s2
  %9 = vst [vmem:[#allocation2] sm:$0x1] %v8
  // Predicated region
  $region2: #{autoencoder_forward.15} parent=0 // pred_check
    _
  $region3: #{autoencoder_forward.15} parent=0 // pred_check_branch
    %11 = sbr.rel (0) target = $region5
  $region4: #{autoencoder_forward.15} parent=0 // pred_region
    _
  $region5: #{autoencoder_forward.15} parent=0 // pred_fallthru
    _
  // Predicated region
  $region6: #{autoencoder_forward.15} parent=0 // pred_check
    _
  $region7: #{autoencoder_forward.15} parent=0 // pred_check_branch
    %13 = sbr.rel (0) target = $region9
  $region8: #{autoencoder_forward.15} parent=0 // pred_region
    _
  $region9: #{autoencoder_forward.15} parent=0 // pred_fallthru
    _
  // Predicated region
  $region10: #{autoencoder_forward.15} parent=0 // pred_check
    _
  $region11: #{autoencoder_forward.15} parent=0 // pred_check_branch
    %15 = sbr.rel (0) target = $region13
  $region12: #{autoencoder_forward.15} parent=0 // pred_region
    _
  $region13: #{autoencoder_forward.15} parent=0 // pred_fallthru
    _
  %v17 = vld [vmem:[%s0] sm:$0x3]
  %v18 = vld [vmem:[%s1] sm:$0xff]
  %v19 = vld [vmem:[%s1 + $0x8] sm:$0xff]
  %v20 = vld [vmem:[%s1 + $0x10] sm:$0xff]
  %v21 = vld [vmem:[%s1 + $0x18] sm:$0xff]
  %v22 = vld [vmem:[%s1 + $0x20] sm:$0xff]
  %v23 = vld [vmem:[%s1 + $0x28] sm:$0xff]
  %v24 = vld [vmem:[%s1 + $0x30] sm:$0xf]
  %v25 = vld [vmem:[%s1 + $0x34] sm:$0xff]
  %v26 = vld [vmem:[%s1 + $0x3c] sm:$0xff]
  %v27 = vld [vmem:[%s1 + $0x44] sm:$0xff]
  %v28 = vld [vmem:[%s1 + $0x4c] sm:$0xff]
  %v29 = vld [vmem:[%s1 + $0x54] sm:$0xff]
  %v30 = vld [vmem:[%s1 + $0x5c] sm:$0xff]
  %v31 = vld [vmem:[%s1 + $0x64] sm:$0xf]
  %v32 = vld [vmem:[%s1 + $0x68] sm:$0xff]
  %v33 = vld [vmem:[%s1 + $0x70] sm:$0xff]
  %v34 = vld [vmem:[%s1 + $0x78] sm:$0xff]
  %v35 = vld [vmem:[%s1 + $0x80] sm:$0xff]
  %v36 = vld [vmem:[%s1 + $0x88] sm:$0xff]
  %v37 = vld [vmem:[%s1 + $0x90] sm:$0xff]
  %v38 = vld [vmem:[%s1 + $0x98] sm:$0xf]
  %v39 = vld [vmem:[%s1 + $0x9c] sm:$0xff]
  %v40 = vld [vmem:[%s1 + $0xa4] sm:$0xff]
  %v41 = vld [vmem:[%s1 + $0xac] sm:$0xff]
  %v42 = vld [vmem:[%s1 + $0xb4] sm:$0xff]
  %v43 = vld [vmem:[%s1 + $0xbc] sm:$0xff]
  %v44 = vld [vmem:[%s1 + $0xc4] sm:$0xff]
  %v45 = vld [vmem:[%s1 + $0xcc] sm:$0xf]
  %v46 = vld [vmem:[%s1 + $0xd0] sm:$0xff]
  %v47 = vld [vmem:[%s1 + $0xd8] sm:$0xff]
  %v48 = vld [vmem:[%s1 + $0xe0] sm:$0xff]
  %v49 = vld [vmem:[%s1 + $0xe8] sm:$0xff]
  %v50 = vld [vmem:[%s1 + $0xf0] sm:$0xff]
  %v51 = vld [vmem:[%s1 + $0xf8] sm:$0xff]
  %v52 = vld [vmem:[%s1 + $0x100] sm:$0xf]
  %v53 = vld [vmem:[%s1 + $0x104] sm:$0xff]
  %v54 = vld [vmem:[%s1 + $0x10c] sm:$0xff]
  %v55 = vld [vmem:[%s1 + $0x114] sm:$0xff]
  %v56 = vld [vmem:[%s1 + $0x11c] sm:$0xff]
  %v57 = vld [vmem:[%s1 + $0x124] sm:$0xff]
  %v58 = vld [vmem:[%s1 + $0x12c] sm:$0xff]
  %v59 = vld [vmem:[%s1 + $0x134] sm:$0xf]
  %v60 = vld [vmem:[%s1 + $0x138] sm:$0xff]
  %v61 = vld [vmem:[%s1 + $0x140] sm:$0xff]
  %v62 = vld [vmem:[%s1 + $0x148] sm:$0xff]
  %v63 = vld [vmem:[%s1 + $0x150] sm:$0xff]
  %v64 = vld [vmem:[%s1 + $0x158] sm:$0xff]
  %v65 = vld [vmem:[%s1 + $0x160] sm:$0xff]
  %v66 = vld [vmem:[%s1 + $0x168] sm:$0xf]
  %v67 = vld [vmem:[%s1 + $0x16c] sm:$0xff]
  %v68 = vld [vmem:[%s1 + $0x174] sm:$0xff]
  %v69 = vld [vmem:[%s1 + $0x17c] sm:$0xff]
  %v70 = vld [vmem:[%s1 + $0x184] sm:$0xff]
  %v71 = vld [vmem:[%s1 + $0x18c] sm:$0xff]
  %v72 = vld [vmem:[%s1 + $0x194] sm:$0xff]
  %v73 = vld [vmem:[%s1 + $0x19c] sm:$0xf]
  %v74 = vld [vmem:[%s1 + $0x1a0] sm:$0xff]
  %v75 = vld [vmem:[%s1 + $0x1a8] sm:$0xff]
  %v76 = vld [vmem:[%s1 + $0x1b0] sm:$0xff]
  %v77 = vld [vmem:[%s1 + $0x1b8] sm:$0xff]
  %v78 = vld [vmem:[%s1 + $0x1c0] sm:$0xff]
  %v79 = vld [vmem:[%s1 + $0x1c8] sm:$0xff]
  %v80 = vld [vmem:[%s1 + $0x1d0] sm:$0xf]
  %v81 = vld [vmem:[%s1 + $0x1d4] sm:$0xff]
  %v82 = vld [vmem:[%s1 + $0x1dc] sm:$0xff]
  %v83 = vld [vmem:[%s1 + $0x1e4] sm:$0xff]
  %v84 = vld [vmem:[%s1 + $0x1ec] sm:$0xff]
  %v85 = vld [vmem:[%s1 + $0x1f4] sm:$0xff]
  %v86 = vld [vmem:[%s1 + $0x1fc] sm:$0xff]
  %v87 = vld [vmem:[%s1 + $0x204] sm:$0xf]
  %v88 = vld [vmem:[%s1 + $0x208] sm:$0xff]
  %v89 = vld [vmem:[%s1 + $0x210] sm:$0xff]
  %v90 = vld [vmem:[%s1 + $0x218] sm:$0xff]
  %v91 = vld [vmem:[%s1 + $0x220] sm:$0xff]
  %v92 = vld [vmem:[%s1 + $0x228] sm:$0xff]
  %v93 = vld [vmem:[%s1 + $0x230] sm:$0xff]
  %v94 = vld [vmem:[%s1 + $0x238] sm:$0xf]
  %v95 = vld [vmem:[%s1 + $0x23c] sm:$0xff]
  %v96 = vld [vmem:[%s1 + $0x244] sm:$0xff]
  %v97 = vld [vmem:[%s1 + $0x24c] sm:$0xff]
  %v98 = vld [vmem:[%s1 + $0x254] sm:$0xff]
  %v99 = vld [vmem:[%s1 + $0x25c] sm:$0xff]
  %v100 = vld [vmem:[%s1 + $0x264] sm:$0xff]
  %v101 = vld [vmem:[%s1 + $0x26c] sm:$0xf]
  %v102 = vld [vmem:[%s1 + $0x270] sm:$0xff]
  %v103 = vld [vmem:[%s1 + $0x278] sm:$0xff]
  %v104 = vld [vmem:[%s1 + $0x280] sm:$0xff]
  %v105 = vld [vmem:[%s1 + $0x288] sm:$0xff]
  %v106 = vld [vmem:[%s1 + $0x290] sm:$0xff]
  %v107 = vld [vmem:[%s1 + $0x298] sm:$0xff]
  %v108 = vld [vmem:[%s1 + $0x2a0] sm:$0xf]
  %v109 = vld [vmem:[%s1 + $0x2a4] sm:$0xff]
  %v110 = vld [vmem:[%s1 + $0x2ac] sm:$0xff]
  %v111 = vld [vmem:[%s1 + $0x2b4] sm:$0xff]
  %v112 = vld [vmem:[%s1 + $0x2bc] sm:$0xff]
  %v113 = vld [vmem:[%s1 + $0x2c4] sm:$0xff]
  %v114 = vld [vmem:[%s1 + $0x2cc] sm:$0xff]
  %v115 = vld [vmem:[%s1 + $0x2d4] sm:$0xf]
  %v116 = vld [vmem:[%s1 + $0x2d8] sm:$0xff]
  %v117 = vld [vmem:[%s1 + $0x2e0] sm:$0xff]
  %v118 = vld [vmem:[%s1 + $0x2e8] sm:$0xff]
  %v119 = vld [vmem:[%s1 + $0x2f0] sm:$0xff]
  %v120 = vld [vmem:[%s1 + $0x2f8] sm:$0xff]
  %v121 = vld [vmem:[%s1 + $0x300] sm:$0xff]
  %v122 = vld [vmem:[%s1 + $0x308] sm:$0xf]
  %v123 = vld [vmem:[%s1 + $0x30c] sm:$0xff]
  %v124 = vld [vmem:[%s1 + $0x314] sm:$0xff]
  %v125 = vld [vmem:[%s1 + $0x31c] sm:$0xff]
  %v126 = vld [vmem:[%s1 + $0x324] sm:$0xff]
  %v127 = vld [vmem:[%s1 + $0x32c] sm:$0xff]
  %v128 = vld [vmem:[%s1 + $0x334] sm:$0xff]
  %v129 = vld [vmem:[%s1 + $0x33c] sm:$0xf]
  %v130 = vld [vmem:[%s1 + $0x340] sm:$0xff]
  %v131 = vld [vmem:[%s1 + $0x348] sm:$0xff]
  %v132 = vld [vmem:[%s1 + $0x350] sm:$0xff]
  %v133 = vld [vmem:[%s1 + $0x358] sm:$0xff]
  %v134 = vld [vmem:[%s1 + $0x360] sm:$0xff]
  %v135 = vld [vmem:[%s1 + $0x368] sm:$0xff]
  %v136 = vld [vmem:[%s1 + $0x370] sm:$0xf]
  %v137 = vld [vmem:[%s1 + $0x374] sm:$0xff]
  %v138 = vld [vmem:[%s1 + $0x37c] sm:$0xff]
  %v139 = vld [vmem:[%s1 + $0x384] sm:$0xff]
  %v140 = vld [vmem:[%s1 + $0x38c] sm:$0xff]
  %v141 = vld [vmem:[%s1 + $0x394] sm:$0xff]
  %v142 = vld [vmem:[%s1 + $0x39c] sm:$0xff]
  %v143 = vld [vmem:[%s1 + $0x3a4] sm:$0xf]
  %v144 = vld [vmem:[#allocation2] sm:$0x1]
  %146 = vset.pattern.permute.xlu0 0
  %147 = vperm.xlu0 %146, %v144
  %v148 = vpop.permute.xlu0 %147
  %v150 = vlaneseq
  %v151 = vshrl.u32 %v150, 7
  %v152 = vsub.s32 0, %v151
  %v153 = vrot.slane %v148, %v152
  %v156 = vunpack.c.l.s4 1966171168
  %v157 = vunpack.c.0.s8 %v156
  %v158 = vlaneseq
  %v159 = vshrl.u32 %v158, 7
  %v160 = vsub.s32 %v157, %v159
  %v161 = vrot.slane %v17, %v160
  %v162 = vcombine.high %v161, %v161
  %v164 = vunpack.c.l.s4 1966171168
  %v165 = vunpack.c.0.s8 %v164
  %v166 = vlaneseq
  %v167 = vshrl.u32 %v166, 7
  %v168 = vsub.s32 %v165, %v167
  %v169 = vrot.slane %v161, %v168
  %v171 = vunpack.c.l.s4 1966171168
  %v172 = vunpack.c.0.s8 %v171
  %v173 = vlaneseq
  %v174 = vshrl.u32 %v173, 7
  %v175 = vsub.s32 %v172, %v174
  %v176 = vrot.slane %v162, %v175
  %v304 = vunpack.c.l.b16 %v18
  %v305 = vunpack.c.h.b16 %v18
  %v306 = vunpack.c.l.b16 %v19
  %v307 = vunpack.c.h.b16 %v19
  %v308 = vunpack.c.l.b16 %v20
  %v309 = vunpack.c.h.b16 %v20
  %v310 = vunpack.c.l.b16 %v21
  %v311 = vunpack.c.h.b16 %v21
  %v312 = vunpack.c.l.b16 %v22
  %v313 = vunpack.c.h.b16 %v22
  %v314 = vunpack.c.l.b16 %v23
  %v315 = vunpack.c.h.b16 %v23
  %v316 = vunpack.c.l.b16 %v24
  %v317 = vunpack.c.l.b16 %v25
  %v318 = vunpack.c.h.b16 %v25
  %v319 = vunpack.c.l.b16 %v26
  %v320 = vunpack.c.h.b16 %v26
  %v321 = vunpack.c.l.b16 %v27
  %v322 = vunpack.c.h.b16 %v27
  %v323 = vunpack.c.l.b16 %v28
  %v324 = vunpack.c.h.b16 %v28
  %v325 = vunpack.c.l.b16 %v29
  %v326 = vunpack.c.h.b16 %v29
  %v327 = vunpack.c.l.b16 %v30
  %v328 = vunpack.c.h.b16 %v30
  %v329 = vunpack.c.l.b16 %v31
  %v330 = vunpack.c.l.b16 %v32
  %v331 = vunpack.c.h.b16 %v32
  %v332 = vunpack.c.l.b16 %v33
  %v333 = vunpack.c.h.b16 %v33
  %v334 = vunpack.c.l.b16 %v34
  %v335 = vunpack.c.h.b16 %v34
  %v336 = vunpack.c.l.b16 %v35
  %v337 = vunpack.c.h.b16 %v35
  %v338 = vunpack.c.l.b16 %v36
  %v339 = vunpack.c.h.b16 %v36
  %v340 = vunpack.c.l.b16 %v37
  %v341 = vunpack.c.h.b16 %v37
  %v342 = vunpack.c.l.b16 %v38
  %v343 = vunpack.c.l.b16 %v39
  %v344 = vunpack.c.h.b16 %v39
  %v345 = vunpack.c.l.b16 %v40
  %v346 = vunpack.c.h.b16 %v40
  %v347 = vunpack.c.l.b16 %v41
  %v348 = vunpack.c.h.b16 %v41
  %v349 = vunpack.c.l.b16 %v42
  %v350 = vunpack.c.h.b16 %v42
  %v351 = vunpack.c.l.b16 %v43
  %v352 = vunpack.c.h.b16 %v43
  %v353 = vunpack.c.l.b16 %v44
  %v354 = vunpack.c.h.b16 %v44
  %v355 = vunpack.c.l.b16 %v45
  %v356 = vunpack.c.l.b16 %v46
  %v357 = vunpack.c.h.b16 %v46
  %v358 = vunpack.c.l.b16 %v47
  %v359 = vunpack.c.h.b16 %v47
  %v360 = vunpack.c.l.b16 %v48
  %v361 = vunpack.c.h.b16 %v48
  %v362 = vunpack.c.l.b16 %v49
  %v363 = vunpack.c.h.b16 %v49
  %v364 = vunpack.c.l.b16 %v50
  %v365 = vunpack.c.h.b16 %v50
  %v366 = vunpack.c.l.b16 %v51
  %v367 = vunpack.c.h.b16 %v51
  %v368 = vunpack.c.l.b16 %v52
  %v369 = vunpack.c.l.b16 %v53
  %v370 = vunpack.c.h.b16 %v53
  %v371 = vunpack.c.l.b16 %v54
  %v372 = vunpack.c.h.b16 %v54
  %v373 = vunpack.c.l.b16 %v55
  %v374 = vunpack.c.h.b16 %v55
  %v375 = vunpack.c.l.b16 %v56
  %v376 = vunpack.c.h.b16 %v56
  %v377 = vunpack.c.l.b16 %v57
  %v378 = vunpack.c.h.b16 %v57
  %v379 = vunpack.c.l.b16 %v58
  %v380 = vunpack.c.h.b16 %v58
  %v381 = vunpack.c.l.b16 %v59
  %v382 = vunpack.c.l.b16 %v60
  %v383 = vunpack.c.h.b16 %v60
  %v384 = vunpack.c.l.b16 %v61
  %v385 = vunpack.c.h.b16 %v61
  %v386 = vunpack.c.l.b16 %v62
  %v387 = vunpack.c.h.b16 %v62
  %v388 = vunpack.c.l.b16 %v63
  %v389 = vunpack.c.h.b16 %v63
  %v390 = vunpack.c.l.b16 %v64
  %v391 = vunpack.c.h.b16 %v64
  %v392 = vunpack.c.l.b16 %v65
  %v393 = vunpack.c.h.b16 %v65
  %v394 = vunpack.c.l.b16 %v66
  %v395 = vunpack.c.l.b16 %v67
  %v396 = vunpack.c.h.b16 %v67
  %v397 = vunpack.c.l.b16 %v68
  %v398 = vunpack.c.h.b16 %v68
  %v399 = vunpack.c.l.b16 %v69
  %v400 = vunpack.c.h.b16 %v69
  %v401 = vunpack.c.l.b16 %v70
  %v402 = vunpack.c.h.b16 %v70
  %v403 = vunpack.c.l.b16 %v71
  %v404 = vunpack.c.h.b16 %v71
  %v405 = vunpack.c.l.b16 %v72
  %v406 = vunpack.c.h.b16 %v72
  %v407 = vunpack.c.l.b16 %v73
  %v408 = vunpack.c.l.b16 %v74
  %v409 = vunpack.c.h.b16 %v74
  %v410 = vunpack.c.l.b16 %v75
  %v411 = vunpack.c.h.b16 %v75
  %v412 = vunpack.c.l.b16 %v76
  %v413 = vunpack.c.h.b16 %v76
  %v414 = vunpack.c.l.b16 %v77
  %v415 = vunpack.c.h.b16 %v77
  %v416 = vunpack.c.l.b16 %v78
  %v417 = vunpack.c.h.b16 %v78
  %v418 = vunpack.c.l.b16 %v79
  %v419 = vunpack.c.h.b16 %v79
  %v420 = vunpack.c.l.b16 %v80
  %v421 = vunpack.c.l.b16 %v81
  %v422 = vunpack.c.h.b16 %v81
  %v423 = vunpack.c.l.b16 %v82
  %v424 = vunpack.c.h.b16 %v82
  %v425 = vunpack.c.l.b16 %v83
  %v426 = vunpack.c.h.b16 %v83
  %v427 = vunpack.c.l.b16 %v84
  %v428 = vunpack.c.h.b16 %v84
  %v429 = vunpack.c.l.b16 %v85
  %v430 = vunpack.c.h.b16 %v85
  %v431 = vunpack.c.l.b16 %v86
  %v432 = vunpack.c.h.b16 %v86
  %v433 = vunpack.c.l.b16 %v87
  %v434 = vunpack.c.l.b16 %v88
  %v435 = vunpack.c.h.b16 %v88
  %v436 = vunpack.c.l.b16 %v89
  %v437 = vunpack.c.h.b16 %v89
  %v438 = vunpack.c.l.b16 %v90
  %v439 = vunpack.c.h.b16 %v90
  %v440 = vunpack.c.l.b16 %v91
  %v441 = vunpack.c.h.b16 %v91
  %v442 = vunpack.c.l.b16 %v92
  %v443 = vunpack.c.h.b16 %v92
  %v444 = vunpack.c.l.b16 %v93
  %v445 = vunpack.c.h.b16 %v93
  %v446 = vunpack.c.l.b16 %v94
  %v447 = vunpack.c.l.b16 %v95
  %v448 = vunpack.c.h.b16 %v95
  %v449 = vunpack.c.l.b16 %v96
  %v450 = vunpack.c.h.b16 %v96
  %v451 = vunpack.c.l.b16 %v97
  %v452 = vunpack.c.h.b16 %v97
  %v453 = vunpack.c.l.b16 %v98
  %v454 = vunpack.c.h.b16 %v98
  %v455 = vunpack.c.l.b16 %v99
  %v456 = vunpack.c.h.b16 %v99
  %v457 = vunpack.c.l.b16 %v100
  %v458 = vunpack.c.h.b16 %v100
  %v459 = vunpack.c.l.b16 %v101
  %v460 = vunpack.c.l.b16 %v102
  %v461 = vunpack.c.h.b16 %v102
  %v462 = vunpack.c.l.b16 %v103
  %v463 = vunpack.c.h.b16 %v103
  %v464 = vunpack.c.l.b16 %v104
  %v465 = vunpack.c.h.b16 %v104
  %v466 = vunpack.c.l.b16 %v105
  %v467 = vunpack.c.h.b16 %v105
  %v468 = vunpack.c.l.b16 %v106
  %v469 = vunpack.c.h.b16 %v106
  %v470 = vunpack.c.l.b16 %v107
  %v471 = vunpack.c.h.b16 %v107
  %v472 = vunpack.c.l.b16 %v108
  %v473 = vunpack.c.l.b16 %v109
  %v474 = vunpack.c.h.b16 %v109
  %v475 = vunpack.c.l.b16 %v110
  %v476 = vunpack.c.h.b16 %v110
  %v477 = vunpack.c.l.b16 %v111
  %v478 = vunpack.c.h.b16 %v111
  %v479 = vunpack.c.l.b16 %v112
  %v480 = vunpack.c.h.b16 %v112
  %v481 = vunpack.c.l.b16 %v113
  %v482 = vunpack.c.h.b16 %v113
  %v483 = vunpack.c.l.b16 %v114
  %v484 = vunpack.c.h.b16 %v114
  %v485 = vunpack.c.l.b16 %v115
  %v486 = vunpack.c.l.b16 %v116
  %v487 = vunpack.c.h.b16 %v116
  %v488 = vunpack.c.l.b16 %v117
  %v489 = vunpack.c.h.b16 %v117
  %v490 = vunpack.c.l.b16 %v118
  %v491 = vunpack.c.h.b16 %v118
  %v492 = vunpack.c.l.b16 %v119
  %v493 = vunpack.c.h.b16 %v119
  %v494 = vunpack.c.l.b16 %v120
  %v495 = vunpack.c.h.b16 %v120
  %v496 = vunpack.c.l.b16 %v121
  %v497 = vunpack.c.h.b16 %v121
  %v498 = vunpack.c.l.b16 %v122
  %v499 = vunpack.c.l.b16 %v123
  %v500 = vunpack.c.h.b16 %v123
  %v501 = vunpack.c.l.b16 %v124
  %v502 = vunpack.c.h.b16 %v124
  %v503 = vunpack.c.l.b16 %v125
  %v504 = vunpack.c.h.b16 %v125
  %v505 = vunpack.c.l.b16 %v126
  %v506 = vunpack.c.h.b16 %v126
  %v507 = vunpack.c.l.b16 %v127
  %v508 = vunpack.c.h.b16 %v127
  %v509 = vunpack.c.l.b16 %v128
  %v510 = vunpack.c.h.b16 %v128
  %v511 = vunpack.c.l.b16 %v129
  %v512 = vunpack.c.l.b16 %v130
  %v513 = vunpack.c.h.b16 %v130
  %v514 = vunpack.c.l.b16 %v131
  %v515 = vunpack.c.h.b16 %v131
  %v516 = vunpack.c.l.b16 %v132
  %v517 = vunpack.c.h.b16 %v132
  %v518 = vunpack.c.l.b16 %v133
  %v519 = vunpack.c.h.b16 %v133
  %v520 = vunpack.c.l.b16 %v134
  %v521 = vunpack.c.h.b16 %v134
  %v522 = vunpack.c.l.b16 %v135
  %v523 = vunpack.c.h.b16 %v135
  %v524 = vunpack.c.l.b16 %v136
  %v525 = vunpack.c.l.b16 %v137
  %v526 = vunpack.c.h.b16 %v137
  %v527 = vunpack.c.l.b16 %v138
  %v528 = vunpack.c.h.b16 %v138
  %v529 = vunpack.c.l.b16 %v139
  %v530 = vunpack.c.h.b16 %v139
  %v531 = vunpack.c.l.b16 %v140
  %v532 = vunpack.c.h.b16 %v140
  %v533 = vunpack.c.l.b16 %v141
  %v534 = vunpack.c.h.b16 %v141
  %v535 = vunpack.c.l.b16 %v142
  %v536 = vunpack.c.h.b16 %v142
  %v537 = vunpack.c.l.b16 %v143
  %v538 = vpack.c.b16 %v317, %v304
  %v539 = vpack.c.b16 %v318, %v305
  %v540 = vpack.c.b16 %v319, %v306
  %v541 = vpack.c.b16 %v320, %v307
  %v542 = vpack.c.b16 %v321, %v308
  %v543 = vpack.c.b16 %v322, %v309
  %v544 = vpack.c.b16 %v323, %v310
  %v545 = vpack.c.b16 %v324, %v311
  %v546 = vpack.c.b16 %v325, %v312
  %v547 = vpack.c.b16 %v326, %v313
  %v548 = vpack.c.b16 %v327, %v314
  %v549 = vpack.c.b16 %v328, %v315
  %v550 = vpack.c.b16 %v329, %v316
  %v551 = vpack.c.b16 %v343, %v330
  %v552 = vpack.c.b16 %v344, %v331
  %v553 = vpack.c.b16 %v345, %v332
  %v554 = vpack.c.b16 %v346, %v333
  %v555 = vpack.c.b16 %v347, %v334
  %v556 = vpack.c.b16 %v348, %v335
  %v557 = vpack.c.b16 %v349, %v336
  %v558 = vpack.c.b16 %v350, %v337
  %v559 = vpack.c.b16 %v351, %v338
  %v560 = vpack.c.b16 %v352, %v339
  %v561 = vpack.c.b16 %v353, %v340
  %v562 = vpack.c.b16 %v354, %v341
  %v563 = vpack.c.b16 %v355, %v342
  %v564 = vpack.c.b16 %v369, %v356
  %v565 = vpack.c.b16 %v370, %v357
  %v566 = vpack.c.b16 %v371, %v358
  %v567 = vpack.c.b16 %v372, %v359
  %v568 = vpack.c.b16 %v373, %v360
  %v569 = vpack.c.b16 %v374, %v361
  %v570 = vpack.c.b16 %v375, %v362
  %v571 = vpack.c.b16 %v376, %v363
  %v572 = vpack.c.b16 %v377, %v364
  %v573 = vpack.c.b16 %v378, %v365
  %v574 = vpack.c.b16 %v379, %v366
  %v575 = vpack.c.b16 %v380, %v367
  %v576 = vpack.c.b16 %v381, %v368
  %v577 = vpack.c.b16 %v395, %v382
  %v578 = vpack.c.b16 %v396, %v383
  %v579 = vpack.c.b16 %v397, %v384
  %v580 = vpack.c.b16 %v398, %v385
  %v581 = vpack.c.b16 %v399, %v386
  %v582 = vpack.c.b16 %v400, %v387
  %v583 = vpack.c.b16 %v401, %v388
  %v584 = vpack.c.b16 %v402, %v389
  %v585 = vpack.c.b16 %v403, %v390
  %v586 = vpack.c.b16 %v404, %v391
  %v587 = vpack.c.b16 %v405, %v392
  %v588 = vpack.c.b16 %v406, %v393
  %v589 = vpack.c.b16 %v407, %v394
  %v590 = vpack.c.b16 %v421, %v408
  %v591 = vpack.c.b16 %v422, %v409
  %v592 = vpack.c.b16 %v423, %v410
  %v593 = vpack.c.b16 %v424, %v411
  %v594 = vpack.c.b16 %v425, %v412
  %v595 = vpack.c.b16 %v426, %v413
  %v596 = vpack.c.b16 %v427, %v414
  %v597 = vpack.c.b16 %v428, %v415
  %v598 = vpack.c.b16 %v429, %v416
  %v599 = vpack.c.b16 %v430, %v417
  %v600 = vpack.c.b16 %v431, %v418
  %v601 = vpack.c.b16 %v432, %v419
  %v602 = vpack.c.b16 %v433, %v420
  %v603 = vpack.c.b16 %v447, %v434
  %v604 = vpack.c.b16 %v448, %v435
  %v605 = vpack.c.b16 %v449, %v436
  %v606 = vpack.c.b16 %v450, %v437
  %v607 = vpack.c.b16 %v451, %v438
  %v608 = vpack.c.b16 %v452, %v439
  %v609 = vpack.c.b16 %v453, %v440
  %v610 = vpack.c.b16 %v454, %v441
  %v611 = vpack.c.b16 %v455, %v442
  %v612 = vpack.c.b16 %v456, %v443
  %v613 = vpack.c.b16 %v457, %v444
  %v614 = vpack.c.b16 %v458, %v445
  %v615 = vpack.c.b16 %v459, %v446
  %v616 = vpack.c.b16 %v473, %v460
  %v617 = vpack.c.b16 %v474, %v461
  %v618 = vpack.c.b16 %v475, %v462
  %v619 = vpack.c.b16 %v476, %v463
  %v620 = vpack.c.b16 %v477, %v464
  %v621 = vpack.c.b16 %v478, %v465
  %v622 = vpack.c.b16 %v479, %v466
  %v623 = vpack.c.b16 %v480, %v467
  %v624 = vpack.c.b16 %v481, %v468
  %v625 = vpack.c.b16 %v482, %v469
  %v626 = vpack.c.b16 %v483, %v470
  %v627 = vpack.c.b16 %v484, %v471
  %v628 = vpack.c.b16 %v485, %v472
  %v629 = vpack.c.b16 %v499, %v486
  %v630 = vpack.c.b16 %v500, %v487
  %v631 = vpack.c.b16 %v501, %v488
  %v632 = vpack.c.b16 %v502, %v489
  %v633 = vpack.c.b16 %v503, %v490
  %v634 = vpack.c.b16 %v504, %v491
  %v635 = vpack.c.b16 %v505, %v492
  %v636 = vpack.c.b16 %v506, %v493
  %v637 = vpack.c.b16 %v507, %v494
  %v638 = vpack.c.b16 %v508, %v495
  %v639 = vpack.c.b16 %v509, %v496
  %v640 = vpack.c.b16 %v510, %v497
  %v641 = vpack.c.b16 %v511, %v498
  %v642 = vpack.c.b16 %v525, %v512
  %v643 = vpack.c.b16 %v526, %v513
  %v644 = vpack.c.b16 %v527, %v514
  %v645 = vpack.c.b16 %v528, %v515
  %v646 = vpack.c.b16 %v529, %v516
  %v647 = vpack.c.b16 %v530, %v517
  %v648 = vpack.c.b16 %v531, %v518
  %v649 = vpack.c.b16 %v532, %v519
  %v650 = vpack.c.b16 %v533, %v520
  %v651 = vpack.c.b16 %v534, %v521
  %v652 = vpack.c.b16 %v535, %v522
  %v653 = vpack.c.b16 %v536, %v523
  %v654 = vpack.c.b16 %v537, %v524
  %vm772 = vcmask 130048
  %v774 = vsel %vm772, %v176, 0
  %776 = vmatprep.subr.bf16.mxu0 %v630
  %777 = vmatpush1.bf16.msra.mxu0 %v629
  %778 = vmatprep.subr.bf16.mxu0 %v617
  %779 = vmatpush1.bf16.msra.mxu0 %v616
  %780 = vmatprep.subr.bf16.mxu0 %v604
  %781 = vmatpush1.bf16.msra.mxu0 %v603
  %782 = vmatprep.subr.bf16.mxu0 %v591
  %783 = vmatpush1.bf16.msra.mxu0 %v590
  %784 = vmatprep.subr.bf16.mxu0 %v578
  %785 = vmatpush1.bf16.msra.mxu0 %v577
  %786 = vmatprep.subr.bf16.mxu0 %v565
  %787 = vmatpush1.bf16.msra.mxu0 %v564
  %788 = vmatprep.subr.bf16.mxu0 %v552
  %789 = vmatpush1.bf16.msra.mxu0 %v551
  %790 = vmatprep.subr.bf16.mxu0 %v539
  %791 = vmatpush1.bf16.msra.mxu0 %v538
  %792 = vmatprep.subr.bf16.mxu0 0
  %793 = vmatpush2.bf16.msra.mxu0 0
  %794 = vmatprep.subr.bf16.mxu0 0
  %795 = vmatpush2.bf16.msra.mxu0 0
  %796 = vmatprep.subr.bf16.mxu0 0
  %797 = vmatpush2.bf16.msra.mxu0 0
  %798 = vmatprep.subr.bf16.mxu0 0
  %799 = vmatpush2.bf16.msra.mxu0 0
  %800 = vmatprep.subr.bf16.mxu0 0
  %801 = vmatpush2.bf16.msra.mxu0 0
  %802 = vmatprep.subr.bf16.mxu0 0
  %803 = vmatpush2.bf16.msra.mxu0 0
  %804 = vmatprep.subr.bf16.mxu0 0
  %805 = vmatpush2.bf16.msra.mxu0 0
  %806 = vmatprep.subr.bf16.mxu0 %v643
  %807 = vmatpush2.bf16.msra.mxu0 %v642
  %808 = vmatprep.mubr.bf16.mxu0 %v774
  %809 = vmatmul.mubr.bf16.gmra.mxu0 %v169
  %v810 = vpop.f32.mrf.mxu0
  %v811 = vadd.f32 %v153, %v810
  %v812 = vpop.f32.mrf.mxu0
  %v813 = vadd.f32 %v153, %v812
  %v814 = vpop.f32.mrf.mxu0
  %v815 = vpop.f32.mrf.mxu0
  %816 = vdwg.mxu0
  %817 = vmatprep.subr.bf16.mxu0 %v632
  %818 = vmatpush1.bf16.msra.mxu0 %v631
  %819 = vmatprep.subr.bf16.mxu0 %v619
  %820 = vmatpush1.bf16.msra.mxu0 %v618
  %821 = vmatprep.subr.bf16.mxu0 %v606
  %822 = vmatpush1.bf16.msra.mxu0 %v605
  %823 = vmatprep.subr.bf16.mxu0 %v593
  %824 = vmatpush1.bf16.msra.mxu0 %v592
  %825 = vmatprep.subr.bf16.mxu0 %v580
  %826 = vmatpush1.bf16.msra.mxu0 %v579
  %827 = vmatprep.subr.bf16.mxu0 %v567
  %828 = vmatpush1.bf16.msra.mxu0 %v566
  %829 = vmatprep.subr.bf16.mxu0 %v554
  %830 = vmatpush1.bf16.msra.mxu0 %v553
  %831 = vmatprep.subr.bf16.mxu0 %v541
  %832 = vmatpush1.bf16.msra.mxu0 %v540
  %833 = vmatprep.subr.bf16.mxu0 0
  %834 = vmatpush2.bf16.msra.mxu0 0
  %835 = vmatprep.subr.bf16.mxu0 0
  %836 = vmatpush2.bf16.msra.mxu0 0
  %837 = vmatprep.subr.bf16.mxu0 0
  %838 = vmatpush2.bf16.msra.mxu0 0
  %839 = vmatprep.subr.bf16.mxu0 0
  %840 = vmatpush2.bf16.msra.mxu0 0
  %841 = vmatprep.subr.bf16.mxu0 0
  %842 = vmatpush2.bf16.msra.mxu0 0
  %843 = vmatprep.subr.bf16.mxu0 0
  %844 = vmatpush2.bf16.msra.mxu0 0
  %845 = vmatprep.subr.bf16.mxu0 0
  %846 = vmatpush2.bf16.msra.mxu0 0
  %847 = vmatprep.subr.bf16.mxu0 %v645
  %848 = vmatpush2.bf16.msra.mxu0 %v644
  %849 = vmatprep.mubr.bf16.mxu0 %v774
  %850 = vmatmul.mubr.bf16.gmra.mxu0 %v169
  %v851 = vpop.f32.mrf.mxu0
  %v852 = vadd.f32 %v153, %v851
  %v853 = vpop.f32.mrf.mxu0
  %v854 = vadd.f32 %v153, %v853
  %v855 = vpop.f32.mrf.mxu0
  %v856 = vpop.f32.mrf.mxu0
  %857 = vdwg.mxu0
  %858 = vmatprep.subr.bf16.mxu0 %v634
  %859 = vmatpush1.bf16.msra.mxu0 %v633
  %860 = vmatprep.subr.bf16.mxu0 %v621
  %861 = vmatpush1.bf16.msra.mxu0 %v620
  %862 = vmatprep.subr.bf16.mxu0 %v608
  %863 = vmatpush1.bf16.msra.mxu0 %v607
  %864 = vmatprep.subr.bf16.mxu0 %v595
  %865 = vmatpush1.bf16.msra.mxu0 %v594
  %866 = vmatprep.subr.bf16.mxu0 %v582
  %867 = vmatpush1.bf16.msra.mxu0 %v581
  %868 = vmatprep.subr.bf16.mxu0 %v569
  %869 = vmatpush1.bf16.msra.mxu0 %v568
  %870 = vmatprep.subr.bf16.mxu0 %v556
  %871 = vmatpush1.bf16.msra.mxu0 %v555
  %872 = vmatprep.subr.bf16.mxu0 %v543
  %873 = vmatpush1.bf16.msra.mxu0 %v542
  %874 = vmatprep.subr.bf16.mxu0 0
  %875 = vmatpush2.bf16.msra.mxu0 0
  %876 = vmatprep.subr.bf16.mxu0 0
  %877 = vmatpush2.bf16.msra.mxu0 0
  %878 = vmatprep.subr.bf16.mxu0 0
  %879 = vmatpush2.bf16.msra.mxu0 0
  %880 = vmatprep.subr.bf16.mxu0 0
  %881 = vmatpush2.bf16.msra.mxu0 0
  %882 = vmatprep.subr.bf16.mxu0 0
  %883 = vmatpush2.bf16.msra.mxu0 0
  %884 = vmatprep.subr.bf16.mxu0 0
  %885 = vmatpush2.bf16.msra.mxu0 0
  %886 = vmatprep.subr.bf16.mxu0 0
  %887 = vmatpush2.bf16.msra.mxu0 0
  %888 = vmatprep.subr.bf16.mxu0 %v647
  %889 = vmatpush2.bf16.msra.mxu0 %v646
  %890 = vmatprep.mubr.bf16.mxu0 %v774
  %891 = vmatmul.mubr.bf16.gmra.mxu0 %v169
  %v892 = vpop.f32.mrf.mxu0
  %v893 = vadd.f32 %v153, %v892
  %v894 = vpop.f32.mrf.mxu0
  %v895 = vadd.f32 %v153, %v894
  %v896 = vpop.f32.mrf.mxu0
  %v897 = vpop.f32.mrf.mxu0
  %898 = vdwg.mxu0
  %899 = vmatprep.subr.bf16.mxu0 %v636
  %900 = vmatpush1.bf16.msra.mxu0 %v635
  %901 = vmatprep.subr.bf16.mxu0 %v623
  %902 = vmatpush1.bf16.msra.mxu0 %v622
  %903 = vmatprep.subr.bf16.mxu0 %v610
  %904 = vmatpush1.bf16.msra.mxu0 %v609
  %905 = vmatprep.subr.bf16.mxu0 %v597
  %906 = vmatpush1.bf16.msra.mxu0 %v596
  %907 = vmatprep.subr.bf16.mxu0 %v584
  %908 = vmatpush1.bf16.msra.mxu0 %v583
  %909 = vmatprep.subr.bf16.mxu0 %v571
  %910 = vmatpush1.bf16.msra.mxu0 %v570
  %911 = vmatprep.subr.bf16.mxu0 %v558
  %912 = vmatpush1.bf16.msra.mxu0 %v557
  %913 = vmatprep.subr.bf16.mxu0 %v545
  %914 = vmatpush1.bf16.msra.mxu0 %v544
  %915 = vmatprep.subr.bf16.mxu0 0
  %916 = vmatpush2.bf16.msra.mxu0 0
  %917 = vmatprep.subr.bf16.mxu0 0
  %918 = vmatpush2.bf16.msra.mxu0 0
  %919 = vmatprep.subr.bf16.mxu0 0
  %920 = vmatpush2.bf16.msra.mxu0 0
  %921 = vmatprep.subr.bf16.mxu0 0
  %922 = vmatpush2.bf16.msra.mxu0 0
  %923 = vmatprep.subr.bf16.mxu0 0
  %924 = vmatpush2.bf16.msra.mxu0 0
  %925 = vmatprep.subr.bf16.mxu0 0
  %926 = vmatpush2.bf16.msra.mxu0 0
  %927 = vmatprep.subr.bf16.mxu0 0
  %928 = vmatpush2.bf16.msra.mxu0 0
  %929 = vmatprep.subr.bf16.mxu0 %v649
  %930 = vmatpush2.bf16.msra.mxu0 %v648
  %931 = vmatprep.mubr.bf16.mxu0 %v774
  %932 = vmatmul.mubr.bf16.gmra.mxu0 %v169
  %v933 = vpop.f32.mrf.mxu0
  %v934 = vadd.f32 %v153, %v933
  %v935 = vpop.f32.mrf.mxu0
  %v936 = vadd.f32 %v153, %v935
  %v937 = vpop.f32.mrf.mxu0
  %v938 = vpop.f32.mrf.mxu0
  %939 = vdwg.mxu0
  %940 = vmatprep.subr.bf16.mxu0 %v638
  %941 = vmatpush1.bf16.msra.mxu0 %v637
  %942 = vmatprep.subr.bf16.mxu0 %v625
  %943 = vmatpush1.bf16.msra.mxu0 %v624
  %944 = vmatprep.subr.bf16.mxu0 %v612
  %945 = vmatpush1.bf16.msra.mxu0 %v611
  %946 = vmatprep.subr.bf16.mxu0 %v599
  %947 = vmatpush1.bf16.msra.mxu0 %v598
  %948 = vmatprep.subr.bf16.mxu0 %v586
  %949 = vmatpush1.bf16.msra.mxu0 %v585
  %950 = vmatprep.subr.bf16.mxu0 %v573
  %951 = vmatpush1.bf16.msra.mxu0 %v572
  %952 = vmatprep.subr.bf16.mxu0 %v560
  %953 = vmatpush1.bf16.msra.mxu0 %v559
  %954 = vmatprep.subr.bf16.mxu0 %v547
  %955 = vmatpush1.bf16.msra.mxu0 %v546
  %956 = vmatprep.subr.bf16.mxu0 0
  %957 = vmatpush2.bf16.msra.mxu0 0
  %958 = vmatprep.subr.bf16.mxu0 0
  %959 = vmatpush2.bf16.msra.mxu0 0
  %960 = vmatprep.subr.bf16.mxu0 0
  %961 = vmatpush2.bf16.msra.mxu0 0
  %962 = vmatprep.subr.bf16.mxu0 0
  %963 = vmatpush2.bf16.msra.mxu0 0
  %964 = vmatprep.subr.bf16.mxu0 0
  %965 = vmatpush2.bf16.msra.mxu0 0
  %966 = vmatprep.subr.bf16.mxu0 0
  %967 = vmatpush2.bf16.msra.mxu0 0
  %968 = vmatprep.subr.bf16.mxu0 0
  %969 = vmatpush2.bf16.msra.mxu0 0
  %970 = vmatprep.subr.bf16.mxu0 %v651
  %971 = vmatpush2.bf16.msra.mxu0 %v650
  %972 = vmatprep.mubr.bf16.mxu0 %v774
  %973 = vmatmul.mubr.bf16.gmra.mxu0 %v169
  %v974 = vpop.f32.mrf.mxu0
  %v975 = vadd.f32 %v153, %v974
  %v976 = vpop.f32.mrf.mxu0
  %v977 = vadd.f32 %v153, %v976
  %v978 = vpop.f32.mrf.mxu0
  %v979 = vpop.f32.mrf.mxu0
  %980 = vdwg.mxu0
  %981 = vmatprep.subr.bf16.mxu0 %v640
  %982 = vmatpush1.bf16.msra.mxu0 %v639
  %983 = vmatprep.subr.bf16.mxu0 %v627
  %984 = vmatpush1.bf16.msra.mxu0 %v626
  %985 = vmatprep.subr.bf16.mxu0 %v614
  %986 = vmatpush1.bf16.msra.mxu0 %v613
  %987 = vmatprep.subr.bf16.mxu0 %v601
  %988 = vmatpush1.bf16.msra.mxu0 %v600
  %989 = vmatprep.subr.bf16.mxu0 %v588
  %990 = vmatpush1.bf16.msra.mxu0 %v587
  %991 = vmatprep.subr.bf16.mxu0 %v575
  %992 = vmatpush1.bf16.msra.mxu0 %v574
  %993 = vmatprep.subr.bf16.mxu0 %v562
  %994 = vmatpush1.bf16.msra.mxu0 %v561
  %995 = vmatprep.subr.bf16.mxu0 %v549
  %996 = vmatpush1.bf16.msra.mxu0 %v548
  %997 = vmatprep.subr.bf16.mxu0 0
  %998 = vmatpush2.bf16.msra.mxu0 0
  %999 = vmatprep.subr.bf16.mxu0 0
  %1000 = vmatpush2.bf16.msra.mxu0 0
  %1001 = vmatprep.subr.bf16.mxu0 0
  %1002 = vmatpush2.bf16.msra.mxu0 0
  %1003 = vmatprep.subr.bf16.mxu0 0
  %1004 = vmatpush2.bf16.msra.mxu0 0
  %1005 = vmatprep.subr.bf16.mxu0 0
  %1006 = vmatpush2.bf16.msra.mxu0 0
  %1007 = vmatprep.subr.bf16.mxu0 0
  %1008 = vmatpush2.bf16.msra.mxu0 0
  %1009 = vmatprep.subr.bf16.mxu0 0
  %1010 = vmatpush2.bf16.msra.mxu0 0
  %1011 = vmatprep.subr.bf16.mxu0 %v653
  %1012 = vmatpush2.bf16.msra.mxu0 %v652
  %1013 = vmatprep.mubr.bf16.mxu0 %v774
  %1014 = vmatmul.mubr.bf16.gmra.mxu0 %v169
  %v1015 = vpop.f32.mrf.mxu0
  %v1016 = vadd.f32 %v153, %v1015
  %v1017 = vpop.f32.mrf.mxu0
  %v1018 = vadd.f32 %v153, %v1017
  %v1019 = vpop.f32.mrf.mxu0
  %v1020 = vpop.f32.mrf.mxu0
  %1021 = vdwg.mxu0
  %1022 = vmatprep.subr.bf16.mxu0 0
  %1023 = vmatpush1.bf16.msra.mxu0 %v641
  %1024 = vmatprep.subr.bf16.mxu0 0
  %1025 = vmatpush1.bf16.msra.mxu0 %v628
  %1026 = vmatprep.subr.bf16.mxu0 0
  %1027 = vmatpush1.bf16.msra.mxu0 %v615
  %1028 = vmatprep.subr.bf16.mxu0 0
  %1029 = vmatpush1.bf16.msra.mxu0 %v602
  %1030 = vmatprep.subr.bf16.mxu0 0
  %1031 = vmatpush1.bf16.msra.mxu0 %v589
  %1032 = vmatprep.subr.bf16.mxu0 0
  %1033 = vmatpush1.bf16.msra.mxu0 %v576
  %1034 = vmatprep.subr.bf16.mxu0 0
  %1035 = vmatpush1.bf16.msra.mxu0 %v563
  %1036 = vmatprep.subr.bf16.mxu0 0
  %1037 = vmatpush1.bf16.msra.mxu0 %v550
  %1038 = vmatprep.subr.bf16.mxu0 0
  %1039 = vmatpush2.bf16.msra.mxu0 0
  %1040 = vmatprep.subr.bf16.mxu0 0
  %1041 = vmatpush2.bf16.msra.mxu0 0
  %1042 = vmatprep.subr.bf16.mxu0 0
  %1043 = vmatpush2.bf16.msra.mxu0 0
  %1044 = vmatprep.subr.bf16.mxu0 0
  %1045 = vmatpush2.bf16.msra.mxu0 0
  %1046 = vmatprep.subr.bf16.mxu0 0
  %1047 = vmatpush2.bf16.msra.mxu0 0
  %1048 = vmatprep.subr.bf16.mxu0 0
  %1049 = vmatpush2.bf16.msra.mxu0 0
  %1050 = vmatprep.subr.bf16.mxu0 0
  %1051 = vmatpush2.bf16.msra.mxu0 0
  %1052 = vmatprep.subr.bf16.mxu0 0
  %1053 = vmatpush2.bf16.msra.mxu0 %v654
  %1054 = vmatprep.mubr.bf16.mxu0 %v774
  %1055 = vmatmul.mubr.bf16.gmra.mxu0 %v169
  %v1056 = vpop.f32.mrf.mxu0
  %v1057 = vadd.f32 %v153, %v1056
  %v1058 = vpop.f32.mrf.mxu0
  %v1059 = vpop.f32.mrf.mxu0
  %v1060 = vpop.f32.mrf.mxu0
  %1061 = vdwg.mxu0
  %v1062 = vxor.u32 %v811, 2147483648
  %v1063 = vxor.u32 %v813, 2147483648
  %v1064 = vxor.u32 %v852, 2147483648
  %v1065 = vxor.u32 %v854, 2147483648
  %v1066 = vxor.u32 %v893, 2147483648
  %v1067 = vxor.u32 %v895, 2147483648
  %v1068 = vxor.u32 %v934, 2147483648
  %v1069 = vxor.u32 %v936, 2147483648
  %v1070 = vxor.u32 %v975, 2147483648
  %v1071 = vxor.u32 %v977, 2147483648
  %v1072 = vxor.u32 %v1016, 2147483648
  %v1073 = vxor.u32 %v1018, 2147483648
  %v1074 = vxor.u32 %v1057, 2147483648
  %v1075 = vmul.f32 %v1062, 1.442695
  %v1076 = vpow.pop %v1075
  %v1077 = vmul.f32 %v1063, 1.442695
  %v1078 = vpow.pop %v1077
  %v1079 = vmul.f32 %v1064, 1.442695
  %v1080 = vpow.pop %v1079
  %v1081 = vmul.f32 %v1065, 1.442695
  %v1082 = vpow.pop %v1081
  %v1083 = vmul.f32 %v1066, 1.442695
  %v1084 = vpow.pop %v1083
  %v1085 = vmul.f32 %v1067, 1.442695
  %v1086 = vpow.pop %v1085
  %v1087 = vmul.f32 %v1068, 1.442695
  %v1088 = vpow.pop %v1087
  %v1089 = vmul.f32 %v1069, 1.442695
  %v1090 = vpow.pop %v1089
  %v1091 = vmul.f32 %v1070, 1.442695
  %v1092 = vpow.pop %v1091
  %v1093 = vmul.f32 %v1071, 1.442695
  %v1094 = vpow.pop %v1093
  %v1095 = vmul.f32 %v1072, 1.442695
  %v1096 = vpow.pop %v1095
  %v1097 = vmul.f32 %v1073, 1.442695
  %v1098 = vpow.pop %v1097
  %v1099 = vmul.f32 %v1074, 1.442695
  %v1100 = vpow.pop %v1099
  %v1101 = vadd.f32 %v1076, 1.0
  %v1102 = vadd.f32 %v1078, 1.0
  %v1103 = vadd.f32 %v1080, 1.0
  %v1104 = vadd.f32 %v1082, 1.0
  %v1105 = vadd.f32 %v1084, 1.0
  %v1106 = vadd.f32 %v1086, 1.0
  %v1107 = vadd.f32 %v1088, 1.0
  %v1108 = vadd.f32 %v1090, 1.0
  %v1109 = vadd.f32 %v1092, 1.0
  %v1110 = vadd.f32 %v1094, 1.0
  %v1111 = vadd.f32 %v1096, 1.0
  %v1112 = vadd.f32 %v1098, 1.0
  %v1113 = vadd.f32 %v1100, 1.0
  %v1114 = vrcp.pop %v1101
  %v1115 = vmul.f32 1.0, %v1114
  %v1116 = vrcp.pop %v1102
  %v1117 = vmul.f32 1.0, %v1116
  %v1118 = vrcp.pop %v1103
  %v1119 = vmul.f32 1.0, %v1118
  %v1120 = vrcp.pop %v1104
  %v1121 = vmul.f32 1.0, %v1120
  %v1122 = vrcp.pop %v1105
  %v1123 = vmul.f32 1.0, %v1122
  %v1124 = vrcp.pop %v1106
  %v1125 = vmul.f32 1.0, %v1124
  %v1126 = vrcp.pop %v1107
  %v1127 = vmul.f32 1.0, %v1126
  %v1128 = vrcp.pop %v1108
  %v1129 = vmul.f32 1.0, %v1128
  %v1130 = vrcp.pop %v1109
  %v1131 = vmul.f32 1.0, %v1130
  %v1132 = vrcp.pop %v1110
  %v1133 = vmul.f32 1.0, %v1132
  %v1134 = vrcp.pop %v1111
  %v1135 = vmul.f32 1.0, %v1134
  %v1136 = vrcp.pop %v1112
  %v1137 = vmul.f32 1.0, %v1136
  %v1138 = vrcp.pop %v1113
  %v1139 = vmul.f32 1.0, %v1138
  %v1153 = vcombine.low %v1115, %v1117
  %v1154 = vcombine.low %v1119, %v1121
  %v1155 = vcombine.low %v1123, %v1125
  %v1156 = vcombine.low %v1127, %v1129
  %v1158 = vunpack.c.l.s4 1966171168
  %v1159 = vunpack.c.0.s8 %v1158
  %v1160 = vlaneseq
  %v1161 = vshrl.u32 %v1160, 7
  %v1162 = vsub.s32 %v1159, %v1161
  %v1163 = vrot.slane %v1153, %v1162
  %v1165 = vunpack.c.l.s4 1966171168
  %v1166 = vunpack.c.0.s8 %v1165
  %v1167 = vlaneseq
  %v1168 = vshrl.u32 %v1167, 7
  %v1169 = vsub.s32 %v1166, %v1168
  %v1170 = vrot.slane %v1154, %v1169
  %v1172 = vunpack.c.l.s4 1966171168
  %v1173 = vunpack.c.0.s8 %v1172
  %v1174 = vlaneseq
  %v1175 = vshrl.u32 %v1174, 7
  %v1176 = vsub.s32 %v1173, %v1175
  %v1177 = vrot.slane %v1155, %v1176
  %v1179 = vunpack.c.l.s4 1966171168
  %v1180 = vunpack.c.0.s8 %v1179
  %v1181 = vlaneseq
  %v1182 = vshrl.u32 %v1181, 7
  %v1183 = vsub.s32 %v1180, %v1182
  %v1184 = vrot.slane %v1156, %v1183
  %v1185 = vcombine.low %v1163, %v1170
  %v1186 = vcombine.low %v1177, %v1184
  %v1188 = vunpack.c.l.s4 1966171168
  %v1189 = vunpack.c.0.s8 %v1188
  %v1190 = vlaneseq
  %v1191 = vshrl.u32 %v1190, 7
  %v1192 = vsub.s32 %v1189, %v1191
  %v1193 = vrot.slane %v1185, %v1192
  %v1195 = vunpack.c.l.s4 1966171168
  %v1196 = vunpack.c.0.s8 %v1195
  %v1197 = vlaneseq
  %v1198 = vshrl.u32 %v1197, 7
  %v1199 = vsub.s32 %v1196, %v1198
  %v1200 = vrot.slane %v1186, %v1199
  %v1201 = vcombine.low %v1193, %v1200
  %v1202 = vcombine.low %v1131, %v1133
  %v1203 = vcombine.low %v1135, %v1137
  %v1205 = vunpack.c.l.s4 1966171168
  %v1206 = vunpack.c.0.s8 %v1205
  %v1207 = vlaneseq
  %v1208 = vshrl.u32 %v1207, 7
  %v1209 = vsub.s32 %v1206, %v1208
  %v1210 = vrot.slane %v1202, %v1209
  %v1212 = vunpack.c.l.s4 1966171168
  %v1213 = vunpack.c.0.s8 %v1212
  %v1214 = vlaneseq
  %v1215 = vshrl.u32 %v1214, 7
  %v1216 = vsub.s32 %v1213, %v1215
  %v1217 = vrot.slane %v1203, %v1216
  %v1219 = vunpack.c.l.s4 1966171168
  %v1220 = vunpack.c.0.s8 %v1219
  %v1221 = vlaneseq
  %v1222 = vshrl.u32 %v1221, 7
  %v1223 = vsub.s32 %v1220, %v1222
  %v1224 = vrot.slane %v1139, %v1223
  %v1225 = vcombine.low %v1210, %v1217
  %v1227 = vunpack.c.l.s4 1966171168
  %v1228 = vunpack.c.0.s8 %v1227
  %v1229 = vlaneseq
  %v1230 = vshrl.u32 %v1229, 7
  %v1231 = vsub.s32 %v1228, %v1230
  %v1232 = vrot.slane %v1225, %v1231
  %v1234 = vunpack.c.l.s4 1966171168
  %v1235 = vunpack.c.0.s8 %v1234
  %v1236 = vlaneseq
  %v1237 = vshrl.u32 %v1236, 7
  %v1238 = vsub.s32 %v1235, %v1237
  %v1239 = vrot.slane %v1224, %v1238
  %v1240 = vcombine.low %v1232, %v1239
  %1243 = vst [vmem:[%s3] sm:$0xff] %v1201
  %v1244 = vlaneseq
  %vm1245 = vcmp.ge.s32.totalorder %v1244, 0
  %vm1246 = vcmp.lt.s32.totalorder %v1244, 544
  %vm1247 = vmand %vm1245, %vm1246
  %1248 = vst.msk [vmem:[%s3 + $0x8] sm:$0x1f] %vm1247, %v1240
  // Predicated region
  $region14: #{autoencoder_forward.15} parent=0 // pred_check
    _
  $region15: #{autoencoder_forward.15} parent=0 // pred_check_branch
    %1250 = sbr.rel (0) target = $region17
  $region16: #{autoencoder_forward.15} parent=0 // pred_region
    _
  $region17: #{autoencoder_forward.15} parent=0 // pred_fallthru
    _
  // Predicated region
  $region18: #{autoencoder_forward.15} parent=0 // pred_check
    _
  $region19: #{autoencoder_forward.15} parent=0 // pred_check_branch
    %1252 = sbr.rel (0) target = $region21
  $region20: #{autoencoder_forward.15} parent=0 // pred_region
    _
  $region21: #{autoencoder_forward.15} parent=0 // pred_fallthru
    _

</llo_original>
